<compile_context>
chip_gen: v7x
topology: tpu7x:2x2x1
jax: 0.10.0
libtpu: 0.0.40
codegen_flags: <defaults>
</compile_context>

<pallas_src>
import math

import jax
import jax.numpy as jnp
from jax.experimental import pallas as pl
from jax.experimental.pallas import tpu as pltpu

# ---- hyperparameters taken from the PyTorch module ----
PCA_COMPONENTS = 50
F_PAD = 64                         # padded feature dim (sublane/lane friendly)
WINDOW_SIZE = 10
D_MODEL = 256
N_HEAD = 8
HEAD_DIM = D_MODEL // N_HEAD       # 32
D_FF = 512
N_LAYERS = 6
LN_EPS = 1e-5


def positional_encoding(d_model: int, max_len: int) -> jnp.ndarray:
    pos = jnp.arange(max_len, dtype=jnp.float32)[:, None]
    div = jnp.exp(jnp.arange(0, d_model, 2, dtype=jnp.float32)
                  * (-math.log(10000.0) / d_model))
    pe = jnp.zeros((max_len, d_model), dtype=jnp.float32)
    pe = pe.at[:, 0::2].set(jnp.sin(pos * div))
    pe = pe.at[:, 1::2].set(jnp.cos(pos * div))
    return pe  # (max_len, d_model)


def _layernorm(x, gamma, beta):
    mean = jnp.mean(x, axis=-1, keepdims=True)
    var = jnp.mean((x - mean) ** 2, axis=-1, keepdims=True)
    return (x - mean) * jax.lax.rsqrt(var + LN_EPS) * gamma + beta


# ---------------------------------------------------------------------------
# Pallas kernel: embed + PE + 6 post-norm encoder layers + regression head.
# One grid step processes a tile of `bt` windows as a single (bt*S, 256)
# activation matrix; windows are isolated by a block-diagonal attention bias.
# All weights are VMEM-resident (constant index maps, single-buffered).
# ---------------------------------------------------------------------------
def transformer_kernel(x_ref, wemb_ref, bemb_ref, pe_ref, bias_ref,
                       wqkv_ref, bqkv_ref, wo_ref, bo_ref,
                       ln1g_ref, ln1b_ref, w1_ref, b1_ref, w2_ref, b2_ref,
                       ln2g_ref, ln2b_ref,
                       hg_ref, hb_ref, wht_ref, bh_ref,
                       out_ref):
    n = x_ref.shape[0]                      # bt * S rows, f32 activations
    bt = out_ref.shape[0]
    S = n // bt

    # ---- embed Linear(50->64 padded, 256) + positional encoding ----
    x = jnp.dot(x_ref[...].astype(jnp.bfloat16), wemb_ref[...],
                preferred_element_type=jnp.float32)
    x = x + bemb_ref[...] + pe_ref[...]
    # TODO(synk): training-mode gaussian input noise (noise_std) and dropout
    # are identity in eval mode.

    def layer(l, x):
        # ---------------- self attention (nhead=8, post-norm) ----------------
        xb = x.astype(jnp.bfloat16)
        qkv = jnp.dot(xb, wqkv_ref[l],
                      preferred_element_type=jnp.float32) + bqkv_ref[l]
        bias = bias_ref[...]                # (n, n) 0 / -1e30 block-diagonal

        heads = []
        for h in range(N_HEAD):             # static unroll over heads
            lo = h * HEAD_DIM
            qh = qkv[:, lo:lo + HEAD_DIM].astype(jnp.bfloat16)          # scale pre-folded
            kh = qkv[:, D_MODEL + lo:D_MODEL + lo + HEAD_DIM].astype(jnp.bfloat16)
            vh = qkv[:, 2 * D_MODEL + lo:2 * D_MODEL + lo + HEAD_DIM].astype(jnp.bfloat16)
            s = jax.lax.dot_general(qh, kh, (((1,), (1,)), ((), ())),
                                    preferred_element_type=jnp.float32)  # (n, n)
            s = s + bias                    # kill cross-window attention
            s = s - jnp.max(s, axis=-1, keepdims=True)
            p = jnp.exp(s)
            p = p * pl.reciprocal(jnp.sum(p, axis=-1, keepdims=True), approx=True)
            hd = jnp.dot(p.astype(jnp.bfloat16), vh,
                         preferred_element_type=jnp.float32)             # (n, 32)
            heads.append(hd.astype(jnp.bfloat16))

        # fused output projection: one (n,256)@(256,256) GEMM instead of 8 K=32 folds
        ctx = jnp.concatenate(heads, axis=-1)                            # (n, 256) bf16
        attn = jnp.dot(ctx, wo_ref[l],
                       preferred_element_type=jnp.float32) + bo_ref[l]
        x = _layernorm(x + attn, ln1g_ref[l], ln1b_ref[l])

        # ---------------- feed forward (relu) ----------------
        h1 = jnp.dot(x.astype(jnp.bfloat16), w1_ref[l],
                     preferred_element_type=jnp.float32) + b1_ref[l]
        h1 = jnp.maximum(h1, 0.0)
        ff = jnp.dot(h1.astype(jnp.bfloat16), w2_ref[l],
                     preferred_element_type=jnp.float32) + b2_ref[l]
        x = _layernorm(x + ff, ln2g_ref[l], ln2b_ref[l])
        return x

    # fori_loop bounds live ranges across layers (matters most on v5e)
    x = jax.lax.fori_loop(0, N_LAYERS, layer, x)

    # ---- last token of every window via in-kernel one-hot selection matmul
    col = jax.lax.broadcasted_iota(jnp.int32, (bt, n), 1)
    row = jax.lax.broadcasted_iota(jnp.int32, (bt, n), 0)
    sel = jnp.where(col == row * S + (S - 1), 1.0, 0.0)                  # (bt, n) f32
    last = jnp.dot(sel, x, preferred_element_type=jnp.float32)           # (bt, 256)

    # ---- head: LayerNorm(256) -> (Dropout: identity at eval) -> Linear(256, 1)
    hn = _layernorm(last, hg_ref[...], hb_ref[...])
    out = jnp.sum(hn * wht_ref[...], axis=-1, keepdims=True) + bh_ref[...]
    out_ref[...] = out.astype(out_ref.dtype)


def transformer_forward_pallas(x, p, *, batch_tile=16):
    """Full forward: (B, S, 50) -> (B,) predictions."""
    B, S, F = x.shape
    bt = batch_tile
    n_tiles = -(-B // bt)
    # Note (v7x): for large B keep n_tiles >= 2 so the parallel axis is
    # sharded across both TensorCores; with bt=16 that means B > 16.
    B_pad = n_tiles * bt
    if B_pad != B:
        x = jnp.pad(x, ((0, B_pad - B), (0, 0), (0, 0)))       # always pad B up
    x2 = x.reshape(B_pad * S, F)
    if F < F_PAD:                                              # lane-friendly DMA
        x2 = jnp.pad(x2, ((0, 0), (0, F_PAD - F)))

    n = bt * S
    # positional encoding replicated for every window in the tile
    pe_rep = jnp.tile(p["pe"], (bt, 1)).astype(jnp.float32)              # (n, 256)
    # block-diagonal additive attention mask: 0 within a window, -1e30 across
    ids = jnp.arange(n, dtype=jnp.int32) // S
    attn_bias = jnp.where(ids[:, None] == ids[None, :], 0.0, -1e30
                          ).astype(jnp.float32)                          # (n, n)

    def cspec(shape):
        # constant-index, single-buffered (weights stay VMEM-resident, 1 copy)
        zeros = (0,) * len(shape)
        return pl.BlockSpec(shape, lambda i, _z=zeros: _z,
                            pipeline_mode=pl.Buffered(1))

    grid_spec = pltpu.PrefetchScalarGridSpec(
        num_scalar_prefetch=0,
        grid=(n_tiles,),
        in_specs=[
            pl.BlockSpec((n, F_PAD), lambda i: (i, 0)),                  # x (per-step)
            cspec((F_PAD, D_MODEL)),                                     # w_emb (bf16)
            cspec((1, D_MODEL)),                                         # b_emb
            cspec((n, D_MODEL)),                                         # pe (tiled)
            cspec((n, n)),                                               # attn bias
            cspec((N_LAYERS, D_MODEL, 3 * D_MODEL)),                     # wqkv (bf16)
            cspec((N_LAYERS, 1, 3 * D_MODEL)),                           # bqkv
            cspec((N_LAYERS, D_MODEL, D_MODEL)),                         # wo (bf16)
            cspec((N_LAYERS, 1, D_MODEL)),                               # bo
            cspec((N_LAYERS, 1, D_MODEL)),                               # ln1 gamma
            cspec((N_LAYERS, 1, D_MODEL)),                               # ln1 beta
            cspec((N_LAYERS, D_MODEL, D_FF)),                            # w1 (bf16)
            cspec((N_LAYERS, 1, D_FF)),                                  # b1
            cspec((N_LAYERS, D_FF, D_MODEL)),                            # w2 (bf16)
            cspec((N_LAYERS, 1, D_MODEL)),                               # b2
            cspec((N_LAYERS, 1, D_MODEL)),                               # ln2 gamma
            cspec((N_LAYERS, 1, D_MODEL)),                               # ln2 beta
            cspec((1, D_MODEL)),                                         # head LN gamma
            cspec((1, D_MODEL)),                                         # head LN beta
            cspec((1, D_MODEL)),                                         # w_head^T
            cspec((1, 1)),                                               # b_head
        ],
        out_specs=pl.BlockSpec((bt, 1), lambda i: (i, 0)),
    )
    out = pl.pallas_call(
        transformer_kernel,
        out_shape=jax.ShapeDtypeStruct((B_pad, 1), jnp.float32),
        grid_spec=grid_spec,
        compiler_params=pltpu.CompilerParams(
            dimension_semantics=("parallel",),
            vmem_limit_bytes=32 * 1024 * 1024),
    )(x2, p["w_emb"], p["b_emb"], pe_rep, attn_bias,
      p["wqkv"], p["bqkv"], p["wo"], p["bo"],
      p["ln1g"], p["ln1b"], p["w1"], p["b1"], p["w2"], p["b2"],
      p["ln2g"], p["ln2b"],
      p["head_g"], p["head_b"], p["w_head_t"], p["b_head"])
    return out[:B, 0]


@jax.jit
def forward(x, kernel_params):
    return transformer_forward_pallas(x, kernel_params)


# ---------------------------------------------------------------------------
# Pure-JAX reference (for correctness check)
# ---------------------------------------------------------------------------
def reference_forward(x, p):
    B, S, _ = x.shape
    h = x @ p["w_emb"] + p["b_emb"][0] + p["pe"]
    scale = 1.0 / math.sqrt(HEAD_DIM)
    for l in range(N_LAYERS):
        qkv = h @ p["wqkv"][l] + p["bqkv"][l, 0]
        q, k, v = jnp.split(qkv, 3, axis=-1)
        q = q.reshape(B, S, N_HEAD, HEAD_DIM)
        k = k.reshape(B, S, N_HEAD, HEAD_DIM)
        v = v.reshape(B, S, N_HEAD, HEAD_DIM)
        s = jnp.einsum("bqhd,bkhd->bhqk", q, k) * scale
        attn = jax.nn.softmax(s, axis=-1)
        o = jnp.einsum("bhqk,bkhd->bqhd", attn, v).reshape(B, S, D_MODEL)
        o = o @ p["wo"][l] + p["bo"][l, 0]
        h = _layernorm(h + o, p["ln1g"][l, 0], p["ln1b"][l, 0])
        f = jax.nn.relu(h @ p["w1"][l] + p["b1"][l, 0]) @ p["w2"][l] + p["b2"][l, 0]
        h = _layernorm(h + f, p["ln2g"][l, 0], p["ln2b"][l, 0])
    last = h[:, -1]
    out = _layernorm(last, p["head_g"], p["head_b"]) @ p["w_head"] + p["b_head"]
    return out[:, 0]


# ---------------------------------------------------------------------------
# Deterministic parameter construction + kernel-side packing
# ---------------------------------------------------------------------------
def init_params(key):
    ks = jax.random.split(key, 16)

    def nrm(k, shape, scale):
        return jax.random.normal(k, shape, jnp.float32) * scale

    return {
        "w_emb": nrm(ks[0], (PCA_COMPONENTS, D_MODEL), 1.0 / math.sqrt(PCA_COMPONENTS)),
        "b_emb": nrm(ks[1], (1, D_MODEL), 0.01),
        "pe": positional_encoding(D_MODEL, WINDOW_SIZE),
        "wqkv": nrm(ks[2], (N_LAYERS, D_MODEL, 3 * D_MODEL), 1.0 / math.sqrt(D_MODEL)),
        "bqkv": nrm(ks[3], (N_LAYERS, 1, 3 * D_MODEL), 0.01),
        "wo": nrm(ks[4], (N_LAYERS, D_MODEL, D_MODEL), 1.0 / math.sqrt(D_MODEL)),
        "bo": nrm(ks[5], (N_LAYERS, 1, D_MODEL), 0.01),
        "ln1g": jnp.ones((N_LAYERS, 1, D_MODEL), jnp.float32),
        "ln1b": jnp.zeros((N_LAYERS, 1, D_MODEL), jnp.float32),
        "w1": nrm(ks[6], (N_LAYERS, D_MODEL, D_FF), 1.0 / math.sqrt(D_MODEL)),
        "b1": nrm(ks[7], (N_LAYERS, 1, D_FF), 0.01),
        "w2": nrm(ks[8], (N_LAYERS, D_FF, D_MODEL), 1.0 / math.sqrt(D_FF)),
        "b2": nrm(ks[9], (N_LAYERS, 1, D_MODEL), 0.01),
        "ln2g": jnp.ones((N_LAYERS, 1, D_MODEL), jnp.float32),
        "ln2b": jnp.zeros((N_LAYERS, 1, D_MODEL), jnp.float32),
        "head_g": jnp.ones((D_MODEL,), jnp.float32),
        "head_b": jnp.zeros((D_MODEL,), jnp.float32),
        "w_head": nrm(ks[10], (D_MODEL, 1), 1.0 / math.sqrt(D_MODEL)),
        "b_head": jnp.zeros((1,), jnp.float32),
    }


_BF16_WEIGHTS = ("w_emb", "wqkv", "wo", "w1", "w2")


def prepare_params(p):
    """Kernel-side packing: scale folding, feature padding, bf16 weights."""
    kp = dict(p)
    scale = 1.0 / math.sqrt(HEAD_DIM)
    # fold 1/sqrt(head_dim) into the Q columns of the packed in-projection
    kp["wqkv"] = p["wqkv"].at[:, :, :D_MODEL].multiply(scale)
    kp["bqkv"] = p["bqkv"].at[:, :, :D_MODEL].multiply(scale)
    # pad embed weight rows 50 -> 64 (matches zero-padded input features)
    kp["w_emb"] = jnp.pad(p["w_emb"], ((0, F_PAD - PCA_COMPONENTS), (0, 0)))
    for k in _BF16_WEIGHTS:
        kp[k] = kp[k].astype(jnp.bfloat16)
    kp["head_g"] = p["head_g"].reshape(1, D_MODEL)
    kp["head_b"] = p["head_b"].reshape(1, D_MODEL)
    kp["w_head_t"] = p["w_head"].reshape(1, D_MODEL)
    kp["b_head"] = p["b_head"].reshape(1, 1)
    return kp


if __name__ == "__main__":
    key = jax.random.PRNGKey(0)
    k_param, k_x = jax.random.split(key)

    B, S = 2, WINDOW_SIZE
    x = jax.random.normal(k_x, (B, S, PCA_COMPONENTS), jnp.float32)
    params = init_params(k_param)
    kparams = prepare_params(params)

    out = jax.block_until_ready(forward(x, kparams))

    # Reference uses bf16-rounded weights (f32 math, unscaled Q + explicit scale).
    ref_params = dict(params)
    for kk in _BF16_WEIGHTS:
        ref_params[kk] = params[kk].astype(jnp.bfloat16).astype(jnp.float32)
    ref = jax.block_until_ready(reference_forward(x, ref_params))

    assert out.shape == (B,), f"bad output shape {out.shape}"
    assert bool(jnp.all(jnp.isfinite(out))), "non-finite output"
    max_diff = float(jnp.max(jnp.abs(out - ref)))
    assert max_diff < 0.1, f"mismatch vs reference: {max_diff}"

    print("KERNEL_OK")
</pallas_src>

<mosaic_0001>
module attributes {stable_mosaic.version = 11 : i64} {
  func.func @transformer_kernel(%arg0: i32, %arg1: memref<160x64xf32, #tpu.memory_space<vmem>>, %arg2: memref<64x256xbf16, #tpu.memory_space<vmem>>, %arg3: memref<1x256xf32, #tpu.memory_space<vmem>>, %arg4: memref<160x256xf32, #tpu.memory_space<vmem>>, %arg5: memref<160x160xf32, #tpu.memory_space<vmem>>, %arg6: memref<6x256x768xbf16, #tpu.memory_space<vmem>>, %arg7: memref<6x1x768xf32, #tpu.memory_space<vmem>>, %arg8: memref<6x256x256xbf16, #tpu.memory_space<vmem>>, %arg9: memref<6x1x256xf32, #tpu.memory_space<vmem>>, %arg10: memref<6x1x256xf32, #tpu.memory_space<vmem>>, %arg11: memref<6x1x256xf32, #tpu.memory_space<vmem>>, %arg12: memref<6x256x512xbf16, #tpu.memory_space<vmem>>, %arg13: memref<6x1x512xf32, #tpu.memory_space<vmem>>, %arg14: memref<6x512x256xbf16, #tpu.memory_space<vmem>>, %arg15: memref<6x1x256xf32, #tpu.memory_space<vmem>>, %arg16: memref<6x1x256xf32, #tpu.memory_space<vmem>>, %arg17: memref<6x1x256xf32, #tpu.memory_space<vmem>>, %arg18: memref<1x256xf32, #tpu.memory_space<vmem>>, %arg19: memref<1x256xf32, #tpu.memory_space<vmem>>, %arg20: memref<1x256xf32, #tpu.memory_space<vmem>>, %arg21: memref<1x1xf32, #tpu.memory_space<vmem>>, %arg22: memref<16x1xf32, #tpu.memory_space<vmem>>) attributes {dimension_semantics = [#tpu.dimension_semantics<parallel>], iteration_bounds = array<i64: 1>, scalar_prefetch = 0 : i64, scratch_operands = 0 : i64, tpu.core_type = #tpu.core_type<tc>, window_params = [{transform_indices = @transform_0, window_bounds = array<i64: 160, 64>}, {pipeline_mode = #tpu.pipeline_mode<synchronous>, transform_indices = @transform_1, window_bounds = array<i64: 64, 256>}, {pipeline_mode = #tpu.pipeline_mode<synchronous>, transform_indices = @transform_2, window_bounds = array<i64: 1, 256>}, {pipeline_mode = #tpu.pipeline_mode<synchronous>, transform_indices = @transform_3, window_bounds = array<i64: 160, 256>}, {pipeline_mode = #tpu.pipeline_mode<synchronous>, transform_indices = @transform_4, window_bounds = array<i64: 160, 160>}, {pipeline_mode = #tpu.pipeline_mode<synchronous>, transform_indices = @transform_5, window_bounds = array<i64: 6, 256, 768>}, {pipeline_mode = #tpu.pipeline_mode<synchronous>, transform_indices = @transform_6, window_bounds = array<i64: 6, 1, 768>}, {pipeline_mode = #tpu.pipeline_mode<synchronous>, transform_indices = @transform_7, window_bounds = array<i64: 6, 256, 256>}, {pipeline_mode = #tpu.pipeline_mode<synchronous>, transform_indices = @transform_8, window_bounds = array<i64: 6, 1, 256>}, {pipeline_mode = #tpu.pipeline_mode<synchronous>, transform_indices = @transform_9, window_bounds = array<i64: 6, 1, 256>}, {pipeline_mode = #tpu.pipeline_mode<synchronous>, transform_indices = @transform_10, window_bounds = array<i64: 6, 1, 256>}, {pipeline_mode = #tpu.pipeline_mode<synchronous>, transform_indices = @transform_11, window_bounds = array<i64: 6, 256, 512>}, {pipeline_mode = #tpu.pipeline_mode<synchronous>, transform_indices = @transform_12, window_bounds = array<i64: 6, 1, 512>}, {pipeline_mode = #tpu.pipeline_mode<synchronous>, transform_indices = @transform_13, window_bounds = array<i64: 6, 512, 256>}, {pipeline_mode = #tpu.pipeline_mode<synchronous>, transform_indices = @transform_14, window_bounds = array<i64: 6, 1, 256>}, {pipeline_mode = #tpu.pipeline_mode<synchronous>, transform_indices = @transform_15, window_bounds = array<i64: 6, 1, 256>}, {pipeline_mode = #tpu.pipeline_mode<synchronous>, transform_indices = @transform_16, window_bounds = array<i64: 6, 1, 256>}, {pipeline_mode = #tpu.pipeline_mode<synchronous>, transform_indices = @transform_17, window_bounds = array<i64: 1, 256>}, {pipeline_mode = #tpu.pipeline_mode<synchronous>, transform_indices = @transform_18, window_bounds = array<i64: 1, 256>}, {pipeline_mode = #tpu.pipeline_mode<synchronous>, transform_indices = @transform_19, window_bounds = array<i64: 1, 256>}, {pipeline_mode = #tpu.pipeline_mode<synchronous>, transform_indices = @transform_20, window_bounds = array<i64: 1, 1>}, {transform_indices = @transform_21, window_bounds = array<i64: 16, 1>}]} {
    %c0 = arith.constant 0 : index
    %c0_0 = arith.constant 0 : index
    %0 = vector.load %arg1[%c0, %c0_0] : memref<160x64xf32, #tpu.memory_space<vmem>>, vector<160x64xf32>
    %1 = arith.truncf %0 : vector<160x64xf32> to vector<160x64xbf16>
    %c0_1 = arith.constant 0 : index
    %c0_2 = arith.constant 0 : index
    %2 = vector.load %arg2[%c0_1, %c0_2] : memref<64x256xbf16, #tpu.memory_space<vmem>>, vector<64x256xbf16>
    %cst = arith.constant dense<0.000000e+00> : vector<160x256xf32>
    %3 = tpu.matmul %1, %2, %cst {dimension_numbers = #tpu.dot_dimension_numbers<[1], [0], [0], [1], [0, 0, 1, 1], [], []>} : vector<160x64xbf16>, vector<64x256xbf16>, vector<160x256xf32> -> vector<160x256xf32>
    %c0_3 = arith.constant 0 : index
    %c0_4 = arith.constant 0 : index
    %4 = vector.load %arg3[%c0_3, %c0_4] : memref<1x256xf32, #tpu.memory_space<vmem>>, vector<1x256xf32>
    %5 = vector.broadcast %4 : vector<1x256xf32> to vector<160x256xf32>
    %6 = arith.addf %3, %5 : vector<160x256xf32>
    %c0_5 = arith.constant 0 : index
    %c0_6 = arith.constant 0 : index
    %7 = vector.load %arg4[%c0_5, %c0_6] : memref<160x256xf32, #tpu.memory_space<vmem>>, vector<160x256xf32>
    %8 = arith.addf %6, %7 : vector<160x256xf32>
    %c0_i32 = arith.constant 0 : i32
    %c6_i32 = arith.constant 6 : i32
    %9 = arith.addi %c0_i32, %c6_i32 : i32
    %c1_i32 = arith.constant 1 : i32
    %10 = scf.for %arg23 = %c0_i32 to %9 step %c1_i32 iter_args(%arg24 = %8) -> (vector<160x256xf32>)  : i32 {
      %55 = arith.truncf %arg24 : vector<160x256xf32> to vector<160x256xbf16>
      %56 = arith.index_cast %arg23 : i32 to index
      %c0_27 = arith.constant 0 : index
      %c0_28 = arith.constant 0 : index
      %57 = vector.load %arg6[%56, %c0_27, %c0_28] : memref<6x256x768xbf16, #tpu.memory_space<vmem>>, vector<1x256x768xbf16>
      %58 = vector.shape_cast %57 : vector<1x256x768xbf16> to vector<256x768xbf16>
      %cst_29 = arith.constant dense<0.000000e+00> : vector<160x768xf32>
      %59 = tpu.matmul %55, %58, %cst_29 {dimension_numbers = #tpu.dot_dimension_numbers<[1], [0], [0], [1], [0, 0, 1, 1], [], []>} : vector<160x256xbf16>, vector<256x768xbf16>, vector<160x768xf32> -> vector<160x768xf32>
      %60 = arith.index_cast %arg23 : i32 to index
      %c0_30 = arith.constant 0 : index
      %c0_31 = arith.constant 0 : index
      %61 = vector.load %arg7[%60, %c0_30, %c0_31] : memref<6x1x768xf32, #tpu.memory_space<vmem>>, vector<1x1x768xf32>
      %62 = vector.shape_cast %61 : vector<1x1x768xf32> to vector<1x768xf32>
      %63 = vector.broadcast %62 : vector<1x768xf32> to vector<160x768xf32>
      %64 = arith.addf %59, %63 : vector<160x768xf32>
      %c0_32 = arith.constant 0 : index
      %c0_33 = arith.constant 0 : index
      %65 = vector.load %arg5[%c0_32, %c0_33] : memref<160x160xf32, #tpu.memory_space<vmem>>, vector<160x160xf32>
      %66 = vector.extract_strided_slice %64 {offsets = [0, 0], sizes = [160, 32], strides = [1, 1]} : vector<160x768xf32> to vector<160x32xf32>
      %67 = arith.truncf %66 : vector<160x32xf32> to vector<160x32xbf16>
      %68 = vector.extract_strided_slice %64 {offsets = [0, 256], sizes = [160, 32], strides = [1, 1]} : vector<160x768xf32> to vector<160x32xf32>
      %69 = arith.truncf %68 : vector<160x32xf32> to vector<160x32xbf16>
      %70 = vector.extract_strided_slice %64 {offsets = [0, 512], sizes = [160, 32], strides = [1, 1]} : vector<160x768xf32> to vector<160x32xf32>
      %71 = arith.truncf %70 : vector<160x32xf32> to vector<160x32xbf16>
      %cst_34 = arith.constant dense<0.000000e+00> : vector<160x160xf32>
      %72 = tpu.matmul %67, %69, %cst_34 {dimension_numbers = #tpu.dot_dimension_numbers<[1], [1], [0], [0], [0, 0, 1, 0], [], []>} : vector<160x32xbf16>, vector<160x32xbf16>, vector<160x160xf32> -> vector<160x160xf32>
      %73 = arith.addf %72, %65 : vector<160x160xf32>
      %cst_35 = arith.constant dense<0xFF800000> : vector<160xf32>
      %74 = vector.multi_reduction <maximumf>, %73, %cst_35 [1] : vector<160x160xf32> to vector<160xf32>
      %75 = vector.shape_cast %74 : vector<160xf32> to vector<160x1xf32>
      %76 = vector.broadcast %75 : vector<160x1xf32> to vector<160x160xf32>
      %77 = arith.subf %73, %76 : vector<160x160xf32>
      %78 = math.exp %77 : vector<160x160xf32>
      %cst_36 = arith.constant dense<0.000000e+00> : vector<160xf32>
      %79 = vector.multi_reduction <add>, %78, %cst_36 [1] : vector<160x160xf32> to vector<160xf32>
      %80 = vector.shape_cast %79 : vector<160xf32> to vector<160x1xf32>
      %81 = tpu.reciprocal %80 {approx = true} : vector<160x1xf32> -> vector<160x1xf32>
      %82 = vector.broadcast %81 : vector<160x1xf32> to vector<160x160xf32>
      %83 = arith.mulf %78, %82 : vector<160x160xf32>
      %84 = arith.truncf %83 : vector<160x160xf32> to vector<160x160xbf16>
      %cst_37 = arith.constant dense<0.000000e+00> : vector<160x32xf32>
      %85 = tpu.matmul %84, %71, %cst_37 {dimension_numbers = #tpu.dot_dimension_numbers<[1], [0], [0], [1], [0, 0, 1, 1], [], []>} : vector<160x160xbf16>, vector<160x32xbf16>, vector<160x32xf32> -> vector<160x32xf32>
      %86 = arith.truncf %85 : vector<160x32xf32> to vector<160x32xbf16>
      %87 = vector.extract_strided_slice %64 {offsets = [0, 32], sizes = [160, 32], strides = [1, 1]} : vector<160x768xf32> to vector<160x32xf32>
      %88 = arith.truncf %87 : vector<160x32xf32> to vector<160x32xbf16>
      %89 = vector.extract_strided_slice %64 {offsets = [0, 288], sizes = [160, 32], strides = [1, 1]} : vector<160x768xf32> to vector<160x32xf32>
      %90 = arith.truncf %89 : vector<160x32xf32> to vector<160x32xbf16>
      %91 = vector.extract_strided_slice %64 {offsets = [0, 544], sizes = [160, 32], strides = [1, 1]} : vector<160x768xf32> to vector<160x32xf32>
      %92 = arith.truncf %91 : vector<160x32xf32> to vector<160x32xbf16>
      %cst_38 = arith.constant dense<0.000000e+00> : vector<160x160xf32>
      %93 = tpu.matmul %88, %90, %cst_38 {dimension_numbers = #tpu.dot_dimension_numbers<[1], [1], [0], [0], [0, 0, 1, 0], [], []>} : vector<160x32xbf16>, vector<160x32xbf16>, vector<160x160xf32> -> vector<160x160xf32>
      %94 = arith.addf %93, %65 : vector<160x160xf32>
      %cst_39 = arith.constant dense<0xFF800000> : vector<160xf32>
      %95 = vector.multi_reduction <maximumf>, %94, %cst_39 [1] : vector<160x160xf32> to vector<160xf32>
      %96 = vector.shape_cast %95 : vector<160xf32> to vector<160x1xf32>
      %97 = vector.broadcast %96 : vector<160x1xf32> to vector<160x160xf32>
      %98 = arith.subf %94, %97 : vector<160x160xf32>
      %99 = math.exp %98 : vector<160x160xf32>
      %cst_40 = arith.constant dense<0.000000e+00> : vector<160xf32>
      %100 = vector.multi_reduction <add>, %99, %cst_40 [1] : vector<160x160xf32> to vector<160xf32>
      %101 = vector.shape_cast %100 : vector<160xf32> to vector<160x1xf32>
      %102 = tpu.reciprocal %101 {approx = true} : vector<160x1xf32> -> vector<160x1xf32>
      %103 = vector.broadcast %102 : vector<160x1xf32> to vector<160x160xf32>
      %104 = arith.mulf %99, %103 : vector<160x160xf32>
      %105 = arith.truncf %104 : vector<160x160xf32> to vector<160x160xbf16>
      %cst_41 = arith.constant dense<0.000000e+00> : vector<160x32xf32>
      %106 = tpu.matmul %105, %92, %cst_41 {dimension_numbers = #tpu.dot_dimension_numbers<[1], [0], [0], [1], [0, 0, 1, 1], [], []>} : vector<160x160xbf16>, vector<160x32xbf16>, vector<160x32xf32> -> vector<160x32xf32>
      %107 = arith.truncf %106 : vector<160x32xf32> to vector<160x32xbf16>
      %108 = vector.extract_strided_slice %64 {offsets = [0, 64], sizes = [160, 32], strides = [1, 1]} : vector<160x768xf32> to vector<160x32xf32>
      %109 = arith.truncf %108 : vector<160x32xf32> to vector<160x32xbf16>
      %110 = vector.extract_strided_slice %64 {offsets = [0, 320], sizes = [160, 32], strides = [1, 1]} : vector<160x768xf32> to vector<160x32xf32>
      %111 = arith.truncf %110 : vector<160x32xf32> to vector<160x32xbf16>
      %112 = vector.extract_strided_slice %64 {offsets = [0, 576], sizes = [160, 32], strides = [1, 1]} : vector<160x768xf32> to vector<160x32xf32>
      %113 = arith.truncf %112 : vector<160x32xf32> to vector<160x32xbf16>
      %cst_42 = arith.constant dense<0.000000e+00> : vector<160x160xf32>
      %114 = tpu.matmul %109, %111, %cst_42 {dimension_numbers = #tpu.dot_dimension_numbers<[1], [1], [0], [0], [0, 0, 1, 0], [], []>} : vector<160x32xbf16>, vector<160x32xbf16>, vector<160x160xf32> -> vector<160x160xf32>
      %115 = arith.addf %114, %65 : vector<160x160xf32>
      %cst_43 = arith.constant dense<0xFF800000> : vector<160xf32>
      %116 = vector.multi_reduction <maximumf>, %115, %cst_43 [1] : vector<160x160xf32> to vector<160xf32>
      %117 = vector.shape_cast %116 : vector<160xf32> to vector<160x1xf32>
      %118 = vector.broadcast %117 : vector<160x1xf32> to vector<160x160xf32>
      %119 = arith.subf %115, %118 : vector<160x160xf32>
      %120 = math.exp %119 : vector<160x160xf32>
      %cst_44 = arith.constant dense<0.000000e+00> : vector<160xf32>
      %121 = vector.multi_reduction <add>, %120, %cst_44 [1] : vector<160x160xf32> to vector<160xf32>
      %122 = vector.shape_cast %121 : vector<160xf32> to vector<160x1xf32>
      %123 = tpu.reciprocal %122 {approx = true} : vector<160x1xf32> -> vector<160x1xf32>
      %124 = vector.broadcast %123 : vector<160x1xf32> to vector<160x160xf32>
      %125 = arith.mulf %120, %124 : vector<160x160xf32>
      %126 = arith.truncf %125 : vector<160x160xf32> to vector<160x160xbf16>
      %cst_45 = arith.constant dense<0.000000e+00> : vector<160x32xf32>
      %127 = tpu.matmul %126, %113, %cst_45 {dimension_numbers = #tpu.dot_dimension_numbers<[1], [0], [0], [1], [0, 0, 1, 1], [], []>} : vector<160x160xbf16>, vector<160x32xbf16>, vector<160x32xf32> -> vector<160x32xf32>
      %128 = arith.truncf %127 : vector<160x32xf32> to vector<160x32xbf16>
      %129 = vector.extract_strided_slice %64 {offsets = [0, 96], sizes = [160, 32], strides = [1, 1]} : vector<160x768xf32> to vector<160x32xf32>
      %130 = arith.truncf %129 : vector<160x32xf32> to vector<160x32xbf16>
      %131 = vector.extract_strided_slice %64 {offsets = [0, 352], sizes = [160, 32], strides = [1, 1]} : vector<160x768xf32> to vector<160x32xf32>
      %132 = arith.truncf %131 : vector<160x32xf32> to vector<160x32xbf16>
      %133 = vector.extract_strided_slice %64 {offsets = [0, 608], sizes = [160, 32], strides = [1, 1]} : vector<160x768xf32> to vector<160x32xf32>
      %134 = arith.truncf %133 : vector<160x32xf32> to vector<160x32xbf16>
      %cst_46 = arith.constant dense<0.000000e+00> : vector<160x160xf32>
      %135 = tpu.matmul %130, %132, %cst_46 {dimension_numbers = #tpu.dot_dimension_numbers<[1], [1], [0], [0], [0, 0, 1, 0], [], []>} : vector<160x32xbf16>, vector<160x32xbf16>, vector<160x160xf32> -> vector<160x160xf32>
      %136 = arith.addf %135, %65 : vector<160x160xf32>
      %cst_47 = arith.constant dense<0xFF800000> : vector<160xf32>
      %137 = vector.multi_reduction <maximumf>, %136, %cst_47 [1] : vector<160x160xf32> to vector<160xf32>
      %138 = vector.shape_cast %137 : vector<160xf32> to vector<160x1xf32>
      %139 = vector.broadcast %138 : vector<160x1xf32> to vector<160x160xf32>
      %140 = arith.subf %136, %139 : vector<160x160xf32>
      %141 = math.exp %140 : vector<160x160xf32>
      %cst_48 = arith.constant dense<0.000000e+00> : vector<160xf32>
      %142 = vector.multi_reduction <add>, %141, %cst_48 [1] : vector<160x160xf32> to vector<160xf32>
      %143 = vector.shape_cast %142 : vector<160xf32> to vector<160x1xf32>
      %144 = tpu.reciprocal %143 {approx = true} : vector<160x1xf32> -> vector<160x1xf32>
      %145 = vector.broadcast %144 : vector<160x1xf32> to vector<160x160xf32>
      %146 = arith.mulf %141, %145 : vector<160x160xf32>
      %147 = arith.truncf %146 : vector<160x160xf32> to vector<160x160xbf16>
      %cst_49 = arith.constant dense<0.000000e+00> : vector<160x32xf32>
      %148 = tpu.matmul %147, %134, %cst_49 {dimension_numbers = #tpu.dot_dimension_numbers<[1], [0], [0], [1], [0, 0, 1, 1], [], []>} : vector<160x160xbf16>, vector<160x32xbf16>, vector<160x32xf32> -> vector<160x32xf32>
      %149 = arith.truncf %148 : vector<160x32xf32> to vector<160x32xbf16>
      %150 = vector.extract_strided_slice %64 {offsets = [0, 128], sizes = [160, 32], strides = [1, 1]} : vector<160x768xf32> to vector<160x32xf32>
      %151 = arith.truncf %150 : vector<160x32xf32> to vector<160x32xbf16>
      %152 = vector.extract_strided_slice %64 {offsets = [0, 384], sizes = [160, 32], strides = [1, 1]} : vector<160x768xf32> to vector<160x32xf32>
      %153 = arith.truncf %152 : vector<160x32xf32> to vector<160x32xbf16>
      %154 = vector.extract_strided_slice %64 {offsets = [0, 640], sizes = [160, 32], strides = [1, 1]} : vector<160x768xf32> to vector<160x32xf32>
      %155 = arith.truncf %154 : vector<160x32xf32> to vector<160x32xbf16>
      %cst_50 = arith.constant dense<0.000000e+00> : vector<160x160xf32>
      %156 = tpu.matmul %151, %153, %cst_50 {dimension_numbers = #tpu.dot_dimension_numbers<[1], [1], [0], [0], [0, 0, 1, 0], [], []>} : vector<160x32xbf16>, vector<160x32xbf16>, vector<160x160xf32> -> vector<160x160xf32>
      %157 = arith.addf %156, %65 : vector<160x160xf32>
      %cst_51 = arith.constant dense<0xFF800000> : vector<160xf32>
      %158 = vector.multi_reduction <maximumf>, %157, %cst_51 [1] : vector<160x160xf32> to vector<160xf32>
      %159 = vector.shape_cast %158 : vector<160xf32> to vector<160x1xf32>
      %160 = vector.broadcast %159 : vector<160x1xf32> to vector<160x160xf32>
      %161 = arith.subf %157, %160 : vector<160x160xf32>
      %162 = math.exp %161 : vector<160x160xf32>
      %cst_52 = arith.constant dense<0.000000e+00> : vector<160xf32>
      %163 = vector.multi_reduction <add>, %162, %cst_52 [1] : vector<160x160xf32> to vector<160xf32>
      %164 = vector.shape_cast %163 : vector<160xf32> to vector<160x1xf32>
      %165 = tpu.reciprocal %164 {approx = true} : vector<160x1xf32> -> vector<160x1xf32>
      %166 = vector.broadcast %165 : vector<160x1xf32> to vector<160x160xf32>
      %167 = arith.mulf %162, %166 : vector<160x160xf32>
      %168 = arith.truncf %167 : vector<160x160xf32> to vector<160x160xbf16>
      %cst_53 = arith.constant dense<0.000000e+00> : vector<160x32xf32>
      %169 = tpu.matmul %168, %155, %cst_53 {dimension_numbers = #tpu.dot_dimension_numbers<[1], [0], [0], [1], [0, 0, 1, 1], [], []>} : vector<160x160xbf16>, vector<160x32xbf16>, vector<160x32xf32> -> vector<160x32xf32>
      %170 = arith.truncf %169 : vector<160x32xf32> to vector<160x32xbf16>
      %171 = vector.extract_strided_slice %64 {offsets = [0, 160], sizes = [160, 32], strides = [1, 1]} : vector<160x768xf32> to vector<160x32xf32>
      %172 = arith.truncf %171 : vector<160x32xf32> to vector<160x32xbf16>
      %173 = vector.extract_strided_slice %64 {offsets = [0, 416], sizes = [160, 32], strides = [1, 1]} : vector<160x768xf32> to vector<160x32xf32>
      %174 = arith.truncf %173 : vector<160x32xf32> to vector<160x32xbf16>
      %175 = vector.extract_strided_slice %64 {offsets = [0, 672], sizes = [160, 32], strides = [1, 1]} : vector<160x768xf32> to vector<160x32xf32>
      %176 = arith.truncf %175 : vector<160x32xf32> to vector<160x32xbf16>
      %cst_54 = arith.constant dense<0.000000e+00> : vector<160x160xf32>
      %177 = tpu.matmul %172, %174, %cst_54 {dimension_numbers = #tpu.dot_dimension_numbers<[1], [1], [0], [0], [0, 0, 1, 0], [], []>} : vector<160x32xbf16>, vector<160x32xbf16>, vector<160x160xf32> -> vector<160x160xf32>
      %178 = arith.addf %177, %65 : vector<160x160xf32>
      %cst_55 = arith.constant dense<0xFF800000> : vector<160xf32>
      %179 = vector.multi_reduction <maximumf>, %178, %cst_55 [1] : vector<160x160xf32> to vector<160xf32>
      %180 = vector.shape_cast %179 : vector<160xf32> to vector<160x1xf32>
      %181 = vector.broadcast %180 : vector<160x1xf32> to vector<160x160xf32>
      %182 = arith.subf %178, %181 : vector<160x160xf32>
      %183 = math.exp %182 : vector<160x160xf32>
      %cst_56 = arith.constant dense<0.000000e+00> : vector<160xf32>
      %184 = vector.multi_reduction <add>, %183, %cst_56 [1] : vector<160x160xf32> to vector<160xf32>
      %185 = vector.shape_cast %184 : vector<160xf32> to vector<160x1xf32>
      %186 = tpu.reciprocal %185 {approx = true} : vector<160x1xf32> -> vector<160x1xf32>
      %187 = vector.broadcast %186 : vector<160x1xf32> to vector<160x160xf32>
      %188 = arith.mulf %183, %187 : vector<160x160xf32>
      %189 = arith.truncf %188 : vector<160x160xf32> to vector<160x160xbf16>
      %cst_57 = arith.constant dense<0.000000e+00> : vector<160x32xf32>
      %190 = tpu.matmul %189, %176, %cst_57 {dimension_numbers = #tpu.dot_dimension_numbers<[1], [0], [0], [1], [0, 0, 1, 1], [], []>} : vector<160x160xbf16>, vector<160x32xbf16>, vector<160x32xf32> -> vector<160x32xf32>
      %191 = arith.truncf %190 : vector<160x32xf32> to vector<160x32xbf16>
      %192 = vector.extract_strided_slice %64 {offsets = [0, 192], sizes = [160, 32], strides = [1, 1]} : vector<160x768xf32> to vector<160x32xf32>
      %193 = arith.truncf %192 : vector<160x32xf32> to vector<160x32xbf16>
      %194 = vector.extract_strided_slice %64 {offsets = [0, 448], sizes = [160, 32], strides = [1, 1]} : vector<160x768xf32> to vector<160x32xf32>
      %195 = arith.truncf %194 : vector<160x32xf32> to vector<160x32xbf16>
      %196 = vector.extract_strided_slice %64 {offsets = [0, 704], sizes = [160, 32], strides = [1, 1]} : vector<160x768xf32> to vector<160x32xf32>
      %197 = arith.truncf %196 : vector<160x32xf32> to vector<160x32xbf16>
      %cst_58 = arith.constant dense<0.000000e+00> : vector<160x160xf32>
      %198 = tpu.matmul %193, %195, %cst_58 {dimension_numbers = #tpu.dot_dimension_numbers<[1], [1], [0], [0], [0, 0, 1, 0], [], []>} : vector<160x32xbf16>, vector<160x32xbf16>, vector<160x160xf32> -> vector<160x160xf32>
      %199 = arith.addf %198, %65 : vector<160x160xf32>
      %cst_59 = arith.constant dense<0xFF800000> : vector<160xf32>
      %200 = vector.multi_reduction <maximumf>, %199, %cst_59 [1] : vector<160x160xf32> to vector<160xf32>
      %201 = vector.shape_cast %200 : vector<160xf32> to vector<160x1xf32>
      %202 = vector.broadcast %201 : vector<160x1xf32> to vector<160x160xf32>
      %203 = arith.subf %199, %202 : vector<160x160xf32>
      %204 = math.exp %203 : vector<160x160xf32>
      %cst_60 = arith.constant dense<0.000000e+00> : vector<160xf32>
      %205 = vector.multi_reduction <add>, %204, %cst_60 [1] : vector<160x160xf32> to vector<160xf32>
      %206 = vector.shape_cast %205 : vector<160xf32> to vector<160x1xf32>
      %207 = tpu.reciprocal %206 {approx = true} : vector<160x1xf32> -> vector<160x1xf32>
      %208 = vector.broadcast %207 : vector<160x1xf32> to vector<160x160xf32>
      %209 = arith.mulf %204, %208 : vector<160x160xf32>
      %210 = arith.truncf %209 : vector<160x160xf32> to vector<160x160xbf16>
      %cst_61 = arith.constant dense<0.000000e+00> : vector<160x32xf32>
      %211 = tpu.matmul %210, %197, %cst_61 {dimension_numbers = #tpu.dot_dimension_numbers<[1], [0], [0], [1], [0, 0, 1, 1], [], []>} : vector<160x160xbf16>, vector<160x32xbf16>, vector<160x32xf32> -> vector<160x32xf32>
      %212 = arith.truncf %211 : vector<160x32xf32> to vector<160x32xbf16>
      %213 = vector.extract_strided_slice %64 {offsets = [0, 224], sizes = [160, 32], strides = [1, 1]} : vector<160x768xf32> to vector<160x32xf32>
      %214 = arith.truncf %213 : vector<160x32xf32> to vector<160x32xbf16>
      %215 = vector.extract_strided_slice %64 {offsets = [0, 480], sizes = [160, 32], strides = [1, 1]} : vector<160x768xf32> to vector<160x32xf32>
      %216 = arith.truncf %215 : vector<160x32xf32> to vector<160x32xbf16>
      %217 = vector.extract_strided_slice %64 {offsets = [0, 736], sizes = [160, 32], strides = [1, 1]} : vector<160x768xf32> to vector<160x32xf32>
      %218 = arith.truncf %217 : vector<160x32xf32> to vector<160x32xbf16>
      %cst_62 = arith.constant dense<0.000000e+00> : vector<160x160xf32>
      %219 = tpu.matmul %214, %216, %cst_62 {dimension_numbers = #tpu.dot_dimension_numbers<[1], [1], [0], [0], [0, 0, 1, 0], [], []>} : vector<160x32xbf16>, vector<160x32xbf16>, vector<160x160xf32> -> vector<160x160xf32>
      %220 = arith.addf %219, %65 : vector<160x160xf32>
      %cst_63 = arith.constant dense<0xFF800000> : vector<160xf32>
      %221 = vector.multi_reduction <maximumf>, %220, %cst_63 [1] : vector<160x160xf32> to vector<160xf32>
      %222 = vector.shape_cast %221 : vector<160xf32> to vector<160x1xf32>
      %223 = vector.broadcast %222 : vector<160x1xf32> to vector<160x160xf32>
      %224 = arith.subf %220, %223 : vector<160x160xf32>
      %225 = math.exp %224 : vector<160x160xf32>
      %cst_64 = arith.constant dense<0.000000e+00> : vector<160xf32>
      %226 = vector.multi_reduction <add>, %225, %cst_64 [1] : vector<160x160xf32> to vector<160xf32>
      %227 = vector.shape_cast %226 : vector<160xf32> to vector<160x1xf32>
      %228 = tpu.reciprocal %227 {approx = true} : vector<160x1xf32> -> vector<160x1xf32>
      %229 = vector.broadcast %228 : vector<160x1xf32> to vector<160x160xf32>
      %230 = arith.mulf %225, %229 : vector<160x160xf32>
      %231 = arith.truncf %230 : vector<160x160xf32> to vector<160x160xbf16>
      %cst_65 = arith.constant dense<0.000000e+00> : vector<160x32xf32>
      %232 = tpu.matmul %231, %218, %cst_65 {dimension_numbers = #tpu.dot_dimension_numbers<[1], [0], [0], [1], [0, 0, 1, 1], [], []>} : vector<160x160xbf16>, vector<160x32xbf16>, vector<160x32xf32> -> vector<160x32xf32>
      %233 = arith.truncf %232 : vector<160x32xf32> to vector<160x32xbf16>
      %234 = tpu.concatenate %86, %107, %128, %149, %170, %191, %212, %233 in 1 : vector<160x32xbf16>, vector<160x32xbf16>, vector<160x32xbf16>, vector<160x32xbf16>, vector<160x32xbf16>, vector<160x32xbf16>, vector<160x32xbf16>, vector<160x32xbf16> -> vector<160x256xbf16>
      %235 = arith.index_cast %arg23 : i32 to index
      %c0_66 = arith.constant 0 : index
      %c0_67 = arith.constant 0 : index
      %236 = vector.load %arg8[%235, %c0_66, %c0_67] : memref<6x256x256xbf16, #tpu.memory_space<vmem>>, vector<1x256x256xbf16>
      %237 = vector.shape_cast %236 : vector<1x256x256xbf16> to vector<256x256xbf16>
      %cst_68 = arith.constant dense<0.000000e+00> : vector<160x256xf32>
      %238 = tpu.matmul %234, %237, %cst_68 {dimension_numbers = #tpu.dot_dimension_numbers<[1], [0], [0], [1], [0, 0, 1, 1], [], []>} : vector<160x256xbf16>, vector<256x256xbf16>, vector<160x256xf32> -> vector<160x256xf32>
      %239 = arith.index_cast %arg23 : i32 to index
      %c0_69 = arith.constant 0 : index
      %c0_70 = arith.constant 0 : index
      %240 = vector.load %arg9[%239, %c0_69, %c0_70] : memref<6x1x256xf32, #tpu.memory_space<vmem>>, vector<1x1x256xf32>
      %241 = vector.shape_cast %240 : vector<1x1x256xf32> to vector<1x256xf32>
      %242 = vector.broadcast %241 : vector<1x256xf32> to vector<160x256xf32>
      %243 = arith.addf %238, %242 : vector<160x256xf32>
      %244 = arith.addf %arg24, %243 : vector<160x256xf32>
      %245 = arith.index_cast %arg23 : i32 to index
      %c0_71 = arith.constant 0 : index
      %c0_72 = arith.constant 0 : index
      %246 = vector.load %arg10[%245, %c0_71, %c0_72] : memref<6x1x256xf32, #tpu.memory_space<vmem>>, vector<1x1x256xf32>
      %247 = vector.shape_cast %246 : vector<1x1x256xf32> to vector<1x256xf32>
      %248 = arith.index_cast %arg23 : i32 to index
      %c0_73 = arith.constant 0 : index
      %c0_74 = arith.constant 0 : index
      %249 = vector.load %arg11[%248, %c0_73, %c0_74] : memref<6x1x256xf32, #tpu.memory_space<vmem>>, vector<1x1x256xf32>
      %250 = vector.shape_cast %249 : vector<1x1x256xf32> to vector<1x256xf32>
      %cst_75 = arith.constant dense<0.000000e+00> : vector<160xf32>
      %251 = vector.multi_reduction <add>, %244, %cst_75 [1] : vector<160x256xf32> to vector<160xf32>
      %252 = vector.shape_cast %251 : vector<160xf32> to vector<160x1xf32>
      %cst_76 = arith.constant 2.560000e+02 : f32
      %253 = vector.broadcast %cst_76 : f32 to vector<160x1xf32>
      %254 = arith.divf %252, %253 : vector<160x1xf32>
      %255 = vector.broadcast %254 : vector<160x1xf32> to vector<160x256xf32>
      %256 = arith.subf %244, %255 : vector<160x256xf32>
      %257 = arith.mulf %256, %256 : vector<160x256xf32>
      %cst_77 = arith.constant dense<0.000000e+00> : vector<160xf32>
      %258 = vector.multi_reduction <add>, %257, %cst_77 [1] : vector<160x256xf32> to vector<160xf32>
      %259 = vector.shape_cast %258 : vector<160xf32> to vector<160x1xf32>
      %cst_78 = arith.constant 2.560000e+02 : f32
      %260 = vector.broadcast %cst_78 : f32 to vector<160x1xf32>
      %261 = arith.divf %259, %260 : vector<160x1xf32>
      %262 = vector.broadcast %254 : vector<160x1xf32> to vector<160x256xf32>
      %263 = arith.subf %244, %262 : vector<160x256xf32>
      %cst_79 = arith.constant 9.99999974E-6 : f32
      %264 = vector.broadcast %cst_79 : f32 to vector<160x1xf32>
      %265 = arith.addf %261, %264 : vector<160x1xf32>
      %266 = math.rsqrt %265 : vector<160x1xf32>
      %267 = vector.broadcast %266 : vector<160x1xf32> to vector<160x256xf32>
      %268 = arith.mulf %263, %267 : vector<160x256xf32>
      %269 = vector.broadcast %247 : vector<1x256xf32> to vector<160x256xf32>
      %270 = arith.mulf %268, %269 : vector<160x256xf32>
      %271 = vector.broadcast %250 : vector<1x256xf32> to vector<160x256xf32>
      %272 = arith.addf %270, %271 : vector<160x256xf32>
      %273 = arith.truncf %272 : vector<160x256xf32> to vector<160x256xbf16>
      %274 = arith.index_cast %arg23 : i32 to index
      %c0_80 = arith.constant 0 : index
      %c0_81 = arith.constant 0 : index
      %275 = vector.load %arg12[%274, %c0_80, %c0_81] : memref<6x256x512xbf16, #tpu.memory_space<vmem>>, vector<1x256x512xbf16>
      %276 = vector.shape_cast %275 : vector<1x256x512xbf16> to vector<256x512xbf16>
      %cst_82 = arith.constant dense<0.000000e+00> : vector<160x512xf32>
      %277 = tpu.matmul %273, %276, %cst_82 {dimension_numbers = #tpu.dot_dimension_numbers<[1], [0], [0], [1], [0, 0, 1, 1], [], []>} : vector<160x256xbf16>, vector<256x512xbf16>, vector<160x512xf32> -> vector<160x512xf32>
      %278 = arith.index_cast %arg23 : i32 to index
      %c0_83 = arith.constant 0 : index
      %c0_84 = arith.constant 0 : index
      %279 = vector.load %arg13[%278, %c0_83, %c0_84] : memref<6x1x512xf32, #tpu.memory_space<vmem>>, vector<1x1x512xf32>
      %280 = vector.shape_cast %279 : vector<1x1x512xf32> to vector<1x512xf32>
      %281 = vector.broadcast %280 : vector<1x512xf32> to vector<160x512xf32>
      %282 = arith.addf %277, %281 : vector<160x512xf32>
      %cst_85 = arith.constant 0.000000e+00 : f32
      %283 = vector.broadcast %cst_85 : f32 to vector<160x512xf32>
      %284 = arith.maximumf %282, %283 : vector<160x512xf32>
      %285 = arith.truncf %284 : vector<160x512xf32> to vector<160x512xbf16>
      %286 = arith.index_cast %arg23 : i32 to index
      %c0_86 = arith.constant 0 : index
      %c0_87 = arith.constant 0 : index
      %287 = vector.load %arg14[%286, %c0_86, %c0_87] : memref<6x512x256xbf16, #tpu.memory_space<vmem>>, vector<1x512x256xbf16>
      %288 = vector.shape_cast %287 : vector<1x512x256xbf16> to vector<512x256xbf16>
      %cst_88 = arith.constant dense<0.000000e+00> : vector<160x256xf32>
      %289 = tpu.matmul %285, %288, %cst_88 {dimension_numbers = #tpu.dot_dimension_numbers<[1], [0], [0], [1], [0, 0, 1, 1], [], []>} : vector<160x512xbf16>, vector<512x256xbf16>, vector<160x256xf32> -> vector<160x256xf32>
      %290 = arith.index_cast %arg23 : i32 to index
      %c0_89 = arith.constant 0 : index
      %c0_90 = arith.constant 0 : index
      %291 = vector.load %arg15[%290, %c0_89, %c0_90] : memref<6x1x256xf32, #tpu.memory_space<vmem>>, vector<1x1x256xf32>
      %292 = vector.shape_cast %291 : vector<1x1x256xf32> to vector<1x256xf32>
      %293 = vector.broadcast %292 : vector<1x256xf32> to vector<160x256xf32>
      %294 = arith.addf %289, %293 : vector<160x256xf32>
      %295 = arith.addf %272, %294 : vector<160x256xf32>
      %296 = arith.index_cast %arg23 : i32 to index
      %c0_91 = arith.constant 0 : index
      %c0_92 = arith.constant 0 : index
      %297 = vector.load %arg16[%296, %c0_91, %c0_92] : memref<6x1x256xf32, #tpu.memory_space<vmem>>, vector<1x1x256xf32>
      %298 = vector.shape_cast %297 : vector<1x1x256xf32> to vector<1x256xf32>
      %299 = arith.index_cast %arg23 : i32 to index
      %c0_93 = arith.constant 0 : index
      %c0_94 = arith.constant 0 : index
      %300 = vector.load %arg17[%299, %c0_93, %c0_94] : memref<6x1x256xf32, #tpu.memory_space<vmem>>, vector<1x1x256xf32>
      %301 = vector.shape_cast %300 : vector<1x1x256xf32> to vector<1x256xf32>
      %cst_95 = arith.constant dense<0.000000e+00> : vector<160xf32>
      %302 = vector.multi_reduction <add>, %295, %cst_95 [1] : vector<160x256xf32> to vector<160xf32>
      %303 = vector.shape_cast %302 : vector<160xf32> to vector<160x1xf32>
      %cst_96 = arith.constant 2.560000e+02 : f32
      %304 = vector.broadcast %cst_96 : f32 to vector<160x1xf32>
      %305 = arith.divf %303, %304 : vector<160x1xf32>
      %306 = vector.broadcast %305 : vector<160x1xf32> to vector<160x256xf32>
      %307 = arith.subf %295, %306 : vector<160x256xf32>
      %308 = arith.mulf %307, %307 : vector<160x256xf32>
      %cst_97 = arith.constant dense<0.000000e+00> : vector<160xf32>
      %309 = vector.multi_reduction <add>, %308, %cst_97 [1] : vector<160x256xf32> to vector<160xf32>
      %310 = vector.shape_cast %309 : vector<160xf32> to vector<160x1xf32>
      %cst_98 = arith.constant 2.560000e+02 : f32
      %311 = vector.broadcast %cst_98 : f32 to vector<160x1xf32>
      %312 = arith.divf %310, %311 : vector<160x1xf32>
      %313 = vector.broadcast %305 : vector<160x1xf32> to vector<160x256xf32>
      %314 = arith.subf %295, %313 : vector<160x256xf32>
      %cst_99 = arith.constant 9.99999974E-6 : f32
      %315 = vector.broadcast %cst_99 : f32 to vector<160x1xf32>
      %316 = arith.addf %312, %315 : vector<160x1xf32>
      %317 = math.rsqrt %316 : vector<160x1xf32>
      %318 = vector.broadcast %317 : vector<160x1xf32> to vector<160x256xf32>
      %319 = arith.mulf %314, %318 : vector<160x256xf32>
      %320 = vector.broadcast %298 : vector<1x256xf32> to vector<160x256xf32>
      %321 = arith.mulf %319, %320 : vector<160x256xf32>
      %322 = vector.broadcast %301 : vector<1x256xf32> to vector<160x256xf32>
      %323 = arith.addf %321, %322 : vector<160x256xf32>
      scf.yield %323 : vector<160x256xf32>
    }
    %c6_i32_7 = arith.constant 6 : i32
    %11 = tpu.iota {dimensions = array<i32: 1>} : vector<16x160xi32>
    %12 = tpu.iota {dimensions = array<i32: 0>} : vector<16x160xi32>
    %c10_i32 = arith.constant 10 : i32
    %13 = vector.broadcast %c10_i32 : i32 to vector<16x160xi32>
    %14 = arith.muli %12, %13 : vector<16x160xi32>
    %c9_i32 = arith.constant 9 : i32
    %15 = vector.broadcast %c9_i32 : i32 to vector<16x160xi32>
    %16 = arith.addi %14, %15 : vector<16x160xi32>
    %17 = arith.cmpi eq, %11, %16 : vector<16x160xi32>
    %cst_8 = arith.constant 1.000000e+00 : f32
    %cst_9 = arith.constant 0.000000e+00 : f32
    %18 = vector.broadcast %cst_8 : f32 to vector<16x160xf32>
    %19 = vector.broadcast %cst_9 : f32 to vector<16x160xf32>
    %20 = arith.select %17, %18, %19 : vector<16x160xi1>, vector<16x160xf32>
    %cst_10 = arith.constant dense<0.000000e+00> : vector<16x256xf32>
    %21 = tpu.matmul %20, %10, %cst_10 {dimension_numbers = #tpu.dot_dimension_numbers<[1], [0], [0], [1], [0, 0, 1, 1], [], []>} : vector<16x160xf32>, vector<160x256xf32>, vector<16x256xf32> -> vector<16x256xf32>
    %c0_11 = arith.constant 0 : index
    %c0_12 = arith.constant 0 : index
    %22 = vector.load %arg18[%c0_11, %c0_12] : memref<1x256xf32, #tpu.memory_space<vmem>>, vector<1x256xf32>
    %c0_13 = arith.constant 0 : index
    %c0_14 = arith.constant 0 : index
    %23 = vector.load %arg19[%c0_13, %c0_14] : memref<1x256xf32, #tpu.memory_space<vmem>>, vector<1x256xf32>
    %cst_15 = arith.constant dense<0.000000e+00> : vector<16xf32>
    %24 = vector.multi_reduction <add>, %21, %cst_15 [1] : vector<16x256xf32> to vector<16xf32>
    %25 = vector.shape_cast %24 : vector<16xf32> to vector<16x1xf32>
    %cst_16 = arith.constant 2.560000e+02 : f32
    %26 = vector.broadcast %cst_16 : f32 to vector<16x1xf32>
    %27 = arith.divf %25, %26 : vector<16x1xf32>
    %28 = vector.broadcast %27 : vector<16x1xf32> to vector<16x256xf32>
    %29 = arith.subf %21, %28 : vector<16x256xf32>
    %30 = arith.mulf %29, %29 : vector<16x256xf32>
    %cst_17 = arith.constant dense<0.000000e+00> : vector<16xf32>
    %31 = vector.multi_reduction <add>, %30, %cst_17 [1] : vector<16x256xf32> to vector<16xf32>
    %32 = vector.shape_cast %31 : vector<16xf32> to vector<16x1xf32>
    %cst_18 = arith.constant 2.560000e+02 : f32
    %33 = vector.broadcast %cst_18 : f32 to vector<16x1xf32>
    %34 = arith.divf %32, %33 : vector<16x1xf32>
    %35 = vector.broadcast %27 : vector<16x1xf32> to vector<16x256xf32>
    %36 = arith.subf %21, %35 : vector<16x256xf32>
    %cst_19 = arith.constant 9.99999974E-6 : f32
    %37 = vector.broadcast %cst_19 : f32 to vector<16x1xf32>
    %38 = arith.addf %34, %37 : vector<16x1xf32>
    %39 = math.rsqrt %38 : vector<16x1xf32>
    %40 = vector.broadcast %39 : vector<16x1xf32> to vector<16x256xf32>
    %41 = arith.mulf %36, %40 : vector<16x256xf32>
    %42 = vector.broadcast %22 : vector<1x256xf32> to vector<16x256xf32>
    %43 = arith.mulf %41, %42 : vector<16x256xf32>
    %44 = vector.broadcast %23 : vector<1x256xf32> to vector<16x256xf32>
    %45 = arith.addf %43, %44 : vector<16x256xf32>
    %c0_20 = arith.constant 0 : index
    %c0_21 = arith.constant 0 : index
    %46 = vector.load %arg20[%c0_20, %c0_21] : memref<1x256xf32, #tpu.memory_space<vmem>>, vector<1x256xf32>
    %47 = vector.broadcast %46 : vector<1x256xf32> to vector<16x256xf32>
    %48 = arith.mulf %45, %47 : vector<16x256xf32>
    %cst_22 = arith.constant dense<0.000000e+00> : vector<16xf32>
    %49 = vector.multi_reduction <add>, %48, %cst_22 [1] : vector<16x256xf32> to vector<16xf32>
    %50 = vector.shape_cast %49 : vector<16xf32> to vector<16x1xf32>
    %c0_23 = arith.constant 0 : index
    %c0_24 = arith.constant 0 : index
    %51 = vector.load %arg21[%c0_23, %c0_24] : memref<1x1xf32, #tpu.memory_space<vmem>>, vector<1x1xf32>
    %52 = vector.broadcast %51 : vector<1x1xf32> to vector<16x1xf32>
    %53 = arith.addf %50, %52 : vector<16x1xf32>
    %c0_25 = arith.constant 0 : index
    %c0_26 = arith.constant 0 : index
    %54 = vector.load %arg22[%c0_25, %c0_26] : memref<16x1xf32, #tpu.memory_space<vmem>>, vector<16x1xf32>
    tpu.vector_store %arg22[%c0_25, %c0_26], %53 {strides = array<i32>} : memref<16x1xf32, #tpu.memory_space<vmem>>, vector<16x1xf32>,
    return
  }
  func.func @transform_0(%arg0: i32) -> (i32, i32) {
    %c0_i32 = arith.constant 0 : i32
    %c0_i32_0 = arith.constant 0 : i32
    return %arg0, %c0_i32 : i32, i32
  }
  func.func @transform_1(%arg0: i32) -> (i32, i32) {
    %c0_i32 = arith.constant 0 : i32
    %c0_i32_0 = arith.constant 0 : i32
    %c0_i32_1 = arith.constant 0 : i32
    return %c0_i32, %c0_i32_0 : i32, i32
  }
  func.func @transform_2(%arg0: i32) -> (i32, i32) {
    %c0_i32 = arith.constant 0 : i32
    %c0_i32_0 = arith.constant 0 : i32
    %c0_i32_1 = arith.constant 0 : i32
    return %c0_i32, %c0_i32_0 : i32, i32
  }
  func.func @transform_3(%arg0: i32) -> (i32, i32) {
    %c0_i32 = arith.constant 0 : i32
    %c0_i32_0 = arith.constant 0 : i32
    %c0_i32_1 = arith.constant 0 : i32
    return %c0_i32, %c0_i32_0 : i32, i32
  }
  func.func @transform_4(%arg0: i32) -> (i32, i32) {
    %c0_i32 = arith.constant 0 : i32
    %c0_i32_0 = arith.constant 0 : i32
    %c0_i32_1 = arith.constant 0 : i32
    return %c0_i32, %c0_i32_0 : i32, i32
  }
  func.func @transform_5(%arg0: i32) -> (i32, i32, i32) {
    %c0_i32 = arith.constant 0 : i32
    %c0_i32_0 = arith.constant 0 : i32
    %c0_i32_1 = arith.constant 0 : i32
    %c0_i32_2 = arith.constant 0 : i32
    return %c0_i32, %c0_i32_0, %c0_i32_1 : i32, i32, i32
  }
  func.func @transform_6(%arg0: i32) -> (i32, i32, i32) {
    %c0_i32 = arith.constant 0 : i32
    %c0_i32_0 = arith.constant 0 : i32
    %c0_i32_1 = arith.constant 0 : i32
    %c0_i32_2 = arith.constant 0 : i32
    return %c0_i32, %c0_i32_0, %c0_i32_1 : i32, i32, i32
  }
  func.func @transform_7(%arg0: i32) -> (i32, i32, i32) {
    %c0_i32 = arith.constant 0 : i32
    %c0_i32_0 = arith.constant 0 : i32
    %c0_i32_1 = arith.constant 0 : i32
    %c0_i32_2 = arith.constant 0 : i32
    return %c0_i32, %c0_i32_0, %c0_i32_1 : i32, i32, i32
  }
  func.func @transform_8(%arg0: i32) -> (i32, i32, i32) {
    %c0_i32 = arith.constant 0 : i32
    %c0_i32_0 = arith.constant 0 : i32
    %c0_i32_1 = arith.constant 0 : i32
    %c0_i32_2 = arith.constant 0 : i32
    return %c0_i32, %c0_i32_0, %c0_i32_1 : i32, i32, i32
  }
  func.func @transform_9(%arg0: i32) -> (i32, i32, i32) {
    %c0_i32 = arith.constant 0 : i32
    %c0_i32_0 = arith.constant 0 : i32
    %c0_i32_1 = arith.constant 0 : i32
    %c0_i32_2 = arith.constant 0 : i32
    return %c0_i32, %c0_i32_0, %c0_i32_1 : i32, i32, i32
  }
  func.func @transform_10(%arg0: i32) -> (i32, i32, i32) {
    %c0_i32 = arith.constant 0 : i32
    %c0_i32_0 = arith.constant 0 : i32
    %c0_i32_1 = arith.constant 0 : i32
    %c0_i32_2 = arith.constant 0 : i32
    return %c0_i32, %c0_i32_0, %c0_i32_1 : i32, i32, i32
  }
  func.func @transform_11(%arg0: i32) -> (i32, i32, i32) {
    %c0_i32 = arith.constant 0 : i32
    %c0_i32_0 = arith.constant 0 : i32
    %c0_i32_1 = arith.constant 0 : i32
    %c0_i32_2 = arith.constant 0 : i32
    return %c0_i32, %c0_i32_0, %c0_i32_1 : i32, i32, i32
  }
  func.func @transform_12(%arg0: i32) -> (i32, i32, i32) {
    %c0_i32 = arith.constant 0 : i32
    %c0_i32_0 = arith.constant 0 : i32
    %c0_i32_1 = arith.constant 0 : i32
    %c0_i32_2 = arith.constant 0 : i32
    return %c0_i32, %c0_i32_0, %c0_i32_1 : i32, i32, i32
  }
  func.func @transform_13(%arg0: i32) -> (i32, i32, i32) {
    %c0_i32 = arith.constant 0 : i32
    %c0_i32_0 = arith.constant 0 : i32
    %c0_i32_1 = arith.constant 0 : i32
    %c0_i32_2 = arith.constant 0 : i32
    return %c0_i32, %c0_i32_0, %c0_i32_1 : i32, i32, i32
  }
  func.func @transform_14(%arg0: i32) -> (i32, i32, i32) {
    %c0_i32 = arith.constant 0 : i32
    %c0_i32_0 = arith.constant 0 : i32
    %c0_i32_1 = arith.constant 0 : i32
    %c0_i32_2 = arith.constant 0 : i32
    return %c0_i32, %c0_i32_0, %c0_i32_1 : i32, i32, i32
  }
  func.func @transform_15(%arg0: i32) -> (i32, i32, i32) {
    %c0_i32 = arith.constant 0 : i32
    %c0_i32_0 = arith.constant 0 : i32
    %c0_i32_1 = arith.constant 0 : i32
    %c0_i32_2 = arith.constant 0 : i32
    return %c0_i32, %c0_i32_0, %c0_i32_1 : i32, i32, i32
  }
  func.func @transform_16(%arg0: i32) -> (i32, i32, i32) {
    %c0_i32 = arith.constant 0 : i32
    %c0_i32_0 = arith.constant 0 : i32
    %c0_i32_1 = arith.constant 0 : i32
    %c0_i32_2 = arith.constant 0 : i32
    return %c0_i32, %c0_i32_0, %c0_i32_1 : i32, i32, i32
  }
  func.func @transform_17(%arg0: i32) -> (i32, i32) {
    %c0_i32 = arith.constant 0 : i32
    %c0_i32_0 = arith.constant 0 : i32
    %c0_i32_1 = arith.constant 0 : i32
    return %c0_i32, %c0_i32_0 : i32, i32
  }
  func.func @transform_18(%arg0: i32) -> (i32, i32) {
    %c0_i32 = arith.constant 0 : i32
    %c0_i32_0 = arith.constant 0 : i32
    %c0_i32_1 = arith.constant 0 : i32
    return %c0_i32, %c0_i32_0 : i32, i32
  }
  func.func @transform_19(%arg0: i32) -> (i32, i32) {
    %c0_i32 = arith.constant 0 : i32
    %c0_i32_0 = arith.constant 0 : i32
    %c0_i32_1 = arith.constant 0 : i32
    return %c0_i32, %c0_i32_0 : i32, i32
  }
  func.func @transform_20(%arg0: i32) -> (i32, i32) {
    %c0_i32 = arith.constant 0 : i32
    %c0_i32_0 = arith.constant 0 : i32
    %c0_i32_1 = arith.constant 0 : i32
    return %c0_i32, %c0_i32_0 : i32, i32
  }
  func.func @transform_21(%arg0: i32) -> (i32, i32) {
    %c0_i32 = arith.constant 0 : i32
    %c0_i32_0 = arith.constant 0 : i32
    return %arg0, %c0_i32 : i32, i32
  }
}

</mosaic_0001>

<llo_original>
// kernel: tile.9
$region0: #{tile.9}
  %s0 = inlined_call_operand.vmem [shape: f32[16,10,256], index: 0, kind: input, shape index: {}]
  %s1 = inlined_call_operand.vmem [shape: f32[160,256], index: 1, kind: output, shape index: {}]
  %v2 = vld [vmem:[%s0] sm:$0xff]
  %3 = vst [vmem:[%s1] sm:$0xff] %v2
  %s4 = scalar_lea.vmem %s0, 8
  %v5 = vld [vmem:[%s4] sm:$0xff]
  %s6 = scalar_lea.vmem %s1, 8
  %7 = vst [vmem:[%s6] sm:$0xff] %v5
  %s8 = scalar_lea.vmem %s0, 16
  %v9 = vld [vmem:[%s8] sm:$0x3]
  %s10 = scalar_lea.vmem %s1, 16
  %11 = vst [vmem:[%s10] sm:$0x3] %v9
  %s12 = scalar_lea.vmem %s0, 24
  %v13 = vld [vmem:[%s12] sm:$0x3]
  %s14 = scalar_lea.vmem %s1, 24
  %15 = vst [vmem:[%s14] sm:$0x3] %v13
  %s16 = scalar_lea.vmem %s0, 32
  %v17 = vld [vmem:[%s16] sm:$0xff]
  %s18 = scalar_lea.vmem %s1, 18
  %19 = vst [vmem:[%s18] sm:$0x3f] %v17
  %s20 = scalar_lea.vmem %s1, 26
  %21 = vst [vmem:[%s20] sm:$0xc0] %v17
  %s22 = scalar_lea.vmem %s0, 40
  %v23 = vld [vmem:[%s22] sm:$0xff]
  %s24 = scalar_lea.vmem %s1, 26
  %25 = vst [vmem:[%s24] sm:$0x3f] %v23
  %s26 = scalar_lea.vmem %s1, 34
  %27 = vst [vmem:[%s26] sm:$0xc0] %v23
  %s28 = scalar_lea.vmem %s0, 48
  %v29 = vld [vmem:[%s28] sm:$0x3]
  %s30 = scalar_lea.vmem %s1, 34
  %31 = vst [vmem:[%s30] sm:$0x3] %v29
  %s32 = scalar_lea.vmem %s0, 56
  %v33 = vld [vmem:[%s32] sm:$0x3]
  %s34 = scalar_lea.vmem %s1, 42
  %35 = vst [vmem:[%s34] sm:$0x3] %v33
  %s36 = scalar_lea.vmem %s0, 64
  %v37 = vld [vmem:[%s36] sm:$0xff]
  %s38 = scalar_lea.vmem %s1, 36
  %39 = vst [vmem:[%s38] sm:$0xf] %v37
  %s40 = scalar_lea.vmem %s1, 44
  %41 = vst [vmem:[%s40] sm:$0xf0] %v37
  %s42 = scalar_lea.vmem %s0, 72
  %v43 = vld [vmem:[%s42] sm:$0xff]
  %s44 = scalar_lea.vmem %s1, 44
  %45 = vst [vmem:[%s44] sm:$0xf] %v43
  %s46 = scalar_lea.vmem %s1, 52
  %47 = vst [vmem:[%s46] sm:$0xf0] %v43
  %s48 = scalar_lea.vmem %s0, 80
  %v49 = vld [vmem:[%s48] sm:$0x3]
  %s50 = scalar_lea.vmem %s1, 52
  %51 = vst [vmem:[%s50] sm:$0x3] %v49
  %s52 = scalar_lea.vmem %s0, 88
  %v53 = vld [vmem:[%s52] sm:$0x3]
  %s54 = scalar_lea.vmem %s1, 60
  %55 = vst [vmem:[%s54] sm:$0x3] %v53
  %s56 = scalar_lea.vmem %s0, 96
  %v57 = vld [vmem:[%s56] sm:$0xff]
  %s58 = scalar_lea.vmem %s1, 54
  %59 = vst [vmem:[%s58] sm:$0x3] %v57
  %s60 = scalar_lea.vmem %s1, 62
  %61 = vst [vmem:[%s60] sm:$0xfc] %v57
  %s62 = scalar_lea.vmem %s0, 104
  %v63 = vld [vmem:[%s62] sm:$0xff]
  %s64 = scalar_lea.vmem %s1, 62
  %65 = vst [vmem:[%s64] sm:$0x3] %v63
  %s66 = scalar_lea.vmem %s1, 70
  %67 = vst [vmem:[%s66] sm:$0xfc] %v63
  %s68 = scalar_lea.vmem %s0, 112
  %v69 = vld [vmem:[%s68] sm:$0x3]
  %s70 = scalar_lea.vmem %s1, 70
  %71 = vst [vmem:[%s70] sm:$0x3] %v69
  %s72 = scalar_lea.vmem %s0, 120
  %v73 = vld [vmem:[%s72] sm:$0x3]
  %s74 = scalar_lea.vmem %s1, 78
  %75 = vst [vmem:[%s74] sm:$0x3] %v73
  %s76 = scalar_lea.vmem %s0, 128
  %v77 = vld [vmem:[%s76] sm:$0xff]
  %s78 = scalar_lea.vmem %s1, 80
  %79 = vst [vmem:[%s78] sm:$0xff] %v77
  %s80 = scalar_lea.vmem %s0, 136
  %v81 = vld [vmem:[%s80] sm:$0xff]
  %s82 = scalar_lea.vmem %s1, 88
  %83 = vst [vmem:[%s82] sm:$0xff] %v81
  %s84 = scalar_lea.vmem %s0, 144
  %v85 = vld [vmem:[%s84] sm:$0x3]
  %s86 = scalar_lea.vmem %s1, 96
  %87 = vst [vmem:[%s86] sm:$0x3] %v85
  %s88 = scalar_lea.vmem %s0, 152
  %v89 = vld [vmem:[%s88] sm:$0x3]
  %s90 = scalar_lea.vmem %s1, 104
  %91 = vst [vmem:[%s90] sm:$0x3] %v89
  %s92 = scalar_lea.vmem %s0, 160
  %v93 = vld [vmem:[%s92] sm:$0xff]
  %s94 = scalar_lea.vmem %s1, 98
  %95 = vst [vmem:[%s94] sm:$0x3f] %v93
  %s96 = scalar_lea.vmem %s1, 106
  %97 = vst [vmem:[%s96] sm:$0xc0] %v93
  %s98 = scalar_lea.vmem %s0, 168
  %v99 = vld [vmem:[%s98] sm:$0xff]
  %s100 = scalar_lea.vmem %s1, 106
  %101 = vst [vmem:[%s100] sm:$0x3f] %v99
  %s102 = scalar_lea.vmem %s1, 114
  %103 = vst [vmem:[%s102] sm:$0xc0] %v99
  %s104 = scalar_lea.vmem %s0, 176
  %v105 = vld [vmem:[%s104] sm:$0x3]
  %s106 = scalar_lea.vmem %s1, 114
  %107 = vst [vmem:[%s106] sm:$0x3] %v105
  %s108 = scalar_lea.vmem %s0, 184
  %v109 = vld [vmem:[%s108] sm:$0x3]
  %s110 = scalar_lea.vmem %s1, 122
  %111 = vst [vmem:[%s110] sm:$0x3] %v109
  %s112 = scalar_lea.vmem %s0, 192
  %v113 = vld [vmem:[%s112] sm:$0xff]
  %s114 = scalar_lea.vmem %s1, 116
  %115 = vst [vmem:[%s114] sm:$0xf] %v113
  %s116 = scalar_lea.vmem %s1, 124
  %117 = vst [vmem:[%s116] sm:$0xf0] %v113
  %s118 = scalar_lea.vmem %s0, 200
  %v119 = vld [vmem:[%s118] sm:$0xff]
  %s120 = scalar_lea.vmem %s1, 124
  %121 = vst [vmem:[%s120] sm:$0xf] %v119
  %s122 = scalar_lea.vmem %s1, 132
  %123 = vst [vmem:[%s122] sm:$0xf0] %v119
  %s124 = scalar_lea.vmem %s0, 208
  %v125 = vld [vmem:[%s124] sm:$0x3]
  %s126 = scalar_lea.vmem %s1, 132
  %127 = vst [vmem:[%s126] sm:$0x3] %v125
  %s128 = scalar_lea.vmem %s0, 216
  %v129 = vld [vmem:[%s128] sm:$0x3]
  %s130 = scalar_lea.vmem %s1, 140
  %131 = vst [vmem:[%s130] sm:$0x3] %v129
  %s132 = scalar_lea.vmem %s0, 224
  %v133 = vld [vmem:[%s132] sm:$0xff]
  %s134 = scalar_lea.vmem %s1, 134
  %135 = vst [vmem:[%s134] sm:$0x3] %v133
  %s136 = scalar_lea.vmem %s1, 142
  %137 = vst [vmem:[%s136] sm:$0xfc] %v133
  %s138 = scalar_lea.vmem %s0, 232
  %v139 = vld [vmem:[%s138] sm:$0xff]
  %s140 = scalar_lea.vmem %s1, 142
  %141 = vst [vmem:[%s140] sm:$0x3] %v139
  %s142 = scalar_lea.vmem %s1, 150
  %143 = vst [vmem:[%s142] sm:$0xfc] %v139
  %s144 = scalar_lea.vmem %s0, 240
  %v145 = vld [vmem:[%s144] sm:$0x3]
  %s146 = scalar_lea.vmem %s1, 150
  %147 = vst [vmem:[%s146] sm:$0x3] %v145
  %s148 = scalar_lea.vmem %s0, 248
  %v149 = vld [vmem:[%s148] sm:$0x3]
  %s150 = scalar_lea.vmem %s1, 158
  %151 = vst [vmem:[%s150] sm:$0x3] %v149
  %s152 = scalar_lea.vmem %s0, 256
  %v153 = vld [vmem:[%s152] sm:$0xff]
  %s154 = scalar_lea.vmem %s1, 160
  %155 = vst [vmem:[%s154] sm:$0xff] %v153
  %s156 = scalar_lea.vmem %s0, 264
  %v157 = vld [vmem:[%s156] sm:$0xff]
  %s158 = scalar_lea.vmem %s1, 168
  %159 = vst [vmem:[%s158] sm:$0xff] %v157
  %s160 = scalar_lea.vmem %s0, 272
  %v161 = vld [vmem:[%s160] sm:$0x3]
  %s162 = scalar_lea.vmem %s1, 176
  %163 = vst [vmem:[%s162] sm:$0x3] %v161
  %s164 = scalar_lea.vmem %s0, 280
  %v165 = vld [vmem:[%s164] sm:$0x3]
  %s166 = scalar_lea.vmem %s1, 184
  %167 = vst [vmem:[%s166] sm:$0x3] %v165
  %s168 = scalar_lea.vmem %s0, 288
  %v169 = vld [vmem:[%s168] sm:$0xff]
  %s170 = scalar_lea.vmem %s1, 178
  %171 = vst [vmem:[%s170] sm:$0x3f] %v169
  %s172 = scalar_lea.vmem %s1, 186
  %173 = vst [vmem:[%s172] sm:$0xc0] %v169
  %s174 = scalar_lea.vmem %s0, 296
  %v175 = vld [vmem:[%s174] sm:$0xff]
  %s176 = scalar_lea.vmem %s1, 186
  %177 = vst [vmem:[%s176] sm:$0x3f] %v175
  %s178 = scalar_lea.vmem %s1, 194
  %179 = vst [vmem:[%s178] sm:$0xc0] %v175
  %s180 = scalar_lea.vmem %s0, 304
  %v181 = vld [vmem:[%s180] sm:$0x3]
  %s182 = scalar_lea.vmem %s1, 194
  %183 = vst [vmem:[%s182] sm:$0x3] %v181
  %s184 = scalar_lea.vmem %s0, 312
  %v185 = vld [vmem:[%s184] sm:$0x3]
  %s186 = scalar_lea.vmem %s1, 202
  %187 = vst [vmem:[%s186] sm:$0x3] %v185
  %s188 = scalar_lea.vmem %s0, 320
  %v189 = vld [vmem:[%s188] sm:$0xff]
  %s190 = scalar_lea.vmem %s1, 196
  %191 = vst [vmem:[%s190] sm:$0xf] %v189
  %s192 = scalar_lea.vmem %s1, 204
  %193 = vst [vmem:[%s192] sm:$0xf0] %v189
  %s194 = scalar_lea.vmem %s0, 328
  %v195 = vld [vmem:[%s194] sm:$0xff]
  %s196 = scalar_lea.vmem %s1, 204
  %197 = vst [vmem:[%s196] sm:$0xf] %v195
  %s198 = scalar_lea.vmem %s1, 212
  %199 = vst [vmem:[%s198] sm:$0xf0] %v195
  %s200 = scalar_lea.vmem %s0, 336
  %v201 = vld [vmem:[%s200] sm:$0x3]
  %s202 = scalar_lea.vmem %s1, 212
  %203 = vst [vmem:[%s202] sm:$0x3] %v201
  %s204 = scalar_lea.vmem %s0, 344
  %v205 = vld [vmem:[%s204] sm:$0x3]
  %s206 = scalar_lea.vmem %s1, 220
  %207 = vst [vmem:[%s206] sm:$0x3] %v205
  %s208 = scalar_lea.vmem %s0, 352
  %v209 = vld [vmem:[%s208] sm:$0xff]
  %s210 = scalar_lea.vmem %s1, 214
  %211 = vst [vmem:[%s210] sm:$0x3] %v209
  %s212 = scalar_lea.vmem %s1, 222
  %213 = vst [vmem:[%s212] sm:$0xfc] %v209
  %s214 = scalar_lea.vmem %s0, 360
  %v215 = vld [vmem:[%s214] sm:$0xff]
  %s216 = scalar_lea.vmem %s1, 222
  %217 = vst [vmem:[%s216] sm:$0x3] %v215
  %s218 = scalar_lea.vmem %s1, 230
  %219 = vst [vmem:[%s218] sm:$0xfc] %v215
  %s220 = scalar_lea.vmem %s0, 368
  %v221 = vld [vmem:[%s220] sm:$0x3]
  %s222 = scalar_lea.vmem %s1, 230
  %223 = vst [vmem:[%s222] sm:$0x3] %v221
  %s224 = scalar_lea.vmem %s0, 376
  %v225 = vld [vmem:[%s224] sm:$0x3]
  %s226 = scalar_lea.vmem %s1, 238
  %227 = vst [vmem:[%s226] sm:$0x3] %v225
  %s228 = scalar_lea.vmem %s0, 384
  %v229 = vld [vmem:[%s228] sm:$0xff]
  %s230 = scalar_lea.vmem %s1, 240
  %231 = vst [vmem:[%s230] sm:$0xff] %v229
  %s232 = scalar_lea.vmem %s0, 392
  %v233 = vld [vmem:[%s232] sm:$0xff]
  %s234 = scalar_lea.vmem %s1, 248
  %235 = vst [vmem:[%s234] sm:$0xff] %v233
  %s236 = scalar_lea.vmem %s0, 400
  %v237 = vld [vmem:[%s236] sm:$0x3]
  %s238 = scalar_lea.vmem %s1, 256
  %239 = vst [vmem:[%s238] sm:$0x3] %v237
  %s240 = scalar_lea.vmem %s0, 408
  %v241 = vld [vmem:[%s240] sm:$0x3]
  %s242 = scalar_lea.vmem %s1, 264
  %243 = vst [vmem:[%s242] sm:$0x3] %v241
  %s244 = scalar_lea.vmem %s0, 416
  %v245 = vld [vmem:[%s244] sm:$0xff]
  %s246 = scalar_lea.vmem %s1, 258
  %247 = vst [vmem:[%s246] sm:$0x3f] %v245
  %s248 = scalar_lea.vmem %s1, 266
  %249 = vst [vmem:[%s248] sm:$0xc0] %v245
  %s250 = scalar_lea.vmem %s0, 424
  %v251 = vld [vmem:[%s250] sm:$0xff]
  %s252 = scalar_lea.vmem %s1, 266
  %253 = vst [vmem:[%s252] sm:$0x3f] %v251
  %s254 = scalar_lea.vmem %s1, 274
  %255 = vst [vmem:[%s254] sm:$0xc0] %v251
  %s256 = scalar_lea.vmem %s0, 432
  %v257 = vld [vmem:[%s256] sm:$0x3]
  %s258 = scalar_lea.vmem %s1, 274
  %259 = vst [vmem:[%s258] sm:$0x3] %v257
  %s260 = scalar_lea.vmem %s0, 440
  %v261 = vld [vmem:[%s260] sm:$0x3]
  %s262 = scalar_lea.vmem %s1, 282
  %263 = vst [vmem:[%s262] sm:$0x3] %v261
  %s264 = scalar_lea.vmem %s0, 448
  %v265 = vld [vmem:[%s264] sm:$0xff]
  %s266 = scalar_lea.vmem %s1, 276
  %267 = vst [vmem:[%s266] sm:$0xf] %v265
  %s268 = scalar_lea.vmem %s1, 284
  %269 = vst [vmem:[%s268] sm:$0xf0] %v265
  %s270 = scalar_lea.vmem %s0, 456
  %v271 = vld [vmem:[%s270] sm:$0xff]
  %s272 = scalar_lea.vmem %s1, 284
  %273 = vst [vmem:[%s272] sm:$0xf] %v271
  %s274 = scalar_lea.vmem %s1, 292
  %275 = vst [vmem:[%s274] sm:$0xf0] %v271
  %s276 = scalar_lea.vmem %s0, 464
  %v277 = vld [vmem:[%s276] sm:$0x3]
  %s278 = scalar_lea.vmem %s1, 292
  %279 = vst [vmem:[%s278] sm:$0x3] %v277
  %s280 = scalar_lea.vmem %s0, 472
  %v281 = vld [vmem:[%s280] sm:$0x3]
  %s282 = scalar_lea.vmem %s1, 300
  %283 = vst [vmem:[%s282] sm:$0x3] %v281
  %s284 = scalar_lea.vmem %s0, 480
  %v285 = vld [vmem:[%s284] sm:$0xff]
  %s286 = scalar_lea.vmem %s1, 294
  %287 = vst [vmem:[%s286] sm:$0x3] %v285
  %s288 = scalar_lea.vmem %s1, 302
  %289 = vst [vmem:[%s288] sm:$0xfc] %v285
  %s290 = scalar_lea.vmem %s0, 488
  %v291 = vld [vmem:[%s290] sm:$0xff]
  %s292 = scalar_lea.vmem %s1, 302
  %293 = vst [vmem:[%s292] sm:$0x3] %v291
  %s294 = scalar_lea.vmem %s1, 310
  %295 = vst [vmem:[%s294] sm:$0xfc] %v291
  %s296 = scalar_lea.vmem %s0, 496
  %v297 = vld [vmem:[%s296] sm:$0x3]
  %s298 = scalar_lea.vmem %s1, 310
  %299 = vst [vmem:[%s298] sm:$0x3] %v297
  %s300 = scalar_lea.vmem %s0, 504
  %v301 = vld [vmem:[%s300] sm:$0x3]
  %s302 = scalar_lea.vmem %s1, 318
  %303 = vst [vmem:[%s302] sm:$0x3] %v301

// kernel: forward.1
$region0: #{forward.1}
  #allocation0 [shape = 'u32[]', space=smem, size = 0x4, offset = 0x4, fixed_abs, tag = 'smem constant byte address 0x4 - core index']
  #allocation1 [shape = 'u32[144,128]{1,0:T(1,128)}', space=vmem, size = 0x12000, scoped, tag = 'internal scratch']
  #allocation2 [shape = 'f32[1,1]{1,0:T(1,128)S(1)}', space=vmem, size = 0x200, scoped, tag = 'scoped memory for forward.1']
  %s0 = inlined_call_operand.vmem [shape: f32[160,64], index: 0, kind: input, shape index: {}]
  %s1 = inlined_call_operand.hbm [shape: bf16[64,256], index: 1, kind: input, shape index: {}]
  %s2 = inlined_call_operand.hbm [shape: f32[1,256], index: 2, kind: input, shape index: {}]
  %s3 = inlined_call_operand.vmem [shape: f32[160,256], index: 3, kind: input, shape index: {}]
  %s4 = inlined_call_operand.vmem [shape: f32[160,160], index: 4, kind: input, shape index: {}]
  %s5 = inlined_call_operand.hbm [shape: bf16[6,256,768], index: 5, kind: input, shape index: {}]
  %s6 = inlined_call_operand.hbm [shape: f32[6,1,768], index: 6, kind: input, shape index: {}]
  %s7 = inlined_call_operand.vmem [shape: bf16[6,256,256], index: 7, kind: input, shape index: {}]
  %s8 = inlined_call_operand.hbm [shape: f32[6,1,256], index: 8, kind: input, shape index: {}]
  %s9 = inlined_call_operand.hbm [shape: f32[6,1,256], index: 9, kind: input, shape index: {}]
  %s10 = inlined_call_operand.hbm [shape: f32[6,1,256], index: 10, kind: input, shape index: {}]
  %s11 = inlined_call_operand.hbm [shape: bf16[6,256,512], index: 11, kind: input, shape index: {}]
  %s12 = inlined_call_operand.hbm [shape: f32[6,1,512], index: 12, kind: input, shape index: {}]
  %s13 = inlined_call_operand.hbm [shape: bf16[6,512,256], index: 13, kind: input, shape index: {}]
  %s14 = inlined_call_operand.hbm [shape: f32[6,1,256], index: 14, kind: input, shape index: {}]
  %s15 = inlined_call_operand.hbm [shape: f32[6,1,256], index: 15, kind: input, shape index: {}]
  %s16 = inlined_call_operand.hbm [shape: f32[6,1,256], index: 16, kind: input, shape index: {}]
  %s17 = inlined_call_operand.hbm [shape: f32[1,256], index: 17, kind: input, shape index: {}]
  %s18 = inlined_call_operand.hbm [shape: f32[1,256], index: 18, kind: input, shape index: {}]
  %s19 = inlined_call_operand.hbm [shape: f32[1,256], index: 19, kind: input, shape index: {}]
  %s20 = inlined_call_operand.<no memory space> [shape: f32[1,1], index: 20, kind: input, shape index: {}]
  %s21 = inlined_call_operand.vmem [shape: f32[16,1], index: 21, kind: output, shape index: {}]
  %s22 = sld [smem:[#allocation0]]
  $region165: #{forward.1} parent=0
    _
  %s24 = ssub.s32 1, %s22
  %s25 = scalar_select 0, %s24, %s22
  %v26 = vstv %s20
  %27 = vst [vmem:[#allocation2] sm:$0x1] %v26
  $region1: #{forward.1} parent=0
    #allocation3 [shape = 'u8[32768]{0}', space=vmem, size = 0x8000, scoped, tag = 'input window, operand 1, single buffered']
    #allocation4 [shape = 's32[1]{0}', space=sflag, size = 0x4, scoped, tag = 'scoped memory for forward.1']
    #allocation5 [shape = 'u8[1024]{0}', space=vmem, size = 0x400, scoped, tag = 'input window, operand 2, single buffered']
    #allocation6 [shape = 's32[1]{0}', space=sflag, size = 0x4, scoped, tag = 'scoped memory for forward.1']
    #allocation7 [shape = 'u8[2359296]{0}', space=vmem, size = 0x240000, scoped, tag = 'input window, operand 5, single buffered']
    #allocation8 [shape = 'u8[18432]{0}', space=vmem, size = 0x4800, scoped, tag = 'input window, operand 6, single buffered']
    #allocation9 [shape = 's32[1]{0}', space=sflag, size = 0x4, scoped, tag = 'scoped memory for forward.1']
    #allocation10 [shape = 'u8[6144]{0}', space=vmem, size = 0x1800, scoped, tag = 'input window, operand 8, single buffered']
    #allocation11 [shape = 'u8[6144]{0}', space=vmem, size = 0x1800, scoped, tag = 'input window, operand 9, single buffered']
    #allocation12 [shape = 's32[1]{0}', space=sflag, size = 0x4, scoped, tag = 'scoped memory for forward.1']
    #allocation13 [shape = 'u8[6144]{0}', space=vmem, size = 0x1800, scoped, tag = 'input window, operand 10, single buffered']
    #allocation14 [shape = 'u8[1572864]{0}', space=vmem, size = 0x180000, scoped, tag = 'input window, operand 11, single buffered']
    #allocation15 [shape = 's32[1]{0}', space=sflag, size = 0x4, scoped, tag = 'scoped memory for forward.1']
    #allocation16 [shape = 'u8[12288]{0}', space=vmem, size = 0x3000, scoped, tag = 'input window, operand 12, single buffered']
    #allocation17 [shape = 'u8[1572864]{0}', space=vmem, size = 0x180000, scoped, tag = 'input window, operand 13, single buffered']
    #allocation18 [shape = 's32[1]{0}', space=sflag, size = 0x4, scoped, tag = 'scoped memory for forward.1']
    #allocation19 [shape = 'u8[6144]{0}', space=vmem, size = 0x1800, scoped, tag = 'input window, operand 14, single buffered']
    #allocation20 [shape = 'u8[6144]{0}', space=vmem, size = 0x1800, scoped, tag = 'input window, operand 15, single buffered']
    #allocation21 [shape = 's32[1]{0}', space=sflag, size = 0x4, scoped, tag = 'scoped memory for forward.1']
    #allocation22 [shape = 'u8[6144]{0}', space=vmem, size = 0x1800, scoped, tag = 'input window, operand 16, single buffered']
    #allocation23 [shape = 'u8[1024]{0}', space=vmem, size = 0x400, scoped, tag = 'input window, operand 17, single buffered']
    #allocation24 [shape = 's32[1]{0}', space=sflag, size = 0x4, scoped, tag = 'scoped memory for forward.1']
    #allocation25 [shape = 'u8[1024]{0}', space=vmem, size = 0x400, scoped, tag = 'input window, operand 18, single buffered']
    #allocation26 [shape = 'u8[1024]{0}', space=vmem, size = 0x400, scoped, tag = 'input window, operand 19, single buffered']
    #allocation27 [shape = 's32[1]{0}', space=sflag, size = 0x4, scoped, tag = 'scoped memory for forward.1']
    %28 = vsyncpa [#allocation4], 0
    %29 = vsyncpa [#allocation6], 0
    %30 = vsyncpa [#allocation9], 0
    %31 = vsyncpa [#allocation12], 0
    %32 = vsyncpa [#allocation15], 0
    %33 = vsyncpa [#allocation18], 0
    %34 = vsyncpa [#allocation21], 0
    %35 = vsyncpa [#allocation24], 0
    %36 = vsyncpa [#allocation27], 0
    // Predicated region
    $region2: #{forward.1} parent=1 // pred_check
      _
    $region3: #{forward.1} parent=1 // pred_check_branch
      %38 = sbr.rel (0) target = $region5
    $region4: #{forward.1} parent=1 // pred_region
      _
    $region5: #{forward.1} parent=1 // pred_fallthru
      _
    // Predicated region
    $region6: #{forward.1} parent=1 // pred_check
      _
    $region7: #{forward.1} parent=1 // pred_check_branch
      %40 = sbr.rel (0) target = $region9
    $region8: #{forward.1} parent=1 // pred_region
      %s42 = ssub.s32 1024, 1024
      %43 = vsyncadd [#allocation4], %s42
      %s44 = sshll.u32 [#allocation3], 4
      %s45 = int_to_ptr.vmem [resolvable:$true] %s44
      %50 = dma.hbm_to_vmem [thread:$0]  %s1, 1024, %s45, [#allocation4], 128, 128, 8
    $region9: #{forward.1} parent=1 // pred_fallthru
      _
    // Predicated region
    $region10: #{forward.1} parent=1 // pred_check
      _
    $region11: #{forward.1} parent=1 // pred_check_branch
      %52 = sbr.rel (0) target = $region13
    $region12: #{forward.1} parent=1 // pred_region
      %s54 = ssub.s32 32, 32
      %55 = vsyncadd [#allocation6], %s54
      %s57 = sshll.u32 [#allocation5], 4
      %s58 = int_to_ptr.vmem [resolvable:$true] %s57
      %60 = dma.hbm_to_vmem [thread:$0]  %s2, 32, %s58, [#allocation6]
    $region13: #{forward.1} parent=1 // pred_fallthru
      _
    // Predicated region
    $region14: #{forward.1} parent=1 // pred_check
      _
    $region15: #{forward.1} parent=1 // pred_check_branch
      %62 = sbr.rel (0) target = $region17
    $region16: #{forward.1} parent=1 // pred_region
      _
    $region17: #{forward.1} parent=1 // pred_fallthru
      _
    // Predicated region
    $region18: #{forward.1} parent=1 // pred_check
      _
    $region19: #{forward.1} parent=1 // pred_check_branch
      %64 = sbr.rel (0) target = $region21
    $region20: #{forward.1} parent=1 // pred_region
      _
    $region21: #{forward.1} parent=1 // pred_fallthru
      _
    // Predicated region
    $region22: #{forward.1} parent=1 // pred_check
      _
    $region23: #{forward.1} parent=1 // pred_check_branch
      %66 = sbr.rel (0) target = $region25
    $region24: #{forward.1} parent=1 // pred_region
      %s68 = ssub.s32 73728, 73728
      %69 = vsyncadd [#allocation6], %s68
      %s70 = sshll.u32 [#allocation7], 4
      %s71 = int_to_ptr.vmem [resolvable:$true] %s70
      %76 = dma.hbm_to_vmem [thread:$0]  %s5, 73728, %s71, [#allocation6], 384, 384, 24
    $region25: #{forward.1} parent=1 // pred_fallthru
      _
    // Predicated region
    $region26: #{forward.1} parent=1 // pred_check
      _
    $region27: #{forward.1} parent=1 // pred_check_branch
      %78 = sbr.rel (0) target = $region29
    $region28: #{forward.1} parent=1 // pred_region
      %s80 = ssub.s32 576, 576
      %81 = vsyncadd [#allocation9], %s80
      %s82 = sshll.u32 [#allocation8], 4
      %s83 = int_to_ptr.vmem [resolvable:$true] %s82
      %88 = dma.hbm_to_vmem [thread:$0]  %s6, 576, %s83, [#allocation9], 96, 96, 6
    $region29: #{forward.1} parent=1 // pred_fallthru
      _
    // Predicated region
    $region30: #{forward.1} parent=1 // pred_check
      _
    $region31: #{forward.1} parent=1 // pred_check_branch
      %90 = sbr.rel (0) target = $region33
    $region32: #{forward.1} parent=1 // pred_region
      _
    $region33: #{forward.1} parent=1 // pred_fallthru
      _
    // Predicated region
    $region34: #{forward.1} parent=1 // pred_check
      _
    $region35: #{forward.1} parent=1 // pred_check_branch
      %92 = sbr.rel (0) target = $region37
    $region36: #{forward.1} parent=1 // pred_region
      %s94 = ssub.s32 192, 192
      %95 = vsyncadd [#allocation9], %s94
      %s96 = sshll.u32 [#allocation10], 4
      %s97 = int_to_ptr.vmem [resolvable:$true] %s96
      %102 = dma.hbm_to_vmem [thread:$0]  %s8, 192, %s97, [#allocation9], 32, 32, 2
    $region37: #{forward.1} parent=1 // pred_fallthru
      _
    // Predicated region
    $region38: #{forward.1} parent=1 // pred_check
      _
    $region39: #{forward.1} parent=1 // pred_check_branch
      %104 = sbr.rel (0) target = $region41
    $region40: #{forward.1} parent=1 // pred_region
      %s106 = ssub.s32 192, 192
      %107 = vsyncadd [#allocation12], %s106
      %s108 = sshll.u32 [#allocation11], 4
      %s109 = int_to_ptr.vmem [resolvable:$true] %s108
      %114 = dma.hbm_to_vmem [thread:$0]  %s9, 192, %s109, [#allocation12], 32, 32, 2
    $region41: #{forward.1} parent=1 // pred_fallthru
      _
    // Predicated region
    $region42: #{forward.1} parent=1 // pred_check
      _
    $region43: #{forward.1} parent=1 // pred_check_branch
      %116 = sbr.rel (0) target = $region45
    $region44: #{forward.1} parent=1 // pred_region
      %s118 = ssub.s32 192, 192
      %119 = vsyncadd [#allocation12], %s118
      %s120 = sshll.u32 [#allocation13], 4
      %s121 = int_to_ptr.vmem [resolvable:$true] %s120
      %126 = dma.hbm_to_vmem [thread:$0]  %s10, 192, %s121, [#allocation12], 32, 32, 2
    $region45: #{forward.1} parent=1 // pred_fallthru
      _
    // Predicated region
    $region46: #{forward.1} parent=1 // pred_check
      _
    $region47: #{forward.1} parent=1 // pred_check_branch
      %128 = sbr.rel (0) target = $region49
    $region48: #{forward.1} parent=1 // pred_region
      %s130 = ssub.s32 49152, 49152
      %131 = vsyncadd [#allocation15], %s130
      %s132 = sshll.u32 [#allocation14], 4
      %s133 = int_to_ptr.vmem [resolvable:$true] %s132
      %138 = dma.hbm_to_vmem [thread:$0]  %s11, 49152, %s133, [#allocation15], 256, 256, 16
    $region49: #{forward.1} parent=1 // pred_fallthru
      _
    // Predicated region
    $region50: #{forward.1} parent=1 // pred_check
      _
    $region51: #{forward.1} parent=1 // pred_check_branch
      %140 = sbr.rel (0) target = $region53
    $region52: #{forward.1} parent=1 // pred_region
      %s142 = ssub.s32 384, 384
      %143 = vsyncadd [#allocation15], %s142
      %s144 = sshll.u32 [#allocation16], 4
      %s145 = int_to_ptr.vmem [resolvable:$true] %s144
      %150 = dma.hbm_to_vmem [thread:$0]  %s12, 384, %s145, [#allocation15], 64, 64, 4
    $region53: #{forward.1} parent=1 // pred_fallthru
      _
    // Predicated region
    $region54: #{forward.1} parent=1 // pred_check
      _
    $region55: #{forward.1} parent=1 // pred_check_branch
      %152 = sbr.rel (0) target = $region57
    $region56: #{forward.1} parent=1 // pred_region
      %s154 = ssub.s32 49152, 49152
      %155 = vsyncadd [#allocation18], %s154
      %s156 = sshll.u32 [#allocation17], 4
      %s157 = int_to_ptr.vmem [resolvable:$true] %s156
      %162 = dma.hbm_to_vmem [thread:$0]  %s13, 49152, %s157, [#allocation18], 128, 128, 8
    $region57: #{forward.1} parent=1 // pred_fallthru
      _
    // Predicated region
    $region58: #{forward.1} parent=1 // pred_check
      _
    $region59: #{forward.1} parent=1 // pred_check_branch
      %164 = sbr.rel (0) target = $region61
    $region60: #{forward.1} parent=1 // pred_region
      %s166 = ssub.s32 192, 192
      %167 = vsyncadd [#allocation18], %s166
      %s168 = sshll.u32 [#allocation19], 4
      %s169 = int_to_ptr.vmem [resolvable:$true] %s168
      %174 = dma.hbm_to_vmem [thread:$0]  %s14, 192, %s169, [#allocation18], 32, 32, 2
    $region61: #{forward.1} parent=1 // pred_fallthru
      _
    // Predicated region
    $region62: #{forward.1} parent=1 // pred_check
      _
    $region63: #{forward.1} parent=1 // pred_check_branch
      %176 = sbr.rel (0) target = $region65
    $region64: #{forward.1} parent=1 // pred_region
      %s178 = ssub.s32 192, 192
      %179 = vsyncadd [#allocation21], %s178
      %s180 = sshll.u32 [#allocation20], 4
      %s181 = int_to_ptr.vmem [resolvable:$true] %s180
      %186 = dma.hbm_to_vmem [thread:$0]  %s15, 192, %s181, [#allocation21], 32, 32, 2
    $region65: #{forward.1} parent=1 // pred_fallthru
      _
    // Predicated region
    $region66: #{forward.1} parent=1 // pred_check
      _
    $region67: #{forward.1} parent=1 // pred_check_branch
      %188 = sbr.rel (0) target = $region69
    $region68: #{forward.1} parent=1 // pred_region
      %s190 = ssub.s32 192, 192
      %191 = vsyncadd [#allocation21], %s190
      %s192 = sshll.u32 [#allocation22], 4
      %s193 = int_to_ptr.vmem [resolvable:$true] %s192
      %198 = dma.hbm_to_vmem [thread:$0]  %s16, 192, %s193, [#allocation21], 32, 32, 2
    $region69: #{forward.1} parent=1 // pred_fallthru
      _
    // Predicated region
    $region70: #{forward.1} parent=1 // pred_check
      _
    $region71: #{forward.1} parent=1 // pred_check_branch
      %200 = sbr.rel (0) target = $region73
    $region72: #{forward.1} parent=1 // pred_region
      %s202 = ssub.s32 32, 32
      %203 = vsyncadd [#allocation24], %s202
      %s205 = sshll.u32 [#allocation23], 4
      %s206 = int_to_ptr.vmem [resolvable:$true] %s205
      %208 = dma.hbm_to_vmem [thread:$0]  %s17, 32, %s206, [#allocation24]
    $region73: #{forward.1} parent=1 // pred_fallthru
      _
    // Predicated region
    $region74: #{forward.1} parent=1 // pred_check
      _
    $region75: #{forward.1} parent=1 // pred_check_branch
      %210 = sbr.rel (0) target = $region77
    $region76: #{forward.1} parent=1 // pred_region
      %s212 = ssub.s32 32, 32
      %213 = vsyncadd [#allocation24], %s212
      %s215 = sshll.u32 [#allocation25], 4
      %s216 = int_to_ptr.vmem [resolvable:$true] %s215
      %218 = dma.hbm_to_vmem [thread:$0]  %s18, 32, %s216, [#allocation24]
    $region77: #{forward.1} parent=1 // pred_fallthru
      _
    // Predicated region
    $region78: #{forward.1} parent=1 // pred_check
      _
    $region79: #{forward.1} parent=1 // pred_check_branch
      %220 = sbr.rel (0) target = $region81
    $region80: #{forward.1} parent=1 // pred_region
      %s222 = ssub.s32 32, 32
      %223 = vsyncadd [#allocation27], %s222
      %s225 = sshll.u32 [#allocation26], 4
      %s226 = int_to_ptr.vmem [resolvable:$true] %s225
      %228 = dma.hbm_to_vmem [thread:$0]  %s19, 32, %s226, [#allocation27]
    $region81: #{forward.1} parent=1 // pred_fallthru
      _
    // Predicated region
    $region82: #{forward.1} parent=1 // pred_check
      _
    $region83: #{forward.1} parent=1 // pred_check_branch
      %230 = sbr.rel (0) target = $region85
    $region84: #{forward.1} parent=1 // pred_region
      _
    $region85: #{forward.1} parent=1 // pred_fallthru
      _
    // Predicated region
    $region86: #{forward.1} parent=1 // pred_check
      _
    $region87: #{forward.1} parent=1 // pred_check_branch
      %232 = sbr.rel (0) target = $region89
    $region88: #{forward.1} parent=1 // pred_region
      %233 = dma.done [#allocation4], 1024
    $region89: #{forward.1} parent=1 // pred_fallthru
      _
    // Predicated region
    $region90: #{forward.1} parent=1 // pred_check
      _
    $region91: #{forward.1} parent=1 // pred_check_branch
      %235 = sbr.rel (0) target = $region93
    $region92: #{forward.1} parent=1 // pred_region
      %236 = dma.done [#allocation6], 32
    $region93: #{forward.1} parent=1 // pred_fallthru
      _
    // Predicated region
    $region94: #{forward.1} parent=1 // pred_check
      _
    $region95: #{forward.1} parent=1 // pred_check_branch
      %238 = sbr.rel (0) target = $region97
    $region96: #{forward.1} parent=1 // pred_region
      %239 = dma.done [#allocation6], 73728
    $region97: #{forward.1} parent=1 // pred_fallthru
      _
    // Predicated region
    $region98: #{forward.1} parent=1 // pred_check
      _
    $region99: #{forward.1} parent=1 // pred_check_branch
      %241 = sbr.rel (0) target = $region101
    $region100: #{forward.1} parent=1 // pred_region
      %242 = dma.done [#allocation9], 576
    $region101: #{forward.1} parent=1 // pred_fallthru
      _
    // Predicated region
    $region102: #{forward.1} parent=1 // pred_check
      _
    $region103: #{forward.1} parent=1 // pred_check_branch
      %244 = sbr.rel (0) target = $region105
    $region104: #{forward.1} parent=1 // pred_region
      %245 = dma.done [#allocation9], 192
    $region105: #{forward.1} parent=1 // pred_fallthru
      _
    // Predicated region
    $region106: #{forward.1} parent=1 // pred_check
      _
    $region107: #{forward.1} parent=1 // pred_check_branch
      %247 = sbr.rel (0) target = $region109
    $region108: #{forward.1} parent=1 // pred_region
      %248 = dma.done [#allocation12], 192
    $region109: #{forward.1} parent=1 // pred_fallthru
      _
    // Predicated region
    $region110: #{forward.1} parent=1 // pred_check
      _
    $region111: #{forward.1} parent=1 // pred_check_branch
      %250 = sbr.rel (0) target = $region113
    $region112: #{forward.1} parent=1 // pred_region
      %251 = dma.done [#allocation12], 192
    $region113: #{forward.1} parent=1 // pred_fallthru
      _
    // Predicated region
    $region114: #{forward.1} parent=1 // pred_check
      _
    $region115: #{forward.1} parent=1 // pred_check_branch
      %253 = sbr.rel (0) target = $region117
    $region116: #{forward.1} parent=1 // pred_region
      %254 = dma.done [#allocation15], 49152
    $region117: #{forward.1} parent=1 // pred_fallthru
      _
    // Predicated region
    $region118: #{forward.1} parent=1 // pred_check
      _
    $region119: #{forward.1} parent=1 // pred_check_branch
      %256 = sbr.rel (0) target = $region121
    $region120: #{forward.1} parent=1 // pred_region
      %257 = dma.done [#allocation15], 384
    $region121: #{forward.1} parent=1 // pred_fallthru
      _
    // Predicated region
    $region122: #{forward.1} parent=1 // pred_check
      _
    $region123: #{forward.1} parent=1 // pred_check_branch
      %259 = sbr.rel (0) target = $region125
    $region124: #{forward.1} parent=1 // pred_region
      %260 = dma.done [#allocation18], 49152
    $region125: #{forward.1} parent=1 // pred_fallthru
      _
    // Predicated region
    $region126: #{forward.1} parent=1 // pred_check
      _
    $region127: #{forward.1} parent=1 // pred_check_branch
      %262 = sbr.rel (0) target = $region129
    $region128: #{forward.1} parent=1 // pred_region
      %263 = dma.done [#allocation18], 192
    $region129: #{forward.1} parent=1 // pred_fallthru
      _
    // Predicated region
    $region130: #{forward.1} parent=1 // pred_check
      _
    $region131: #{forward.1} parent=1 // pred_check_branch
      %265 = sbr.rel (0) target = $region133
    $region132: #{forward.1} parent=1 // pred_region
      %266 = dma.done [#allocation21], 192
    $region133: #{forward.1} parent=1 // pred_fallthru
      _
    // Predicated region
    $region134: #{forward.1} parent=1 // pred_check
      _
    $region135: #{forward.1} parent=1 // pred_check_branch
      %268 = sbr.rel (0) target = $region137
    $region136: #{forward.1} parent=1 // pred_region
      %269 = dma.done [#allocation21], 192
    $region137: #{forward.1} parent=1 // pred_fallthru
      _
    // Predicated region
    $region138: #{forward.1} parent=1 // pred_check
      _
    $region139: #{forward.1} parent=1 // pred_check_branch
      %271 = sbr.rel (0) target = $region141
    $region140: #{forward.1} parent=1 // pred_region
      %272 = dma.done [#allocation24], 32
    $region141: #{forward.1} parent=1 // pred_fallthru
      _
    // Predicated region
    $region142: #{forward.1} parent=1 // pred_check
      _
    $region143: #{forward.1} parent=1 // pred_check_branch
      %274 = sbr.rel (0) target = $region145
    $region144: #{forward.1} parent=1 // pred_region
      %275 = dma.done [#allocation24], 32
    $region145: #{forward.1} parent=1 // pred_fallthru
      _
    // Predicated region
    $region146: #{forward.1} parent=1 // pred_check
      _
    $region147: #{forward.1} parent=1 // pred_check_branch
      %277 = sbr.rel (0) target = $region149
    $region148: #{forward.1} parent=1 // pred_region
      %278 = dma.done [#allocation27], 32
    $region149: #{forward.1} parent=1 // pred_fallthru
      _
    %v280 = vld [vmem:[%s0] sm:$0xff]
    %v281 = vld [vmem:[%s0 + $0x8] sm:$0xff]
    %v282 = vld [vmem:[%s0 + $0x10] sm:$0xff]
    %v283 = vld [vmem:[%s0 + $0x18] sm:$0xff]
    %v284 = vld [vmem:[%s0 + $0x20] sm:$0xff]
    %v285 = vld [vmem:[%s0 + $0x28] sm:$0xff]
    %v286 = vld [vmem:[%s0 + $0x30] sm:$0xff]
    %v287 = vld [vmem:[%s0 + $0x38] sm:$0xff]
    %v288 = vld [vmem:[%s0 + $0x40] sm:$0xff]
    %v289 = vld [vmem:[%s0 + $0x48] sm:$0xff]
    %v290 = vld [vmem:[%s0 + $0x50] sm:$0xff]
    %v291 = vld [vmem:[%s0 + $0x58] sm:$0xff]
    %v292 = vld [vmem:[%s0 + $0x60] sm:$0xff]
    %v293 = vld [vmem:[%s0 + $0x68] sm:$0xff]
    %v294 = vld [vmem:[%s0 + $0x70] sm:$0xff]
    %v295 = vld [vmem:[%s0 + $0x78] sm:$0xff]
    %v296 = vld [vmem:[%s0 + $0x80] sm:$0xff]
    %v297 = vld [vmem:[%s0 + $0x88] sm:$0xff]
    %v298 = vld [vmem:[%s0 + $0x90] sm:$0xff]
    %v299 = vld [vmem:[%s0 + $0x98] sm:$0xff]
    %v300 = vpack.c.bf16 %v281, %v280
    %v301 = vpack.c.bf16 %v283, %v282
    %v302 = vpack.c.bf16 %v285, %v284
    %v303 = vpack.c.bf16 %v287, %v286
    %v304 = vpack.c.bf16 %v289, %v288
    %v305 = vpack.c.bf16 %v291, %v290
    %v306 = vpack.c.bf16 %v293, %v292
    %v307 = vpack.c.bf16 %v295, %v294
    %v308 = vpack.c.bf16 %v297, %v296
    %v309 = vpack.c.bf16 %v299, %v298
    %v310 = vld [vmem:[#allocation3] sm:$0xff]
    %v311 = vld [vmem:[#allocation3 + $0x8] sm:$0xff]
    %v312 = vld [vmem:[#allocation3 + $0x10] sm:$0xff]
    %v313 = vld [vmem:[#allocation3 + $0x18] sm:$0xff]
    %v314 = vld [vmem:[#allocation3 + $0x20] sm:$0xff]
    %v315 = vld [vmem:[#allocation3 + $0x28] sm:$0xff]
    %v316 = vld [vmem:[#allocation3 + $0x30] sm:$0xff]
    %v317 = vld [vmem:[#allocation3 + $0x38] sm:$0xff]
    %v318 = vld [vmem:[#allocation5] sm:$0x3]
    %v320 = vlaneseq
    %v321 = vshrl.u32 %v320, 7
    %v322 = vsub.s32 0, %v321
    %v323 = vrot.slane %v318, %v322
    %v324 = vlaneseq
    %v325 = vshrl.u32 %v324, 7
    %v326 = vsub.s32 1, %v325
    %v327 = vrot.slane %v318, %v326
    %v338 = vunpack.c.l.b16 %v310
    %v339 = vunpack.c.h.b16 %v310
    %v340 = vunpack.c.l.b16 %v311
    %v341 = vunpack.c.h.b16 %v311
    %v342 = vunpack.c.l.b16 %v312
    %v343 = vunpack.c.h.b16 %v312
    %v344 = vunpack.c.l.b16 %v313
    %v345 = vunpack.c.h.b16 %v313
    %v346 = vunpack.c.l.b16 %v314
    %v347 = vunpack.c.h.b16 %v314
    %v348 = vunpack.c.l.b16 %v315
    %v349 = vunpack.c.h.b16 %v315
    %v350 = vunpack.c.l.b16 %v316
    %v351 = vunpack.c.h.b16 %v316
    %v352 = vunpack.c.l.b16 %v317
    %v353 = vunpack.c.h.b16 %v317
    %v354 = vpack.c.b16 %v340, %v338
    %v355 = vpack.c.b16 %v341, %v339
    %v356 = vpack.c.b16 %v344, %v342
    %v357 = vpack.c.b16 %v345, %v343
    %v358 = vpack.c.b16 %v348, %v346
    %v359 = vpack.c.b16 %v349, %v347
    %v360 = vpack.c.b16 %v352, %v350
    %v361 = vpack.c.b16 %v353, %v351
    %vm370 = vcmask 523264
    %v372 = vsel %vm370, %v300, 0
    %v375 = vsel %vm370, %v301, 0
    %v378 = vsel %vm370, %v302, 0
    %v381 = vsel %vm370, %v303, 0
    %v384 = vsel %vm370, %v304, 0
    %v387 = vsel %vm370, %v305, 0
    %v390 = vsel %vm370, %v306, 0
    %v393 = vsel %vm370, %v307, 0
    %v396 = vsel %vm370, %v308, 0
    %v399 = vsel %vm370, %v309, 0
    %401 = vmatprep.subr.bf16.mxu0 %v355
    %402 = vmatpush1.bf16.msra.mxu0 %v354
    %403 = vmatprep.subr.bf16.mxu0 %v357
    %404 = vmatpush1.bf16.msra.mxu0 %v356
    %405 = vmatprep.subr.bf16.mxu0 %v359
    %406 = vmatpush1.bf16.msra.mxu0 %v358
    %407 = vmatprep.subr.bf16.mxu0 %v361
    %408 = vmatpush1.bf16.msra.mxu0 %v360
    %409 = vmatprep.subr.bf16.mxu0 0
    %410 = vmatpush1.bf16.msra.mxu0 0
    %411 = vmatprep.subr.bf16.mxu0 0
    %412 = vmatpush1.bf16.msra.mxu0 0
    %413 = vmatprep.subr.bf16.mxu0 0
    %414 = vmatpush1.bf16.msra.mxu0 0
    %415 = vmatprep.subr.bf16.mxu0 0
    %416 = vmatpush1.bf16.msra.mxu0 0
    %417 = vmatprep.subr.bf16.mxu0 0
    %418 = vmatpush1.bf16.msra.mxu0 0
    %419 = vmatprep.subr.bf16.mxu0 0
    %420 = vmatpush1.bf16.msra.mxu0 0
    %421 = vmatprep.subr.bf16.mxu0 0
    %422 = vmatpush1.bf16.msra.mxu0 0
    %423 = vmatprep.subr.bf16.mxu0 0
    %424 = vmatpush1.bf16.msra.mxu0 0
    %425 = vmatprep.subr.bf16.mxu0 0
    %426 = vmatpush1.bf16.msra.mxu0 0
    %427 = vmatprep.subr.bf16.mxu0 0
    %428 = vmatpush1.bf16.msra.mxu0 0
    %429 = vmatprep.subr.bf16.mxu0 0
    %430 = vmatpush1.bf16.msra.mxu0 0
    %431 = vmatprep.subr.bf16.mxu0 0
    %432 = vmatpush1.bf16.msra.mxu0 0
    %433 = vmatprep.mubr.bf16.mxu0 0
    %434 = vmatmul.mubr.bf16.gmra.mrb[0].mxu0 %v372
    %v435 = vpop.f32.mrb[0].mxu0
    %v436 = vadd.f32 %v323, %v435
    %v437 = vpop.f32.mrb[0].mxu0
    %v438 = vadd.f32 %v327, %v437
    %v439 = vpop.f32.mrb[0].mxu0
    %v440 = vadd.f32 %v323, %v439
    %v441 = vpop.f32.mrb[0].mxu0
    %v442 = vadd.f32 %v327, %v441
    %443 = vmatprep.mubr.bf16.mxu0 0
    %444 = vmatmul.mubr.bf16.gmra.mrb[0].mxu0 %v375
    %v445 = vpop.f32.mrb[0].mxu0
    %v446 = vadd.f32 %v323, %v445
    %v447 = vpop.f32.mrb[0].mxu0
    %v448 = vadd.f32 %v327, %v447
    %v449 = vpop.f32.mrb[0].mxu0
    %v450 = vadd.f32 %v323, %v449
    %v451 = vpop.f32.mrb[0].mxu0
    %v452 = vadd.f32 %v327, %v451
    %453 = vmatprep.mubr.bf16.mxu0 0
    %454 = vmatmul.mubr.bf16.gmra.mrb[0].mxu0 %v378
    %v455 = vpop.f32.mrb[0].mxu0
    %v456 = vadd.f32 %v323, %v455
    %v457 = vpop.f32.mrb[0].mxu0
    %v458 = vadd.f32 %v327, %v457
    %v459 = vpop.f32.mrb[0].mxu0
    %v460 = vadd.f32 %v323, %v459
    %v461 = vpop.f32.mrb[0].mxu0
    %v462 = vadd.f32 %v327, %v461
    %463 = vmatprep.mubr.bf16.mxu0 0
    %464 = vmatmul.mubr.bf16.gmra.mrb[0].mxu0 %v381
    %v465 = vpop.f32.mrb[0].mxu0
    %v466 = vadd.f32 %v323, %v465
    %v467 = vpop.f32.mrb[0].mxu0
    %v468 = vadd.f32 %v327, %v467
    %v469 = vpop.f32.mrb[0].mxu0
    %v470 = vadd.f32 %v323, %v469
    %v471 = vpop.f32.mrb[0].mxu0
    %v472 = vadd.f32 %v327, %v471
    %473 = vmatprep.mubr.bf16.mxu0 0
    %474 = vmatmul.mubr.bf16.gmra.mrb[0].mxu0 %v384
    %v475 = vpop.f32.mrb[0].mxu0
    %v476 = vadd.f32 %v323, %v475
    %v477 = vpop.f32.mrb[0].mxu0
    %v478 = vadd.f32 %v327, %v477
    %v479 = vpop.f32.mrb[0].mxu0
    %v480 = vadd.f32 %v323, %v479
    %v481 = vpop.f32.mrb[0].mxu0
    %v482 = vadd.f32 %v327, %v481
    %483 = vmatprep.mubr.bf16.mxu0 0
    %484 = vmatmul.mubr.bf16.gmra.mrb[0].mxu0 %v387
    %v485 = vpop.f32.mrb[0].mxu0
    %v486 = vadd.f32 %v323, %v485
    %v487 = vpop.f32.mrb[0].mxu0
    %v488 = vadd.f32 %v327, %v487
    %v489 = vpop.f32.mrb[0].mxu0
    %v490 = vadd.f32 %v323, %v489
    %v491 = vpop.f32.mrb[0].mxu0
    %v492 = vadd.f32 %v327, %v491
    %493 = vmatprep.mubr.bf16.mxu0 0
    %494 = vmatmul.mubr.bf16.gmra.mrb[0].mxu0 %v390
    %v495 = vpop.f32.mrb[0].mxu0
    %v496 = vadd.f32 %v323, %v495
    %v497 = vpop.f32.mrb[0].mxu0
    %v498 = vadd.f32 %v327, %v497
    %v499 = vpop.f32.mrb[0].mxu0
    %v500 = vadd.f32 %v323, %v499
    %v501 = vpop.f32.mrb[0].mxu0
    %v502 = vadd.f32 %v327, %v501
    %503 = vmatprep.mubr.bf16.mxu0 0
    %504 = vmatmul.mubr.bf16.gmra.mrb[0].mxu0 %v393
    %v505 = vpop.f32.mrb[0].mxu0
    %v506 = vadd.f32 %v323, %v505
    %v507 = vpop.f32.mrb[0].mxu0
    %v508 = vadd.f32 %v327, %v507
    %v509 = vpop.f32.mrb[0].mxu0
    %v510 = vadd.f32 %v323, %v509
    %v511 = vpop.f32.mrb[0].mxu0
    %v512 = vadd.f32 %v327, %v511
    %513 = vmatprep.mubr.bf16.mxu0 0
    %514 = vmatmul.mubr.bf16.gmra.mrb[0].mxu0 %v396
    %v515 = vpop.f32.mrb[0].mxu0
    %v516 = vadd.f32 %v323, %v515
    %v517 = vpop.f32.mrb[0].mxu0
    %v518 = vadd.f32 %v327, %v517
    %v519 = vpop.f32.mrb[0].mxu0
    %v520 = vadd.f32 %v323, %v519
    %v521 = vpop.f32.mrb[0].mxu0
    %v522 = vadd.f32 %v327, %v521
    %523 = vmatprep.mubr.bf16.mxu0 0
    %524 = vmatmul.mubr.bf16.gmra.mrb[0].mxu0 %v399
    %v525 = vpop.f32.mrb[0].mxu0
    %v526 = vadd.f32 %v323, %v525
    %v527 = vpop.f32.mrb[0].mxu0
    %v528 = vadd.f32 %v327, %v527
    %v529 = vpop.f32.mrb[0].mxu0
    %v530 = vadd.f32 %v323, %v529
    %v531 = vpop.f32.mrb[0].mxu0
    %v532 = vadd.f32 %v327, %v531
    %533 = vdwg.mxu0
    %v534 = vld [vmem:[%s3] sm:$0xff]
    %v535 = vld [vmem:[%s3 + $0x8] sm:$0xff]
    %v536 = vld [vmem:[%s3 + $0x10] sm:$0xff]
    %v537 = vld [vmem:[%s3 + $0x18] sm:$0xff]
    %v538 = vld [vmem:[%s3 + $0x20] sm:$0xff]
    %v539 = vld [vmem:[%s3 + $0x28] sm:$0xff]
    %v540 = vld [vmem:[%s3 + $0x30] sm:$0xff]
    %v541 = vld [vmem:[%s3 + $0x38] sm:$0xff]
    %v542 = vld [vmem:[%s3 + $0x40] sm:$0xff]
    %v543 = vld [vmem:[%s3 + $0x48] sm:$0xff]
    %v544 = vld [vmem:[%s3 + $0x50] sm:$0xff]
    %v545 = vld [vmem:[%s3 + $0x58] sm:$0xff]
    %v546 = vld [vmem:[%s3 + $0x60] sm:$0xff]
    %v547 = vld [vmem:[%s3 + $0x68] sm:$0xff]
    %v548 = vld [vmem:[%s3 + $0x70] sm:$0xff]
    %v549 = vld [vmem:[%s3 + $0x78] sm:$0xff]
    %v550 = vld [vmem:[%s3 + $0x80] sm:$0xff]
    %v551 = vld [vmem:[%s3 + $0x88] sm:$0xff]
    %v552 = vld [vmem:[%s3 + $0x90] sm:$0xff]
    %v553 = vld [vmem:[%s3 + $0x98] sm:$0xff]
    %v554 = vld [vmem:[%s3 + $0xa0] sm:$0xff]
    %v555 = vld [vmem:[%s3 + $0xa8] sm:$0xff]
    %v556 = vld [vmem:[%s3 + $0xb0] sm:$0xff]
    %v557 = vld [vmem:[%s3 + $0xb8] sm:$0xff]
    %v558 = vld [vmem:[%s3 + $0xc0] sm:$0xff]
    %v559 = vld [vmem:[%s3 + $0xc8] sm:$0xff]
    %v560 = vld [vmem:[%s3 + $0xd0] sm:$0xff]
    %v561 = vld [vmem:[%s3 + $0xd8] sm:$0xff]
    %v562 = vld [vmem:[%s3 + $0xe0] sm:$0xff]
    %v563 = vld [vmem:[%s3 + $0xe8] sm:$0xff]
    %v564 = vld [vmem:[%s3 + $0xf0] sm:$0xff]
    %v565 = vld [vmem:[%s3 + $0xf8] sm:$0xff]
    %v566 = vld [vmem:[%s3 + $0x100] sm:$0xff]
    %v567 = vld [vmem:[%s3 + $0x108] sm:$0xff]
    %v568 = vld [vmem:[%s3 + $0x110] sm:$0xff]
    %v569 = vld [vmem:[%s3 + $0x118] sm:$0xff]
    %v570 = vld [vmem:[%s3 + $0x120] sm:$0xff]
    %v571 = vld [vmem:[%s3 + $0x128] sm:$0xff]
    %v572 = vld [vmem:[%s3 + $0x130] sm:$0xff]
    %v573 = vld [vmem:[%s3 + $0x138] sm:$0xff]
    %v574 = vadd.f32 %v436, %v534
    %v575 = vadd.f32 %v438, %v535
    %v576 = vadd.f32 %v440, %v536
    %v577 = vadd.f32 %v442, %v537
    %v578 = vadd.f32 %v446, %v538
    %v579 = vadd.f32 %v448, %v539
    %v580 = vadd.f32 %v450, %v540
    %v581 = vadd.f32 %v452, %v541
    %v582 = vadd.f32 %v456, %v542
    %v583 = vadd.f32 %v458, %v543
    %v584 = vadd.f32 %v460, %v544
    %v585 = vadd.f32 %v462, %v545
    %v586 = vadd.f32 %v466, %v546
    %v587 = vadd.f32 %v468, %v547
    %v588 = vadd.f32 %v470, %v548
    %v589 = vadd.f32 %v472, %v549
    %v590 = vadd.f32 %v476, %v550
    %v591 = vadd.f32 %v478, %v551
    %v592 = vadd.f32 %v480, %v552
    %v593 = vadd.f32 %v482, %v553
    %v594 = vadd.f32 %v486, %v554
    %v595 = vadd.f32 %v488, %v555
    %v596 = vadd.f32 %v490, %v556
    %v597 = vadd.f32 %v492, %v557
    %v598 = vadd.f32 %v496, %v558
    %v599 = vadd.f32 %v498, %v559
    %v600 = vadd.f32 %v500, %v560
    %v601 = vadd.f32 %v502, %v561
    %v602 = vadd.f32 %v506, %v562
    %v603 = vadd.f32 %v508, %v563
    %v604 = vadd.f32 %v510, %v564
    %v605 = vadd.f32 %v512, %v565
    %v606 = vadd.f32 %v516, %v566
    %v607 = vadd.f32 %v518, %v567
    %v608 = vadd.f32 %v520, %v568
    %v609 = vadd.f32 %v522, %v569
    %v610 = vadd.f32 %v526, %v570
    %v611 = vadd.f32 %v528, %v571
    %v612 = vadd.f32 %v530, %v572
    %v613 = vadd.f32 %v532, %v573
    loop: start=0, step=1, limit=6
    $region150: #{forward.1} parent=1 // loop_pre_header
      _
    $region151: #{forward.1} parent=1 // loop_header
      %s615 = sphi 0, %s619
      %p616 = scmp.ge.s32.totalorder %s615, 6
      %v620 = vphi %v574, %v10979
      %v621 = vphi %v575, %v10980
      %v622 = vphi %v576, %v10981
      %v623 = vphi %v577, %v10982
      %v624 = vphi %v578, %v10983
      %v625 = vphi %v579, %v10984
      %v626 = vphi %v580, %v10985
      %v627 = vphi %v581, %v10986
      %v628 = vphi %v582, %v10987
      %v629 = vphi %v583, %v10988
      %v630 = vphi %v584, %v10989
      %v631 = vphi %v585, %v10990
      %v632 = vphi %v586, %v10991
      %v633 = vphi %v587, %v10992
      %v634 = vphi %v588, %v10993
      %v635 = vphi %v589, %v10994
      %v636 = vphi %v590, %v10995
      %v637 = vphi %v591, %v10996
      %v638 = vphi %v592, %v10997
      %v639 = vphi %v593, %v10998
      %v640 = vphi %v594, %v10999
      %v641 = vphi %v595, %v11000
      %v642 = vphi %v596, %v11001
      %v643 = vphi %v597, %v11002
      %v644 = vphi %v598, %v11003
      %v645 = vphi %v599, %v11004
      %v646 = vphi %v600, %v11005
      %v647 = vphi %v601, %v11006
      %v648 = vphi %v602, %v11007
      %v649 = vphi %v603, %v11008
      %v650 = vphi %v604, %v11009
      %v651 = vphi %v605, %v11010
      %v652 = vphi %v606, %v11011
      %v653 = vphi %v607, %v11012
      %v654 = vphi %v608, %v11013
      %v655 = vphi %v609, %v11014
      %v656 = vphi %v610, %v11015
      %v657 = vphi %v611, %v11016
      %v658 = vphi %v612, %v11017
      %v659 = vphi %v613, %v11018
    $region152: #{forward.1} parent=1 // loop_header_branch
      %618 = sbr.rel (%p616) target = $region156
    $region153: #{forward.1} parent=1 // loop_body
      %v660 = vpack.c.bf16 %v622, %v620
      %v661 = vpack.c.bf16 %v623, %v621
      %v662 = vpack.c.bf16 %v626, %v624
      %v663 = vpack.c.bf16 %v627, %v625
      %v664 = vpack.c.bf16 %v630, %v628
      %v665 = vpack.c.bf16 %v631, %v629
      %v666 = vpack.c.bf16 %v634, %v632
      %v667 = vpack.c.bf16 %v635, %v633
      %v668 = vpack.c.bf16 %v638, %v636
      %v669 = vpack.c.bf16 %v639, %v637
      %v670 = vpack.c.bf16 %v642, %v640
      %v671 = vpack.c.bf16 %v643, %v641
      %v672 = vpack.c.bf16 %v646, %v644
      %v673 = vpack.c.bf16 %v647, %v645
      %v674 = vpack.c.bf16 %v650, %v648
      %v675 = vpack.c.bf16 %v651, %v649
      %v676 = vpack.c.bf16 %v654, %v652
      %v677 = vpack.c.bf16 %v655, %v653
      %v678 = vpack.c.bf16 %v658, %v656
      %v679 = vpack.c.bf16 %v659, %v657
      %s680 = smul.u32 %s615, 192
      %s681 = smul.addr %s680, 4
      %s682 = scalar_lea.vmem [#allocation7], %s681
      %v683 = vld [vmem:[%s682] sm:$0xff]
      %v684 = vld [vmem:[%s682 + $0x8] sm:$0xff]
      %v685 = vld [vmem:[%s682 + $0x10] sm:$0xff]
      %v686 = vld [vmem:[%s682 + $0x18] sm:$0xff]
      %v687 = vld [vmem:[%s682 + $0x20] sm:$0xff]
      %v688 = vld [vmem:[%s682 + $0x28] sm:$0xff]
      %v689 = vld [vmem:[%s682 + $0x30] sm:$0xff]
      %v690 = vld [vmem:[%s682 + $0x38] sm:$0xff]
      %v691 = vld [vmem:[%s682 + $0x40] sm:$0xff]
      %v692 = vld [vmem:[%s682 + $0x48] sm:$0xff]
      %v693 = vld [vmem:[%s682 + $0x50] sm:$0xff]
      %v694 = vld [vmem:[%s682 + $0x58] sm:$0xff]
      %v695 = vld [vmem:[%s682 + $0x60] sm:$0xff]
      %v696 = vld [vmem:[%s682 + $0x68] sm:$0xff]
      %v697 = vld [vmem:[%s682 + $0x70] sm:$0xff]
      %v698 = vld [vmem:[%s682 + $0x78] sm:$0xff]
      %v699 = vld [vmem:[%s682 + $0x80] sm:$0xff]
      %v700 = vld [vmem:[%s682 + $0x88] sm:$0xff]
      %v701 = vld [vmem:[%s682 + $0x90] sm:$0xff]
      %v702 = vld [vmem:[%s682 + $0x98] sm:$0xff]
      %v703 = vld [vmem:[%s682 + $0xa0] sm:$0xff]
      %v704 = vld [vmem:[%s682 + $0xa8] sm:$0xff]
      %v705 = vld [vmem:[%s682 + $0xb0] sm:$0xff]
      %v706 = vld [vmem:[%s682 + $0xb8] sm:$0xff]
      %v707 = vld [vmem:[%s682 + $0xc0] sm:$0xff]
      %v708 = vld [vmem:[%s682 + $0xc8] sm:$0xff]
      %v709 = vld [vmem:[%s682 + $0xd0] sm:$0xff]
      %v710 = vld [vmem:[%s682 + $0xd8] sm:$0xff]
      %v711 = vld [vmem:[%s682 + $0xe0] sm:$0xff]
      %v712 = vld [vmem:[%s682 + $0xe8] sm:$0xff]
      %v713 = vld [vmem:[%s682 + $0xf0] sm:$0xff]
      %v714 = vld [vmem:[%s682 + $0xf8] sm:$0xff]
      %v715 = vld [vmem:[%s682 + $0x100] sm:$0xff]
      %v716 = vld [vmem:[%s682 + $0x108] sm:$0xff]
      %v717 = vld [vmem:[%s682 + $0x110] sm:$0xff]
      %v718 = vld [vmem:[%s682 + $0x118] sm:$0xff]
      %v719 = vld [vmem:[%s682 + $0x120] sm:$0xff]
      %v720 = vld [vmem:[%s682 + $0x128] sm:$0xff]
      %v721 = vld [vmem:[%s682 + $0x130] sm:$0xff]
      %v722 = vld [vmem:[%s682 + $0x138] sm:$0xff]
      %v723 = vld [vmem:[%s682 + $0x140] sm:$0xff]
      %v724 = vld [vmem:[%s682 + $0x148] sm:$0xff]
      %v725 = vld [vmem:[%s682 + $0x150] sm:$0xff]
      %v726 = vld [vmem:[%s682 + $0x158] sm:$0xff]
      %v727 = vld [vmem:[%s682 + $0x160] sm:$0xff]
      %v728 = vld [vmem:[%s682 + $0x168] sm:$0xff]
      %v729 = vld [vmem:[%s682 + $0x170] sm:$0xff]
      %v730 = vld [vmem:[%s682 + $0x178] sm:$0xff]
      %v731 = vld [vmem:[%s682 + $0x180] sm:$0xff]
      %v732 = vld [vmem:[%s682 + $0x188] sm:$0xff]
      %v733 = vld [vmem:[%s682 + $0x190] sm:$0xff]
      %v734 = vld [vmem:[%s682 + $0x198] sm:$0xff]
      %v735 = vld [vmem:[%s682 + $0x1a0] sm:$0xff]
      %v736 = vld [vmem:[%s682 + $0x1a8] sm:$0xff]
      %v737 = vld [vmem:[%s682 + $0x1b0] sm:$0xff]
      %v738 = vld [vmem:[%s682 + $0x1b8] sm:$0xff]
      %v739 = vld [vmem:[%s682 + $0x1c0] sm:$0xff]
      %v740 = vld [vmem:[%s682 + $0x1c8] sm:$0xff]
      %v741 = vld [vmem:[%s682 + $0x1d0] sm:$0xff]
      %v742 = vld [vmem:[%s682 + $0x1d8] sm:$0xff]
      %v743 = vld [vmem:[%s682 + $0x1e0] sm:$0xff]
      %v744 = vld [vmem:[%s682 + $0x1e8] sm:$0xff]
      %v745 = vld [vmem:[%s682 + $0x1f0] sm:$0xff]
      %v746 = vld [vmem:[%s682 + $0x1f8] sm:$0xff]
      %v747 = vld [vmem:[%s682 + $0x200] sm:$0xff]
      %v748 = vld [vmem:[%s682 + $0x208] sm:$0xff]
      %v749 = vld [vmem:[%s682 + $0x210] sm:$0xff]
      %v750 = vld [vmem:[%s682 + $0x218] sm:$0xff]
      %v751 = vld [vmem:[%s682 + $0x220] sm:$0xff]
      %v752 = vld [vmem:[%s682 + $0x228] sm:$0xff]
      %v753 = vld [vmem:[%s682 + $0x230] sm:$0xff]
      %v754 = vld [vmem:[%s682 + $0x238] sm:$0xff]
      %v755 = vld [vmem:[%s682 + $0x240] sm:$0xff]
      %v756 = vld [vmem:[%s682 + $0x248] sm:$0xff]
      %v757 = vld [vmem:[%s682 + $0x250] sm:$0xff]
      %v758 = vld [vmem:[%s682 + $0x258] sm:$0xff]
      %v759 = vld [vmem:[%s682 + $0x260] sm:$0xff]
      %v760 = vld [vmem:[%s682 + $0x268] sm:$0xff]
      %v761 = vld [vmem:[%s682 + $0x270] sm:$0xff]
      %v762 = vld [vmem:[%s682 + $0x278] sm:$0xff]
      %v763 = vld [vmem:[%s682 + $0x280] sm:$0xff]
      %v764 = vld [vmem:[%s682 + $0x288] sm:$0xff]
      %v765 = vld [vmem:[%s682 + $0x290] sm:$0xff]
      %v766 = vld [vmem:[%s682 + $0x298] sm:$0xff]
      %v767 = vld [vmem:[%s682 + $0x2a0] sm:$0xff]
      %v768 = vld [vmem:[%s682 + $0x2a8] sm:$0xff]
      %v769 = vld [vmem:[%s682 + $0x2b0] sm:$0xff]
      %v770 = vld [vmem:[%s682 + $0x2b8] sm:$0xff]
      %v771 = vld [vmem:[%s682 + $0x2c0] sm:$0xff]
      %v772 = vld [vmem:[%s682 + $0x2c8] sm:$0xff]
      %v773 = vld [vmem:[%s682 + $0x2d0] sm:$0xff]
      %v774 = vld [vmem:[%s682 + $0x2d8] sm:$0xff]
      %v775 = vld [vmem:[%s682 + $0x2e0] sm:$0xff]
      %v776 = vld [vmem:[%s682 + $0x2e8] sm:$0xff]
      %v777 = vld [vmem:[%s682 + $0x2f0] sm:$0xff]
      %v778 = vld [vmem:[%s682 + $0x2f8] sm:$0xff]
      %s779 = smul.u32 %s615, 6
      %s780 = scalar_lea.vmem [#allocation8], %s779
      %v781 = vld [vmem:[%s780] sm:$0x3f]
      %v783 = vlaneseq
      %v784 = vshrl.u32 %v783, 7
      %v785 = vsub.s32 0, %v784
      %v786 = vrot.slane %v781, %v785
      %v787 = vlaneseq
      %v788 = vshrl.u32 %v787, 7
      %v789 = vsub.s32 1, %v788
      %v790 = vrot.slane %v781, %v789
      %v791 = vlaneseq
      %v792 = vshrl.u32 %v791, 7
      %v793 = vsub.s32 2, %v792
      %v794 = vrot.slane %v781, %v793
      %v795 = vlaneseq
      %v796 = vshrl.u32 %v795, 7
      %v797 = vsub.s32 3, %v796
      %v798 = vrot.slane %v781, %v797
      %v799 = vlaneseq
      %v800 = vshrl.u32 %v799, 7
      %v801 = vsub.s32 4, %v800
      %v802 = vrot.slane %v781, %v801
      %v803 = vlaneseq
      %v804 = vshrl.u32 %v803, 7
      %v805 = vsub.s32 5, %v804
      %v806 = vrot.slane %v781, %v805
      %v909 = vunpack.c.l.b16 %v683
      %v910 = vunpack.c.h.b16 %v683
      %v911 = vunpack.c.l.b16 %v684
      %v912 = vunpack.c.h.b16 %v684
      %v913 = vunpack.c.l.b16 %v685
      %v914 = vunpack.c.h.b16 %v685
      %v915 = vunpack.c.l.b16 %v686
      %v916 = vunpack.c.h.b16 %v686
      %v917 = vunpack.c.l.b16 %v687
      %v918 = vunpack.c.h.b16 %v687
      %v919 = vunpack.c.l.b16 %v688
      %v920 = vunpack.c.h.b16 %v688
      %v921 = vunpack.c.l.b16 %v689
      %v922 = vunpack.c.h.b16 %v689
      %v923 = vunpack.c.l.b16 %v690
      %v924 = vunpack.c.h.b16 %v690
      %v925 = vunpack.c.l.b16 %v691
      %v926 = vunpack.c.h.b16 %v691
      %v927 = vunpack.c.l.b16 %v692
      %v928 = vunpack.c.h.b16 %v692
      %v929 = vunpack.c.l.b16 %v693
      %v930 = vunpack.c.h.b16 %v693
      %v931 = vunpack.c.l.b16 %v694
      %v932 = vunpack.c.h.b16 %v694
      %v933 = vunpack.c.l.b16 %v695
      %v934 = vunpack.c.h.b16 %v695
      %v935 = vunpack.c.l.b16 %v696
      %v936 = vunpack.c.h.b16 %v696
      %v937 = vunpack.c.l.b16 %v697
      %v938 = vunpack.c.h.b16 %v697
      %v939 = vunpack.c.l.b16 %v698
      %v940 = vunpack.c.h.b16 %v698
      %v941 = vunpack.c.l.b16 %v699
      %v942 = vunpack.c.h.b16 %v699
      %v943 = vunpack.c.l.b16 %v700
      %v944 = vunpack.c.h.b16 %v700
      %v945 = vunpack.c.l.b16 %v701
      %v946 = vunpack.c.h.b16 %v701
      %v947 = vunpack.c.l.b16 %v702
      %v948 = vunpack.c.h.b16 %v702
      %v949 = vunpack.c.l.b16 %v703
      %v950 = vunpack.c.h.b16 %v703
      %v951 = vunpack.c.l.b16 %v704
      %v952 = vunpack.c.h.b16 %v704
      %v953 = vunpack.c.l.b16 %v705
      %v954 = vunpack.c.h.b16 %v705
      %v955 = vunpack.c.l.b16 %v706
      %v956 = vunpack.c.h.b16 %v706
      %v957 = vunpack.c.l.b16 %v707
      %v958 = vunpack.c.h.b16 %v707
      %v959 = vunpack.c.l.b16 %v708
      %v960 = vunpack.c.h.b16 %v708
      %v961 = vunpack.c.l.b16 %v709
      %v962 = vunpack.c.h.b16 %v709
      %v963 = vunpack.c.l.b16 %v710
      %v964 = vunpack.c.h.b16 %v710
      %v965 = vunpack.c.l.b16 %v711
      %v966 = vunpack.c.h.b16 %v711
      %v967 = vunpack.c.l.b16 %v712
      %v968 = vunpack.c.h.b16 %v712
      %v969 = vunpack.c.l.b16 %v713
      %v970 = vunpack.c.h.b16 %v713
      %v971 = vunpack.c.l.b16 %v714
      %v972 = vunpack.c.h.b16 %v714
      %v973 = vunpack.c.l.b16 %v715
      %v974 = vunpack.c.h.b16 %v715
      %v975 = vunpack.c.l.b16 %v716
      %v976 = vunpack.c.h.b16 %v716
      %v977 = vunpack.c.l.b16 %v717
      %v978 = vunpack.c.h.b16 %v717
      %v979 = vunpack.c.l.b16 %v718
      %v980 = vunpack.c.h.b16 %v718
      %v981 = vunpack.c.l.b16 %v719
      %v982 = vunpack.c.h.b16 %v719
      %v983 = vunpack.c.l.b16 %v720
      %v984 = vunpack.c.h.b16 %v720
      %v985 = vunpack.c.l.b16 %v721
      %v986 = vunpack.c.h.b16 %v721
      %v987 = vunpack.c.l.b16 %v722
      %v988 = vunpack.c.h.b16 %v722
      %v989 = vunpack.c.l.b16 %v723
      %v990 = vunpack.c.h.b16 %v723
      %v991 = vunpack.c.l.b16 %v724
      %v992 = vunpack.c.h.b16 %v724
      %v993 = vunpack.c.l.b16 %v725
      %v994 = vunpack.c.h.b16 %v725
      %v995 = vunpack.c.l.b16 %v726
      %v996 = vunpack.c.h.b16 %v726
      %v997 = vunpack.c.l.b16 %v727
      %v998 = vunpack.c.h.b16 %v727
      %v999 = vunpack.c.l.b16 %v728
      %v1000 = vunpack.c.h.b16 %v728
      %v1001 = vunpack.c.l.b16 %v729
      %v1002 = vunpack.c.h.b16 %v729
      %v1003 = vunpack.c.l.b16 %v730
      %v1004 = vunpack.c.h.b16 %v730
      %v1005 = vunpack.c.l.b16 %v731
      %v1006 = vunpack.c.h.b16 %v731
      %v1007 = vunpack.c.l.b16 %v732
      %v1008 = vunpack.c.h.b16 %v732
      %v1009 = vunpack.c.l.b16 %v733
      %v1010 = vunpack.c.h.b16 %v733
      %v1011 = vunpack.c.l.b16 %v734
      %v1012 = vunpack.c.h.b16 %v734
      %v1013 = vunpack.c.l.b16 %v735
      %v1014 = vunpack.c.h.b16 %v735
      %v1015 = vunpack.c.l.b16 %v736
      %v1016 = vunpack.c.h.b16 %v736
      %v1017 = vunpack.c.l.b16 %v737
      %v1018 = vunpack.c.h.b16 %v737
      %v1019 = vunpack.c.l.b16 %v738
      %v1020 = vunpack.c.h.b16 %v738
      %v1021 = vunpack.c.l.b16 %v739
      %v1022 = vunpack.c.h.b16 %v739
      %v1023 = vunpack.c.l.b16 %v740
      %v1024 = vunpack.c.h.b16 %v740
      %v1025 = vunpack.c.l.b16 %v741
      %v1026 = vunpack.c.h.b16 %v741
      %v1027 = vunpack.c.l.b16 %v742
      %v1028 = vunpack.c.h.b16 %v742
      %v1029 = vunpack.c.l.b16 %v743
      %v1030 = vunpack.c.h.b16 %v743
      %v1031 = vunpack.c.l.b16 %v744
      %v1032 = vunpack.c.h.b16 %v744
      %v1033 = vunpack.c.l.b16 %v745
      %v1034 = vunpack.c.h.b16 %v745
      %v1035 = vunpack.c.l.b16 %v746
      %v1036 = vunpack.c.h.b16 %v746
      %v1037 = vunpack.c.l.b16 %v747
      %v1038 = vunpack.c.h.b16 %v747
      %v1039 = vunpack.c.l.b16 %v748
      %v1040 = vunpack.c.h.b16 %v748
      %v1041 = vunpack.c.l.b16 %v749
      %v1042 = vunpack.c.h.b16 %v749
      %v1043 = vunpack.c.l.b16 %v750
      %v1044 = vunpack.c.h.b16 %v750
      %v1045 = vunpack.c.l.b16 %v751
      %v1046 = vunpack.c.h.b16 %v751
      %v1047 = vunpack.c.l.b16 %v752
      %v1048 = vunpack.c.h.b16 %v752
      %v1049 = vunpack.c.l.b16 %v753
      %v1050 = vunpack.c.h.b16 %v753
      %v1051 = vunpack.c.l.b16 %v754
      %v1052 = vunpack.c.h.b16 %v754
      %v1053 = vunpack.c.l.b16 %v755
      %v1054 = vunpack.c.h.b16 %v755
      %v1055 = vunpack.c.l.b16 %v756
      %v1056 = vunpack.c.h.b16 %v756
      %v1057 = vunpack.c.l.b16 %v757
      %v1058 = vunpack.c.h.b16 %v757
      %v1059 = vunpack.c.l.b16 %v758
      %v1060 = vunpack.c.h.b16 %v758
      %v1061 = vunpack.c.l.b16 %v759
      %v1062 = vunpack.c.h.b16 %v759
      %v1063 = vunpack.c.l.b16 %v760
      %v1064 = vunpack.c.h.b16 %v760
      %v1065 = vunpack.c.l.b16 %v761
      %v1066 = vunpack.c.h.b16 %v761
      %v1067 = vunpack.c.l.b16 %v762
      %v1068 = vunpack.c.h.b16 %v762
      %v1069 = vunpack.c.l.b16 %v763
      %v1070 = vunpack.c.h.b16 %v763
      %v1071 = vunpack.c.l.b16 %v764
      %v1072 = vunpack.c.h.b16 %v764
      %v1073 = vunpack.c.l.b16 %v765
      %v1074 = vunpack.c.h.b16 %v765
      %v1075 = vunpack.c.l.b16 %v766
      %v1076 = vunpack.c.h.b16 %v766
      %v1077 = vunpack.c.l.b16 %v767
      %v1078 = vunpack.c.h.b16 %v767
      %v1079 = vunpack.c.l.b16 %v768
      %v1080 = vunpack.c.h.b16 %v768
      %v1081 = vunpack.c.l.b16 %v769
      %v1082 = vunpack.c.h.b16 %v769
      %v1083 = vunpack.c.l.b16 %v770
      %v1084 = vunpack.c.h.b16 %v770
      %v1085 = vunpack.c.l.b16 %v771
      %v1086 = vunpack.c.h.b16 %v771
      %v1087 = vunpack.c.l.b16 %v772
      %v1088 = vunpack.c.h.b16 %v772
      %v1089 = vunpack.c.l.b16 %v773
      %v1090 = vunpack.c.h.b16 %v773
      %v1091 = vunpack.c.l.b16 %v774
      %v1092 = vunpack.c.h.b16 %v774
      %v1093 = vunpack.c.l.b16 %v775
      %v1094 = vunpack.c.h.b16 %v775
      %v1095 = vunpack.c.l.b16 %v776
      %v1096 = vunpack.c.h.b16 %v776
      %v1097 = vunpack.c.l.b16 %v777
      %v1098 = vunpack.c.h.b16 %v777
      %v1099 = vunpack.c.l.b16 %v778
      %v1100 = vunpack.c.h.b16 %v778
      %v1101 = vpack.c.b16 %v915, %v909
      %v1102 = vpack.c.b16 %v916, %v910
      %v1103 = vpack.c.b16 %v917, %v911
      %v1104 = vpack.c.b16 %v918, %v912
      %v1105 = vpack.c.b16 %v919, %v913
      %v1106 = vpack.c.b16 %v920, %v914
      %v1107 = vpack.c.b16 %v927, %v921
      %v1108 = vpack.c.b16 %v928, %v922
      %v1109 = vpack.c.b16 %v929, %v923
      %v1110 = vpack.c.b16 %v930, %v924
      %v1111 = vpack.c.b16 %v931, %v925
      %v1112 = vpack.c.b16 %v932, %v926
      %v1113 = vpack.c.b16 %v939, %v933
      %v1114 = vpack.c.b16 %v940, %v934
      %v1115 = vpack.c.b16 %v941, %v935
      %v1116 = vpack.c.b16 %v942, %v936
      %v1117 = vpack.c.b16 %v943, %v937
      %v1118 = vpack.c.b16 %v944, %v938
      %v1119 = vpack.c.b16 %v951, %v945
      %v1120 = vpack.c.b16 %v952, %v946
      %v1121 = vpack.c.b16 %v953, %v947
      %v1122 = vpack.c.b16 %v954, %v948
      %v1123 = vpack.c.b16 %v955, %v949
      %v1124 = vpack.c.b16 %v956, %v950
      %v1125 = vpack.c.b16 %v963, %v957
      %v1126 = vpack.c.b16 %v964, %v958
      %v1127 = vpack.c.b16 %v965, %v959
      %v1128 = vpack.c.b16 %v966, %v960
      %v1129 = vpack.c.b16 %v967, %v961
      %v1130 = vpack.c.b16 %v968, %v962
      %v1131 = vpack.c.b16 %v975, %v969
      %v1132 = vpack.c.b16 %v976, %v970
      %v1133 = vpack.c.b16 %v977, %v971
      %v1134 = vpack.c.b16 %v978, %v972
      %v1135 = vpack.c.b16 %v979, %v973
      %v1136 = vpack.c.b16 %v980, %v974
      %v1137 = vpack.c.b16 %v987, %v981
      %v1138 = vpack.c.b16 %v988, %v982
      %v1139 = vpack.c.b16 %v989, %v983
      %v1140 = vpack.c.b16 %v990, %v984
      %v1141 = vpack.c.b16 %v991, %v985
      %v1142 = vpack.c.b16 %v992, %v986
      %v1143 = vpack.c.b16 %v999, %v993
      %v1144 = vpack.c.b16 %v1000, %v994
      %v1145 = vpack.c.b16 %v1001, %v995
      %v1146 = vpack.c.b16 %v1002, %v996
      %v1147 = vpack.c.b16 %v1003, %v997
      %v1148 = vpack.c.b16 %v1004, %v998
      %v1149 = vpack.c.b16 %v1011, %v1005
      %v1150 = vpack.c.b16 %v1012, %v1006
      %v1151 = vpack.c.b16 %v1013, %v1007
      %v1152 = vpack.c.b16 %v1014, %v1008
      %v1153 = vpack.c.b16 %v1015, %v1009
      %v1154 = vpack.c.b16 %v1016, %v1010
      %v1155 = vpack.c.b16 %v1023, %v1017
      %v1156 = vpack.c.b16 %v1024, %v1018
      %v1157 = vpack.c.b16 %v1025, %v1019
      %v1158 = vpack.c.b16 %v1026, %v1020
      %v1159 = vpack.c.b16 %v1027, %v1021
      %v1160 = vpack.c.b16 %v1028, %v1022
      %v1161 = vpack.c.b16 %v1035, %v1029
      %v1162 = vpack.c.b16 %v1036, %v1030
      %v1163 = vpack.c.b16 %v1037, %v1031
      %v1164 = vpack.c.b16 %v1038, %v1032
      %v1165 = vpack.c.b16 %v1039, %v1033
      %v1166 = vpack.c.b16 %v1040, %v1034
      %v1167 = vpack.c.b16 %v1047, %v1041
      %v1168 = vpack.c.b16 %v1048, %v1042
      %v1169 = vpack.c.b16 %v1049, %v1043
      %v1170 = vpack.c.b16 %v1050, %v1044
      %v1171 = vpack.c.b16 %v1051, %v1045
      %v1172 = vpack.c.b16 %v1052, %v1046
      %v1173 = vpack.c.b16 %v1059, %v1053
      %v1174 = vpack.c.b16 %v1060, %v1054
      %v1175 = vpack.c.b16 %v1061, %v1055
      %v1176 = vpack.c.b16 %v1062, %v1056
      %v1177 = vpack.c.b16 %v1063, %v1057
      %v1178 = vpack.c.b16 %v1064, %v1058
      %v1179 = vpack.c.b16 %v1071, %v1065
      %v1180 = vpack.c.b16 %v1072, %v1066
      %v1181 = vpack.c.b16 %v1073, %v1067
      %v1182 = vpack.c.b16 %v1074, %v1068
      %v1183 = vpack.c.b16 %v1075, %v1069
      %v1184 = vpack.c.b16 %v1076, %v1070
      %v1185 = vpack.c.b16 %v1083, %v1077
      %v1186 = vpack.c.b16 %v1084, %v1078
      %v1187 = vpack.c.b16 %v1085, %v1079
      %v1188 = vpack.c.b16 %v1086, %v1080
      %v1189 = vpack.c.b16 %v1087, %v1081
      %v1190 = vpack.c.b16 %v1088, %v1082
      %v1191 = vpack.c.b16 %v1095, %v1089
      %v1192 = vpack.c.b16 %v1096, %v1090
      %v1193 = vpack.c.b16 %v1097, %v1091
      %v1194 = vpack.c.b16 %v1098, %v1092
      %v1195 = vpack.c.b16 %v1099, %v1093
      %v1196 = vpack.c.b16 %v1100, %v1094
      %1293 = vmatprep.subr.bf16.mxu0 %v1102
      %1294 = vmatpush1.bf16.msra.mxu0 %v1101
      %1295 = vmatprep.subr.bf16.mxu0 %v1108
      %1296 = vmatpush1.bf16.msra.mxu0 %v1107
      %1297 = vmatprep.subr.bf16.mxu0 %v1114
      %1298 = vmatpush1.bf16.msra.mxu0 %v1113
      %1299 = vmatprep.subr.bf16.mxu0 %v1120
      %1300 = vmatpush1.bf16.msra.mxu0 %v1119
      %1301 = vmatprep.subr.bf16.mxu0 %v1126
      %1302 = vmatpush1.bf16.msra.mxu0 %v1125
      %1303 = vmatprep.subr.bf16.mxu0 %v1132
      %1304 = vmatpush1.bf16.msra.mxu0 %v1131
      %1305 = vmatprep.subr.bf16.mxu0 %v1138
      %1306 = vmatpush1.bf16.msra.mxu0 %v1137
      %1307 = vmatprep.subr.bf16.mxu0 %v1144
      %1308 = vmatpush1.bf16.msra.mxu0 %v1143
      %1309 = vmatprep.subr.bf16.mxu0 %v1150
      %1310 = vmatpush1.bf16.msra.mxu0 %v1149
      %1311 = vmatprep.subr.bf16.mxu0 %v1156
      %1312 = vmatpush1.bf16.msra.mxu0 %v1155
      %1313 = vmatprep.subr.bf16.mxu0 %v1162
      %1314 = vmatpush1.bf16.msra.mxu0 %v1161
      %1315 = vmatprep.subr.bf16.mxu0 %v1168
      %1316 = vmatpush1.bf16.msra.mxu0 %v1167
      %1317 = vmatprep.subr.bf16.mxu0 %v1174
      %1318 = vmatpush1.bf16.msra.mxu0 %v1173
      %1319 = vmatprep.subr.bf16.mxu0 %v1180
      %1320 = vmatpush1.bf16.msra.mxu0 %v1179
      %1321 = vmatprep.subr.bf16.mxu0 %v1186
      %1322 = vmatpush1.bf16.msra.mxu0 %v1185
      %1323 = vmatprep.subr.bf16.mxu0 %v1192
      %1324 = vmatpush1.bf16.msra.mxu0 %v1191
      %1325 = vmatprep.mubr.bf16.mxu0 %v661
      %1326 = vmatmul.mubr.bf16.gmra.mrb[0].mxu0 %v660
      %v1327 = vpop.f32.mrb[0].mxu0
      %v1328 = vadd.f32 %v786, %v1327
      %v1329 = vpop.f32.mrb[0].mxu0
      %v1330 = vadd.f32 %v790, %v1329
      %v1331 = vpop.f32.mrb[0].mxu0
      %v1332 = vadd.f32 %v786, %v1331
      %v1333 = vpop.f32.mrb[0].mxu0
      %v1334 = vadd.f32 %v790, %v1333
      %1335 = vmatprep.mubr.bf16.mxu0 %v663
      %1336 = vmatmul.mubr.bf16.gmra.mrb[0].mxu0 %v662
      %v1337 = vpop.f32.mrb[0].mxu0
      %v1338 = vadd.f32 %v786, %v1337
      %v1339 = vpop.f32.mrb[0].mxu0
      %v1340 = vadd.f32 %v790, %v1339
      %v1341 = vpop.f32.mrb[0].mxu0
      %v1342 = vadd.f32 %v786, %v1341
      %v1343 = vpop.f32.mrb[0].mxu0
      %v1344 = vadd.f32 %v790, %v1343
      %1345 = vmatprep.mubr.bf16.mxu0 %v665
      %1346 = vmatmul.mubr.bf16.gmra.mrb[0].mxu0 %v664
      %v1347 = vpop.f32.mrb[0].mxu0
      %v1348 = vadd.f32 %v786, %v1347
      %v1349 = vpop.f32.mrb[0].mxu0
      %v1350 = vadd.f32 %v790, %v1349
      %v1351 = vpop.f32.mrb[0].mxu0
      %v1352 = vadd.f32 %v786, %v1351
      %v1353 = vpop.f32.mrb[0].mxu0
      %v1354 = vadd.f32 %v790, %v1353
      %1355 = vmatprep.mubr.bf16.mxu0 %v667
      %1356 = vmatmul.mubr.bf16.gmra.mrb[0].mxu0 %v666
      %v1357 = vpop.f32.mrb[0].mxu0
      %v1358 = vadd.f32 %v786, %v1357
      %v1359 = vpop.f32.mrb[0].mxu0
      %v1360 = vadd.f32 %v790, %v1359
      %v1361 = vpop.f32.mrb[0].mxu0
      %v1362 = vadd.f32 %v786, %v1361
      %v1363 = vpop.f32.mrb[0].mxu0
      %v1364 = vadd.f32 %v790, %v1363
      %1365 = vmatprep.mubr.bf16.mxu0 %v669
      %1366 = vmatmul.mubr.bf16.gmra.mrb[0].mxu0 %v668
      %v1367 = vpop.f32.mrb[0].mxu0
      %v1368 = vadd.f32 %v786, %v1367
      %v1369 = vpop.f32.mrb[0].mxu0
      %v1370 = vadd.f32 %v790, %v1369
      %v1371 = vpop.f32.mrb[0].mxu0
      %v1372 = vadd.f32 %v786, %v1371
      %v1373 = vpop.f32.mrb[0].mxu0
      %v1374 = vadd.f32 %v790, %v1373
      %1375 = vmatprep.mubr.bf16.mxu0 %v671
      %1376 = vmatmul.mubr.bf16.gmra.mrb[0].mxu0 %v670
      %v1377 = vpop.f32.mrb[0].mxu0
      %v1378 = vadd.f32 %v786, %v1377
      %v1379 = vpop.f32.mrb[0].mxu0
      %v1380 = vadd.f32 %v790, %v1379
      %v1381 = vpop.f32.mrb[0].mxu0
      %v1382 = vadd.f32 %v786, %v1381
      %v1383 = vpop.f32.mrb[0].mxu0
      %v1384 = vadd.f32 %v790, %v1383
      %1385 = vmatprep.mubr.bf16.mxu0 %v673
      %1386 = vmatmul.mubr.bf16.gmra.mrb[0].mxu0 %v672
      %v1387 = vpop.f32.mrb[0].mxu0
      %v1388 = vadd.f32 %v786, %v1387
      %v1389 = vpop.f32.mrb[0].mxu0
      %v1390 = vadd.f32 %v790, %v1389
      %v1391 = vpop.f32.mrb[0].mxu0
      %v1392 = vadd.f32 %v786, %v1391
      %v1393 = vpop.f32.mrb[0].mxu0
      %v1394 = vadd.f32 %v790, %v1393
      %1395 = vmatprep.mubr.bf16.mxu0 %v675
      %1396 = vmatmul.mubr.bf16.gmra.mrb[0].mxu0 %v674
      %v1397 = vpop.f32.mrb[0].mxu0
      %v1398 = vadd.f32 %v786, %v1397
      %v1399 = vpop.f32.mrb[0].mxu0
      %v1400 = vadd.f32 %v790, %v1399
      %v1401 = vpop.f32.mrb[0].mxu0
      %v1402 = vadd.f32 %v786, %v1401
      %v1403 = vpop.f32.mrb[0].mxu0
      %v1404 = vadd.f32 %v790, %v1403
      %1405 = vmatprep.mubr.bf16.mxu0 %v677
      %1406 = vmatmul.mubr.bf16.gmra.mrb[0].mxu0 %v676
      %v1407 = vpop.f32.mrb[0].mxu0
      %v1408 = vadd.f32 %v786, %v1407
      %v1409 = vpop.f32.mrb[0].mxu0
      %v1410 = vadd.f32 %v790, %v1409
      %v1411 = vpop.f32.mrb[0].mxu0
      %v1412 = vadd.f32 %v786, %v1411
      %v1413 = vpop.f32.mrb[0].mxu0
      %v1414 = vadd.f32 %v790, %v1413
      %1415 = vmatprep.mubr.bf16.mxu0 %v679
      %1416 = vmatmul.mubr.bf16.gmra.mrb[0].mxu0 %v678
      %v1417 = vpop.f32.mrb[0].mxu0
      %v1418 = vadd.f32 %v786, %v1417
      %v1419 = vpop.f32.mrb[0].mxu0
      %v1420 = vadd.f32 %v790, %v1419
      %v1421 = vpop.f32.mrb[0].mxu0
      %v1422 = vadd.f32 %v786, %v1421
      %v1423 = vpop.f32.mrb[0].mxu0
      %v1424 = vadd.f32 %v790, %v1423
      %1425 = vdwg.mxu0
      %1426 = vmatprep.subr.bf16.mxu0 %v1104
      %1427 = vmatpush1.bf16.msra.mxu0 %v1103
      %1428 = vmatprep.subr.bf16.mxu0 %v1110
      %1429 = vmatpush1.bf16.msra.mxu0 %v1109
      %1430 = vmatprep.subr.bf16.mxu0 %v1116
      %1431 = vmatpush1.bf16.msra.mxu0 %v1115
      %1432 = vmatprep.subr.bf16.mxu0 %v1122
      %1433 = vmatpush1.bf16.msra.mxu0 %v1121
      %1434 = vmatprep.subr.bf16.mxu0 %v1128
      %1435 = vmatpush1.bf16.msra.mxu0 %v1127
      %1436 = vmatprep.subr.bf16.mxu0 %v1134
      %1437 = vmatpush1.bf16.msra.mxu0 %v1133
      %1438 = vmatprep.subr.bf16.mxu0 %v1140
      %1439 = vmatpush1.bf16.msra.mxu0 %v1139
      %1440 = vmatprep.subr.bf16.mxu0 %v1146
      %1441 = vmatpush1.bf16.msra.mxu0 %v1145
      %1442 = vmatprep.subr.bf16.mxu0 %v1152
      %1443 = vmatpush1.bf16.msra.mxu0 %v1151
      %1444 = vmatprep.subr.bf16.mxu0 %v1158
      %1445 = vmatpush1.bf16.msra.mxu0 %v1157
      %1446 = vmatprep.subr.bf16.mxu0 %v1164
      %1447 = vmatpush1.bf16.msra.mxu0 %v1163
      %1448 = vmatprep.subr.bf16.mxu0 %v1170
      %1449 = vmatpush1.bf16.msra.mxu0 %v1169
      %1450 = vmatprep.subr.bf16.mxu0 %v1176
      %1451 = vmatpush1.bf16.msra.mxu0 %v1175
      %1452 = vmatprep.subr.bf16.mxu0 %v1182
      %1453 = vmatpush1.bf16.msra.mxu0 %v1181
      %1454 = vmatprep.subr.bf16.mxu0 %v1188
      %1455 = vmatpush1.bf16.msra.mxu0 %v1187
      %1456 = vmatprep.subr.bf16.mxu0 %v1194
      %1457 = vmatpush1.bf16.msra.mxu0 %v1193
      %1458 = vmatprep.mubr.bf16.mxu0 %v661
      %1459 = vmatmul.mubr.bf16.gmra.mrb[0].mxu0 %v660
      %v1460 = vpop.f32.mrb[0].mxu0
      %v1461 = vadd.f32 %v794, %v1460
      %v1462 = vpop.f32.mrb[0].mxu0
      %v1463 = vadd.f32 %v798, %v1462
      %v1464 = vpop.f32.mrb[0].mxu0
      %v1465 = vadd.f32 %v794, %v1464
      %v1466 = vpop.f32.mrb[0].mxu0
      %v1467 = vadd.f32 %v798, %v1466
      %1468 = vmatprep.mubr.bf16.mxu0 %v663
      %1469 = vmatmul.mubr.bf16.gmra.mrb[0].mxu0 %v662
      %v1470 = vpop.f32.mrb[0].mxu0
      %v1471 = vadd.f32 %v794, %v1470
      %v1472 = vpop.f32.mrb[0].mxu0
      %v1473 = vadd.f32 %v798, %v1472
      %v1474 = vpop.f32.mrb[0].mxu0
      %v1475 = vadd.f32 %v794, %v1474
      %v1476 = vpop.f32.mrb[0].mxu0
      %v1477 = vadd.f32 %v798, %v1476
      %1478 = vmatprep.mubr.bf16.mxu0 %v665
      %1479 = vmatmul.mubr.bf16.gmra.mrb[0].mxu0 %v664
      %v1480 = vpop.f32.mrb[0].mxu0
      %v1481 = vadd.f32 %v794, %v1480
      %v1482 = vpop.f32.mrb[0].mxu0
      %v1483 = vadd.f32 %v798, %v1482
      %v1484 = vpop.f32.mrb[0].mxu0
      %v1485 = vadd.f32 %v794, %v1484
      %v1486 = vpop.f32.mrb[0].mxu0
      %v1487 = vadd.f32 %v798, %v1486
      %1488 = vmatprep.mubr.bf16.mxu0 %v667
      %1489 = vmatmul.mubr.bf16.gmra.mrb[0].mxu0 %v666
      %v1490 = vpop.f32.mrb[0].mxu0
      %v1491 = vadd.f32 %v794, %v1490
      %v1492 = vpop.f32.mrb[0].mxu0
      %v1493 = vadd.f32 %v798, %v1492
      %v1494 = vpop.f32.mrb[0].mxu0
      %v1495 = vadd.f32 %v794, %v1494
      %v1496 = vpop.f32.mrb[0].mxu0
      %v1497 = vadd.f32 %v798, %v1496
      %1498 = vmatprep.mubr.bf16.mxu0 %v669
      %1499 = vmatmul.mubr.bf16.gmra.mrb[0].mxu0 %v668
      %v1500 = vpop.f32.mrb[0].mxu0
      %v1501 = vadd.f32 %v794, %v1500
      %v1502 = vpop.f32.mrb[0].mxu0
      %v1503 = vadd.f32 %v798, %v1502
      %v1504 = vpop.f32.mrb[0].mxu0
      %v1505 = vadd.f32 %v794, %v1504
      %v1506 = vpop.f32.mrb[0].mxu0
      %v1507 = vadd.f32 %v798, %v1506
      %1508 = vmatprep.mubr.bf16.mxu0 %v671
      %1509 = vmatmul.mubr.bf16.gmra.mrb[0].mxu0 %v670
      %v1510 = vpop.f32.mrb[0].mxu0
      %v1511 = vadd.f32 %v794, %v1510
      %v1512 = vpop.f32.mrb[0].mxu0
      %v1513 = vadd.f32 %v798, %v1512
      %v1514 = vpop.f32.mrb[0].mxu0
      %v1515 = vadd.f32 %v794, %v1514
      %v1516 = vpop.f32.mrb[0].mxu0
      %v1517 = vadd.f32 %v798, %v1516
      %1518 = vmatprep.mubr.bf16.mxu0 %v673
      %1519 = vmatmul.mubr.bf16.gmra.mrb[0].mxu0 %v672
      %v1520 = vpop.f32.mrb[0].mxu0
      %v1521 = vadd.f32 %v794, %v1520
      %v1522 = vpop.f32.mrb[0].mxu0
      %v1523 = vadd.f32 %v798, %v1522
      %v1524 = vpop.f32.mrb[0].mxu0
      %v1525 = vadd.f32 %v794, %v1524
      %v1526 = vpop.f32.mrb[0].mxu0
      %v1527 = vadd.f32 %v798, %v1526
      %1528 = vmatprep.mubr.bf16.mxu0 %v675
      %1529 = vmatmul.mubr.bf16.gmra.mrb[0].mxu0 %v674
      %v1530 = vpop.f32.mrb[0].mxu0
      %v1531 = vadd.f32 %v794, %v1530
      %v1532 = vpop.f32.mrb[0].mxu0
      %v1533 = vadd.f32 %v798, %v1532
      %v1534 = vpop.f32.mrb[0].mxu0
      %v1535 = vadd.f32 %v794, %v1534
      %v1536 = vpop.f32.mrb[0].mxu0
      %v1537 = vadd.f32 %v798, %v1536
      %1538 = vmatprep.mubr.bf16.mxu0 %v677
      %1539 = vmatmul.mubr.bf16.gmra.mrb[0].mxu0 %v676
      %v1540 = vpop.f32.mrb[0].mxu0
      %v1541 = vadd.f32 %v794, %v1540
      %v1542 = vpop.f32.mrb[0].mxu0
      %v1543 = vadd.f32 %v798, %v1542
      %v1544 = vpop.f32.mrb[0].mxu0
      %v1545 = vadd.f32 %v794, %v1544
      %v1546 = vpop.f32.mrb[0].mxu0
      %v1547 = vadd.f32 %v798, %v1546
      %1548 = vmatprep.mubr.bf16.mxu0 %v679
      %1549 = vmatmul.mubr.bf16.gmra.mrb[0].mxu0 %v678
      %v1550 = vpop.f32.mrb[0].mxu0
      %v1551 = vadd.f32 %v794, %v1550
      %v1552 = vpop.f32.mrb[0].mxu0
      %v1553 = vadd.f32 %v798, %v1552
      %v1554 = vpop.f32.mrb[0].mxu0
      %v1555 = vadd.f32 %v794, %v1554
      %v1556 = vpop.f32.mrb[0].mxu0
      %v1557 = vadd.f32 %v798, %v1556
      %1558 = vdwg.mxu0
      %1559 = vmatprep.subr.bf16.mxu0 %v1106
      %1560 = vmatpush1.bf16.msra.mxu0 %v1105
      %1561 = vmatprep.subr.bf16.mxu0 %v1112
      %1562 = vmatpush1.bf16.msra.mxu0 %v1111
      %1563 = vmatprep.subr.bf16.mxu0 %v1118
      %1564 = vmatpush1.bf16.msra.mxu0 %v1117
      %1565 = vmatprep.subr.bf16.mxu0 %v1124
      %1566 = vmatpush1.bf16.msra.mxu0 %v1123
      %1567 = vmatprep.subr.bf16.mxu0 %v1130
      %1568 = vmatpush1.bf16.msra.mxu0 %v1129
      %1569 = vmatprep.subr.bf16.mxu0 %v1136
      %1570 = vmatpush1.bf16.msra.mxu0 %v1135
      %1571 = vmatprep.subr.bf16.mxu0 %v1142
      %1572 = vmatpush1.bf16.msra.mxu0 %v1141
      %1573 = vmatprep.subr.bf16.mxu0 %v1148
      %1574 = vmatpush1.bf16.msra.mxu0 %v1147
      %1575 = vmatprep.subr.bf16.mxu0 %v1154
      %1576 = vmatpush1.bf16.msra.mxu0 %v1153
      %1577 = vmatprep.subr.bf16.mxu0 %v1160
      %1578 = vmatpush1.bf16.msra.mxu0 %v1159
      %1579 = vmatprep.subr.bf16.mxu0 %v1166
      %1580 = vmatpush1.bf16.msra.mxu0 %v1165
      %1581 = vmatprep.subr.bf16.mxu0 %v1172
      %1582 = vmatpush1.bf16.msra.mxu0 %v1171
      %1583 = vmatprep.subr.bf16.mxu0 %v1178
      %1584 = vmatpush1.bf16.msra.mxu0 %v1177
      %1585 = vmatprep.subr.bf16.mxu0 %v1184
      %1586 = vmatpush1.bf16.msra.mxu0 %v1183
      %1587 = vmatprep.subr.bf16.mxu0 %v1190
      %1588 = vmatpush1.bf16.msra.mxu0 %v1189
      %1589 = vmatprep.subr.bf16.mxu0 %v1196
      %1590 = vmatpush1.bf16.msra.mxu0 %v1195
      %1591 = vmatprep.mubr.bf16.mxu0 %v661
      %1592 = vmatmul.mubr.bf16.gmra.mrb[0].mxu0 %v660
      %v1593 = vpop.f32.mrb[0].mxu0
      %v1594 = vadd.f32 %v802, %v1593
      %v1595 = vpop.f32.mrb[0].mxu0
      %v1596 = vadd.f32 %v806, %v1595
      %v1597 = vpop.f32.mrb[0].mxu0
      %v1598 = vadd.f32 %v802, %v1597
      %v1599 = vpop.f32.mrb[0].mxu0
      %v1600 = vadd.f32 %v806, %v1599
      %1601 = vmatprep.mubr.bf16.mxu0 %v663
      %1602 = vmatmul.mubr.bf16.gmra.mrb[0].mxu0 %v662
      %v1603 = vpop.f32.mrb[0].mxu0
      %v1604 = vadd.f32 %v802, %v1603
      %v1605 = vpop.f32.mrb[0].mxu0
      %v1606 = vadd.f32 %v806, %v1605
      %v1607 = vpop.f32.mrb[0].mxu0
      %v1608 = vadd.f32 %v802, %v1607
      %v1609 = vpop.f32.mrb[0].mxu0
      %v1610 = vadd.f32 %v806, %v1609
      %1611 = vmatprep.mubr.bf16.mxu0 %v665
      %1612 = vmatmul.mubr.bf16.gmra.mrb[0].mxu0 %v664
      %v1613 = vpop.f32.mrb[0].mxu0
      %v1614 = vadd.f32 %v802, %v1613
      %v1615 = vpop.f32.mrb[0].mxu0
      %v1616 = vadd.f32 %v806, %v1615
      %v1617 = vpop.f32.mrb[0].mxu0
      %v1618 = vadd.f32 %v802, %v1617
      %v1619 = vpop.f32.mrb[0].mxu0
      %v1620 = vadd.f32 %v806, %v1619
      %1621 = vmatprep.mubr.bf16.mxu0 %v667
      %1622 = vmatmul.mubr.bf16.gmra.mrb[0].mxu0 %v666
      %v1623 = vpop.f32.mrb[0].mxu0
      %v1624 = vadd.f32 %v802, %v1623
      %v1625 = vpop.f32.mrb[0].mxu0
      %v1626 = vadd.f32 %v806, %v1625
      %v1627 = vpop.f32.mrb[0].mxu0
      %v1628 = vadd.f32 %v802, %v1627
      %v1629 = vpop.f32.mrb[0].mxu0
      %v1630 = vadd.f32 %v806, %v1629
      %1631 = vmatprep.mubr.bf16.mxu0 %v669
      %1632 = vmatmul.mubr.bf16.gmra.mrb[0].mxu0 %v668
      %v1633 = vpop.f32.mrb[0].mxu0
      %v1634 = vadd.f32 %v802, %v1633
      %v1635 = vpop.f32.mrb[0].mxu0
      %v1636 = vadd.f32 %v806, %v1635
      %v1637 = vpop.f32.mrb[0].mxu0
      %v1638 = vadd.f32 %v802, %v1637
      %v1639 = vpop.f32.mrb[0].mxu0
      %v1640 = vadd.f32 %v806, %v1639
      %1641 = vmatprep.mubr.bf16.mxu0 %v671
      %1642 = vmatmul.mubr.bf16.gmra.mrb[0].mxu0 %v670
      %v1643 = vpop.f32.mrb[0].mxu0
      %v1644 = vadd.f32 %v802, %v1643
      %v1645 = vpop.f32.mrb[0].mxu0
      %v1646 = vadd.f32 %v806, %v1645
      %v1647 = vpop.f32.mrb[0].mxu0
      %v1648 = vadd.f32 %v802, %v1647
      %v1649 = vpop.f32.mrb[0].mxu0
      %v1650 = vadd.f32 %v806, %v1649
      %1651 = vmatprep.mubr.bf16.mxu0 %v673
      %1652 = vmatmul.mubr.bf16.gmra.mrb[0].mxu0 %v672
      %v1653 = vpop.f32.mrb[0].mxu0
      %v1654 = vadd.f32 %v802, %v1653
      %v1655 = vpop.f32.mrb[0].mxu0
      %v1656 = vadd.f32 %v806, %v1655
      %v1657 = vpop.f32.mrb[0].mxu0
      %v1658 = vadd.f32 %v802, %v1657
      %v1659 = vpop.f32.mrb[0].mxu0
      %v1660 = vadd.f32 %v806, %v1659
      %1661 = vmatprep.mubr.bf16.mxu0 %v675
      %1662 = vmatmul.mubr.bf16.gmra.mrb[0].mxu0 %v674
      %v1663 = vpop.f32.mrb[0].mxu0
      %v1664 = vadd.f32 %v802, %v1663
      %v1665 = vpop.f32.mrb[0].mxu0
      %v1666 = vadd.f32 %v806, %v1665
      %v1667 = vpop.f32.mrb[0].mxu0
      %v1668 = vadd.f32 %v802, %v1667
      %v1669 = vpop.f32.mrb[0].mxu0
      %v1670 = vadd.f32 %v806, %v1669
      %1671 = vmatprep.mubr.bf16.mxu0 %v677
      %1672 = vmatmul.mubr.bf16.gmra.mrb[0].mxu0 %v676
      %v1673 = vpop.f32.mrb[0].mxu0
      %v1674 = vadd.f32 %v802, %v1673
      %v1675 = vpop.f32.mrb[0].mxu0
      %v1676 = vadd.f32 %v806, %v1675
      %v1677 = vpop.f32.mrb[0].mxu0
      %v1678 = vadd.f32 %v802, %v1677
      %v1679 = vpop.f32.mrb[0].mxu0
      %v1680 = vadd.f32 %v806, %v1679
      %1681 = vmatprep.mubr.bf16.mxu0 %v679
      %1682 = vmatmul.mubr.bf16.gmra.mrb[0].mxu0 %v678
      %v1683 = vpop.f32.mrb[0].mxu0
      %v1684 = vadd.f32 %v802, %v1683
      %v1685 = vpop.f32.mrb[0].mxu0
      %v1686 = vadd.f32 %v806, %v1685
      %v1687 = vpop.f32.mrb[0].mxu0
      %v1688 = vadd.f32 %v802, %v1687
      %v1689 = vpop.f32.mrb[0].mxu0
      %v1690 = vadd.f32 %v806, %v1689
      %1691 = vdwg.mxu0
      %v1692 = vld [vmem:[%s4] sm:$0xff]
      %v1693 = vld [vmem:[%s4 + $0x8] sm:$0xff]
      %v1694 = vld [vmem:[%s4 + $0x10] sm:$0xff]
      %v1695 = vld [vmem:[%s4 + $0x18] sm:$0xff]
      %v1696 = vld [vmem:[%s4 + $0x20] sm:$0xff]
      %v1697 = vld [vmem:[%s4 + $0x28] sm:$0xff]
      %v1698 = vld [vmem:[%s4 + $0x30] sm:$0xff]
      %v1699 = vld [vmem:[%s4 + $0x38] sm:$0xff]
      %v1700 = vld [vmem:[%s4 + $0x40] sm:$0xff]
      %v1701 = vld [vmem:[%s4 + $0x48] sm:$0xff]
      %v1702 = vld [vmem:[%s4 + $0x50] sm:$0xff]
      %v1703 = vld [vmem:[%s4 + $0x58] sm:$0xff]
      %v1704 = vld [vmem:[%s4 + $0x60] sm:$0xff]
      %v1705 = vld [vmem:[%s4 + $0x68] sm:$0xff]
      %v1706 = vld [vmem:[%s4 + $0x70] sm:$0xff]
      %v1707 = vld [vmem:[%s4 + $0x78] sm:$0xff]
      %v1708 = vld [vmem:[%s4 + $0x80] sm:$0xff]
      %v1709 = vld [vmem:[%s4 + $0x88] sm:$0xff]
      %v1710 = vld [vmem:[%s4 + $0x90] sm:$0xff]
      %v1711 = vld [vmem:[%s4 + $0x98] sm:$0xff]
      %v1712 = vld [vmem:[%s4 + $0xa0] sm:$0xff]
      %v1713 = vld [vmem:[%s4 + $0xa8] sm:$0xff]
      %v1714 = vld [vmem:[%s4 + $0xb0] sm:$0xff]
      %v1715 = vld [vmem:[%s4 + $0xb8] sm:$0xff]
      %v1716 = vld [vmem:[%s4 + $0xc0] sm:$0xff]
      %v1717 = vld [vmem:[%s4 + $0xc8] sm:$0xff]
      %v1718 = vld [vmem:[%s4 + $0xd0] sm:$0xff]
      %v1719 = vld [vmem:[%s4 + $0xd8] sm:$0xff]
      %v1720 = vld [vmem:[%s4 + $0xe0] sm:$0xff]
      %v1721 = vld [vmem:[%s4 + $0xe8] sm:$0xff]
      %v1722 = vld [vmem:[%s4 + $0xf0] sm:$0xff]
      %v1723 = vld [vmem:[%s4 + $0xf8] sm:$0xff]
      %v1724 = vld [vmem:[%s4 + $0x100] sm:$0xff]
      %v1725 = vld [vmem:[%s4 + $0x108] sm:$0xff]
      %v1726 = vld [vmem:[%s4 + $0x110] sm:$0xff]
      %v1727 = vld [vmem:[%s4 + $0x118] sm:$0xff]
      %v1728 = vld [vmem:[%s4 + $0x120] sm:$0xff]
      %v1729 = vld [vmem:[%s4 + $0x128] sm:$0xff]
      %v1730 = vld [vmem:[%s4 + $0x130] sm:$0xff]
      %v1731 = vld [vmem:[%s4 + $0x138] sm:$0xff]
      %v1732 = vpack.c.bf16 %v1332, %v1328
      %v1733 = vpack.c.bf16 %v1342, %v1338
      %v1734 = vpack.c.bf16 %v1352, %v1348
      %v1735 = vpack.c.bf16 %v1362, %v1358
      %v1736 = vpack.c.bf16 %v1372, %v1368
      %v1737 = vpack.c.bf16 %v1382, %v1378
      %v1738 = vpack.c.bf16 %v1392, %v1388
      %v1739 = vpack.c.bf16 %v1402, %v1398
      %v1740 = vpack.c.bf16 %v1412, %v1408
      %v1741 = vpack.c.bf16 %v1422, %v1418
      %v1742 = vpack.c.bf16 %v1465, %v1461
      %v1743 = vpack.c.bf16 %v1475, %v1471
      %v1744 = vpack.c.bf16 %v1485, %v1481
      %v1745 = vpack.c.bf16 %v1495, %v1491
      %v1746 = vpack.c.bf16 %v1505, %v1501
      %v1747 = vpack.c.bf16 %v1515, %v1511
      %v1748 = vpack.c.bf16 %v1525, %v1521
      %v1749 = vpack.c.bf16 %v1535, %v1531
      %v1750 = vpack.c.bf16 %v1545, %v1541
      %v1751 = vpack.c.bf16 %v1555, %v1551
      %v1752 = vpack.c.bf16 %v1598, %v1594
      %v1753 = vpack.c.bf16 %v1608, %v1604
      %v1754 = vpack.c.bf16 %v1618, %v1614
      %v1755 = vpack.c.bf16 %v1628, %v1624
      %v1756 = vpack.c.bf16 %v1638, %v1634
      %v1757 = vpack.c.bf16 %v1648, %v1644
      %v1758 = vpack.c.bf16 %v1658, %v1654
      %v1759 = vpack.c.bf16 %v1668, %v1664
      %v1760 = vpack.c.bf16 %v1678, %v1674
      %v1761 = vpack.c.bf16 %v1688, %v1684
      %vm1762 = vcmask 261120
      %v1764 = vsel %vm1762, %v1732, 0
      %v1767 = vsel %vm1762, %v1733, 0
      %v1770 = vsel %vm1762, %v1734, 0
      %v1773 = vsel %vm1762, %v1735, 0
      %v1776 = vsel %vm1762, %v1736, 0
      %v1779 = vsel %vm1762, %v1737, 0
      %v1782 = vsel %vm1762, %v1738, 0
      %v1785 = vsel %vm1762, %v1739, 0
      %v1788 = vsel %vm1762, %v1740, 0
      %v1791 = vsel %vm1762, %v1741, 0
      %v1794 = vsel %vm1762, %v1742, 0
      %v1797 = vsel %vm1762, %v1743, 0
      %v1800 = vsel %vm1762, %v1744, 0
      %v1803 = vsel %vm1762, %v1745, 0
      %v1806 = vsel %vm1762, %v1746, 0
      %v1809 = vsel %vm1762, %v1747, 0
      %v1812 = vsel %vm1762, %v1748, 0
      %v1815 = vsel %vm1762, %v1749, 0
      %v1818 = vsel %vm1762, %v1750, 0
      %v1821 = vsel %vm1762, %v1751, 0
      %1823 = vmatprep.subr.bf16.mxu0 0
      %1824 = vmatpush1.bf16.xpose.msra.mxu0 %v1794
      %1825 = vmatprep.subr.bf16.mxu0 0
      %1826 = vmatpush1.bf16.xpose.msra.mxu0 %v1797
      %1827 = vmatprep.subr.bf16.mxu0 0
      %1828 = vmatpush1.bf16.xpose.msra.mxu0 %v1800
      %1829 = vmatprep.subr.bf16.mxu0 0
      %1830 = vmatpush1.bf16.xpose.msra.mxu0 %v1803
      %1831 = vmatprep.subr.bf16.mxu0 0
      %1832 = vmatpush1.bf16.xpose.msra.mxu0 %v1806
      %1833 = vmatprep.subr.bf16.mxu0 0
      %1834 = vmatpush1.bf16.xpose.msra.mxu0 %v1809
      %1835 = vmatprep.subr.bf16.mxu0 0
      %1836 = vmatpush1.bf16.xpose.msra.mxu0 %v1812
      %1837 = vmatprep.subr.bf16.mxu0 0
      %1838 = vmatpush1.bf16.xpose.msra.mxu0 %v1815
      %1839 = vmatprep.subr.bf16.mxu0 0
      %1840 = vmatpush1.bf16.xpose.msra.mxu0 %v1818
      %1841 = vmatprep.subr.bf16.mxu0 0
      %1842 = vmatpush1.bf16.xpose.msra.mxu0 %v1821
      %1843 = vmatprep.subr.bf16.mxu0 0
      %1844 = vmatpush1.bf16.xpose.msra.mxu0 0
      %1845 = vmatprep.subr.bf16.mxu0 0
      %1846 = vmatpush1.bf16.xpose.msra.mxu0 0
      %1847 = vmatprep.subr.bf16.mxu0 0
      %1848 = vmatpush1.bf16.xpose.msra.mxu0 0
      %1849 = vmatprep.subr.bf16.mxu0 0
      %1850 = vmatpush1.bf16.xpose.msra.mxu0 0
      %1851 = vmatprep.subr.bf16.mxu0 0
      %1852 = vmatpush1.bf16.xpose.msra.mxu0 0
      %1853 = vmatprep.subr.bf16.mxu0 0
      %1854 = vmatpush1.bf16.xpose.msra.mxu0 0
      %1855 = vmatprep.mubr.bf16.mxu0 0
      %1856 = vmatmul.mubr.bf16.gmra.mrb[0].mxu0 %v1764
      %v1857 = vpop.f32.mrb[0].mxu0
      %v1858 = vadd.f32 %v1692, %v1857
      %v1859 = vpop.f32.mrb[0].mxu0
      %v1860 = vadd.f32 %v1693, %v1859
      %v1861 = vpop.f32.mrb[0].mxu0
      %v1862 = vadd.f32 %v1694, %v1861
      %v1863 = vpop.f32.mrb[0].mxu0
      %v1864 = vadd.f32 %v1695, %v1863
      %1865 = vmatprep.mubr.bf16.mxu0 0
      %1866 = vmatmul.mubr.bf16.gmra.mrb[0].mxu0 %v1767
      %v1867 = vpop.f32.mrb[0].mxu0
      %v1868 = vadd.f32 %v1696, %v1867
      %v1869 = vpop.f32.mrb[0].mxu0
      %v1870 = vadd.f32 %v1697, %v1869
      %v1871 = vpop.f32.mrb[0].mxu0
      %v1872 = vadd.f32 %v1698, %v1871
      %v1873 = vpop.f32.mrb[0].mxu0
      %v1874 = vadd.f32 %v1699, %v1873
      %1875 = vmatprep.mubr.bf16.mxu0 0
      %1876 = vmatmul.mubr.bf16.gmra.mrb[0].mxu0 %v1770
      %v1877 = vpop.f32.mrb[0].mxu0
      %v1878 = vadd.f32 %v1700, %v1877
      %v1879 = vpop.f32.mrb[0].mxu0
      %v1880 = vadd.f32 %v1701, %v1879
      %v1881 = vpop.f32.mrb[0].mxu0
      %v1882 = vadd.f32 %v1702, %v1881
      %v1883 = vpop.f32.mrb[0].mxu0
      %v1884 = vadd.f32 %v1703, %v1883
      %1885 = vmatprep.mubr.bf16.mxu0 0
      %1886 = vmatmul.mubr.bf16.gmra.mrb[0].mxu0 %v1773
      %v1887 = vpop.f32.mrb[0].mxu0
      %v1888 = vadd.f32 %v1704, %v1887
      %v1889 = vpop.f32.mrb[0].mxu0
      %v1890 = vadd.f32 %v1705, %v1889
      %v1891 = vpop.f32.mrb[0].mxu0
      %v1892 = vadd.f32 %v1706, %v1891
      %v1893 = vpop.f32.mrb[0].mxu0
      %v1894 = vadd.f32 %v1707, %v1893
      %1895 = vmatprep.mubr.bf16.mxu0 0
      %1896 = vmatmul.mubr.bf16.gmra.mrb[0].mxu0 %v1776
      %v1897 = vpop.f32.mrb[0].mxu0
      %v1898 = vadd.f32 %v1708, %v1897
      %v1899 = vpop.f32.mrb[0].mxu0
      %v1900 = vadd.f32 %v1709, %v1899
      %v1901 = vpop.f32.mrb[0].mxu0
      %v1902 = vadd.f32 %v1710, %v1901
      %v1903 = vpop.f32.mrb[0].mxu0
      %v1904 = vadd.f32 %v1711, %v1903
      %1905 = vmatprep.mubr.bf16.mxu0 0
      %1906 = vmatmul.mubr.bf16.gmra.mrb[0].mxu0 %v1779
      %v1907 = vpop.f32.mrb[0].mxu0
      %v1908 = vadd.f32 %v1712, %v1907
      %v1909 = vpop.f32.mrb[0].mxu0
      %v1910 = vadd.f32 %v1713, %v1909
      %v1911 = vpop.f32.mrb[0].mxu0
      %v1912 = vadd.f32 %v1714, %v1911
      %v1913 = vpop.f32.mrb[0].mxu0
      %v1914 = vadd.f32 %v1715, %v1913
      %1915 = vmatprep.mubr.bf16.mxu0 0
      %1916 = vmatmul.mubr.bf16.gmra.mrb[0].mxu0 %v1782
      %v1917 = vpop.f32.mrb[0].mxu0
      %v1918 = vadd.f32 %v1716, %v1917
      %v1919 = vpop.f32.mrb[0].mxu0
      %v1920 = vadd.f32 %v1717, %v1919
      %v1921 = vpop.f32.mrb[0].mxu0
      %v1922 = vadd.f32 %v1718, %v1921
      %v1923 = vpop.f32.mrb[0].mxu0
      %v1924 = vadd.f32 %v1719, %v1923
      %1925 = vmatprep.mubr.bf16.mxu0 0
      %1926 = vmatmul.mubr.bf16.gmra.mrb[0].mxu0 %v1785
      %v1927 = vpop.f32.mrb[0].mxu0
      %v1928 = vadd.f32 %v1720, %v1927
      %v1929 = vpop.f32.mrb[0].mxu0
      %v1930 = vadd.f32 %v1721, %v1929
      %v1931 = vpop.f32.mrb[0].mxu0
      %v1932 = vadd.f32 %v1722, %v1931
      %v1933 = vpop.f32.mrb[0].mxu0
      %v1934 = vadd.f32 %v1723, %v1933
      %1935 = vmatprep.mubr.bf16.mxu0 0
      %1936 = vmatmul.mubr.bf16.gmra.mrb[0].mxu0 %v1788
      %v1937 = vpop.f32.mrb[0].mxu0
      %v1938 = vadd.f32 %v1724, %v1937
      %v1939 = vpop.f32.mrb[0].mxu0
      %v1940 = vadd.f32 %v1725, %v1939
      %v1941 = vpop.f32.mrb[0].mxu0
      %v1942 = vadd.f32 %v1726, %v1941
      %v1943 = vpop.f32.mrb[0].mxu0
      %v1944 = vadd.f32 %v1727, %v1943
      %1945 = vmatprep.mubr.bf16.mxu0 0
      %1946 = vmatmul.mubr.bf16.gmra.mrb[0].mxu0 %v1791
      %v1947 = vpop.f32.mrb[0].mxu0
      %v1948 = vadd.f32 %v1728, %v1947
      %v1949 = vpop.f32.mrb[0].mxu0
      %v1950 = vadd.f32 %v1729, %v1949
      %v1951 = vpop.f32.mrb[0].mxu0
      %v1952 = vadd.f32 %v1730, %v1951
      %v1953 = vpop.f32.mrb[0].mxu0
      %v1954 = vadd.f32 %v1731, %v1953
      %1955 = vdwg.mxu0
      %v1956 = vsel %vm1762, %v1860, -inf
      %v1957 = vmax.f32 %v1858, %v1956
      %1958 = vmax.xlane.f32.xlu0 %v1957
      %v1959 = vpop.xlane.xlu0 %1958
      %v1960 = vsel %vm1762, %v1864, -inf
      %v1961 = vmax.f32 %v1862, %v1960
      %1962 = vmax.xlane.f32.xlu0 %v1961
      %v1963 = vpop.xlane.xlu0 %1962
      %v1964 = vsel %vm1762, %v1870, -inf
      %v1965 = vmax.f32 %v1868, %v1964
      %1966 = vmax.xlane.f32.xlu0 %v1965
      %v1967 = vpop.xlane.xlu0 %1966
      %v1968 = vsel %vm1762, %v1874, -inf
      %v1969 = vmax.f32 %v1872, %v1968
      %1970 = vmax.xlane.f32.xlu0 %v1969
      %v1971 = vpop.xlane.xlu0 %1970
      %v1972 = vsel %vm1762, %v1880, -inf
      %v1973 = vmax.f32 %v1878, %v1972
      %1974 = vmax.xlane.f32.xlu0 %v1973
      %v1975 = vpop.xlane.xlu0 %1974
      %v1976 = vsel %vm1762, %v1884, -inf
      %v1977 = vmax.f32 %v1882, %v1976
      %1978 = vmax.xlane.f32.xlu0 %v1977
      %v1979 = vpop.xlane.xlu0 %1978
      %v1980 = vsel %vm1762, %v1890, -inf
      %v1981 = vmax.f32 %v1888, %v1980
      %1982 = vmax.xlane.f32.xlu0 %v1981
      %v1983 = vpop.xlane.xlu0 %1982
      %v1984 = vsel %vm1762, %v1894, -inf
      %v1985 = vmax.f32 %v1892, %v1984
      %1986 = vmax.xlane.f32.xlu0 %v1985
      %v1987 = vpop.xlane.xlu0 %1986
      %v1988 = vsel %vm1762, %v1900, -inf
      %v1989 = vmax.f32 %v1898, %v1988
      %1990 = vmax.xlane.f32.xlu0 %v1989
      %v1991 = vpop.xlane.xlu0 %1990
      %v1992 = vsel %vm1762, %v1904, -inf
      %v1993 = vmax.f32 %v1902, %v1992
      %1994 = vmax.xlane.f32.xlu0 %v1993
      %v1995 = vpop.xlane.xlu0 %1994
      %v1996 = vsel %vm1762, %v1910, -inf
      %v1997 = vmax.f32 %v1908, %v1996
      %1998 = vmax.xlane.f32.xlu0 %v1997
      %v1999 = vpop.xlane.xlu0 %1998
      %v2000 = vsel %vm1762, %v1914, -inf
      %v2001 = vmax.f32 %v1912, %v2000
      %2002 = vmax.xlane.f32.xlu0 %v2001
      %v2003 = vpop.xlane.xlu0 %2002
      %v2004 = vsel %vm1762, %v1920, -inf
      %v2005 = vmax.f32 %v1918, %v2004
      %2006 = vmax.xlane.f32.xlu0 %v2005
      %v2007 = vpop.xlane.xlu0 %2006
      %v2008 = vsel %vm1762, %v1924, -inf
      %v2009 = vmax.f32 %v1922, %v2008
      %2010 = vmax.xlane.f32.xlu0 %v2009
      %v2011 = vpop.xlane.xlu0 %2010
      %v2012 = vsel %vm1762, %v1930, -inf
      %v2013 = vmax.f32 %v1928, %v2012
      %2014 = vmax.xlane.f32.xlu0 %v2013
      %v2015 = vpop.xlane.xlu0 %2014
      %v2016 = vsel %vm1762, %v1934, -inf
      %v2017 = vmax.f32 %v1932, %v2016
      %2018 = vmax.xlane.f32.xlu0 %v2017
      %v2019 = vpop.xlane.xlu0 %2018
      %v2020 = vsel %vm1762, %v1940, -inf
      %v2021 = vmax.f32 %v1938, %v2020
      %2022 = vmax.xlane.f32.xlu0 %v2021
      %v2023 = vpop.xlane.xlu0 %2022
      %v2024 = vsel %vm1762, %v1944, -inf
      %v2025 = vmax.f32 %v1942, %v2024
      %2026 = vmax.xlane.f32.xlu0 %v2025
      %v2027 = vpop.xlane.xlu0 %2026
      %v2028 = vsel %vm1762, %v1950, -inf
      %v2029 = vmax.f32 %v1948, %v2028
      %2030 = vmax.xlane.f32.xlu0 %v2029
      %v2031 = vpop.xlane.xlu0 %2030
      %v2032 = vsel %vm1762, %v1954, -inf
      %v2033 = vmax.f32 %v1952, %v2032
      %2034 = vmax.xlane.f32.xlu0 %v2033
      %v2035 = vpop.xlane.xlu0 %2034
      %v2036 = vsub.f32 %v1858, %v1959
      %v2037 = vsub.f32 %v1860, %v1959
      %v2038 = vsub.f32 %v1862, %v1963
      %v2039 = vsub.f32 %v1864, %v1963
      %v2040 = vsub.f32 %v1868, %v1967
      %v2041 = vsub.f32 %v1870, %v1967
      %v2042 = vsub.f32 %v1872, %v1971
      %v2043 = vsub.f32 %v1874, %v1971
      %v2044 = vsub.f32 %v1878, %v1975
      %v2045 = vsub.f32 %v1880, %v1975
      %v2046 = vsub.f32 %v1882, %v1979
      %v2047 = vsub.f32 %v1884, %v1979
      %v2048 = vsub.f32 %v1888, %v1983
      %v2049 = vsub.f32 %v1890, %v1983
      %v2050 = vsub.f32 %v1892, %v1987
      %v2051 = vsub.f32 %v1894, %v1987
      %v2052 = vsub.f32 %v1898, %v1991
      %v2053 = vsub.f32 %v1900, %v1991
      %v2054 = vsub.f32 %v1902, %v1995
      %v2055 = vsub.f32 %v1904, %v1995
      %v2056 = vsub.f32 %v1908, %v1999
      %v2057 = vsub.f32 %v1910, %v1999
      %v2058 = vsub.f32 %v1912, %v2003
      %v2059 = vsub.f32 %v1914, %v2003
      %v2060 = vsub.f32 %v1918, %v2007
      %v2061 = vsub.f32 %v1920, %v2007
      %v2062 = vsub.f32 %v1922, %v2011
      %v2063 = vsub.f32 %v1924, %v2011
      %v2064 = vsub.f32 %v1928, %v2015
      %v2065 = vsub.f32 %v1930, %v2015
      %v2066 = vsub.f32 %v1932, %v2019
      %v2067 = vsub.f32 %v1934, %v2019
      %v2068 = vsub.f32 %v1938, %v2023
      %v2069 = vsub.f32 %v1940, %v2023
      %v2070 = vsub.f32 %v1942, %v2027
      %v2071 = vsub.f32 %v1944, %v2027
      %v2072 = vsub.f32 %v1948, %v2031
      %v2073 = vsub.f32 %v1950, %v2031
      %v2074 = vsub.f32 %v1952, %v2035
      %v2075 = vsub.f32 %v1954, %v2035
      %v2076 = vmul.f32 %v2036, 1.442695
      %v2077 = vpow.pop %v2076
      %v2078 = vmul.f32 %v2037, 1.442695
      %v2079 = vpow.pop %v2078
      %v2080 = vmul.f32 %v2038, 1.442695
      %v2081 = vpow.pop %v2080
      %v2082 = vmul.f32 %v2039, 1.442695
      %v2083 = vpow.pop %v2082
      %v2084 = vmul.f32 %v2040, 1.442695
      %v2085 = vpow.pop %v2084
      %v2086 = vmul.f32 %v2041, 1.442695
      %v2087 = vpow.pop %v2086
      %v2088 = vmul.f32 %v2042, 1.442695
      %v2089 = vpow.pop %v2088
      %v2090 = vmul.f32 %v2043, 1.442695
      %v2091 = vpow.pop %v2090
      %v2092 = vmul.f32 %v2044, 1.442695
      %v2093 = vpow.pop %v2092
      %v2094 = vmul.f32 %v2045, 1.442695
      %v2095 = vpow.pop %v2094
      %v2096 = vmul.f32 %v2046, 1.442695
      %v2097 = vpow.pop %v2096
      %v2098 = vmul.f32 %v2047, 1.442695
      %v2099 = vpow.pop %v2098
      %v2100 = vmul.f32 %v2048, 1.442695
      %v2101 = vpow.pop %v2100
      %v2102 = vmul.f32 %v2049, 1.442695
      %v2103 = vpow.pop %v2102
      %v2104 = vmul.f32 %v2050, 1.442695
      %v2105 = vpow.pop %v2104
      %v2106 = vmul.f32 %v2051, 1.442695
      %v2107 = vpow.pop %v2106
      %v2108 = vmul.f32 %v2052, 1.442695
      %v2109 = vpow.pop %v2108
      %v2110 = vmul.f32 %v2053, 1.442695
      %v2111 = vpow.pop %v2110
      %v2112 = vmul.f32 %v2054, 1.442695
      %v2113 = vpow.pop %v2112
      %v2114 = vmul.f32 %v2055, 1.442695
      %v2115 = vpow.pop %v2114
      %v2116 = vmul.f32 %v2056, 1.442695
      %v2117 = vpow.pop %v2116
      %v2118 = vmul.f32 %v2057, 1.442695
      %v2119 = vpow.pop %v2118
      %v2120 = vmul.f32 %v2058, 1.442695
      %v2121 = vpow.pop %v2120
      %v2122 = vmul.f32 %v2059, 1.442695
      %v2123 = vpow.pop %v2122
      %v2124 = vmul.f32 %v2060, 1.442695
      %v2125 = vpow.pop %v2124
      %v2126 = vmul.f32 %v2061, 1.442695
      %v2127 = vpow.pop %v2126
      %v2128 = vmul.f32 %v2062, 1.442695
      %v2129 = vpow.pop %v2128
      %v2130 = vmul.f32 %v2063, 1.442695
      %v2131 = vpow.pop %v2130
      %v2132 = vmul.f32 %v2064, 1.442695
      %v2133 = vpow.pop %v2132
      %v2134 = vmul.f32 %v2065, 1.442695
      %v2135 = vpow.pop %v2134
      %v2136 = vmul.f32 %v2066, 1.442695
      %v2137 = vpow.pop %v2136
      %v2138 = vmul.f32 %v2067, 1.442695
      %v2139 = vpow.pop %v2138
      %v2140 = vmul.f32 %v2068, 1.442695
      %v2141 = vpow.pop %v2140
      %v2142 = vmul.f32 %v2069, 1.442695
      %v2143 = vpow.pop %v2142
      %v2144 = vmul.f32 %v2070, 1.442695
      %v2145 = vpow.pop %v2144
      %v2146 = vmul.f32 %v2071, 1.442695
      %v2147 = vpow.pop %v2146
      %v2148 = vmul.f32 %v2072, 1.442695
      %v2149 = vpow.pop %v2148
      %v2150 = vmul.f32 %v2073, 1.442695
      %v2151 = vpow.pop %v2150
      %v2152 = vmul.f32 %v2074, 1.442695
      %v2153 = vpow.pop %v2152
      %v2154 = vmul.f32 %v2075, 1.442695
      %v2155 = vpow.pop %v2154
      %v2156 = vsel %vm1762, %v2079, 0.0
      %v2157 = vadd.f32 %v2077, %v2156
      %2158 = vadd.xlane.f32.xlu0 %v2157
      %v2159 = vpop.xlane.xlu0 %2158
      %v2160 = vsel %vm1762, %v2083, 0.0
      %v2161 = vadd.f32 %v2081, %v2160
      %2162 = vadd.xlane.f32.xlu0 %v2161
      %v2163 = vpop.xlane.xlu0 %2162
      %v2164 = vsel %vm1762, %v2087, 0.0
      %v2165 = vadd.f32 %v2085, %v2164
      %2166 = vadd.xlane.f32.xlu0 %v2165
      %v2167 = vpop.xlane.xlu0 %2166
      %v2168 = vsel %vm1762, %v2091, 0.0
      %v2169 = vadd.f32 %v2089, %v2168
      %2170 = vadd.xlane.f32.xlu0 %v2169
      %v2171 = vpop.xlane.xlu0 %2170
      %v2172 = vsel %vm1762, %v2095, 0.0
      %v2173 = vadd.f32 %v2093, %v2172
      %2174 = vadd.xlane.f32.xlu0 %v2173
      %v2175 = vpop.xlane.xlu0 %2174
      %v2176 = vsel %vm1762, %v2099, 0.0
      %v2177 = vadd.f32 %v2097, %v2176
      %2178 = vadd.xlane.f32.xlu0 %v2177
      %v2179 = vpop.xlane.xlu0 %2178
      %v2180 = vsel %vm1762, %v2103, 0.0
      %v2181 = vadd.f32 %v2101, %v2180
      %2182 = vadd.xlane.f32.xlu0 %v2181
      %v2183 = vpop.xlane.xlu0 %2182
      %v2184 = vsel %vm1762, %v2107, 0.0
      %v2185 = vadd.f32 %v2105, %v2184
      %2186 = vadd.xlane.f32.xlu0 %v2185
      %v2187 = vpop.xlane.xlu0 %2186
      %v2188 = vsel %vm1762, %v2111, 0.0
      %v2189 = vadd.f32 %v2109, %v2188
      %2190 = vadd.xlane.f32.xlu0 %v2189
      %v2191 = vpop.xlane.xlu0 %2190
      %v2192 = vsel %vm1762, %v2115, 0.0
      %v2193 = vadd.f32 %v2113, %v2192
      %2194 = vadd.xlane.f32.xlu0 %v2193
      %v2195 = vpop.xlane.xlu0 %2194
      %v2196 = vsel %vm1762, %v2119, 0.0
      %v2197 = vadd.f32 %v2117, %v2196
      %2198 = vadd.xlane.f32.xlu0 %v2197
      %v2199 = vpop.xlane.xlu0 %2198
      %v2200 = vsel %vm1762, %v2123, 0.0
      %v2201 = vadd.f32 %v2121, %v2200
      %2202 = vadd.xlane.f32.xlu0 %v2201
      %v2203 = vpop.xlane.xlu0 %2202
      %v2204 = vsel %vm1762, %v2127, 0.0
      %v2205 = vadd.f32 %v2125, %v2204
      %2206 = vadd.xlane.f32.xlu0 %v2205
      %v2207 = vpop.xlane.xlu0 %2206
      %v2208 = vsel %vm1762, %v2131, 0.0
      %v2209 = vadd.f32 %v2129, %v2208
      %2210 = vadd.xlane.f32.xlu0 %v2209
      %v2211 = vpop.xlane.xlu0 %2210
      %v2212 = vsel %vm1762, %v2135, 0.0
      %v2213 = vadd.f32 %v2133, %v2212
      %2214 = vadd.xlane.f32.xlu0 %v2213
      %v2215 = vpop.xlane.xlu0 %2214
      %v2216 = vsel %vm1762, %v2139, 0.0
      %v2217 = vadd.f32 %v2137, %v2216
      %2218 = vadd.xlane.f32.xlu0 %v2217
      %v2219 = vpop.xlane.xlu0 %2218
      %v2220 = vsel %vm1762, %v2143, 0.0
      %v2221 = vadd.f32 %v2141, %v2220
      %2222 = vadd.xlane.f32.xlu0 %v2221
      %v2223 = vpop.xlane.xlu0 %2222
      %v2224 = vsel %vm1762, %v2147, 0.0
      %v2225 = vadd.f32 %v2145, %v2224
      %2226 = vadd.xlane.f32.xlu0 %v2225
      %v2227 = vpop.xlane.xlu0 %2226
      %v2228 = vsel %vm1762, %v2151, 0.0
      %v2229 = vadd.f32 %v2149, %v2228
      %2230 = vadd.xlane.f32.xlu0 %v2229
      %v2231 = vpop.xlane.xlu0 %2230
      %v2232 = vsel %vm1762, %v2155, 0.0
      %v2233 = vadd.f32 %v2153, %v2232
      %2234 = vadd.xlane.f32.xlu0 %v2233
      %v2235 = vpop.xlane.xlu0 %2234
      %v2236 = vrcp.pop %v2159
      %v2237 = vrcp.pop %v2163
      %v2238 = vrcp.pop %v2167
      %v2239 = vrcp.pop %v2171
      %v2240 = vrcp.pop %v2175
      %v2241 = vrcp.pop %v2179
      %v2242 = vrcp.pop %v2183
      %v2243 = vrcp.pop %v2187
      %v2244 = vrcp.pop %v2191
      %v2245 = vrcp.pop %v2195
      %v2246 = vrcp.pop %v2199
      %v2247 = vrcp.pop %v2203
      %v2248 = vrcp.pop %v2207
      %v2249 = vrcp.pop %v2211
      %v2250 = vrcp.pop %v2215
      %v2251 = vrcp.pop %v2219
      %v2252 = vrcp.pop %v2223
      %v2253 = vrcp.pop %v2227
      %v2254 = vrcp.pop %v2231
      %v2255 = vrcp.pop %v2235
      %v2256 = vmul.f32 %v2077, %v2236
      %v2257 = vmul.f32 %v2079, %v2236
      %v2258 = vmul.f32 %v2081, %v2237
      %v2259 = vmul.f32 %v2083, %v2237
      %v2260 = vmul.f32 %v2085, %v2238
      %v2261 = vmul.f32 %v2087, %v2238
      %v2262 = vmul.f32 %v2089, %v2239
      %v2263 = vmul.f32 %v2091, %v2239
      %v2264 = vmul.f32 %v2093, %v2240
      %v2265 = vmul.f32 %v2095, %v2240
      %v2266 = vmul.f32 %v2097, %v2241
      %v2267 = vmul.f32 %v2099, %v2241
      %v2268 = vmul.f32 %v2101, %v2242
      %v2269 = vmul.f32 %v2103, %v2242
      %v2270 = vmul.f32 %v2105, %v2243
      %v2271 = vmul.f32 %v2107, %v2243
      %v2272 = vmul.f32 %v2109, %v2244
      %v2273 = vmul.f32 %v2111, %v2244
      %v2274 = vmul.f32 %v2113, %v2245
      %v2275 = vmul.f32 %v2115, %v2245
      %v2276 = vmul.f32 %v2117, %v2246
      %v2277 = vmul.f32 %v2119, %v2246
      %v2278 = vmul.f32 %v2121, %v2247
      %v2279 = vmul.f32 %v2123, %v2247
      %v2280 = vmul.f32 %v2125, %v2248
      %v2281 = vmul.f32 %v2127, %v2248
      %v2282 = vmul.f32 %v2129, %v2249
      %v2283 = vmul.f32 %v2131, %v2249
      %v2284 = vmul.f32 %v2133, %v2250
      %v2285 = vmul.f32 %v2135, %v2250
      %v2286 = vmul.f32 %v2137, %v2251
      %v2287 = vmul.f32 %v2139, %v2251
      %v2288 = vmul.f32 %v2141, %v2252
      %v2289 = vmul.f32 %v2143, %v2252
      %v2290 = vmul.f32 %v2145, %v2253
      %v2291 = vmul.f32 %v2147, %v2253
      %v2292 = vmul.f32 %v2149, %v2254
      %v2293 = vmul.f32 %v2151, %v2254
      %v2294 = vmul.f32 %v2153, %v2255
      %v2295 = vmul.f32 %v2155, %v2255
      %v2296 = vpack.c.bf16 %v2258, %v2256
      %v2297 = vpack.c.bf16 %v2259, %v2257
      %v2298 = vpack.c.bf16 %v2262, %v2260
      %v2299 = vpack.c.bf16 %v2263, %v2261
      %v2300 = vpack.c.bf16 %v2266, %v2264
      %v2301 = vpack.c.bf16 %v2267, %v2265
      %v2302 = vpack.c.bf16 %v2270, %v2268
      %v2303 = vpack.c.bf16 %v2271, %v2269
      %v2304 = vpack.c.bf16 %v2274, %v2272
      %v2305 = vpack.c.bf16 %v2275, %v2273
      %v2306 = vpack.c.bf16 %v2278, %v2276
      %v2307 = vpack.c.bf16 %v2279, %v2277
      %v2308 = vpack.c.bf16 %v2282, %v2280
      %v2309 = vpack.c.bf16 %v2283, %v2281
      %v2310 = vpack.c.bf16 %v2286, %v2284
      %v2311 = vpack.c.bf16 %v2287, %v2285
      %v2312 = vpack.c.bf16 %v2290, %v2288
      %v2313 = vpack.c.bf16 %v2291, %v2289
      %v2314 = vpack.c.bf16 %v2294, %v2292
      %v2315 = vpack.c.bf16 %v2295, %v2293
      %v2317 = vsel %vm1762, %v2297, 0
      %v2320 = vsel %vm1762, %v2299, 0
      %v2323 = vsel %vm1762, %v2301, 0
      %v2326 = vsel %vm1762, %v2303, 0
      %v2329 = vsel %vm1762, %v2305, 0
      %v2332 = vsel %vm1762, %v2307, 0
      %v2335 = vsel %vm1762, %v2309, 0
      %v2338 = vsel %vm1762, %v2311, 0
      %v2341 = vsel %vm1762, %v2313, 0
      %v2344 = vsel %vm1762, %v2315, 0
      %2346 = vmatprep.subr.bf16.mxu0 0
      %2347 = vmatpush1.bf16.msra.mxu0 %v1752
      %2348 = vmatprep.subr.bf16.mxu0 0
      %2349 = vmatpush1.bf16.msra.mxu0 %v1753
      %2350 = vmatprep.subr.bf16.mxu0 0
      %2351 = vmatpush1.bf16.msra.mxu0 %v1754
      %2352 = vmatprep.subr.bf16.mxu0 0
      %2353 = vmatpush1.bf16.msra.mxu0 %v1755
      %2354 = vmatprep.subr.bf16.mxu0 0
      %2355 = vmatpush1.bf16.msra.mxu0 %v1756
      %2356 = vmatprep.subr.bf16.mxu0 0
      %2357 = vmatpush1.bf16.msra.mxu0 %v1757
      %2358 = vmatprep.subr.bf16.mxu0 0
      %2359 = vmatpush1.bf16.msra.mxu0 %v1758
      %2360 = vmatprep.subr.bf16.mxu0 0
      %2361 = vmatpush1.bf16.msra.mxu0 %v1759
      %2362 = vmatprep.subr.bf16.mxu0 0
      %2363 = vmatpush1.bf16.msra.mxu0 %v1760
      %2364 = vmatprep.subr.bf16.mxu0 0
      %2365 = vmatpush1.bf16.msra.mxu0 %v1761
      %2366 = vmatprep.subr.bf16.mxu0 0
      %2367 = vmatpush1.bf16.msra.mxu0 0
      %2368 = vmatprep.subr.bf16.mxu0 0
      %2369 = vmatpush1.bf16.msra.mxu0 0
      %2370 = vmatprep.subr.bf16.mxu0 0
      %2371 = vmatpush1.bf16.msra.mxu0 0
      %2372 = vmatprep.subr.bf16.mxu0 0
      %2373 = vmatpush1.bf16.msra.mxu0 0
      %2374 = vmatprep.subr.bf16.mxu0 0
      %2375 = vmatpush1.bf16.msra.mxu0 0
      %2376 = vmatprep.subr.bf16.mxu0 0
      %2377 = vmatpush1.bf16.msra.mxu0 0
      %2378 = vmatprep.mubr.bf16.mxu0 %v2317
      %2379 = vmatmul.mubr.bf16.gmra.mrb[0].mxu0 %v2296
      %v2380 = vpop.f32.mrb[0].mxu0
      %v2381 = vadd.f32 0.0, %v2380
      %v2382 = vpop.f32.mrb[0].mxu0
      %v2383 = vpop.f32.mrb[0].mxu0
      %v2384 = vadd.f32 0.0, %v2383
      %v2385 = vpop.f32.mrb[0].mxu0
      %2386 = vmatprep.mubr.bf16.mxu0 %v2320
      %2387 = vmatmul.mubr.bf16.gmra.mrb[0].mxu0 %v2298
      %v2388 = vpop.f32.mrb[0].mxu0
      %v2389 = vadd.f32 0.0, %v2388
      %v2390 = vpop.f32.mrb[0].mxu0
      %v2391 = vpop.f32.mrb[0].mxu0
      %v2392 = vadd.f32 0.0, %v2391
      %v2393 = vpop.f32.mrb[0].mxu0
      %2394 = vmatprep.mubr.bf16.mxu0 %v2323
      %2395 = vmatmul.mubr.bf16.gmra.mrb[0].mxu0 %v2300
      %v2396 = vpop.f32.mrb[0].mxu0
      %v2397 = vadd.f32 0.0, %v2396
      %v2398 = vpop.f32.mrb[0].mxu0
      %v2399 = vpop.f32.mrb[0].mxu0
      %v2400 = vadd.f32 0.0, %v2399
      %v2401 = vpop.f32.mrb[0].mxu0
      %2402 = vmatprep.mubr.bf16.mxu0 %v2326
      %2403 = vmatmul.mubr.bf16.gmra.mrb[0].mxu0 %v2302
      %v2404 = vpop.f32.mrb[0].mxu0
      %v2405 = vadd.f32 0.0, %v2404
      %v2406 = vpop.f32.mrb[0].mxu0
      %v2407 = vpop.f32.mrb[0].mxu0
      %v2408 = vadd.f32 0.0, %v2407
      %v2409 = vpop.f32.mrb[0].mxu0
      %2410 = vmatprep.mubr.bf16.mxu0 %v2329
      %2411 = vmatmul.mubr.bf16.gmra.mrb[0].mxu0 %v2304
      %v2412 = vpop.f32.mrb[0].mxu0
      %v2413 = vadd.f32 0.0, %v2412
      %v2414 = vpop.f32.mrb[0].mxu0
      %v2415 = vpop.f32.mrb[0].mxu0
      %v2416 = vadd.f32 0.0, %v2415
      %v2417 = vpop.f32.mrb[0].mxu0
      %2418 = vmatprep.mubr.bf16.mxu0 %v2332
      %2419 = vmatmul.mubr.bf16.gmra.mrb[0].mxu0 %v2306
      %v2420 = vpop.f32.mrb[0].mxu0
      %v2421 = vadd.f32 0.0, %v2420
      %v2422 = vpop.f32.mrb[0].mxu0
      %v2423 = vpop.f32.mrb[0].mxu0
      %v2424 = vadd.f32 0.0, %v2423
      %v2425 = vpop.f32.mrb[0].mxu0
      %2426 = vmatprep.mubr.bf16.mxu0 %v2335
      %2427 = vmatmul.mubr.bf16.gmra.mrb[0].mxu0 %v2308
      %v2428 = vpop.f32.mrb[0].mxu0
      %v2429 = vadd.f32 0.0, %v2428
      %v2430 = vpop.f32.mrb[0].mxu0
      %v2431 = vpop.f32.mrb[0].mxu0
      %v2432 = vadd.f32 0.0, %v2431
      %v2433 = vpop.f32.mrb[0].mxu0
      %2434 = vmatprep.mubr.bf16.mxu0 %v2338
      %2435 = vmatmul.mubr.bf16.gmra.mrb[0].mxu0 %v2310
      %v2436 = vpop.f32.mrb[0].mxu0
      %v2437 = vadd.f32 0.0, %v2436
      %v2438 = vpop.f32.mrb[0].mxu0
      %v2439 = vpop.f32.mrb[0].mxu0
      %v2440 = vadd.f32 0.0, %v2439
      %v2441 = vpop.f32.mrb[0].mxu0
      %2442 = vmatprep.mubr.bf16.mxu0 %v2341
      %2443 = vmatmul.mubr.bf16.gmra.mrb[0].mxu0 %v2312
      %v2444 = vpop.f32.mrb[0].mxu0
      %v2445 = vadd.f32 0.0, %v2444
      %v2446 = vpop.f32.mrb[0].mxu0
      %v2447 = vpop.f32.mrb[0].mxu0
      %v2448 = vadd.f32 0.0, %v2447
      %v2449 = vpop.f32.mrb[0].mxu0
      %2450 = vmatprep.mubr.bf16.mxu0 %v2344
      %2451 = vmatmul.mubr.bf16.gmra.mrb[0].mxu0 %v2314
      %v2452 = vpop.f32.mrb[0].mxu0
      %v2453 = vadd.f32 0.0, %v2452
      %v2454 = vpop.f32.mrb[0].mxu0
      %v2455 = vpop.f32.mrb[0].mxu0
      %v2456 = vadd.f32 0.0, %v2455
      %v2457 = vpop.f32.mrb[0].mxu0
      %2458 = vdwg.mxu0
      %v2459 = vpack.c.bf16 %v2384, %v2381
      %v2460 = vpack.c.bf16 %v2392, %v2389
      %v2461 = vpack.c.bf16 %v2400, %v2397
      %v2462 = vpack.c.bf16 %v2408, %v2405
      %v2463 = vpack.c.bf16 %v2416, %v2413
      %v2464 = vpack.c.bf16 %v2424, %v2421
      %v2465 = vpack.c.bf16 %v2432, %v2429
      %v2466 = vpack.c.bf16 %v2440, %v2437
      %v2467 = vpack.c.bf16 %v2448, %v2445
      %v2468 = vpack.c.bf16 %v2456, %v2453
      %2479 = vrot.lane.b32.xlu0 %v1732, 96
      %v2480 = vpop.permute.xlu0 %2479
      %2481 = vrot.lane.b32.xlu0 %v1733, 96
      %v2482 = vpop.permute.xlu0 %2481
      %2483 = vrot.lane.b32.xlu0 %v1734, 96
      %v2484 = vpop.permute.xlu0 %2483
      %2485 = vrot.lane.b32.xlu0 %v1735, 96
      %v2486 = vpop.permute.xlu0 %2485
      %2487 = vrot.lane.b32.xlu0 %v1736, 96
      %v2488 = vpop.permute.xlu0 %2487
      %2489 = vrot.lane.b32.xlu0 %v1737, 96
      %v2490 = vpop.permute.xlu0 %2489
      %2491 = vrot.lane.b32.xlu0 %v1738, 96
      %v2492 = vpop.permute.xlu0 %2491
      %2493 = vrot.lane.b32.xlu0 %v1739, 96
      %v2494 = vpop.permute.xlu0 %2493
      %2495 = vrot.lane.b32.xlu0 %v1740, 96
      %v2496 = vpop.permute.xlu0 %2495
      %2497 = vrot.lane.b32.xlu0 %v1741, 96
      %v2498 = vpop.permute.xlu0 %2497
      %2509 = vrot.lane.b32.xlu0 %v1742, 96
      %v2510 = vpop.permute.xlu0 %2509
      %2511 = vrot.lane.b32.xlu0 %v1743, 96
      %v2512 = vpop.permute.xlu0 %2511
      %2513 = vrot.lane.b32.xlu0 %v1744, 96
      %v2514 = vpop.permute.xlu0 %2513
      %2515 = vrot.lane.b32.xlu0 %v1745, 96
      %v2516 = vpop.permute.xlu0 %2515
      %2517 = vrot.lane.b32.xlu0 %v1746, 96
      %v2518 = vpop.permute.xlu0 %2517
      %2519 = vrot.lane.b32.xlu0 %v1747, 96
      %v2520 = vpop.permute.xlu0 %2519
      %2521 = vrot.lane.b32.xlu0 %v1748, 96
      %v2522 = vpop.permute.xlu0 %2521
      %2523 = vrot.lane.b32.xlu0 %v1749, 96
      %v2524 = vpop.permute.xlu0 %2523
      %2525 = vrot.lane.b32.xlu0 %v1750, 96
      %v2526 = vpop.permute.xlu0 %2525
      %2527 = vrot.lane.b32.xlu0 %v1751, 96
      %v2528 = vpop.permute.xlu0 %2527
      %v2530 = vsel %vm1762, %v2480, 0
      %v2533 = vsel %vm1762, %v2482, 0
      %v2536 = vsel %vm1762, %v2484, 0
      %v2539 = vsel %vm1762, %v2486, 0
      %v2542 = vsel %vm1762, %v2488, 0
      %v2545 = vsel %vm1762, %v2490, 0
      %v2548 = vsel %vm1762, %v2492, 0
      %v2551 = vsel %vm1762, %v2494, 0
      %v2554 = vsel %vm1762, %v2496, 0
      %v2557 = vsel %vm1762, %v2498, 0
      %v2560 = vsel %vm1762, %v2510, 0
      %v2563 = vsel %vm1762, %v2512, 0
      %v2566 = vsel %vm1762, %v2514, 0
      %v2569 = vsel %vm1762, %v2516, 0
      %v2572 = vsel %vm1762, %v2518, 0
      %v2575 = vsel %vm1762, %v2520, 0
      %v2578 = vsel %vm1762, %v2522, 0
      %v2581 = vsel %vm1762, %v2524, 0
      %v2584 = vsel %vm1762, %v2526, 0
      %v2587 = vsel %vm1762, %v2528, 0
      %2589 = vmatprep.subr.bf16.mxu0 0
      %2590 = vmatpush1.bf16.xpose.msra.mxu0 %v2560
      %2591 = vmatprep.subr.bf16.mxu0 0
      %2592 = vmatpush1.bf16.xpose.msra.mxu0 %v2563
      %2593 = vmatprep.subr.bf16.mxu0 0
      %2594 = vmatpush1.bf16.xpose.msra.mxu0 %v2566
      %2595 = vmatprep.subr.bf16.mxu0 0
      %2596 = vmatpush1.bf16.xpose.msra.mxu0 %v2569
      %2597 = vmatprep.subr.bf16.mxu0 0
      %2598 = vmatpush1.bf16.xpose.msra.mxu0 %v2572
      %2599 = vmatprep.subr.bf16.mxu0 0
      %2600 = vmatpush1.bf16.xpose.msra.mxu0 %v2575
      %2601 = vmatprep.subr.bf16.mxu0 0
      %2602 = vmatpush1.bf16.xpose.msra.mxu0 %v2578
      %2603 = vmatprep.subr.bf16.mxu0 0
      %2604 = vmatpush1.bf16.xpose.msra.mxu0 %v2581
      %2605 = vmatprep.subr.bf16.mxu0 0
      %2606 = vmatpush1.bf16.xpose.msra.mxu0 %v2584
      %2607 = vmatprep.subr.bf16.mxu0 0
      %2608 = vmatpush1.bf16.xpose.msra.mxu0 %v2587
      %2609 = vmatprep.subr.bf16.mxu0 0
      %2610 = vmatpush1.bf16.xpose.msra.mxu0 0
      %2611 = vmatprep.subr.bf16.mxu0 0
      %2612 = vmatpush1.bf16.xpose.msra.mxu0 0
      %2613 = vmatprep.subr.bf16.mxu0 0
      %2614 = vmatpush1.bf16.xpose.msra.mxu0 0
      %2615 = vmatprep.subr.bf16.mxu0 0
      %2616 = vmatpush1.bf16.xpose.msra.mxu0 0
      %2617 = vmatprep.subr.bf16.mxu0 0
      %2618 = vmatpush1.bf16.xpose.msra.mxu0 0
      %2619 = vmatprep.subr.bf16.mxu0 0
      %2620 = vmatpush1.bf16.xpose.msra.mxu0 0
      %2621 = vmatprep.mubr.bf16.mxu0 0
      %2622 = vmatmul.mubr.bf16.gmra.mrb[0].mxu0 %v2530
      %v2623 = vpop.f32.mrb[0].mxu0
      %v2624 = vadd.f32 %v1692, %v2623
      %v2625 = vpop.f32.mrb[0].mxu0
      %v2626 = vadd.f32 %v1693, %v2625
      %v2627 = vpop.f32.mrb[0].mxu0
      %v2628 = vadd.f32 %v1694, %v2627
      %v2629 = vpop.f32.mrb[0].mxu0
      %v2630 = vadd.f32 %v1695, %v2629
      %2631 = vmatprep.mubr.bf16.mxu0 0
      %2632 = vmatmul.mubr.bf16.gmra.mrb[0].mxu0 %v2533
      %v2633 = vpop.f32.mrb[0].mxu0
      %v2634 = vadd.f32 %v1696, %v2633
      %v2635 = vpop.f32.mrb[0].mxu0
      %v2636 = vadd.f32 %v1697, %v2635
      %v2637 = vpop.f32.mrb[0].mxu0
      %v2638 = vadd.f32 %v1698, %v2637
      %v2639 = vpop.f32.mrb[0].mxu0
      %v2640 = vadd.f32 %v1699, %v2639
      %2641 = vmatprep.mubr.bf16.mxu0 0
      %2642 = vmatmul.mubr.bf16.gmra.mrb[0].mxu0 %v2536
      %v2643 = vpop.f32.mrb[0].mxu0
      %v2644 = vadd.f32 %v1700, %v2643
      %v2645 = vpop.f32.mrb[0].mxu0
      %v2646 = vadd.f32 %v1701, %v2645
      %v2647 = vpop.f32.mrb[0].mxu0
      %v2648 = vadd.f32 %v1702, %v2647
      %v2649 = vpop.f32.mrb[0].mxu0
      %v2650 = vadd.f32 %v1703, %v2649
      %2651 = vmatprep.mubr.bf16.mxu0 0
      %2652 = vmatmul.mubr.bf16.gmra.mrb[0].mxu0 %v2539
      %v2653 = vpop.f32.mrb[0].mxu0
      %v2654 = vadd.f32 %v1704, %v2653
      %v2655 = vpop.f32.mrb[0].mxu0
      %v2656 = vadd.f32 %v1705, %v2655
      %v2657 = vpop.f32.mrb[0].mxu0
      %v2658 = vadd.f32 %v1706, %v2657
      %v2659 = vpop.f32.mrb[0].mxu0
      %v2660 = vadd.f32 %v1707, %v2659
      %2661 = vmatprep.mubr.bf16.mxu0 0
      %2662 = vmatmul.mubr.bf16.gmra.mrb[0].mxu0 %v2542
      %v2663 = vpop.f32.mrb[0].mxu0
      %v2664 = vadd.f32 %v1708, %v2663
      %v2665 = vpop.f32.mrb[0].mxu0
      %v2666 = vadd.f32 %v1709, %v2665
      %v2667 = vpop.f32.mrb[0].mxu0
      %v2668 = vadd.f32 %v1710, %v2667
      %v2669 = vpop.f32.mrb[0].mxu0
      %v2670 = vadd.f32 %v1711, %v2669
      %2671 = vmatprep.mubr.bf16.mxu0 0
      %2672 = vmatmul.mubr.bf16.gmra.mrb[0].mxu0 %v2545
      %v2673 = vpop.f32.mrb[0].mxu0
      %v2674 = vadd.f32 %v1712, %v2673
      %v2675 = vpop.f32.mrb[0].mxu0
      %v2676 = vadd.f32 %v1713, %v2675
      %v2677 = vpop.f32.mrb[0].mxu0
      %v2678 = vadd.f32 %v1714, %v2677
      %v2679 = vpop.f32.mrb[0].mxu0
      %v2680 = vadd.f32 %v1715, %v2679
      %2681 = vmatprep.mubr.bf16.mxu0 0
      %2682 = vmatmul.mubr.bf16.gmra.mrb[0].mxu0 %v2548
      %v2683 = vpop.f32.mrb[0].mxu0
      %v2684 = vadd.f32 %v1716, %v2683
      %v2685 = vpop.f32.mrb[0].mxu0
      %v2686 = vadd.f32 %v1717, %v2685
      %v2687 = vpop.f32.mrb[0].mxu0
      %v2688 = vadd.f32 %v1718, %v2687
      %v2689 = vpop.f32.mrb[0].mxu0
      %v2690 = vadd.f32 %v1719, %v2689
      %2691 = vmatprep.mubr.bf16.mxu0 0
      %2692 = vmatmul.mubr.bf16.gmra.mrb[0].mxu0 %v2551
      %v2693 = vpop.f32.mrb[0].mxu0
      %v2694 = vadd.f32 %v1720, %v2693
      %v2695 = vpop.f32.mrb[0].mxu0
      %v2696 = vadd.f32 %v1721, %v2695
      %v2697 = vpop.f32.mrb[0].mxu0
      %v2698 = vadd.f32 %v1722, %v2697
      %v2699 = vpop.f32.mrb[0].mxu0
      %v2700 = vadd.f32 %v1723, %v2699
      %2701 = vmatprep.mubr.bf16.mxu0 0
      %2702 = vmatmul.mubr.bf16.gmra.mrb[0].mxu0 %v2554
      %v2703 = vpop.f32.mrb[0].mxu0
      %v2704 = vadd.f32 %v1724, %v2703
      %v2705 = vpop.f32.mrb[0].mxu0
      %v2706 = vadd.f32 %v1725, %v2705
      %v2707 = vpop.f32.mrb[0].mxu0
      %v2708 = vadd.f32 %v1726, %v2707
      %v2709 = vpop.f32.mrb[0].mxu0
      %v2710 = vadd.f32 %v1727, %v2709
      %2711 = vmatprep.mubr.bf16.mxu0 0
      %2712 = vmatmul.mubr.bf16.gmra.mrb[0].mxu0 %v2557
      %v2713 = vpop.f32.mrb[0].mxu0
      %v2714 = vadd.f32 %v1728, %v2713
      %v2715 = vpop.f32.mrb[0].mxu0
      %v2716 = vadd.f32 %v1729, %v2715
      %v2717 = vpop.f32.mrb[0].mxu0
      %v2718 = vadd.f32 %v1730, %v2717
      %v2719 = vpop.f32.mrb[0].mxu0
      %v2720 = vadd.f32 %v1731, %v2719
      %2721 = vdwg.mxu0
      %v2722 = vsel %vm1762, %v2626, -inf
      %v2723 = vmax.f32 %v2624, %v2722
      %2724 = vmax.xlane.f32.xlu0 %v2723
      %v2725 = vpop.xlane.xlu0 %2724
      %v2726 = vsel %vm1762, %v2630, -inf
      %v2727 = vmax.f32 %v2628, %v2726
      %2728 = vmax.xlane.f32.xlu0 %v2727
      %v2729 = vpop.xlane.xlu0 %2728
      %v2730 = vsel %vm1762, %v2636, -inf
      %v2731 = vmax.f32 %v2634, %v2730
      %2732 = vmax.xlane.f32.xlu0 %v2731
      %v2733 = vpop.xlane.xlu0 %2732
      %v2734 = vsel %vm1762, %v2640, -inf
      %v2735 = vmax.f32 %v2638, %v2734
      %2736 = vmax.xlane.f32.xlu0 %v2735
      %v2737 = vpop.xlane.xlu0 %2736
      %v2738 = vsel %vm1762, %v2646, -inf
      %v2739 = vmax.f32 %v2644, %v2738
      %2740 = vmax.xlane.f32.xlu0 %v2739
      %v2741 = vpop.xlane.xlu0 %2740
      %v2742 = vsel %vm1762, %v2650, -inf
      %v2743 = vmax.f32 %v2648, %v2742
      %2744 = vmax.xlane.f32.xlu0 %v2743
      %v2745 = vpop.xlane.xlu0 %2744
      %v2746 = vsel %vm1762, %v2656, -inf
      %v2747 = vmax.f32 %v2654, %v2746
      %2748 = vmax.xlane.f32.xlu0 %v2747
      %v2749 = vpop.xlane.xlu0 %2748
      %v2750 = vsel %vm1762, %v2660, -inf
      %v2751 = vmax.f32 %v2658, %v2750
      %2752 = vmax.xlane.f32.xlu0 %v2751
      %v2753 = vpop.xlane.xlu0 %2752
      %v2754 = vsel %vm1762, %v2666, -inf
      %v2755 = vmax.f32 %v2664, %v2754
      %2756 = vmax.xlane.f32.xlu0 %v2755
      %v2757 = vpop.xlane.xlu0 %2756
      %v2758 = vsel %vm1762, %v2670, -inf
      %v2759 = vmax.f32 %v2668, %v2758
      %2760 = vmax.xlane.f32.xlu0 %v2759
      %v2761 = vpop.xlane.xlu0 %2760
      %v2762 = vsel %vm1762, %v2676, -inf
      %v2763 = vmax.f32 %v2674, %v2762
      %2764 = vmax.xlane.f32.xlu0 %v2763
      %v2765 = vpop.xlane.xlu0 %2764
      %v2766 = vsel %vm1762, %v2680, -inf
      %v2767 = vmax.f32 %v2678, %v2766
      %2768 = vmax.xlane.f32.xlu0 %v2767
      %v2769 = vpop.xlane.xlu0 %2768
      %v2770 = vsel %vm1762, %v2686, -inf
      %v2771 = vmax.f32 %v2684, %v2770
      %2772 = vmax.xlane.f32.xlu0 %v2771
      %v2773 = vpop.xlane.xlu0 %2772
      %v2774 = vsel %vm1762, %v2690, -inf
      %v2775 = vmax.f32 %v2688, %v2774
      %2776 = vmax.xlane.f32.xlu0 %v2775
      %v2777 = vpop.xlane.xlu0 %2776
      %v2778 = vsel %vm1762, %v2696, -inf
      %v2779 = vmax.f32 %v2694, %v2778
      %2780 = vmax.xlane.f32.xlu0 %v2779
      %v2781 = vpop.xlane.xlu0 %2780
      %v2782 = vsel %vm1762, %v2700, -inf
      %v2783 = vmax.f32 %v2698, %v2782
      %2784 = vmax.xlane.f32.xlu0 %v2783
      %v2785 = vpop.xlane.xlu0 %2784
      %v2786 = vsel %vm1762, %v2706, -inf
      %v2787 = vmax.f32 %v2704, %v2786
      %2788 = vmax.xlane.f32.xlu0 %v2787
      %v2789 = vpop.xlane.xlu0 %2788
      %v2790 = vsel %vm1762, %v2710, -inf
      %v2791 = vmax.f32 %v2708, %v2790
      %2792 = vmax.xlane.f32.xlu0 %v2791
      %v2793 = vpop.xlane.xlu0 %2792
      %v2794 = vsel %vm1762, %v2716, -inf
      %v2795 = vmax.f32 %v2714, %v2794
      %2796 = vmax.xlane.f32.xlu0 %v2795
      %v2797 = vpop.xlane.xlu0 %2796
      %v2798 = vsel %vm1762, %v2720, -inf
      %v2799 = vmax.f32 %v2718, %v2798
      %2800 = vmax.xlane.f32.xlu0 %v2799
      %v2801 = vpop.xlane.xlu0 %2800
      %v2802 = vsub.f32 %v2624, %v2725
      %v2803 = vsub.f32 %v2626, %v2725
      %v2804 = vsub.f32 %v2628, %v2729
      %v2805 = vsub.f32 %v2630, %v2729
      %v2806 = vsub.f32 %v2634, %v2733
      %v2807 = vsub.f32 %v2636, %v2733
      %v2808 = vsub.f32 %v2638, %v2737
      %v2809 = vsub.f32 %v2640, %v2737
      %v2810 = vsub.f32 %v2644, %v2741
      %v2811 = vsub.f32 %v2646, %v2741
      %v2812 = vsub.f32 %v2648, %v2745
      %v2813 = vsub.f32 %v2650, %v2745
      %v2814 = vsub.f32 %v2654, %v2749
      %v2815 = vsub.f32 %v2656, %v2749
      %v2816 = vsub.f32 %v2658, %v2753
      %v2817 = vsub.f32 %v2660, %v2753
      %v2818 = vsub.f32 %v2664, %v2757
      %v2819 = vsub.f32 %v2666, %v2757
      %v2820 = vsub.f32 %v2668, %v2761
      %v2821 = vsub.f32 %v2670, %v2761
      %v2822 = vsub.f32 %v2674, %v2765
      %v2823 = vsub.f32 %v2676, %v2765
      %v2824 = vsub.f32 %v2678, %v2769
      %v2825 = vsub.f32 %v2680, %v2769
      %v2826 = vsub.f32 %v2684, %v2773
      %v2827 = vsub.f32 %v2686, %v2773
      %v2828 = vsub.f32 %v2688, %v2777
      %v2829 = vsub.f32 %v2690, %v2777
      %v2830 = vsub.f32 %v2694, %v2781
      %v2831 = vsub.f32 %v2696, %v2781
      %v2832 = vsub.f32 %v2698, %v2785
      %v2833 = vsub.f32 %v2700, %v2785
      %v2834 = vsub.f32 %v2704, %v2789
      %v2835 = vsub.f32 %v2706, %v2789
      %v2836 = vsub.f32 %v2708, %v2793
      %v2837 = vsub.f32 %v2710, %v2793
      %v2838 = vsub.f32 %v2714, %v2797
      %v2839 = vsub.f32 %v2716, %v2797
      %v2840 = vsub.f32 %v2718, %v2801
      %v2841 = vsub.f32 %v2720, %v2801
      %v2842 = vmul.f32 %v2802, 1.442695
      %v2843 = vpow.pop %v2842
      %v2844 = vmul.f32 %v2803, 1.442695
      %v2845 = vpow.pop %v2844
      %v2846 = vmul.f32 %v2804, 1.442695
      %v2847 = vpow.pop %v2846
      %v2848 = vmul.f32 %v2805, 1.442695
      %v2849 = vpow.pop %v2848
      %v2850 = vmul.f32 %v2806, 1.442695
      %v2851 = vpow.pop %v2850
      %v2852 = vmul.f32 %v2807, 1.442695
      %v2853 = vpow.pop %v2852
      %v2854 = vmul.f32 %v2808, 1.442695
      %v2855 = vpow.pop %v2854
      %v2856 = vmul.f32 %v2809, 1.442695
      %v2857 = vpow.pop %v2856
      %v2858 = vmul.f32 %v2810, 1.442695
      %v2859 = vpow.pop %v2858
      %v2860 = vmul.f32 %v2811, 1.442695
      %v2861 = vpow.pop %v2860
      %v2862 = vmul.f32 %v2812, 1.442695
      %v2863 = vpow.pop %v2862
      %v2864 = vmul.f32 %v2813, 1.442695
      %v2865 = vpow.pop %v2864
      %v2866 = vmul.f32 %v2814, 1.442695
      %v2867 = vpow.pop %v2866
      %v2868 = vmul.f32 %v2815, 1.442695
      %v2869 = vpow.pop %v2868
      %v2870 = vmul.f32 %v2816, 1.442695
      %v2871 = vpow.pop %v2870
      %v2872 = vmul.f32 %v2817, 1.442695
      %v2873 = vpow.pop %v2872
      %v2874 = vmul.f32 %v2818, 1.442695
      %v2875 = vpow.pop %v2874
      %v2876 = vmul.f32 %v2819, 1.442695
      %v2877 = vpow.pop %v2876
      %v2878 = vmul.f32 %v2820, 1.442695
      %v2879 = vpow.pop %v2878
      %v2880 = vmul.f32 %v2821, 1.442695
      %v2881 = vpow.pop %v2880
      %v2882 = vmul.f32 %v2822, 1.442695
      %v2883 = vpow.pop %v2882
      %v2884 = vmul.f32 %v2823, 1.442695
      %v2885 = vpow.pop %v2884
      %v2886 = vmul.f32 %v2824, 1.442695
      %v2887 = vpow.pop %v2886
      %v2888 = vmul.f32 %v2825, 1.442695
      %v2889 = vpow.pop %v2888
      %v2890 = vmul.f32 %v2826, 1.442695
      %v2891 = vpow.pop %v2890
      %v2892 = vmul.f32 %v2827, 1.442695
      %v2893 = vpow.pop %v2892
      %v2894 = vmul.f32 %v2828, 1.442695
      %v2895 = vpow.pop %v2894
      %v2896 = vmul.f32 %v2829, 1.442695
      %v2897 = vpow.pop %v2896
      %v2898 = vmul.f32 %v2830, 1.442695
      %v2899 = vpow.pop %v2898
      %v2900 = vmul.f32 %v2831, 1.442695
      %v2901 = vpow.pop %v2900
      %v2902 = vmul.f32 %v2832, 1.442695
      %v2903 = vpow.pop %v2902
      %v2904 = vmul.f32 %v2833, 1.442695
      %v2905 = vpow.pop %v2904
      %v2906 = vmul.f32 %v2834, 1.442695
      %v2907 = vpow.pop %v2906
      %v2908 = vmul.f32 %v2835, 1.442695
      %v2909 = vpow.pop %v2908
      %v2910 = vmul.f32 %v2836, 1.442695
      %v2911 = vpow.pop %v2910
      %v2912 = vmul.f32 %v2837, 1.442695
      %v2913 = vpow.pop %v2912
      %v2914 = vmul.f32 %v2838, 1.442695
      %v2915 = vpow.pop %v2914
      %v2916 = vmul.f32 %v2839, 1.442695
      %v2917 = vpow.pop %v2916
      %v2918 = vmul.f32 %v2840, 1.442695
      %v2919 = vpow.pop %v2918
      %v2920 = vmul.f32 %v2841, 1.442695
      %v2921 = vpow.pop %v2920
      %v2922 = vsel %vm1762, %v2845, 0.0
      %v2923 = vadd.f32 %v2843, %v2922
      %2924 = vadd.xlane.f32.xlu0 %v2923
      %v2925 = vpop.xlane.xlu0 %2924
      %v2926 = vsel %vm1762, %v2849, 0.0
      %v2927 = vadd.f32 %v2847, %v2926
      %2928 = vadd.xlane.f32.xlu0 %v2927
      %v2929 = vpop.xlane.xlu0 %2928
      %v2930 = vsel %vm1762, %v2853, 0.0
      %v2931 = vadd.f32 %v2851, %v2930
      %2932 = vadd.xlane.f32.xlu0 %v2931
      %v2933 = vpop.xlane.xlu0 %2932
      %v2934 = vsel %vm1762, %v2857, 0.0
      %v2935 = vadd.f32 %v2855, %v2934
      %2936 = vadd.xlane.f32.xlu0 %v2935
      %v2937 = vpop.xlane.xlu0 %2936
      %v2938 = vsel %vm1762, %v2861, 0.0
      %v2939 = vadd.f32 %v2859, %v2938
      %2940 = vadd.xlane.f32.xlu0 %v2939
      %v2941 = vpop.xlane.xlu0 %2940
      %v2942 = vsel %vm1762, %v2865, 0.0
      %v2943 = vadd.f32 %v2863, %v2942
      %2944 = vadd.xlane.f32.xlu0 %v2943
      %v2945 = vpop.xlane.xlu0 %2944
      %v2946 = vsel %vm1762, %v2869, 0.0
      %v2947 = vadd.f32 %v2867, %v2946
      %2948 = vadd.xlane.f32.xlu0 %v2947
      %v2949 = vpop.xlane.xlu0 %2948
      %v2950 = vsel %vm1762, %v2873, 0.0
      %v2951 = vadd.f32 %v2871, %v2950
      %2952 = vadd.xlane.f32.xlu0 %v2951
      %v2953 = vpop.xlane.xlu0 %2952
      %v2954 = vsel %vm1762, %v2877, 0.0
      %v2955 = vadd.f32 %v2875, %v2954
      %2956 = vadd.xlane.f32.xlu0 %v2955
      %v2957 = vpop.xlane.xlu0 %2956
      %v2958 = vsel %vm1762, %v2881, 0.0
      %v2959 = vadd.f32 %v2879, %v2958
      %2960 = vadd.xlane.f32.xlu0 %v2959
      %v2961 = vpop.xlane.xlu0 %2960
      %v2962 = vsel %vm1762, %v2885, 0.0
      %v2963 = vadd.f32 %v2883, %v2962
      %2964 = vadd.xlane.f32.xlu0 %v2963
      %v2965 = vpop.xlane.xlu0 %2964
      %v2966 = vsel %vm1762, %v2889, 0.0
      %v2967 = vadd.f32 %v2887, %v2966
      %2968 = vadd.xlane.f32.xlu0 %v2967
      %v2969 = vpop.xlane.xlu0 %2968
      %v2970 = vsel %vm1762, %v2893, 0.0
      %v2971 = vadd.f32 %v2891, %v2970
      %2972 = vadd.xlane.f32.xlu0 %v2971
      %v2973 = vpop.xlane.xlu0 %2972
      %v2974 = vsel %vm1762, %v2897, 0.0
      %v2975 = vadd.f32 %v2895, %v2974
      %2976 = vadd.xlane.f32.xlu0 %v2975
      %v2977 = vpop.xlane.xlu0 %2976
      %v2978 = vsel %vm1762, %v2901, 0.0
      %v2979 = vadd.f32 %v2899, %v2978
      %2980 = vadd.xlane.f32.xlu0 %v2979
      %v2981 = vpop.xlane.xlu0 %2980
      %v2982 = vsel %vm1762, %v2905, 0.0
      %v2983 = vadd.f32 %v2903, %v2982
      %2984 = vadd.xlane.f32.xlu0 %v2983
      %v2985 = vpop.xlane.xlu0 %2984
      %v2986 = vsel %vm1762, %v2909, 0.0
      %v2987 = vadd.f32 %v2907, %v2986
      %2988 = vadd.xlane.f32.xlu0 %v2987
      %v2989 = vpop.xlane.xlu0 %2988
      %v2990 = vsel %vm1762, %v2913, 0.0
      %v2991 = vadd.f32 %v2911, %v2990
      %2992 = vadd.xlane.f32.xlu0 %v2991
      %v2993 = vpop.xlane.xlu0 %2992
      %v2994 = vsel %vm1762, %v2917, 0.0
      %v2995 = vadd.f32 %v2915, %v2994
      %2996 = vadd.xlane.f32.xlu0 %v2995
      %v2997 = vpop.xlane.xlu0 %2996
      %v2998 = vsel %vm1762, %v2921, 0.0
      %v2999 = vadd.f32 %v2919, %v2998
      %3000 = vadd.xlane.f32.xlu0 %v2999
      %v3001 = vpop.xlane.xlu0 %3000
      %v3002 = vrcp.pop %v2925
      %v3003 = vrcp.pop %v2929
      %v3004 = vrcp.pop %v2933
      %v3005 = vrcp.pop %v2937
      %v3006 = vrcp.pop %v2941
      %v3007 = vrcp.pop %v2945
      %v3008 = vrcp.pop %v2949
      %v3009 = vrcp.pop %v2953
      %v3010 = vrcp.pop %v2957
      %v3011 = vrcp.pop %v2961
      %v3012 = vrcp.pop %v2965
      %v3013 = vrcp.pop %v2969
      %v3014 = vrcp.pop %v2973
      %v3015 = vrcp.pop %v2977
      %v3016 = vrcp.pop %v2981
      %v3017 = vrcp.pop %v2985
      %v3018 = vrcp.pop %v2989
      %v3019 = vrcp.pop %v2993
      %v3020 = vrcp.pop %v2997
      %v3021 = vrcp.pop %v3001
      %v3022 = vmul.f32 %v2843, %v3002
      %v3023 = vmul.f32 %v2845, %v3002
      %v3024 = vmul.f32 %v2847, %v3003
      %v3025 = vmul.f32 %v2849, %v3003
      %v3026 = vmul.f32 %v2851, %v3004
      %v3027 = vmul.f32 %v2853, %v3004
      %v3028 = vmul.f32 %v2855, %v3005
      %v3029 = vmul.f32 %v2857, %v3005
      %v3030 = vmul.f32 %v2859, %v3006
      %v3031 = vmul.f32 %v2861, %v3006
      %v3032 = vmul.f32 %v2863, %v3007
      %v3033 = vmul.f32 %v2865, %v3007
      %v3034 = vmul.f32 %v2867, %v3008
      %v3035 = vmul.f32 %v2869, %v3008
      %v3036 = vmul.f32 %v2871, %v3009
      %v3037 = vmul.f32 %v2873, %v3009
      %v3038 = vmul.f32 %v2875, %v3010
      %v3039 = vmul.f32 %v2877, %v3010
      %v3040 = vmul.f32 %v2879, %v3011
      %v3041 = vmul.f32 %v2881, %v3011
      %v3042 = vmul.f32 %v2883, %v3012
      %v3043 = vmul.f32 %v2885, %v3012
      %v3044 = vmul.f32 %v2887, %v3013
      %v3045 = vmul.f32 %v2889, %v3013
      %v3046 = vmul.f32 %v2891, %v3014
      %v3047 = vmul.f32 %v2893, %v3014
      %v3048 = vmul.f32 %v2895, %v3015
      %v3049 = vmul.f32 %v2897, %v3015
      %v3050 = vmul.f32 %v2899, %v3016
      %v3051 = vmul.f32 %v2901, %v3016
      %v3052 = vmul.f32 %v2903, %v3017
      %v3053 = vmul.f32 %v2905, %v3017
      %v3054 = vmul.f32 %v2907, %v3018
      %v3055 = vmul.f32 %v2909, %v3018
      %v3056 = vmul.f32 %v2911, %v3019
      %v3057 = vmul.f32 %v2913, %v3019
      %v3058 = vmul.f32 %v2915, %v3020
      %v3059 = vmul.f32 %v2917, %v3020
      %v3060 = vmul.f32 %v2919, %v3021
      %v3061 = vmul.f32 %v2921, %v3021
      %v3062 = vpack.c.bf16 %v3024, %v3022
      %v3063 = vpack.c.bf16 %v3025, %v3023
      %v3064 = vpack.c.bf16 %v3028, %v3026
      %v3065 = vpack.c.bf16 %v3029, %v3027
      %v3066 = vpack.c.bf16 %v3032, %v3030
      %v3067 = vpack.c.bf16 %v3033, %v3031
      %v3068 = vpack.c.bf16 %v3036, %v3034
      %v3069 = vpack.c.bf16 %v3037, %v3035
      %v3070 = vpack.c.bf16 %v3040, %v3038
      %v3071 = vpack.c.bf16 %v3041, %v3039
      %v3072 = vpack.c.bf16 %v3044, %v3042
      %v3073 = vpack.c.bf16 %v3045, %v3043
      %v3074 = vpack.c.bf16 %v3048, %v3046
      %v3075 = vpack.c.bf16 %v3049, %v3047
      %v3076 = vpack.c.bf16 %v3052, %v3050
      %v3077 = vpack.c.bf16 %v3053, %v3051
      %v3078 = vpack.c.bf16 %v3056, %v3054
      %v3079 = vpack.c.bf16 %v3057, %v3055
      %v3080 = vpack.c.bf16 %v3060, %v3058
      %v3081 = vpack.c.bf16 %v3061, %v3059
      %3092 = vrot.lane.b32.xlu0 %v1752, 96
      %v3093 = vpop.permute.xlu0 %3092
      %3094 = vrot.lane.b32.xlu0 %v1753, 96
      %v3095 = vpop.permute.xlu0 %3094
      %3096 = vrot.lane.b32.xlu0 %v1754, 96
      %v3097 = vpop.permute.xlu0 %3096
      %3098 = vrot.lane.b32.xlu0 %v1755, 96
      %v3099 = vpop.permute.xlu0 %3098
      %3100 = vrot.lane.b32.xlu0 %v1756, 96
      %v3101 = vpop.permute.xlu0 %3100
      %3102 = vrot.lane.b32.xlu0 %v1757, 96
      %v3103 = vpop.permute.xlu0 %3102
      %3104 = vrot.lane.b32.xlu0 %v1758, 96
      %v3105 = vpop.permute.xlu0 %3104
      %3106 = vrot.lane.b32.xlu0 %v1759, 96
      %v3107 = vpop.permute.xlu0 %3106
      %3108 = vrot.lane.b32.xlu0 %v1760, 96
      %v3109 = vpop.permute.xlu0 %3108
      %3110 = vrot.lane.b32.xlu0 %v1761, 96
      %v3111 = vpop.permute.xlu0 %3110
      %v3123 = vsel %vm1762, %v3063, 0
      %v3126 = vsel %vm1762, %v3065, 0
      %v3129 = vsel %vm1762, %v3067, 0
      %v3132 = vsel %vm1762, %v3069, 0
      %v3135 = vsel %vm1762, %v3071, 0
      %v3138 = vsel %vm1762, %v3073, 0
      %v3141 = vsel %vm1762, %v3075, 0
      %v3144 = vsel %vm1762, %v3077, 0
      %v3147 = vsel %vm1762, %v3079, 0
      %v3150 = vsel %vm1762, %v3081, 0
      %3152 = vmatprep.subr.bf16.mxu0 0
      %3153 = vmatpush1.bf16.msra.mxu0 %v3093
      %3154 = vmatprep.subr.bf16.mxu0 0
      %3155 = vmatpush1.bf16.msra.mxu0 %v3095
      %3156 = vmatprep.subr.bf16.mxu0 0
      %3157 = vmatpush1.bf16.msra.mxu0 %v3097
      %3158 = vmatprep.subr.bf16.mxu0 0
      %3159 = vmatpush1.bf16.msra.mxu0 %v3099
      %3160 = vmatprep.subr.bf16.mxu0 0
      %3161 = vmatpush1.bf16.msra.mxu0 %v3101
      %3162 = vmatprep.subr.bf16.mxu0 0
      %3163 = vmatpush1.bf16.msra.mxu0 %v3103
      %3164 = vmatprep.subr.bf16.mxu0 0
      %3165 = vmatpush1.bf16.msra.mxu0 %v3105
      %3166 = vmatprep.subr.bf16.mxu0 0
      %3167 = vmatpush1.bf16.msra.mxu0 %v3107
      %3168 = vmatprep.subr.bf16.mxu0 0
      %3169 = vmatpush1.bf16.msra.mxu0 %v3109
      %3170 = vmatprep.subr.bf16.mxu0 0
      %3171 = vmatpush1.bf16.msra.mxu0 %v3111
      %3172 = vmatprep.subr.bf16.mxu0 0
      %3173 = vmatpush1.bf16.msra.mxu0 0
      %3174 = vmatprep.subr.bf16.mxu0 0
      %3175 = vmatpush1.bf16.msra.mxu0 0
      %3176 = vmatprep.subr.bf16.mxu0 0
      %3177 = vmatpush1.bf16.msra.mxu0 0
      %3178 = vmatprep.subr.bf16.mxu0 0
      %3179 = vmatpush1.bf16.msra.mxu0 0
      %3180 = vmatprep.subr.bf16.mxu0 0
      %3181 = vmatpush1.bf16.msra.mxu0 0
      %3182 = vmatprep.subr.bf16.mxu0 0
      %3183 = vmatpush1.bf16.msra.mxu0 0
      %3184 = vmatprep.mubr.bf16.mxu0 %v3123
      %3185 = vmatmul.mubr.bf16.gmra.mrb[0].mxu0 %v3062
      %v3186 = vpop.f32.mrb[0].mxu0
      %v3187 = vadd.f32 0.0, %v3186
      %v3188 = vpop.f32.mrb[0].mxu0
      %v3189 = vpop.f32.mrb[0].mxu0
      %v3190 = vadd.f32 0.0, %v3189
      %v3191 = vpop.f32.mrb[0].mxu0
      %3192 = vmatprep.mubr.bf16.mxu0 %v3126
      %3193 = vmatmul.mubr.bf16.gmra.mrb[0].mxu0 %v3064
      %v3194 = vpop.f32.mrb[0].mxu0
      %v3195 = vadd.f32 0.0, %v3194
      %v3196 = vpop.f32.mrb[0].mxu0
      %v3197 = vpop.f32.mrb[0].mxu0
      %v3198 = vadd.f32 0.0, %v3197
      %v3199 = vpop.f32.mrb[0].mxu0
      %3200 = vmatprep.mubr.bf16.mxu0 %v3129
      %3201 = vmatmul.mubr.bf16.gmra.mrb[0].mxu0 %v3066
      %v3202 = vpop.f32.mrb[0].mxu0
      %v3203 = vadd.f32 0.0, %v3202
      %v3204 = vpop.f32.mrb[0].mxu0
      %v3205 = vpop.f32.mrb[0].mxu0
      %v3206 = vadd.f32 0.0, %v3205
      %v3207 = vpop.f32.mrb[0].mxu0
      %3208 = vmatprep.mubr.bf16.mxu0 %v3132
      %3209 = vmatmul.mubr.bf16.gmra.mrb[0].mxu0 %v3068
      %v3210 = vpop.f32.mrb[0].mxu0
      %v3211 = vadd.f32 0.0, %v3210
      %v3212 = vpop.f32.mrb[0].mxu0
      %v3213 = vpop.f32.mrb[0].mxu0
      %v3214 = vadd.f32 0.0, %v3213
      %v3215 = vpop.f32.mrb[0].mxu0
      %3216 = vmatprep.mubr.bf16.mxu0 %v3135
      %3217 = vmatmul.mubr.bf16.gmra.mrb[0].mxu0 %v3070
      %v3218 = vpop.f32.mrb[0].mxu0
      %v3219 = vadd.f32 0.0, %v3218
      %v3220 = vpop.f32.mrb[0].mxu0
      %v3221 = vpop.f32.mrb[0].mxu0
      %v3222 = vadd.f32 0.0, %v3221
      %v3223 = vpop.f32.mrb[0].mxu0
      %3224 = vmatprep.mubr.bf16.mxu0 %v3138
      %3225 = vmatmul.mubr.bf16.gmra.mrb[0].mxu0 %v3072
      %v3226 = vpop.f32.mrb[0].mxu0
      %v3227 = vadd.f32 0.0, %v3226
      %v3228 = vpop.f32.mrb[0].mxu0
      %v3229 = vpop.f32.mrb[0].mxu0
      %v3230 = vadd.f32 0.0, %v3229
      %v3231 = vpop.f32.mrb[0].mxu0
      %3232 = vmatprep.mubr.bf16.mxu0 %v3141
      %3233 = vmatmul.mubr.bf16.gmra.mrb[0].mxu0 %v3074
      %v3234 = vpop.f32.mrb[0].mxu0
      %v3235 = vadd.f32 0.0, %v3234
      %v3236 = vpop.f32.mrb[0].mxu0
      %v3237 = vpop.f32.mrb[0].mxu0
      %v3238 = vadd.f32 0.0, %v3237
      %v3239 = vpop.f32.mrb[0].mxu0
      %3240 = vmatprep.mubr.bf16.mxu0 %v3144
      %3241 = vmatmul.mubr.bf16.gmra.mrb[0].mxu0 %v3076
      %v3242 = vpop.f32.mrb[0].mxu0
      %v3243 = vadd.f32 0.0, %v3242
      %v3244 = vpop.f32.mrb[0].mxu0
      %v3245 = vpop.f32.mrb[0].mxu0
      %v3246 = vadd.f32 0.0, %v3245
      %v3247 = vpop.f32.mrb[0].mxu0
      %3248 = vmatprep.mubr.bf16.mxu0 %v3147
      %3249 = vmatmul.mubr.bf16.gmra.mrb[0].mxu0 %v3078
      %v3250 = vpop.f32.mrb[0].mxu0
      %v3251 = vadd.f32 0.0, %v3250
      %v3252 = vpop.f32.mrb[0].mxu0
      %v3253 = vpop.f32.mrb[0].mxu0
      %v3254 = vadd.f32 0.0, %v3253
      %v3255 = vpop.f32.mrb[0].mxu0
      %3256 = vmatprep.mubr.bf16.mxu0 %v3150
      %3257 = vmatmul.mubr.bf16.gmra.mrb[0].mxu0 %v3080
      %v3258 = vpop.f32.mrb[0].mxu0
      %v3259 = vadd.f32 0.0, %v3258
      %v3260 = vpop.f32.mrb[0].mxu0
      %v3261 = vpop.f32.mrb[0].mxu0
      %v3262 = vadd.f32 0.0, %v3261
      %v3263 = vpop.f32.mrb[0].mxu0
      %3264 = vdwg.mxu0
      %v3265 = vpack.c.bf16 %v3190, %v3187
      %v3266 = vpack.c.bf16 %v3198, %v3195
      %v3267 = vpack.c.bf16 %v3206, %v3203
      %v3268 = vpack.c.bf16 %v3214, %v3211
      %v3269 = vpack.c.bf16 %v3222, %v3219
      %v3270 = vpack.c.bf16 %v3230, %v3227
      %v3271 = vpack.c.bf16 %v3238, %v3235
      %v3272 = vpack.c.bf16 %v3246, %v3243
      %v3273 = vpack.c.bf16 %v3254, %v3251
      %v3274 = vpack.c.bf16 %v3262, %v3259
      %3275 = vrot.lane.b32.xlu0 %v1732, 64
      %v3276 = vpop.permute.xlu0 %3275
      %3277 = vrot.lane.b32.xlu0 %v1733, 64
      %v3278 = vpop.permute.xlu0 %3277
      %3279 = vrot.lane.b32.xlu0 %v1734, 64
      %v3280 = vpop.permute.xlu0 %3279
      %3281 = vrot.lane.b32.xlu0 %v1735, 64
      %v3282 = vpop.permute.xlu0 %3281
      %3283 = vrot.lane.b32.xlu0 %v1736, 64
      %v3284 = vpop.permute.xlu0 %3283
      %3285 = vrot.lane.b32.xlu0 %v1737, 64
      %v3286 = vpop.permute.xlu0 %3285
      %3287 = vrot.lane.b32.xlu0 %v1738, 64
      %v3288 = vpop.permute.xlu0 %3287
      %3289 = vrot.lane.b32.xlu0 %v1739, 64
      %v3290 = vpop.permute.xlu0 %3289
      %3291 = vrot.lane.b32.xlu0 %v1740, 64
      %v3292 = vpop.permute.xlu0 %3291
      %3293 = vrot.lane.b32.xlu0 %v1741, 64
      %v3294 = vpop.permute.xlu0 %3293
      %3295 = vrot.lane.b32.xlu0 %v1742, 64
      %v3296 = vpop.permute.xlu0 %3295
      %3297 = vrot.lane.b32.xlu0 %v1743, 64
      %v3298 = vpop.permute.xlu0 %3297
      %3299 = vrot.lane.b32.xlu0 %v1744, 64
      %v3300 = vpop.permute.xlu0 %3299
      %3301 = vrot.lane.b32.xlu0 %v1745, 64
      %v3302 = vpop.permute.xlu0 %3301
      %3303 = vrot.lane.b32.xlu0 %v1746, 64
      %v3304 = vpop.permute.xlu0 %3303
      %3305 = vrot.lane.b32.xlu0 %v1747, 64
      %v3306 = vpop.permute.xlu0 %3305
      %3307 = vrot.lane.b32.xlu0 %v1748, 64
      %v3308 = vpop.permute.xlu0 %3307
      %3309 = vrot.lane.b32.xlu0 %v1749, 64
      %v3310 = vpop.permute.xlu0 %3309
      %3311 = vrot.lane.b32.xlu0 %v1750, 64
      %v3312 = vpop.permute.xlu0 %3311
      %3313 = vrot.lane.b32.xlu0 %v1751, 64
      %v3314 = vpop.permute.xlu0 %3313
      %v3316 = vsel %vm1762, %v3276, 0
      %v3319 = vsel %vm1762, %v3278, 0
      %v3322 = vsel %vm1762, %v3280, 0
      %v3325 = vsel %vm1762, %v3282, 0
      %v3328 = vsel %vm1762, %v3284, 0
      %v3331 = vsel %vm1762, %v3286, 0
      %v3334 = vsel %vm1762, %v3288, 0
      %v3337 = vsel %vm1762, %v3290, 0
      %v3340 = vsel %vm1762, %v3292, 0
      %v3343 = vsel %vm1762, %v3294, 0
      %v3346 = vsel %vm1762, %v3296, 0
      %v3349 = vsel %vm1762, %v3298, 0
      %v3352 = vsel %vm1762, %v3300, 0
      %v3355 = vsel %vm1762, %v3302, 0
      %v3358 = vsel %vm1762, %v3304, 0
      %v3361 = vsel %vm1762, %v3306, 0
      %v3364 = vsel %vm1762, %v3308, 0
      %v3367 = vsel %vm1762, %v3310, 0
      %v3370 = vsel %vm1762, %v3312, 0
      %v3373 = vsel %vm1762, %v3314, 0
      %3375 = vmatprep.subr.bf16.mxu0 0
      %3376 = vmatpush1.bf16.xpose.msra.mxu0 %v3346
      %3377 = vmatprep.subr.bf16.mxu0 0
      %3378 = vmatpush1.bf16.xpose.msra.mxu0 %v3349
      %3379 = vmatprep.subr.bf16.mxu0 0
      %3380 = vmatpush1.bf16.xpose.msra.mxu0 %v3352
      %3381 = vmatprep.subr.bf16.mxu0 0
      %3382 = vmatpush1.bf16.xpose.msra.mxu0 %v3355
      %3383 = vmatprep.subr.bf16.mxu0 0
      %3384 = vmatpush1.bf16.xpose.msra.mxu0 %v3358
      %3385 = vmatprep.subr.bf16.mxu0 0
      %3386 = vmatpush1.bf16.xpose.msra.mxu0 %v3361
      %3387 = vmatprep.subr.bf16.mxu0 0
      %3388 = vmatpush1.bf16.xpose.msra.mxu0 %v3364
      %3389 = vmatprep.subr.bf16.mxu0 0
      %3390 = vmatpush1.bf16.xpose.msra.mxu0 %v3367
      %3391 = vmatprep.subr.bf16.mxu0 0
      %3392 = vmatpush1.bf16.xpose.msra.mxu0 %v3370
      %3393 = vmatprep.subr.bf16.mxu0 0
      %3394 = vmatpush1.bf16.xpose.msra.mxu0 %v3373
      %3395 = vmatprep.subr.bf16.mxu0 0
      %3396 = vmatpush1.bf16.xpose.msra.mxu0 0
      %3397 = vmatprep.subr.bf16.mxu0 0
      %3398 = vmatpush1.bf16.xpose.msra.mxu0 0
      %3399 = vmatprep.subr.bf16.mxu0 0
      %3400 = vmatpush1.bf16.xpose.msra.mxu0 0
      %3401 = vmatprep.subr.bf16.mxu0 0
      %3402 = vmatpush1.bf16.xpose.msra.mxu0 0
      %3403 = vmatprep.subr.bf16.mxu0 0
      %3404 = vmatpush1.bf16.xpose.msra.mxu0 0
      %3405 = vmatprep.subr.bf16.mxu0 0
      %3406 = vmatpush1.bf16.xpose.msra.mxu0 0
      %3407 = vmatprep.mubr.bf16.mxu0 0
      %3408 = vmatmul.mubr.bf16.gmra.mrb[0].mxu0 %v3316
      %v3409 = vpop.f32.mrb[0].mxu0
      %v3410 = vadd.f32 %v1692, %v3409
      %v3411 = vpop.f32.mrb[0].mxu0
      %v3412 = vadd.f32 %v1693, %v3411
      %v3413 = vpop.f32.mrb[0].mxu0
      %v3414 = vadd.f32 %v1694, %v3413
      %v3415 = vpop.f32.mrb[0].mxu0
      %v3416 = vadd.f32 %v1695, %v3415
      %3417 = vmatprep.mubr.bf16.mxu0 0
      %3418 = vmatmul.mubr.bf16.gmra.mrb[0].mxu0 %v3319
      %v3419 = vpop.f32.mrb[0].mxu0
      %v3420 = vadd.f32 %v1696, %v3419
      %v3421 = vpop.f32.mrb[0].mxu0
      %v3422 = vadd.f32 %v1697, %v3421
      %v3423 = vpop.f32.mrb[0].mxu0
      %v3424 = vadd.f32 %v1698, %v3423
      %v3425 = vpop.f32.mrb[0].mxu0
      %v3426 = vadd.f32 %v1699, %v3425
      %3427 = vmatprep.mubr.bf16.mxu0 0
      %3428 = vmatmul.mubr.bf16.gmra.mrb[0].mxu0 %v3322
      %v3429 = vpop.f32.mrb[0].mxu0
      %v3430 = vadd.f32 %v1700, %v3429
      %v3431 = vpop.f32.mrb[0].mxu0
      %v3432 = vadd.f32 %v1701, %v3431
      %v3433 = vpop.f32.mrb[0].mxu0
      %v3434 = vadd.f32 %v1702, %v3433
      %v3435 = vpop.f32.mrb[0].mxu0
      %v3436 = vadd.f32 %v1703, %v3435
      %3437 = vmatprep.mubr.bf16.mxu0 0
      %3438 = vmatmul.mubr.bf16.gmra.mrb[0].mxu0 %v3325
      %v3439 = vpop.f32.mrb[0].mxu0
      %v3440 = vadd.f32 %v1704, %v3439
      %v3441 = vpop.f32.mrb[0].mxu0
      %v3442 = vadd.f32 %v1705, %v3441
      %v3443 = vpop.f32.mrb[0].mxu0
      %v3444 = vadd.f32 %v1706, %v3443
      %v3445 = vpop.f32.mrb[0].mxu0
      %v3446 = vadd.f32 %v1707, %v3445
      %3447 = vmatprep.mubr.bf16.mxu0 0
      %3448 = vmatmul.mubr.bf16.gmra.mrb[0].mxu0 %v3328
      %v3449 = vpop.f32.mrb[0].mxu0
      %v3450 = vadd.f32 %v1708, %v3449
      %v3451 = vpop.f32.mrb[0].mxu0
      %v3452 = vadd.f32 %v1709, %v3451
      %v3453 = vpop.f32.mrb[0].mxu0
      %v3454 = vadd.f32 %v1710, %v3453
      %v3455 = vpop.f32.mrb[0].mxu0
      %v3456 = vadd.f32 %v1711, %v3455
      %3457 = vmatprep.mubr.bf16.mxu0 0
      %3458 = vmatmul.mubr.bf16.gmra.mrb[0].mxu0 %v3331
      %v3459 = vpop.f32.mrb[0].mxu0
      %v3460 = vadd.f32 %v1712, %v3459
      %v3461 = vpop.f32.mrb[0].mxu0
      %v3462 = vadd.f32 %v1713, %v3461
      %v3463 = vpop.f32.mrb[0].mxu0
      %v3464 = vadd.f32 %v1714, %v3463
      %v3465 = vpop.f32.mrb[0].mxu0
      %v3466 = vadd.f32 %v1715, %v3465
      %3467 = vmatprep.mubr.bf16.mxu0 0
      %3468 = vmatmul.mubr.bf16.gmra.mrb[0].mxu0 %v3334
      %v3469 = vpop.f32.mrb[0].mxu0
      %v3470 = vadd.f32 %v1716, %v3469
      %v3471 = vpop.f32.mrb[0].mxu0
      %v3472 = vadd.f32 %v1717, %v3471
      %v3473 = vpop.f32.mrb[0].mxu0
      %v3474 = vadd.f32 %v1718, %v3473
      %v3475 = vpop.f32.mrb[0].mxu0
      %v3476 = vadd.f32 %v1719, %v3475
      %3477 = vmatprep.mubr.bf16.mxu0 0
      %3478 = vmatmul.mubr.bf16.gmra.mrb[0].mxu0 %v3337
      %v3479 = vpop.f32.mrb[0].mxu0
      %v3480 = vadd.f32 %v1720, %v3479
      %v3481 = vpop.f32.mrb[0].mxu0
      %v3482 = vadd.f32 %v1721, %v3481
      %v3483 = vpop.f32.mrb[0].mxu0
      %v3484 = vadd.f32 %v1722, %v3483
      %v3485 = vpop.f32.mrb[0].mxu0
      %v3486 = vadd.f32 %v1723, %v3485
      %3487 = vmatprep.mubr.bf16.mxu0 0
      %3488 = vmatmul.mubr.bf16.gmra.mrb[0].mxu0 %v3340
      %v3489 = vpop.f32.mrb[0].mxu0
      %v3490 = vadd.f32 %v1724, %v3489
      %v3491 = vpop.f32.mrb[0].mxu0
      %v3492 = vadd.f32 %v1725, %v3491
      %v3493 = vpop.f32.mrb[0].mxu0
      %v3494 = vadd.f32 %v1726, %v3493
      %v3495 = vpop.f32.mrb[0].mxu0
      %v3496 = vadd.f32 %v1727, %v3495
      %3497 = vmatprep.mubr.bf16.mxu0 0
      %3498 = vmatmul.mubr.bf16.gmra.mrb[0].mxu0 %v3343
      %v3499 = vpop.f32.mrb[0].mxu0
      %v3500 = vadd.f32 %v1728, %v3499
      %v3501 = vpop.f32.mrb[0].mxu0
      %v3502 = vadd.f32 %v1729, %v3501
      %v3503 = vpop.f32.mrb[0].mxu0
      %v3504 = vadd.f32 %v1730, %v3503
      %v3505 = vpop.f32.mrb[0].mxu0
      %v3506 = vadd.f32 %v1731, %v3505
      %3507 = vdwg.mxu0
      %v3508 = vsel %vm1762, %v3412, -inf
      %v3509 = vmax.f32 %v3410, %v3508
      %3510 = vmax.xlane.f32.xlu0 %v3509
      %v3511 = vpop.xlane.xlu0 %3510
      %v3512 = vsel %vm1762, %v3416, -inf
      %v3513 = vmax.f32 %v3414, %v3512
      %3514 = vmax.xlane.f32.xlu0 %v3513
      %v3515 = vpop.xlane.xlu0 %3514
      %v3516 = vsel %vm1762, %v3422, -inf
      %v3517 = vmax.f32 %v3420, %v3516
      %3518 = vmax.xlane.f32.xlu0 %v3517
      %v3519 = vpop.xlane.xlu0 %3518
      %v3520 = vsel %vm1762, %v3426, -inf
      %v3521 = vmax.f32 %v3424, %v3520
      %3522 = vmax.xlane.f32.xlu0 %v3521
      %v3523 = vpop.xlane.xlu0 %3522
      %v3524 = vsel %vm1762, %v3432, -inf
      %v3525 = vmax.f32 %v3430, %v3524
      %3526 = vmax.xlane.f32.xlu0 %v3525
      %v3527 = vpop.xlane.xlu0 %3526
      %v3528 = vsel %vm1762, %v3436, -inf
      %v3529 = vmax.f32 %v3434, %v3528
      %3530 = vmax.xlane.f32.xlu0 %v3529
      %v3531 = vpop.xlane.xlu0 %3530
      %v3532 = vsel %vm1762, %v3442, -inf
      %v3533 = vmax.f32 %v3440, %v3532
      %3534 = vmax.xlane.f32.xlu0 %v3533
      %v3535 = vpop.xlane.xlu0 %3534
      %v3536 = vsel %vm1762, %v3446, -inf
      %v3537 = vmax.f32 %v3444, %v3536
      %3538 = vmax.xlane.f32.xlu0 %v3537
      %v3539 = vpop.xlane.xlu0 %3538
      %v3540 = vsel %vm1762, %v3452, -inf
      %v3541 = vmax.f32 %v3450, %v3540
      %3542 = vmax.xlane.f32.xlu0 %v3541
      %v3543 = vpop.xlane.xlu0 %3542
      %v3544 = vsel %vm1762, %v3456, -inf
      %v3545 = vmax.f32 %v3454, %v3544
      %3546 = vmax.xlane.f32.xlu0 %v3545
      %v3547 = vpop.xlane.xlu0 %3546
      %v3548 = vsel %vm1762, %v3462, -inf
      %v3549 = vmax.f32 %v3460, %v3548
      %3550 = vmax.xlane.f32.xlu0 %v3549
      %v3551 = vpop.xlane.xlu0 %3550
      %v3552 = vsel %vm1762, %v3466, -inf
      %v3553 = vmax.f32 %v3464, %v3552
      %3554 = vmax.xlane.f32.xlu0 %v3553
      %v3555 = vpop.xlane.xlu0 %3554
      %v3556 = vsel %vm1762, %v3472, -inf
      %v3557 = vmax.f32 %v3470, %v3556
      %3558 = vmax.xlane.f32.xlu0 %v3557
      %v3559 = vpop.xlane.xlu0 %3558
      %v3560 = vsel %vm1762, %v3476, -inf
      %v3561 = vmax.f32 %v3474, %v3560
      %3562 = vmax.xlane.f32.xlu0 %v3561
      %v3563 = vpop.xlane.xlu0 %3562
      %v3564 = vsel %vm1762, %v3482, -inf
      %v3565 = vmax.f32 %v3480, %v3564
      %3566 = vmax.xlane.f32.xlu0 %v3565
      %v3567 = vpop.xlane.xlu0 %3566
      %v3568 = vsel %vm1762, %v3486, -inf
      %v3569 = vmax.f32 %v3484, %v3568
      %3570 = vmax.xlane.f32.xlu0 %v3569
      %v3571 = vpop.xlane.xlu0 %3570
      %v3572 = vsel %vm1762, %v3492, -inf
      %v3573 = vmax.f32 %v3490, %v3572
      %3574 = vmax.xlane.f32.xlu0 %v3573
      %v3575 = vpop.xlane.xlu0 %3574
      %v3576 = vsel %vm1762, %v3496, -inf
      %v3577 = vmax.f32 %v3494, %v3576
      %3578 = vmax.xlane.f32.xlu0 %v3577
      %v3579 = vpop.xlane.xlu0 %3578
      %v3580 = vsel %vm1762, %v3502, -inf
      %v3581 = vmax.f32 %v3500, %v3580
      %3582 = vmax.xlane.f32.xlu0 %v3581
      %v3583 = vpop.xlane.xlu0 %3582
      %v3584 = vsel %vm1762, %v3506, -inf
      %v3585 = vmax.f32 %v3504, %v3584
      %3586 = vmax.xlane.f32.xlu0 %v3585
      %v3587 = vpop.xlane.xlu0 %3586
      %v3588 = vsub.f32 %v3410, %v3511
      %v3589 = vsub.f32 %v3412, %v3511
      %v3590 = vsub.f32 %v3414, %v3515
      %v3591 = vsub.f32 %v3416, %v3515
      %v3592 = vsub.f32 %v3420, %v3519
      %v3593 = vsub.f32 %v3422, %v3519
      %v3594 = vsub.f32 %v3424, %v3523
      %v3595 = vsub.f32 %v3426, %v3523
      %v3596 = vsub.f32 %v3430, %v3527
      %v3597 = vsub.f32 %v3432, %v3527
      %v3598 = vsub.f32 %v3434, %v3531
      %v3599 = vsub.f32 %v3436, %v3531
      %v3600 = vsub.f32 %v3440, %v3535
      %v3601 = vsub.f32 %v3442, %v3535
      %v3602 = vsub.f32 %v3444, %v3539
      %v3603 = vsub.f32 %v3446, %v3539
      %v3604 = vsub.f32 %v3450, %v3543
      %v3605 = vsub.f32 %v3452, %v3543
      %v3606 = vsub.f32 %v3454, %v3547
      %v3607 = vsub.f32 %v3456, %v3547
      %v3608 = vsub.f32 %v3460, %v3551
      %v3609 = vsub.f32 %v3462, %v3551
      %v3610 = vsub.f32 %v3464, %v3555
      %v3611 = vsub.f32 %v3466, %v3555
      %v3612 = vsub.f32 %v3470, %v3559
      %v3613 = vsub.f32 %v3472, %v3559
      %v3614 = vsub.f32 %v3474, %v3563
      %v3615 = vsub.f32 %v3476, %v3563
      %v3616 = vsub.f32 %v3480, %v3567
      %v3617 = vsub.f32 %v3482, %v3567
      %v3618 = vsub.f32 %v3484, %v3571
      %v3619 = vsub.f32 %v3486, %v3571
      %v3620 = vsub.f32 %v3490, %v3575
      %v3621 = vsub.f32 %v3492, %v3575
      %v3622 = vsub.f32 %v3494, %v3579
      %v3623 = vsub.f32 %v3496, %v3579
      %v3624 = vsub.f32 %v3500, %v3583
      %v3625 = vsub.f32 %v3502, %v3583
      %v3626 = vsub.f32 %v3504, %v3587
      %v3627 = vsub.f32 %v3506, %v3587
      %v3628 = vmul.f32 %v3588, 1.442695
      %v3629 = vpow.pop %v3628
      %v3630 = vmul.f32 %v3589, 1.442695
      %v3631 = vpow.pop %v3630
      %v3632 = vmul.f32 %v3590, 1.442695
      %v3633 = vpow.pop %v3632
      %v3634 = vmul.f32 %v3591, 1.442695
      %v3635 = vpow.pop %v3634
      %v3636 = vmul.f32 %v3592, 1.442695
      %v3637 = vpow.pop %v3636
      %v3638 = vmul.f32 %v3593, 1.442695
      %v3639 = vpow.pop %v3638
      %v3640 = vmul.f32 %v3594, 1.442695
      %v3641 = vpow.pop %v3640
      %v3642 = vmul.f32 %v3595, 1.442695
      %v3643 = vpow.pop %v3642
      %v3644 = vmul.f32 %v3596, 1.442695
      %v3645 = vpow.pop %v3644
      %v3646 = vmul.f32 %v3597, 1.442695
      %v3647 = vpow.pop %v3646
      %v3648 = vmul.f32 %v3598, 1.442695
      %v3649 = vpow.pop %v3648
      %v3650 = vmul.f32 %v3599, 1.442695
      %v3651 = vpow.pop %v3650
      %v3652 = vmul.f32 %v3600, 1.442695
      %v3653 = vpow.pop %v3652
      %v3654 = vmul.f32 %v3601, 1.442695
      %v3655 = vpow.pop %v3654
      %v3656 = vmul.f32 %v3602, 1.442695
      %v3657 = vpow.pop %v3656
      %v3658 = vmul.f32 %v3603, 1.442695
      %v3659 = vpow.pop %v3658
      %v3660 = vmul.f32 %v3604, 1.442695
      %v3661 = vpow.pop %v3660
      %v3662 = vmul.f32 %v3605, 1.442695
      %v3663 = vpow.pop %v3662
      %v3664 = vmul.f32 %v3606, 1.442695
      %v3665 = vpow.pop %v3664
      %v3666 = vmul.f32 %v3607, 1.442695
      %v3667 = vpow.pop %v3666
      %v3668 = vmul.f32 %v3608, 1.442695
      %v3669 = vpow.pop %v3668
      %v3670 = vmul.f32 %v3609, 1.442695
      %v3671 = vpow.pop %v3670
      %v3672 = vmul.f32 %v3610, 1.442695
      %v3673 = vpow.pop %v3672
      %v3674 = vmul.f32 %v3611, 1.442695
      %v3675 = vpow.pop %v3674
      %v3676 = vmul.f32 %v3612, 1.442695
      %v3677 = vpow.pop %v3676
      %v3678 = vmul.f32 %v3613, 1.442695
      %v3679 = vpow.pop %v3678
      %v3680 = vmul.f32 %v3614, 1.442695
      %v3681 = vpow.pop %v3680
      %v3682 = vmul.f32 %v3615, 1.442695
      %v3683 = vpow.pop %v3682
      %v3684 = vmul.f32 %v3616, 1.442695
      %v3685 = vpow.pop %v3684
      %v3686 = vmul.f32 %v3617, 1.442695
      %v3687 = vpow.pop %v3686
      %v3688 = vmul.f32 %v3618, 1.442695
      %v3689 = vpow.pop %v3688
      %v3690 = vmul.f32 %v3619, 1.442695
      %v3691 = vpow.pop %v3690
      %v3692 = vmul.f32 %v3620, 1.442695
      %v3693 = vpow.pop %v3692
      %v3694 = vmul.f32 %v3621, 1.442695
      %v3695 = vpow.pop %v3694
      %v3696 = vmul.f32 %v3622, 1.442695
      %v3697 = vpow.pop %v3696
      %v3698 = vmul.f32 %v3623, 1.442695
      %v3699 = vpow.pop %v3698
      %v3700 = vmul.f32 %v3624, 1.442695
      %v3701 = vpow.pop %v3700
      %v3702 = vmul.f32 %v3625, 1.442695
      %v3703 = vpow.pop %v3702
      %v3704 = vmul.f32 %v3626, 1.442695
      %v3705 = vpow.pop %v3704
      %v3706 = vmul.f32 %v3627, 1.442695
      %v3707 = vpow.pop %v3706
      %v3708 = vsel %vm1762, %v3631, 0.0
      %v3709 = vadd.f32 %v3629, %v3708
      %3710 = vadd.xlane.f32.xlu0 %v3709
      %v3711 = vpop.xlane.xlu0 %3710
      %v3712 = vsel %vm1762, %v3635, 0.0
      %v3713 = vadd.f32 %v3633, %v3712
      %3714 = vadd.xlane.f32.xlu0 %v3713
      %v3715 = vpop.xlane.xlu0 %3714
      %v3716 = vsel %vm1762, %v3639, 0.0
      %v3717 = vadd.f32 %v3637, %v3716
      %3718 = vadd.xlane.f32.xlu0 %v3717
      %v3719 = vpop.xlane.xlu0 %3718
      %v3720 = vsel %vm1762, %v3643, 0.0
      %v3721 = vadd.f32 %v3641, %v3720
      %3722 = vadd.xlane.f32.xlu0 %v3721
      %v3723 = vpop.xlane.xlu0 %3722
      %v3724 = vsel %vm1762, %v3647, 0.0
      %v3725 = vadd.f32 %v3645, %v3724
      %3726 = vadd.xlane.f32.xlu0 %v3725
      %v3727 = vpop.xlane.xlu0 %3726
      %v3728 = vsel %vm1762, %v3651, 0.0
      %v3729 = vadd.f32 %v3649, %v3728
      %3730 = vadd.xlane.f32.xlu0 %v3729
      %v3731 = vpop.xlane.xlu0 %3730
      %v3732 = vsel %vm1762, %v3655, 0.0
      %v3733 = vadd.f32 %v3653, %v3732
      %3734 = vadd.xlane.f32.xlu0 %v3733
      %v3735 = vpop.xlane.xlu0 %3734
      %v3736 = vsel %vm1762, %v3659, 0.0
      %v3737 = vadd.f32 %v3657, %v3736
      %3738 = vadd.xlane.f32.xlu0 %v3737
      %v3739 = vpop.xlane.xlu0 %3738
      %v3740 = vsel %vm1762, %v3663, 0.0
      %v3741 = vadd.f32 %v3661, %v3740
      %3742 = vadd.xlane.f32.xlu0 %v3741
      %v3743 = vpop.xlane.xlu0 %3742
      %v3744 = vsel %vm1762, %v3667, 0.0
      %v3745 = vadd.f32 %v3665, %v3744
      %3746 = vadd.xlane.f32.xlu0 %v3745
      %v3747 = vpop.xlane.xlu0 %3746
      %v3748 = vsel %vm1762, %v3671, 0.0
      %v3749 = vadd.f32 %v3669, %v3748
      %3750 = vadd.xlane.f32.xlu0 %v3749
      %v3751 = vpop.xlane.xlu0 %3750
      %v3752 = vsel %vm1762, %v3675, 0.0
      %v3753 = vadd.f32 %v3673, %v3752
      %3754 = vadd.xlane.f32.xlu0 %v3753
      %v3755 = vpop.xlane.xlu0 %3754
      %v3756 = vsel %vm1762, %v3679, 0.0
      %v3757 = vadd.f32 %v3677, %v3756
      %3758 = vadd.xlane.f32.xlu0 %v3757
      %v3759 = vpop.xlane.xlu0 %3758
      %v3760 = vsel %vm1762, %v3683, 0.0
      %v3761 = vadd.f32 %v3681, %v3760
      %3762 = vadd.xlane.f32.xlu0 %v3761
      %v3763 = vpop.xlane.xlu0 %3762
      %v3764 = vsel %vm1762, %v3687, 0.0
      %v3765 = vadd.f32 %v3685, %v3764
      %3766 = vadd.xlane.f32.xlu0 %v3765
      %v3767 = vpop.xlane.xlu0 %3766
      %v3768 = vsel %vm1762, %v3691, 0.0
      %v3769 = vadd.f32 %v3689, %v3768
      %3770 = vadd.xlane.f32.xlu0 %v3769
      %v3771 = vpop.xlane.xlu0 %3770
      %v3772 = vsel %vm1762, %v3695, 0.0
      %v3773 = vadd.f32 %v3693, %v3772
      %3774 = vadd.xlane.f32.xlu0 %v3773
      %v3775 = vpop.xlane.xlu0 %3774
      %v3776 = vsel %vm1762, %v3699, 0.0
      %v3777 = vadd.f32 %v3697, %v3776
      %3778 = vadd.xlane.f32.xlu0 %v3777
      %v3779 = vpop.xlane.xlu0 %3778
      %v3780 = vsel %vm1762, %v3703, 0.0
      %v3781 = vadd.f32 %v3701, %v3780
      %3782 = vadd.xlane.f32.xlu0 %v3781
      %v3783 = vpop.xlane.xlu0 %3782
      %v3784 = vsel %vm1762, %v3707, 0.0
      %v3785 = vadd.f32 %v3705, %v3784
      %3786 = vadd.xlane.f32.xlu0 %v3785
      %v3787 = vpop.xlane.xlu0 %3786
      %v3788 = vrcp.pop %v3711
      %v3789 = vrcp.pop %v3715
      %v3790 = vrcp.pop %v3719
      %v3791 = vrcp.pop %v3723
      %v3792 = vrcp.pop %v3727
      %v3793 = vrcp.pop %v3731
      %v3794 = vrcp.pop %v3735
      %v3795 = vrcp.pop %v3739
      %v3796 = vrcp.pop %v3743
      %v3797 = vrcp.pop %v3747
      %v3798 = vrcp.pop %v3751
      %v3799 = vrcp.pop %v3755
      %v3800 = vrcp.pop %v3759
      %v3801 = vrcp.pop %v3763
      %v3802 = vrcp.pop %v3767
      %v3803 = vrcp.pop %v3771
      %v3804 = vrcp.pop %v3775
      %v3805 = vrcp.pop %v3779
      %v3806 = vrcp.pop %v3783
      %v3807 = vrcp.pop %v3787
      %v3808 = vmul.f32 %v3629, %v3788
      %v3809 = vmul.f32 %v3631, %v3788
      %v3810 = vmul.f32 %v3633, %v3789
      %v3811 = vmul.f32 %v3635, %v3789
      %v3812 = vmul.f32 %v3637, %v3790
      %v3813 = vmul.f32 %v3639, %v3790
      %v3814 = vmul.f32 %v3641, %v3791
      %v3815 = vmul.f32 %v3643, %v3791
      %v3816 = vmul.f32 %v3645, %v3792
      %v3817 = vmul.f32 %v3647, %v3792
      %v3818 = vmul.f32 %v3649, %v3793
      %v3819 = vmul.f32 %v3651, %v3793
      %v3820 = vmul.f32 %v3653, %v3794
      %v3821 = vmul.f32 %v3655, %v3794
      %v3822 = vmul.f32 %v3657, %v3795
      %v3823 = vmul.f32 %v3659, %v3795
      %v3824 = vmul.f32 %v3661, %v3796
      %v3825 = vmul.f32 %v3663, %v3796
      %v3826 = vmul.f32 %v3665, %v3797
      %v3827 = vmul.f32 %v3667, %v3797
      %v3828 = vmul.f32 %v3669, %v3798
      %v3829 = vmul.f32 %v3671, %v3798
      %v3830 = vmul.f32 %v3673, %v3799
      %v3831 = vmul.f32 %v3675, %v3799
      %v3832 = vmul.f32 %v3677, %v3800
      %v3833 = vmul.f32 %v3679, %v3800
      %v3834 = vmul.f32 %v3681, %v3801
      %v3835 = vmul.f32 %v3683, %v3801
      %v3836 = vmul.f32 %v3685, %v3802
      %v3837 = vmul.f32 %v3687, %v3802
      %v3838 = vmul.f32 %v3689, %v3803
      %v3839 = vmul.f32 %v3691, %v3803
      %v3840 = vmul.f32 %v3693, %v3804
      %v3841 = vmul.f32 %v3695, %v3804
      %v3842 = vmul.f32 %v3697, %v3805
      %v3843 = vmul.f32 %v3699, %v3805
      %v3844 = vmul.f32 %v3701, %v3806
      %v3845 = vmul.f32 %v3703, %v3806
      %v3846 = vmul.f32 %v3705, %v3807
      %v3847 = vmul.f32 %v3707, %v3807
      %v3848 = vpack.c.bf16 %v3810, %v3808
      %v3849 = vpack.c.bf16 %v3811, %v3809
      %v3850 = vpack.c.bf16 %v3814, %v3812
      %v3851 = vpack.c.bf16 %v3815, %v3813
      %v3852 = vpack.c.bf16 %v3818, %v3816
      %v3853 = vpack.c.bf16 %v3819, %v3817
      %v3854 = vpack.c.bf16 %v3822, %v3820
      %v3855 = vpack.c.bf16 %v3823, %v3821
      %v3856 = vpack.c.bf16 %v3826, %v3824
      %v3857 = vpack.c.bf16 %v3827, %v3825
      %v3858 = vpack.c.bf16 %v3830, %v3828
      %v3859 = vpack.c.bf16 %v3831, %v3829
      %v3860 = vpack.c.bf16 %v3834, %v3832
      %v3861 = vpack.c.bf16 %v3835, %v3833
      %v3862 = vpack.c.bf16 %v3838, %v3836
      %v3863 = vpack.c.bf16 %v3839, %v3837
      %v3864 = vpack.c.bf16 %v3842, %v3840
      %v3865 = vpack.c.bf16 %v3843, %v3841
      %v3866 = vpack.c.bf16 %v3846, %v3844
      %v3867 = vpack.c.bf16 %v3847, %v3845
      %3868 = vrot.lane.b32.xlu0 %v1752, 64
      %v3869 = vpop.permute.xlu0 %3868
      %3870 = vrot.lane.b32.xlu0 %v1753, 64
      %v3871 = vpop.permute.xlu0 %3870
      %3872 = vrot.lane.b32.xlu0 %v1754, 64
      %v3873 = vpop.permute.xlu0 %3872
      %3874 = vrot.lane.b32.xlu0 %v1755, 64
      %v3875 = vpop.permute.xlu0 %3874
      %3876 = vrot.lane.b32.xlu0 %v1756, 64
      %v3877 = vpop.permute.xlu0 %3876
      %3878 = vrot.lane.b32.xlu0 %v1757, 64
      %v3879 = vpop.permute.xlu0 %3878
      %3880 = vrot.lane.b32.xlu0 %v1758, 64
      %v3881 = vpop.permute.xlu0 %3880
      %3882 = vrot.lane.b32.xlu0 %v1759, 64
      %v3883 = vpop.permute.xlu0 %3882
      %3884 = vrot.lane.b32.xlu0 %v1760, 64
      %v3885 = vpop.permute.xlu0 %3884
      %3886 = vrot.lane.b32.xlu0 %v1761, 64
      %v3887 = vpop.permute.xlu0 %3886
      %v3899 = vsel %vm1762, %v3849, 0
      %v3902 = vsel %vm1762, %v3851, 0
      %v3905 = vsel %vm1762, %v3853, 0
      %v3908 = vsel %vm1762, %v3855, 0
      %v3911 = vsel %vm1762, %v3857, 0
      %v3914 = vsel %vm1762, %v3859, 0
      %v3917 = vsel %vm1762, %v3861, 0
      %v3920 = vsel %vm1762, %v3863, 0
      %v3923 = vsel %vm1762, %v3865, 0
      %v3926 = vsel %vm1762, %v3867, 0
      %3928 = vmatprep.subr.bf16.mxu0 0
      %3929 = vmatpush1.bf16.msra.mxu0 %v3869
      %3930 = vmatprep.subr.bf16.mxu0 0
      %3931 = vmatpush1.bf16.msra.mxu0 %v3871
      %3932 = vmatprep.subr.bf16.mxu0 0
      %3933 = vmatpush1.bf16.msra.mxu0 %v3873
      %3934 = vmatprep.subr.bf16.mxu0 0
      %3935 = vmatpush1.bf16.msra.mxu0 %v3875
      %3936 = vmatprep.subr.bf16.mxu0 0
      %3937 = vmatpush1.bf16.msra.mxu0 %v3877
      %3938 = vmatprep.subr.bf16.mxu0 0
      %3939 = vmatpush1.bf16.msra.mxu0 %v3879
      %3940 = vmatprep.subr.bf16.mxu0 0
      %3941 = vmatpush1.bf16.msra.mxu0 %v3881
      %3942 = vmatprep.subr.bf16.mxu0 0
      %3943 = vmatpush1.bf16.msra.mxu0 %v3883
      %3944 = vmatprep.subr.bf16.mxu0 0
      %3945 = vmatpush1.bf16.msra.mxu0 %v3885
      %3946 = vmatprep.subr.bf16.mxu0 0
      %3947 = vmatpush1.bf16.msra.mxu0 %v3887
      %3948 = vmatprep.subr.bf16.mxu0 0
      %3949 = vmatpush1.bf16.msra.mxu0 0
      %3950 = vmatprep.subr.bf16.mxu0 0
      %3951 = vmatpush1.bf16.msra.mxu0 0
      %3952 = vmatprep.subr.bf16.mxu0 0
      %3953 = vmatpush1.bf16.msra.mxu0 0
      %3954 = vmatprep.subr.bf16.mxu0 0
      %3955 = vmatpush1.bf16.msra.mxu0 0
      %3956 = vmatprep.subr.bf16.mxu0 0
      %3957 = vmatpush1.bf16.msra.mxu0 0
      %3958 = vmatprep.subr.bf16.mxu0 0
      %3959 = vmatpush1.bf16.msra.mxu0 0
      %3960 = vmatprep.mubr.bf16.mxu0 %v3899
      %3961 = vmatmul.mubr.bf16.gmra.mrb[0].mxu0 %v3848
      %v3962 = vpop.f32.mrb[0].mxu0
      %v3963 = vadd.f32 0.0, %v3962
      %v3964 = vpop.f32.mrb[0].mxu0
      %v3965 = vpop.f32.mrb[0].mxu0
      %v3966 = vadd.f32 0.0, %v3965
      %v3967 = vpop.f32.mrb[0].mxu0
      %3968 = vmatprep.mubr.bf16.mxu0 %v3902
      %3969 = vmatmul.mubr.bf16.gmra.mrb[0].mxu0 %v3850
      %v3970 = vpop.f32.mrb[0].mxu0
      %v3971 = vadd.f32 0.0, %v3970
      %v3972 = vpop.f32.mrb[0].mxu0
      %v3973 = vpop.f32.mrb[0].mxu0
      %v3974 = vadd.f32 0.0, %v3973
      %v3975 = vpop.f32.mrb[0].mxu0
      %3976 = vmatprep.mubr.bf16.mxu0 %v3905
      %3977 = vmatmul.mubr.bf16.gmra.mrb[0].mxu0 %v3852
      %v3978 = vpop.f32.mrb[0].mxu0
      %v3979 = vadd.f32 0.0, %v3978
      %v3980 = vpop.f32.mrb[0].mxu0
      %v3981 = vpop.f32.mrb[0].mxu0
      %v3982 = vadd.f32 0.0, %v3981
      %v3983 = vpop.f32.mrb[0].mxu0
      %3984 = vmatprep.mubr.bf16.mxu0 %v3908
      %3985 = vmatmul.mubr.bf16.gmra.mrb[0].mxu0 %v3854
      %v3986 = vpop.f32.mrb[0].mxu0
      %v3987 = vadd.f32 0.0, %v3986
      %v3988 = vpop.f32.mrb[0].mxu0
      %v3989 = vpop.f32.mrb[0].mxu0
      %v3990 = vadd.f32 0.0, %v3989
      %v3991 = vpop.f32.mrb[0].mxu0
      %3992 = vmatprep.mubr.bf16.mxu0 %v3911
      %3993 = vmatmul.mubr.bf16.gmra.mrb[0].mxu0 %v3856
      %v3994 = vpop.f32.mrb[0].mxu0
      %v3995 = vadd.f32 0.0, %v3994
      %v3996 = vpop.f32.mrb[0].mxu0
      %v3997 = vpop.f32.mrb[0].mxu0
      %v3998 = vadd.f32 0.0, %v3997
      %v3999 = vpop.f32.mrb[0].mxu0
      %4000 = vmatprep.mubr.bf16.mxu0 %v3914
      %4001 = vmatmul.mubr.bf16.gmra.mrb[0].mxu0 %v3858
      %v4002 = vpop.f32.mrb[0].mxu0
      %v4003 = vadd.f32 0.0, %v4002
      %v4004 = vpop.f32.mrb[0].mxu0
      %v4005 = vpop.f32.mrb[0].mxu0
      %v4006 = vadd.f32 0.0, %v4005
      %v4007 = vpop.f32.mrb[0].mxu0
      %4008 = vmatprep.mubr.bf16.mxu0 %v3917
      %4009 = vmatmul.mubr.bf16.gmra.mrb[0].mxu0 %v3860
      %v4010 = vpop.f32.mrb[0].mxu0
      %v4011 = vadd.f32 0.0, %v4010
      %v4012 = vpop.f32.mrb[0].mxu0
      %v4013 = vpop.f32.mrb[0].mxu0
      %v4014 = vadd.f32 0.0, %v4013
      %v4015 = vpop.f32.mrb[0].mxu0
      %4016 = vmatprep.mubr.bf16.mxu0 %v3920
      %4017 = vmatmul.mubr.bf16.gmra.mrb[0].mxu0 %v3862
      %v4018 = vpop.f32.mrb[0].mxu0
      %v4019 = vadd.f32 0.0, %v4018
      %v4020 = vpop.f32.mrb[0].mxu0
      %v4021 = vpop.f32.mrb[0].mxu0
      %v4022 = vadd.f32 0.0, %v4021
      %v4023 = vpop.f32.mrb[0].mxu0
      %4024 = vmatprep.mubr.bf16.mxu0 %v3923
      %4025 = vmatmul.mubr.bf16.gmra.mrb[0].mxu0 %v3864
      %v4026 = vpop.f32.mrb[0].mxu0
      %v4027 = vadd.f32 0.0, %v4026
      %v4028 = vpop.f32.mrb[0].mxu0
      %v4029 = vpop.f32.mrb[0].mxu0
      %v4030 = vadd.f32 0.0, %v4029
      %v4031 = vpop.f32.mrb[0].mxu0
      %4032 = vmatprep.mubr.bf16.mxu0 %v3926
      %4033 = vmatmul.mubr.bf16.gmra.mrb[0].mxu0 %v3866
      %v4034 = vpop.f32.mrb[0].mxu0
      %v4035 = vadd.f32 0.0, %v4034
      %v4036 = vpop.f32.mrb[0].mxu0
      %v4037 = vpop.f32.mrb[0].mxu0
      %v4038 = vadd.f32 0.0, %v4037
      %v4039 = vpop.f32.mrb[0].mxu0
      %4040 = vdwg.mxu0
      %v4041 = vpack.c.bf16 %v3966, %v3963
      %v4042 = vpack.c.bf16 %v3974, %v3971
      %v4043 = vpack.c.bf16 %v3982, %v3979
      %v4044 = vpack.c.bf16 %v3990, %v3987
      %v4045 = vpack.c.bf16 %v3998, %v3995
      %v4046 = vpack.c.bf16 %v4006, %v4003
      %v4047 = vpack.c.bf16 %v4014, %v4011
      %v4048 = vpack.c.bf16 %v4022, %v4019
      %v4049 = vpack.c.bf16 %v4030, %v4027
      %v4050 = vpack.c.bf16 %v4038, %v4035
      %4051 = vrot.lane.b32.xlu0 %v1732, 32
      %v4052 = vpop.permute.xlu0 %4051
      %4053 = vrot.lane.b32.xlu0 %v1733, 32
      %v4054 = vpop.permute.xlu0 %4053
      %4055 = vrot.lane.b32.xlu0 %v1734, 32
      %v4056 = vpop.permute.xlu0 %4055
      %4057 = vrot.lane.b32.xlu0 %v1735, 32
      %v4058 = vpop.permute.xlu0 %4057
      %4059 = vrot.lane.b32.xlu0 %v1736, 32
      %v4060 = vpop.permute.xlu0 %4059
      %4061 = vrot.lane.b32.xlu0 %v1737, 32
      %v4062 = vpop.permute.xlu0 %4061
      %4063 = vrot.lane.b32.xlu0 %v1738, 32
      %v4064 = vpop.permute.xlu0 %4063
      %4065 = vrot.lane.b32.xlu0 %v1739, 32
      %v4066 = vpop.permute.xlu0 %4065
      %4067 = vrot.lane.b32.xlu0 %v1740, 32
      %v4068 = vpop.permute.xlu0 %4067
      %4069 = vrot.lane.b32.xlu0 %v1741, 32
      %v4070 = vpop.permute.xlu0 %4069
      %4071 = vrot.lane.b32.xlu0 %v1742, 32
      %v4072 = vpop.permute.xlu0 %4071
      %4073 = vrot.lane.b32.xlu0 %v1743, 32
      %v4074 = vpop.permute.xlu0 %4073
      %4075 = vrot.lane.b32.xlu0 %v1744, 32
      %v4076 = vpop.permute.xlu0 %4075
      %4077 = vrot.lane.b32.xlu0 %v1745, 32
      %v4078 = vpop.permute.xlu0 %4077
      %4079 = vrot.lane.b32.xlu0 %v1746, 32
      %v4080 = vpop.permute.xlu0 %4079
      %4081 = vrot.lane.b32.xlu0 %v1747, 32
      %v4082 = vpop.permute.xlu0 %4081
      %4083 = vrot.lane.b32.xlu0 %v1748, 32
      %v4084 = vpop.permute.xlu0 %4083
      %4085 = vrot.lane.b32.xlu0 %v1749, 32
      %v4086 = vpop.permute.xlu0 %4085
      %4087 = vrot.lane.b32.xlu0 %v1750, 32
      %v4088 = vpop.permute.xlu0 %4087
      %4089 = vrot.lane.b32.xlu0 %v1751, 32
      %v4090 = vpop.permute.xlu0 %4089
      %v4092 = vsel %vm1762, %v4052, 0
      %v4095 = vsel %vm1762, %v4054, 0
      %v4098 = vsel %vm1762, %v4056, 0
      %v4101 = vsel %vm1762, %v4058, 0
      %v4104 = vsel %vm1762, %v4060, 0
      %v4107 = vsel %vm1762, %v4062, 0
      %v4110 = vsel %vm1762, %v4064, 0
      %v4113 = vsel %vm1762, %v4066, 0
      %v4116 = vsel %vm1762, %v4068, 0
      %v4119 = vsel %vm1762, %v4070, 0
      %v4122 = vsel %vm1762, %v4072, 0
      %v4125 = vsel %vm1762, %v4074, 0
      %v4128 = vsel %vm1762, %v4076, 0
      %v4131 = vsel %vm1762, %v4078, 0
      %v4134 = vsel %vm1762, %v4080, 0
      %v4137 = vsel %vm1762, %v4082, 0
      %v4140 = vsel %vm1762, %v4084, 0
      %v4143 = vsel %vm1762, %v4086, 0
      %v4146 = vsel %vm1762, %v4088, 0
      %v4149 = vsel %vm1762, %v4090, 0
      %4151 = vmatprep.subr.bf16.mxu0 0
      %4152 = vmatpush1.bf16.xpose.msra.mxu0 %v4122
      %4153 = vmatprep.subr.bf16.mxu0 0
      %4154 = vmatpush1.bf16.xpose.msra.mxu0 %v4125
      %4155 = vmatprep.subr.bf16.mxu0 0
      %4156 = vmatpush1.bf16.xpose.msra.mxu0 %v4128
      %4157 = vmatprep.subr.bf16.mxu0 0
      %4158 = vmatpush1.bf16.xpose.msra.mxu0 %v4131
      %4159 = vmatprep.subr.bf16.mxu0 0
      %4160 = vmatpush1.bf16.xpose.msra.mxu0 %v4134
      %4161 = vmatprep.subr.bf16.mxu0 0
      %4162 = vmatpush1.bf16.xpose.msra.mxu0 %v4137
      %4163 = vmatprep.subr.bf16.mxu0 0
      %4164 = vmatpush1.bf16.xpose.msra.mxu0 %v4140
      %4165 = vmatprep.subr.bf16.mxu0 0
      %4166 = vmatpush1.bf16.xpose.msra.mxu0 %v4143
      %4167 = vmatprep.subr.bf16.mxu0 0
      %4168 = vmatpush1.bf16.xpose.msra.mxu0 %v4146
      %4169 = vmatprep.subr.bf16.mxu0 0
      %4170 = vmatpush1.bf16.xpose.msra.mxu0 %v4149
      %4171 = vmatprep.subr.bf16.mxu0 0
      %4172 = vmatpush1.bf16.xpose.msra.mxu0 0
      %4173 = vmatprep.subr.bf16.mxu0 0
      %4174 = vmatpush1.bf16.xpose.msra.mxu0 0
      %4175 = vmatprep.subr.bf16.mxu0 0
      %4176 = vmatpush1.bf16.xpose.msra.mxu0 0
      %4177 = vmatprep.subr.bf16.mxu0 0
      %4178 = vmatpush1.bf16.xpose.msra.mxu0 0
      %4179 = vmatprep.subr.bf16.mxu0 0
      %4180 = vmatpush1.bf16.xpose.msra.mxu0 0
      %4181 = vmatprep.subr.bf16.mxu0 0
      %4182 = vmatpush1.bf16.xpose.msra.mxu0 0
      %4183 = vmatprep.mubr.bf16.mxu0 0
      %4184 = vmatmul.mubr.bf16.gmra.mrb[0].mxu0 %v4092
      %v4185 = vpop.f32.mrb[0].mxu0
      %v4186 = vadd.f32 %v1692, %v4185
      %v4187 = vpop.f32.mrb[0].mxu0
      %v4188 = vadd.f32 %v1693, %v4187
      %v4189 = vpop.f32.mrb[0].mxu0
      %v4190 = vadd.f32 %v1694, %v4189
      %v4191 = vpop.f32.mrb[0].mxu0
      %v4192 = vadd.f32 %v1695, %v4191
      %4193 = vmatprep.mubr.bf16.mxu0 0
      %4194 = vmatmul.mubr.bf16.gmra.mrb[0].mxu0 %v4095
      %v4195 = vpop.f32.mrb[0].mxu0
      %v4196 = vadd.f32 %v1696, %v4195
      %v4197 = vpop.f32.mrb[0].mxu0
      %v4198 = vadd.f32 %v1697, %v4197
      %v4199 = vpop.f32.mrb[0].mxu0
      %v4200 = vadd.f32 %v1698, %v4199
      %v4201 = vpop.f32.mrb[0].mxu0
      %v4202 = vadd.f32 %v1699, %v4201
      %4203 = vmatprep.mubr.bf16.mxu0 0
      %4204 = vmatmul.mubr.bf16.gmra.mrb[0].mxu0 %v4098
      %v4205 = vpop.f32.mrb[0].mxu0
      %v4206 = vadd.f32 %v1700, %v4205
      %v4207 = vpop.f32.mrb[0].mxu0
      %v4208 = vadd.f32 %v1701, %v4207
      %v4209 = vpop.f32.mrb[0].mxu0
      %v4210 = vadd.f32 %v1702, %v4209
      %v4211 = vpop.f32.mrb[0].mxu0
      %v4212 = vadd.f32 %v1703, %v4211
      %4213 = vmatprep.mubr.bf16.mxu0 0
      %4214 = vmatmul.mubr.bf16.gmra.mrb[0].mxu0 %v4101
      %v4215 = vpop.f32.mrb[0].mxu0
      %v4216 = vadd.f32 %v1704, %v4215
      %v4217 = vpop.f32.mrb[0].mxu0
      %v4218 = vadd.f32 %v1705, %v4217
      %v4219 = vpop.f32.mrb[0].mxu0
      %v4220 = vadd.f32 %v1706, %v4219
      %v4221 = vpop.f32.mrb[0].mxu0
      %v4222 = vadd.f32 %v1707, %v4221
      %4223 = vmatprep.mubr.bf16.mxu0 0
      %4224 = vmatmul.mubr.bf16.gmra.mrb[0].mxu0 %v4104
      %v4225 = vpop.f32.mrb[0].mxu0
      %v4226 = vadd.f32 %v1708, %v4225
      %v4227 = vpop.f32.mrb[0].mxu0
      %v4228 = vadd.f32 %v1709, %v4227
      %v4229 = vpop.f32.mrb[0].mxu0
      %v4230 = vadd.f32 %v1710, %v4229
      %v4231 = vpop.f32.mrb[0].mxu0
      %v4232 = vadd.f32 %v1711, %v4231
      %4233 = vmatprep.mubr.bf16.mxu0 0
      %4234 = vmatmul.mubr.bf16.gmra.mrb[0].mxu0 %v4107
      %v4235 = vpop.f32.mrb[0].mxu0
      %v4236 = vadd.f32 %v1712, %v4235
      %v4237 = vpop.f32.mrb[0].mxu0
      %v4238 = vadd.f32 %v1713, %v4237
      %v4239 = vpop.f32.mrb[0].mxu0
      %v4240 = vadd.f32 %v1714, %v4239
      %v4241 = vpop.f32.mrb[0].mxu0
      %v4242 = vadd.f32 %v1715, %v4241
      %4243 = vmatprep.mubr.bf16.mxu0 0
      %4244 = vmatmul.mubr.bf16.gmra.mrb[0].mxu0 %v4110
      %v4245 = vpop.f32.mrb[0].mxu0
      %v4246 = vadd.f32 %v1716, %v4245
      %v4247 = vpop.f32.mrb[0].mxu0
      %v4248 = vadd.f32 %v1717, %v4247
      %v4249 = vpop.f32.mrb[0].mxu0
      %v4250 = vadd.f32 %v1718, %v4249
      %v4251 = vpop.f32.mrb[0].mxu0
      %v4252 = vadd.f32 %v1719, %v4251
      %4253 = vmatprep.mubr.bf16.mxu0 0
      %4254 = vmatmul.mubr.bf16.gmra.mrb[0].mxu0 %v4113
      %v4255 = vpop.f32.mrb[0].mxu0
      %v4256 = vadd.f32 %v1720, %v4255
      %v4257 = vpop.f32.mrb[0].mxu0
      %v4258 = vadd.f32 %v1721, %v4257
      %v4259 = vpop.f32.mrb[0].mxu0
      %v4260 = vadd.f32 %v1722, %v4259
      %v4261 = vpop.f32.mrb[0].mxu0
      %v4262 = vadd.f32 %v1723, %v4261
      %4263 = vmatprep.mubr.bf16.mxu0 0
      %4264 = vmatmul.mubr.bf16.gmra.mrb[0].mxu0 %v4116
      %v4265 = vpop.f32.mrb[0].mxu0
      %v4266 = vadd.f32 %v1724, %v4265
      %v4267 = vpop.f32.mrb[0].mxu0
      %v4268 = vadd.f32 %v1725, %v4267
      %v4269 = vpop.f32.mrb[0].mxu0
      %v4270 = vadd.f32 %v1726, %v4269
      %v4271 = vpop.f32.mrb[0].mxu0
      %v4272 = vadd.f32 %v1727, %v4271
      %4273 = vmatprep.mubr.bf16.mxu0 0
      %4274 = vmatmul.mubr.bf16.gmra.mrb[0].mxu0 %v4119
      %v4275 = vpop.f32.mrb[0].mxu0
      %v4276 = vadd.f32 %v1728, %v4275
      %v4277 = vpop.f32.mrb[0].mxu0
      %v4278 = vadd.f32 %v1729, %v4277
      %v4279 = vpop.f32.mrb[0].mxu0
      %v4280 = vadd.f32 %v1730, %v4279
      %v4281 = vpop.f32.mrb[0].mxu0
      %v4282 = vadd.f32 %v1731, %v4281
      %4283 = vdwg.mxu0
      %v4284 = vsel %vm1762, %v4188, -inf
      %v4285 = vmax.f32 %v4186, %v4284
      %4286 = vmax.xlane.f32.xlu0 %v4285
      %v4287 = vpop.xlane.xlu0 %4286
      %v4288 = vsel %vm1762, %v4192, -inf
      %v4289 = vmax.f32 %v4190, %v4288
      %4290 = vmax.xlane.f32.xlu0 %v4289
      %v4291 = vpop.xlane.xlu0 %4290
      %v4292 = vsel %vm1762, %v4198, -inf
      %v4293 = vmax.f32 %v4196, %v4292
      %4294 = vmax.xlane.f32.xlu0 %v4293
      %v4295 = vpop.xlane.xlu0 %4294
      %v4296 = vsel %vm1762, %v4202, -inf
      %v4297 = vmax.f32 %v4200, %v4296
      %4298 = vmax.xlane.f32.xlu0 %v4297
      %v4299 = vpop.xlane.xlu0 %4298
      %v4300 = vsel %vm1762, %v4208, -inf
      %v4301 = vmax.f32 %v4206, %v4300
      %4302 = vmax.xlane.f32.xlu0 %v4301
      %v4303 = vpop.xlane.xlu0 %4302
      %v4304 = vsel %vm1762, %v4212, -inf
      %v4305 = vmax.f32 %v4210, %v4304
      %4306 = vmax.xlane.f32.xlu0 %v4305
      %v4307 = vpop.xlane.xlu0 %4306
      %v4308 = vsel %vm1762, %v4218, -inf
      %v4309 = vmax.f32 %v4216, %v4308
      %4310 = vmax.xlane.f32.xlu0 %v4309
      %v4311 = vpop.xlane.xlu0 %4310
      %v4312 = vsel %vm1762, %v4222, -inf
      %v4313 = vmax.f32 %v4220, %v4312
      %4314 = vmax.xlane.f32.xlu0 %v4313
      %v4315 = vpop.xlane.xlu0 %4314
      %v4316 = vsel %vm1762, %v4228, -inf
      %v4317 = vmax.f32 %v4226, %v4316
      %4318 = vmax.xlane.f32.xlu0 %v4317
      %v4319 = vpop.xlane.xlu0 %4318
      %v4320 = vsel %vm1762, %v4232, -inf
      %v4321 = vmax.f32 %v4230, %v4320
      %4322 = vmax.xlane.f32.xlu0 %v4321
      %v4323 = vpop.xlane.xlu0 %4322
      %v4324 = vsel %vm1762, %v4238, -inf
      %v4325 = vmax.f32 %v4236, %v4324
      %4326 = vmax.xlane.f32.xlu0 %v4325
      %v4327 = vpop.xlane.xlu0 %4326
      %v4328 = vsel %vm1762, %v4242, -inf
      %v4329 = vmax.f32 %v4240, %v4328
      %4330 = vmax.xlane.f32.xlu0 %v4329
      %v4331 = vpop.xlane.xlu0 %4330
      %v4332 = vsel %vm1762, %v4248, -inf
      %v4333 = vmax.f32 %v4246, %v4332
      %4334 = vmax.xlane.f32.xlu0 %v4333
      %v4335 = vpop.xlane.xlu0 %4334
      %v4336 = vsel %vm1762, %v4252, -inf
      %v4337 = vmax.f32 %v4250, %v4336
      %4338 = vmax.xlane.f32.xlu0 %v4337
      %v4339 = vpop.xlane.xlu0 %4338
      %v4340 = vsel %vm1762, %v4258, -inf
      %v4341 = vmax.f32 %v4256, %v4340
      %4342 = vmax.xlane.f32.xlu0 %v4341
      %v4343 = vpop.xlane.xlu0 %4342
      %v4344 = vsel %vm1762, %v4262, -inf
      %v4345 = vmax.f32 %v4260, %v4344
      %4346 = vmax.xlane.f32.xlu0 %v4345
      %v4347 = vpop.xlane.xlu0 %4346
      %v4348 = vsel %vm1762, %v4268, -inf
      %v4349 = vmax.f32 %v4266, %v4348
      %4350 = vmax.xlane.f32.xlu0 %v4349
      %v4351 = vpop.xlane.xlu0 %4350
      %v4352 = vsel %vm1762, %v4272, -inf
      %v4353 = vmax.f32 %v4270, %v4352
      %4354 = vmax.xlane.f32.xlu0 %v4353
      %v4355 = vpop.xlane.xlu0 %4354
      %v4356 = vsel %vm1762, %v4278, -inf
      %v4357 = vmax.f32 %v4276, %v4356
      %4358 = vmax.xlane.f32.xlu0 %v4357
      %v4359 = vpop.xlane.xlu0 %4358
      %v4360 = vsel %vm1762, %v4282, -inf
      %v4361 = vmax.f32 %v4280, %v4360
      %4362 = vmax.xlane.f32.xlu0 %v4361
      %v4363 = vpop.xlane.xlu0 %4362
      %v4364 = vsub.f32 %v4186, %v4287
      %v4365 = vsub.f32 %v4188, %v4287
      %v4366 = vsub.f32 %v4190, %v4291
      %v4367 = vsub.f32 %v4192, %v4291
      %v4368 = vsub.f32 %v4196, %v4295
      %v4369 = vsub.f32 %v4198, %v4295
      %v4370 = vsub.f32 %v4200, %v4299
      %v4371 = vsub.f32 %v4202, %v4299
      %v4372 = vsub.f32 %v4206, %v4303
      %v4373 = vsub.f32 %v4208, %v4303
      %v4374 = vsub.f32 %v4210, %v4307
      %v4375 = vsub.f32 %v4212, %v4307
      %v4376 = vsub.f32 %v4216, %v4311
      %v4377 = vsub.f32 %v4218, %v4311
      %v4378 = vsub.f32 %v4220, %v4315
      %v4379 = vsub.f32 %v4222, %v4315
      %v4380 = vsub.f32 %v4226, %v4319
      %v4381 = vsub.f32 %v4228, %v4319
      %v4382 = vsub.f32 %v4230, %v4323
      %v4383 = vsub.f32 %v4232, %v4323
      %v4384 = vsub.f32 %v4236, %v4327
      %v4385 = vsub.f32 %v4238, %v4327
      %v4386 = vsub.f32 %v4240, %v4331
      %v4387 = vsub.f32 %v4242, %v4331
      %v4388 = vsub.f32 %v4246, %v4335
      %v4389 = vsub.f32 %v4248, %v4335
      %v4390 = vsub.f32 %v4250, %v4339
      %v4391 = vsub.f32 %v4252, %v4339
      %v4392 = vsub.f32 %v4256, %v4343
      %v4393 = vsub.f32 %v4258, %v4343
      %v4394 = vsub.f32 %v4260, %v4347
      %v4395 = vsub.f32 %v4262, %v4347
      %v4396 = vsub.f32 %v4266, %v4351
      %v4397 = vsub.f32 %v4268, %v4351
      %v4398 = vsub.f32 %v4270, %v4355
      %v4399 = vsub.f32 %v4272, %v4355
      %v4400 = vsub.f32 %v4276, %v4359
      %v4401 = vsub.f32 %v4278, %v4359
      %v4402 = vsub.f32 %v4280, %v4363
      %v4403 = vsub.f32 %v4282, %v4363
      %v4404 = vmul.f32 %v4364, 1.442695
      %v4405 = vpow.pop %v4404
      %v4406 = vmul.f32 %v4365, 1.442695
      %v4407 = vpow.pop %v4406
      %v4408 = vmul.f32 %v4366, 1.442695
      %v4409 = vpow.pop %v4408
      %v4410 = vmul.f32 %v4367, 1.442695
      %v4411 = vpow.pop %v4410
      %v4412 = vmul.f32 %v4368, 1.442695
      %v4413 = vpow.pop %v4412
      %v4414 = vmul.f32 %v4369, 1.442695
      %v4415 = vpow.pop %v4414
      %v4416 = vmul.f32 %v4370, 1.442695
      %v4417 = vpow.pop %v4416
      %v4418 = vmul.f32 %v4371, 1.442695
      %v4419 = vpow.pop %v4418
      %v4420 = vmul.f32 %v4372, 1.442695
      %v4421 = vpow.pop %v4420
      %v4422 = vmul.f32 %v4373, 1.442695
      %v4423 = vpow.pop %v4422
      %v4424 = vmul.f32 %v4374, 1.442695
      %v4425 = vpow.pop %v4424
      %v4426 = vmul.f32 %v4375, 1.442695
      %v4427 = vpow.pop %v4426
      %v4428 = vmul.f32 %v4376, 1.442695
      %v4429 = vpow.pop %v4428
      %v4430 = vmul.f32 %v4377, 1.442695
      %v4431 = vpow.pop %v4430
      %v4432 = vmul.f32 %v4378, 1.442695
      %v4433 = vpow.pop %v4432
      %v4434 = vmul.f32 %v4379, 1.442695
      %v4435 = vpow.pop %v4434
      %v4436 = vmul.f32 %v4380, 1.442695
      %v4437 = vpow.pop %v4436
      %v4438 = vmul.f32 %v4381, 1.442695
      %v4439 = vpow.pop %v4438
      %v4440 = vmul.f32 %v4382, 1.442695
      %v4441 = vpow.pop %v4440
      %v4442 = vmul.f32 %v4383, 1.442695
      %v4443 = vpow.pop %v4442
      %v4444 = vmul.f32 %v4384, 1.442695
      %v4445 = vpow.pop %v4444
      %v4446 = vmul.f32 %v4385, 1.442695
      %v4447 = vpow.pop %v4446
      %v4448 = vmul.f32 %v4386, 1.442695
      %v4449 = vpow.pop %v4448
      %v4450 = vmul.f32 %v4387, 1.442695
      %v4451 = vpow.pop %v4450
      %v4452 = vmul.f32 %v4388, 1.442695
      %v4453 = vpow.pop %v4452
      %v4454 = vmul.f32 %v4389, 1.442695
      %v4455 = vpow.pop %v4454
      %v4456 = vmul.f32 %v4390, 1.442695
      %v4457 = vpow.pop %v4456
      %v4458 = vmul.f32 %v4391, 1.442695
      %v4459 = vpow.pop %v4458
      %v4460 = vmul.f32 %v4392, 1.442695
      %v4461 = vpow.pop %v4460
      %v4462 = vmul.f32 %v4393, 1.442695
      %v4463 = vpow.pop %v4462
      %v4464 = vmul.f32 %v4394, 1.442695
      %v4465 = vpow.pop %v4464
      %v4466 = vmul.f32 %v4395, 1.442695
      %v4467 = vpow.pop %v4466
      %v4468 = vmul.f32 %v4396, 1.442695
      %v4469 = vpow.pop %v4468
      %v4470 = vmul.f32 %v4397, 1.442695
      %v4471 = vpow.pop %v4470
      %v4472 = vmul.f32 %v4398, 1.442695
      %v4473 = vpow.pop %v4472
      %v4474 = vmul.f32 %v4399, 1.442695
      %v4475 = vpow.pop %v4474
      %v4476 = vmul.f32 %v4400, 1.442695
      %v4477 = vpow.pop %v4476
      %v4478 = vmul.f32 %v4401, 1.442695
      %v4479 = vpow.pop %v4478
      %v4480 = vmul.f32 %v4402, 1.442695
      %v4481 = vpow.pop %v4480
      %v4482 = vmul.f32 %v4403, 1.442695
      %v4483 = vpow.pop %v4482
      %v4484 = vsel %vm1762, %v4407, 0.0
      %v4485 = vadd.f32 %v4405, %v4484
      %4486 = vadd.xlane.f32.xlu0 %v4485
      %v4487 = vpop.xlane.xlu0 %4486
      %v4488 = vsel %vm1762, %v4411, 0.0
      %v4489 = vadd.f32 %v4409, %v4488
      %4490 = vadd.xlane.f32.xlu0 %v4489
      %v4491 = vpop.xlane.xlu0 %4490
      %v4492 = vsel %vm1762, %v4415, 0.0
      %v4493 = vadd.f32 %v4413, %v4492
      %4494 = vadd.xlane.f32.xlu0 %v4493
      %v4495 = vpop.xlane.xlu0 %4494
      %v4496 = vsel %vm1762, %v4419, 0.0
      %v4497 = vadd.f32 %v4417, %v4496
      %4498 = vadd.xlane.f32.xlu0 %v4497
      %v4499 = vpop.xlane.xlu0 %4498
      %v4500 = vsel %vm1762, %v4423, 0.0
      %v4501 = vadd.f32 %v4421, %v4500
      %4502 = vadd.xlane.f32.xlu0 %v4501
      %v4503 = vpop.xlane.xlu0 %4502
      %v4504 = vsel %vm1762, %v4427, 0.0
      %v4505 = vadd.f32 %v4425, %v4504
      %4506 = vadd.xlane.f32.xlu0 %v4505
      %v4507 = vpop.xlane.xlu0 %4506
      %v4508 = vsel %vm1762, %v4431, 0.0
      %v4509 = vadd.f32 %v4429, %v4508
      %4510 = vadd.xlane.f32.xlu0 %v4509
      %v4511 = vpop.xlane.xlu0 %4510
      %v4512 = vsel %vm1762, %v4435, 0.0
      %v4513 = vadd.f32 %v4433, %v4512
      %4514 = vadd.xlane.f32.xlu0 %v4513
      %v4515 = vpop.xlane.xlu0 %4514
      %v4516 = vsel %vm1762, %v4439, 0.0
      %v4517 = vadd.f32 %v4437, %v4516
      %4518 = vadd.xlane.f32.xlu0 %v4517
      %v4519 = vpop.xlane.xlu0 %4518
      %v4520 = vsel %vm1762, %v4443, 0.0
      %v4521 = vadd.f32 %v4441, %v4520
      %4522 = vadd.xlane.f32.xlu0 %v4521
      %v4523 = vpop.xlane.xlu0 %4522
      %v4524 = vsel %vm1762, %v4447, 0.0
      %v4525 = vadd.f32 %v4445, %v4524
      %4526 = vadd.xlane.f32.xlu0 %v4525
      %v4527 = vpop.xlane.xlu0 %4526
      %v4528 = vsel %vm1762, %v4451, 0.0
      %v4529 = vadd.f32 %v4449, %v4528
      %4530 = vadd.xlane.f32.xlu0 %v4529
      %v4531 = vpop.xlane.xlu0 %4530
      %v4532 = vsel %vm1762, %v4455, 0.0
      %v4533 = vadd.f32 %v4453, %v4532
      %4534 = vadd.xlane.f32.xlu0 %v4533
      %v4535 = vpop.xlane.xlu0 %4534
      %v4536 = vsel %vm1762, %v4459, 0.0
      %v4537 = vadd.f32 %v4457, %v4536
      %4538 = vadd.xlane.f32.xlu0 %v4537
      %v4539 = vpop.xlane.xlu0 %4538
      %v4540 = vsel %vm1762, %v4463, 0.0
      %v4541 = vadd.f32 %v4461, %v4540
      %4542 = vadd.xlane.f32.xlu0 %v4541
      %v4543 = vpop.xlane.xlu0 %4542
      %v4544 = vsel %vm1762, %v4467, 0.0
      %v4545 = vadd.f32 %v4465, %v4544
      %4546 = vadd.xlane.f32.xlu0 %v4545
      %v4547 = vpop.xlane.xlu0 %4546
      %v4548 = vsel %vm1762, %v4471, 0.0
      %v4549 = vadd.f32 %v4469, %v4548
      %4550 = vadd.xlane.f32.xlu0 %v4549
      %v4551 = vpop.xlane.xlu0 %4550
      %v4552 = vsel %vm1762, %v4475, 0.0
      %v4553 = vadd.f32 %v4473, %v4552
      %4554 = vadd.xlane.f32.xlu0 %v4553
      %v4555 = vpop.xlane.xlu0 %4554
      %v4556 = vsel %vm1762, %v4479, 0.0
      %v4557 = vadd.f32 %v4477, %v4556
      %4558 = vadd.xlane.f32.xlu0 %v4557
      %v4559 = vpop.xlane.xlu0 %4558
      %v4560 = vsel %vm1762, %v4483, 0.0
      %v4561 = vadd.f32 %v4481, %v4560
      %4562 = vadd.xlane.f32.xlu0 %v4561
      %v4563 = vpop.xlane.xlu0 %4562
      %v4564 = vrcp.pop %v4487
      %v4565 = vrcp.pop %v4491
      %v4566 = vrcp.pop %v4495
      %v4567 = vrcp.pop %v4499
      %v4568 = vrcp.pop %v4503
      %v4569 = vrcp.pop %v4507
      %v4570 = vrcp.pop %v4511
      %v4571 = vrcp.pop %v4515
      %v4572 = vrcp.pop %v4519
      %v4573 = vrcp.pop %v4523
      %v4574 = vrcp.pop %v4527
      %v4575 = vrcp.pop %v4531
      %v4576 = vrcp.pop %v4535
      %v4577 = vrcp.pop %v4539
      %v4578 = vrcp.pop %v4543
      %v4579 = vrcp.pop %v4547
      %v4580 = vrcp.pop %v4551
      %v4581 = vrcp.pop %v4555
      %v4582 = vrcp.pop %v4559
      %v4583 = vrcp.pop %v4563
      %v4584 = vmul.f32 %v4405, %v4564
      %v4585 = vmul.f32 %v4407, %v4564
      %v4586 = vmul.f32 %v4409, %v4565
      %v4587 = vmul.f32 %v4411, %v4565
      %v4588 = vmul.f32 %v4413, %v4566
      %v4589 = vmul.f32 %v4415, %v4566
      %v4590 = vmul.f32 %v4417, %v4567
      %v4591 = vmul.f32 %v4419, %v4567
      %v4592 = vmul.f32 %v4421, %v4568
      %v4593 = vmul.f32 %v4423, %v4568
      %v4594 = vmul.f32 %v4425, %v4569
      %v4595 = vmul.f32 %v4427, %v4569
      %v4596 = vmul.f32 %v4429, %v4570
      %v4597 = vmul.f32 %v4431, %v4570
      %v4598 = vmul.f32 %v4433, %v4571
      %v4599 = vmul.f32 %v4435, %v4571
      %v4600 = vmul.f32 %v4437, %v4572
      %v4601 = vmul.f32 %v4439, %v4572
      %v4602 = vmul.f32 %v4441, %v4573
      %v4603 = vmul.f32 %v4443, %v4573
      %v4604 = vmul.f32 %v4445, %v4574
      %v4605 = vmul.f32 %v4447, %v4574
      %v4606 = vmul.f32 %v4449, %v4575
      %v4607 = vmul.f32 %v4451, %v4575
      %v4608 = vmul.f32 %v4453, %v4576
      %v4609 = vmul.f32 %v4455, %v4576
      %v4610 = vmul.f32 %v4457, %v4577
      %v4611 = vmul.f32 %v4459, %v4577
      %v4612 = vmul.f32 %v4461, %v4578
      %v4613 = vmul.f32 %v4463, %v4578
      %v4614 = vmul.f32 %v4465, %v4579
      %v4615 = vmul.f32 %v4467, %v4579
      %v4616 = vmul.f32 %v4469, %v4580
      %v4617 = vmul.f32 %v4471, %v4580
      %v4618 = vmul.f32 %v4473, %v4581
      %v4619 = vmul.f32 %v4475, %v4581
      %v4620 = vmul.f32 %v4477, %v4582
      %v4621 = vmul.f32 %v4479, %v4582
      %v4622 = vmul.f32 %v4481, %v4583
      %v4623 = vmul.f32 %v4483, %v4583
      %v4624 = vpack.c.bf16 %v4586, %v4584
      %v4625 = vpack.c.bf16 %v4587, %v4585
      %v4626 = vpack.c.bf16 %v4590, %v4588
      %v4627 = vpack.c.bf16 %v4591, %v4589
      %v4628 = vpack.c.bf16 %v4594, %v4592
      %v4629 = vpack.c.bf16 %v4595, %v4593
      %v4630 = vpack.c.bf16 %v4598, %v4596
      %v4631 = vpack.c.bf16 %v4599, %v4597
      %v4632 = vpack.c.bf16 %v4602, %v4600
      %v4633 = vpack.c.bf16 %v4603, %v4601
      %v4634 = vpack.c.bf16 %v4606, %v4604
      %v4635 = vpack.c.bf16 %v4607, %v4605
      %v4636 = vpack.c.bf16 %v4610, %v4608
      %v4637 = vpack.c.bf16 %v4611, %v4609
      %v4638 = vpack.c.bf16 %v4614, %v4612
      %v4639 = vpack.c.bf16 %v4615, %v4613
      %v4640 = vpack.c.bf16 %v4618, %v4616
      %v4641 = vpack.c.bf16 %v4619, %v4617
      %v4642 = vpack.c.bf16 %v4622, %v4620
      %v4643 = vpack.c.bf16 %v4623, %v4621
      %4644 = vrot.lane.b32.xlu0 %v1752, 32
      %v4645 = vpop.permute.xlu0 %4644
      %4646 = vrot.lane.b32.xlu0 %v1753, 32
      %v4647 = vpop.permute.xlu0 %4646
      %4648 = vrot.lane.b32.xlu0 %v1754, 32
      %v4649 = vpop.permute.xlu0 %4648
      %4650 = vrot.lane.b32.xlu0 %v1755, 32
      %v4651 = vpop.permute.xlu0 %4650
      %4652 = vrot.lane.b32.xlu0 %v1756, 32
      %v4653 = vpop.permute.xlu0 %4652
      %4654 = vrot.lane.b32.xlu0 %v1757, 32
      %v4655 = vpop.permute.xlu0 %4654
      %4656 = vrot.lane.b32.xlu0 %v1758, 32
      %v4657 = vpop.permute.xlu0 %4656
      %4658 = vrot.lane.b32.xlu0 %v1759, 32
      %v4659 = vpop.permute.xlu0 %4658
      %4660 = vrot.lane.b32.xlu0 %v1760, 32
      %v4661 = vpop.permute.xlu0 %4660
      %4662 = vrot.lane.b32.xlu0 %v1761, 32
      %v4663 = vpop.permute.xlu0 %4662
      %v4675 = vsel %vm1762, %v4625, 0
      %v4678 = vsel %vm1762, %v4627, 0
      %v4681 = vsel %vm1762, %v4629, 0
      %v4684 = vsel %vm1762, %v4631, 0
      %v4687 = vsel %vm1762, %v4633, 0
      %v4690 = vsel %vm1762, %v4635, 0
      %v4693 = vsel %vm1762, %v4637, 0
      %v4696 = vsel %vm1762, %v4639, 0
      %v4699 = vsel %vm1762, %v4641, 0
      %v4702 = vsel %vm1762, %v4643, 0
      %4704 = vmatprep.subr.bf16.mxu0 0
      %4705 = vmatpush1.bf16.msra.mxu0 %v4645
      %4706 = vmatprep.subr.bf16.mxu0 0
      %4707 = vmatpush1.bf16.msra.mxu0 %v4647
      %4708 = vmatprep.subr.bf16.mxu0 0
      %4709 = vmatpush1.bf16.msra.mxu0 %v4649
      %4710 = vmatprep.subr.bf16.mxu0 0
      %4711 = vmatpush1.bf16.msra.mxu0 %v4651
      %4712 = vmatprep.subr.bf16.mxu0 0
      %4713 = vmatpush1.bf16.msra.mxu0 %v4653
      %4714 = vmatprep.subr.bf16.mxu0 0
      %4715 = vmatpush1.bf16.msra.mxu0 %v4655
      %4716 = vmatprep.subr.bf16.mxu0 0
      %4717 = vmatpush1.bf16.msra.mxu0 %v4657
      %4718 = vmatprep.subr.bf16.mxu0 0
      %4719 = vmatpush1.bf16.msra.mxu0 %v4659
      %4720 = vmatprep.subr.bf16.mxu0 0
      %4721 = vmatpush1.bf16.msra.mxu0 %v4661
      %4722 = vmatprep.subr.bf16.mxu0 0
      %4723 = vmatpush1.bf16.msra.mxu0 %v4663
      %4724 = vmatprep.subr.bf16.mxu0 0
      %4725 = vmatpush1.bf16.msra.mxu0 0
      %4726 = vmatprep.subr.bf16.mxu0 0
      %4727 = vmatpush1.bf16.msra.mxu0 0
      %4728 = vmatprep.subr.bf16.mxu0 0
      %4729 = vmatpush1.bf16.msra.mxu0 0
      %4730 = vmatprep.subr.bf16.mxu0 0
      %4731 = vmatpush1.bf16.msra.mxu0 0
      %4732 = vmatprep.subr.bf16.mxu0 0
      %4733 = vmatpush1.bf16.msra.mxu0 0
      %4734 = vmatprep.subr.bf16.mxu0 0
      %4735 = vmatpush1.bf16.msra.mxu0 0
      %4736 = vmatprep.mubr.bf16.mxu0 %v4675
      %4737 = vmatmul.mubr.bf16.gmra.mrb[0].mxu0 %v4624
      %v4738 = vpop.f32.mrb[0].mxu0
      %v4739 = vadd.f32 0.0, %v4738
      %v4740 = vpop.f32.mrb[0].mxu0
      %v4741 = vpop.f32.mrb[0].mxu0
      %v4742 = vadd.f32 0.0, %v4741
      %v4743 = vpop.f32.mrb[0].mxu0
      %4744 = vmatprep.mubr.bf16.mxu0 %v4678
      %4745 = vmatmul.mubr.bf16.gmra.mrb[0].mxu0 %v4626
      %v4746 = vpop.f32.mrb[0].mxu0
      %v4747 = vadd.f32 0.0, %v4746
      %v4748 = vpop.f32.mrb[0].mxu0
      %v4749 = vpop.f32.mrb[0].mxu0
      %v4750 = vadd.f32 0.0, %v4749
      %v4751 = vpop.f32.mrb[0].mxu0
      %4752 = vmatprep.mubr.bf16.mxu0 %v4681
      %4753 = vmatmul.mubr.bf16.gmra.mrb[0].mxu0 %v4628
      %v4754 = vpop.f32.mrb[0].mxu0
      %v4755 = vadd.f32 0.0, %v4754
      %v4756 = vpop.f32.mrb[0].mxu0
      %v4757 = vpop.f32.mrb[0].mxu0
      %v4758 = vadd.f32 0.0, %v4757
      %v4759 = vpop.f32.mrb[0].mxu0
      %4760 = vmatprep.mubr.bf16.mxu0 %v4684
      %4761 = vmatmul.mubr.bf16.gmra.mrb[0].mxu0 %v4630
      %v4762 = vpop.f32.mrb[0].mxu0
      %v4763 = vadd.f32 0.0, %v4762
      %v4764 = vpop.f32.mrb[0].mxu0
      %v4765 = vpop.f32.mrb[0].mxu0
      %v4766 = vadd.f32 0.0, %v4765
      %v4767 = vpop.f32.mrb[0].mxu0
      %4768 = vmatprep.mubr.bf16.mxu0 %v4687
      %4769 = vmatmul.mubr.bf16.gmra.mrb[0].mxu0 %v4632
      %v4770 = vpop.f32.mrb[0].mxu0
      %v4771 = vadd.f32 0.0, %v4770
      %v4772 = vpop.f32.mrb[0].mxu0
      %v4773 = vpop.f32.mrb[0].mxu0
      %v4774 = vadd.f32 0.0, %v4773
      %v4775 = vpop.f32.mrb[0].mxu0
      %4776 = vmatprep.mubr.bf16.mxu0 %v4690
      %4777 = vmatmul.mubr.bf16.gmra.mrb[0].mxu0 %v4634
      %v4778 = vpop.f32.mrb[0].mxu0
      %v4779 = vadd.f32 0.0, %v4778
      %v4780 = vpop.f32.mrb[0].mxu0
      %v4781 = vpop.f32.mrb[0].mxu0
      %v4782 = vadd.f32 0.0, %v4781
      %v4783 = vpop.f32.mrb[0].mxu0
      %4784 = vmatprep.mubr.bf16.mxu0 %v4693
      %4785 = vmatmul.mubr.bf16.gmra.mrb[0].mxu0 %v4636
      %v4786 = vpop.f32.mrb[0].mxu0
      %v4787 = vadd.f32 0.0, %v4786
      %v4788 = vpop.f32.mrb[0].mxu0
      %v4789 = vpop.f32.mrb[0].mxu0
      %v4790 = vadd.f32 0.0, %v4789
      %v4791 = vpop.f32.mrb[0].mxu0
      %4792 = vmatprep.mubr.bf16.mxu0 %v4696
      %4793 = vmatmul.mubr.bf16.gmra.mrb[0].mxu0 %v4638
      %v4794 = vpop.f32.mrb[0].mxu0
      %v4795 = vadd.f32 0.0, %v4794
      %v4796 = vpop.f32.mrb[0].mxu0
      %v4797 = vpop.f32.mrb[0].mxu0
      %v4798 = vadd.f32 0.0, %v4797
      %v4799 = vpop.f32.mrb[0].mxu0
      %4800 = vmatprep.mubr.bf16.mxu0 %v4699
      %4801 = vmatmul.mubr.bf16.gmra.mrb[0].mxu0 %v4640
      %v4802 = vpop.f32.mrb[0].mxu0
      %v4803 = vadd.f32 0.0, %v4802
      %v4804 = vpop.f32.mrb[0].mxu0
      %v4805 = vpop.f32.mrb[0].mxu0
      %v4806 = vadd.f32 0.0, %v4805
      %v4807 = vpop.f32.mrb[0].mxu0
      %4808 = vmatprep.mubr.bf16.mxu0 %v4702
      %4809 = vmatmul.mubr.bf16.gmra.mrb[0].mxu0 %v4642
      %v4810 = vpop.f32.mrb[0].mxu0
      %v4811 = vadd.f32 0.0, %v4810
      %v4812 = vpop.f32.mrb[0].mxu0
      %v4813 = vpop.f32.mrb[0].mxu0
      %v4814 = vadd.f32 0.0, %v4813
      %v4815 = vpop.f32.mrb[0].mxu0
      %4816 = vdwg.mxu0
      %v4817 = vpack.c.bf16 %v4742, %v4739
      %v4818 = vpack.c.bf16 %v4750, %v4747
      %v4819 = vpack.c.bf16 %v4758, %v4755
      %v4820 = vpack.c.bf16 %v4766, %v4763
      %v4821 = vpack.c.bf16 %v4774, %v4771
      %v4822 = vpack.c.bf16 %v4782, %v4779
      %v4823 = vpack.c.bf16 %v4790, %v4787
      %v4824 = vpack.c.bf16 %v4798, %v4795
      %v4825 = vpack.c.bf16 %v4806, %v4803
      %v4826 = vpack.c.bf16 %v4814, %v4811
      %v4827 = vpack.c.bf16 %v1334, %v1330
      %v4828 = vpack.c.bf16 %v1344, %v1340
      %v4829 = vpack.c.bf16 %v1354, %v1350
      %v4830 = vpack.c.bf16 %v1364, %v1360
      %v4831 = vpack.c.bf16 %v1374, %v1370
      %v4832 = vpack.c.bf16 %v1384, %v1380
      %v4833 = vpack.c.bf16 %v1394, %v1390
      %v4834 = vpack.c.bf16 %v1404, %v1400
      %v4835 = vpack.c.bf16 %v1414, %v1410
      %v4836 = vpack.c.bf16 %v1424, %v1420
      %v4837 = vpack.c.bf16 %v1467, %v1463
      %v4838 = vpack.c.bf16 %v1477, %v1473
      %v4839 = vpack.c.bf16 %v1487, %v1483
      %v4840 = vpack.c.bf16 %v1497, %v1493
      %v4841 = vpack.c.bf16 %v1507, %v1503
      %v4842 = vpack.c.bf16 %v1517, %v1513
      %v4843 = vpack.c.bf16 %v1527, %v1523
      %v4844 = vpack.c.bf16 %v1537, %v1533
      %v4845 = vpack.c.bf16 %v1547, %v1543
      %v4846 = vpack.c.bf16 %v1557, %v1553
      %v4847 = vpack.c.bf16 %v1600, %v1596
      %v4848 = vpack.c.bf16 %v1610, %v1606
      %v4849 = vpack.c.bf16 %v1620, %v1616
      %v4850 = vpack.c.bf16 %v1630, %v1626
      %v4851 = vpack.c.bf16 %v1640, %v1636
      %v4852 = vpack.c.bf16 %v1650, %v1646
      %v4853 = vpack.c.bf16 %v1660, %v1656
      %v4854 = vpack.c.bf16 %v1670, %v1666
      %v4855 = vpack.c.bf16 %v1680, %v1676
      %v4856 = vpack.c.bf16 %v1690, %v1686
      %v4858 = vsel %vm1762, %v4827, 0
      %v4861 = vsel %vm1762, %v4828, 0
      %v4864 = vsel %vm1762, %v4829, 0
      %v4867 = vsel %vm1762, %v4830, 0
      %v4870 = vsel %vm1762, %v4831, 0
      %v4873 = vsel %vm1762, %v4832, 0
      %v4876 = vsel %vm1762, %v4833, 0
      %v4879 = vsel %vm1762, %v4834, 0
      %v4882 = vsel %vm1762, %v4835, 0
      %v4885 = vsel %vm1762, %v4836, 0
      %v4888 = vsel %vm1762, %v4837, 0
      %v4891 = vsel %vm1762, %v4838, 0
      %v4894 = vsel %vm1762, %v4839, 0
      %v4897 = vsel %vm1762, %v4840, 0
      %v4900 = vsel %vm1762, %v4841, 0
      %v4903 = vsel %vm1762, %v4842, 0
      %v4906 = vsel %vm1762, %v4843, 0
      %v4909 = vsel %vm1762, %v4844, 0
      %v4912 = vsel %vm1762, %v4845, 0
      %v4915 = vsel %vm1762, %v4846, 0
      %4917 = vmatprep.subr.bf16.mxu0 0
      %4918 = vmatpush1.bf16.xpose.msra.mxu0 %v4888
      %4919 = vmatprep.subr.bf16.mxu0 0
      %4920 = vmatpush1.bf16.xpose.msra.mxu0 %v4891
      %4921 = vmatprep.subr.bf16.mxu0 0
      %4922 = vmatpush1.bf16.xpose.msra.mxu0 %v4894
      %4923 = vmatprep.subr.bf16.mxu0 0
      %4924 = vmatpush1.bf16.xpose.msra.mxu0 %v4897
      %4925 = vmatprep.subr.bf16.mxu0 0
      %4926 = vmatpush1.bf16.xpose.msra.mxu0 %v4900
      %4927 = vmatprep.subr.bf16.mxu0 0
      %4928 = vmatpush1.bf16.xpose.msra.mxu0 %v4903
      %4929 = vmatprep.subr.bf16.mxu0 0
      %4930 = vmatpush1.bf16.xpose.msra.mxu0 %v4906
      %4931 = vmatprep.subr.bf16.mxu0 0
      %4932 = vmatpush1.bf16.xpose.msra.mxu0 %v4909
      %4933 = vmatprep.subr.bf16.mxu0 0
      %4934 = vmatpush1.bf16.xpose.msra.mxu0 %v4912
      %4935 = vmatprep.subr.bf16.mxu0 0
      %4936 = vmatpush1.bf16.xpose.msra.mxu0 %v4915
      %4937 = vmatprep.subr.bf16.mxu0 0
      %4938 = vmatpush1.bf16.xpose.msra.mxu0 0
      %4939 = vmatprep.subr.bf16.mxu0 0
      %4940 = vmatpush1.bf16.xpose.msra.mxu0 0
      %4941 = vmatprep.subr.bf16.mxu0 0
      %4942 = vmatpush1.bf16.xpose.msra.mxu0 0
      %4943 = vmatprep.subr.bf16.mxu0 0
      %4944 = vmatpush1.bf16.xpose.msra.mxu0 0
      %4945 = vmatprep.subr.bf16.mxu0 0
      %4946 = vmatpush1.bf16.xpose.msra.mxu0 0
      %4947 = vmatprep.subr.bf16.mxu0 0
      %4948 = vmatpush1.bf16.xpose.msra.mxu0 0
      %4949 = vmatprep.mubr.bf16.mxu0 0
      %4950 = vmatmul.mubr.bf16.gmra.mrb[0].mxu0 %v4858
      %v4951 = vpop.f32.mrb[0].mxu0
      %v4952 = vadd.f32 %v1692, %v4951
      %v4953 = vpop.f32.mrb[0].mxu0
      %v4954 = vadd.f32 %v1693, %v4953
      %v4955 = vpop.f32.mrb[0].mxu0
      %v4956 = vadd.f32 %v1694, %v4955
      %v4957 = vpop.f32.mrb[0].mxu0
      %v4958 = vadd.f32 %v1695, %v4957
      %4959 = vmatprep.mubr.bf16.mxu0 0
      %4960 = vmatmul.mubr.bf16.gmra.mrb[0].mxu0 %v4861
      %v4961 = vpop.f32.mrb[0].mxu0
      %v4962 = vadd.f32 %v1696, %v4961
      %v4963 = vpop.f32.mrb[0].mxu0
      %v4964 = vadd.f32 %v1697, %v4963
      %v4965 = vpop.f32.mrb[0].mxu0
      %v4966 = vadd.f32 %v1698, %v4965
      %v4967 = vpop.f32.mrb[0].mxu0
      %v4968 = vadd.f32 %v1699, %v4967
      %4969 = vmatprep.mubr.bf16.mxu0 0
      %4970 = vmatmul.mubr.bf16.gmra.mrb[0].mxu0 %v4864
      %v4971 = vpop.f32.mrb[0].mxu0
      %v4972 = vadd.f32 %v1700, %v4971
      %v4973 = vpop.f32.mrb[0].mxu0
      %v4974 = vadd.f32 %v1701, %v4973
      %v4975 = vpop.f32.mrb[0].mxu0
      %v4976 = vadd.f32 %v1702, %v4975
      %v4977 = vpop.f32.mrb[0].mxu0
      %v4978 = vadd.f32 %v1703, %v4977
      %4979 = vmatprep.mubr.bf16.mxu0 0
      %4980 = vmatmul.mubr.bf16.gmra.mrb[0].mxu0 %v4867
      %v4981 = vpop.f32.mrb[0].mxu0
      %v4982 = vadd.f32 %v1704, %v4981
      %v4983 = vpop.f32.mrb[0].mxu0
      %v4984 = vadd.f32 %v1705, %v4983
      %v4985 = vpop.f32.mrb[0].mxu0
      %v4986 = vadd.f32 %v1706, %v4985
      %v4987 = vpop.f32.mrb[0].mxu0
      %v4988 = vadd.f32 %v1707, %v4987
      %4989 = vmatprep.mubr.bf16.mxu0 0
      %4990 = vmatmul.mubr.bf16.gmra.mrb[0].mxu0 %v4870
      %v4991 = vpop.f32.mrb[0].mxu0
      %v4992 = vadd.f32 %v1708, %v4991
      %v4993 = vpop.f32.mrb[0].mxu0
      %v4994 = vadd.f32 %v1709, %v4993
      %v4995 = vpop.f32.mrb[0].mxu0
      %v4996 = vadd.f32 %v1710, %v4995
      %v4997 = vpop.f32.mrb[0].mxu0
      %v4998 = vadd.f32 %v1711, %v4997
      %4999 = vmatprep.mubr.bf16.mxu0 0
      %5000 = vmatmul.mubr.bf16.gmra.mrb[0].mxu0 %v4873
      %v5001 = vpop.f32.mrb[0].mxu0
      %v5002 = vadd.f32 %v1712, %v5001
      %v5003 = vpop.f32.mrb[0].mxu0
      %v5004 = vadd.f32 %v1713, %v5003
      %v5005 = vpop.f32.mrb[0].mxu0
      %v5006 = vadd.f32 %v1714, %v5005
      %v5007 = vpop.f32.mrb[0].mxu0
      %v5008 = vadd.f32 %v1715, %v5007
      %5009 = vmatprep.mubr.bf16.mxu0 0
      %5010 = vmatmul.mubr.bf16.gmra.mrb[0].mxu0 %v4876
      %v5011 = vpop.f32.mrb[0].mxu0
      %v5012 = vadd.f32 %v1716, %v5011
      %v5013 = vpop.f32.mrb[0].mxu0
      %v5014 = vadd.f32 %v1717, %v5013
      %v5015 = vpop.f32.mrb[0].mxu0
      %v5016 = vadd.f32 %v1718, %v5015
      %v5017 = vpop.f32.mrb[0].mxu0
      %v5018 = vadd.f32 %v1719, %v5017
      %5019 = vmatprep.mubr.bf16.mxu0 0
      %5020 = vmatmul.mubr.bf16.gmra.mrb[0].mxu0 %v4879
      %v5021 = vpop.f32.mrb[0].mxu0
      %v5022 = vadd.f32 %v1720, %v5021
      %v5023 = vpop.f32.mrb[0].mxu0
      %v5024 = vadd.f32 %v1721, %v5023
      %v5025 = vpop.f32.mrb[0].mxu0
      %v5026 = vadd.f32 %v1722, %v5025
      %v5027 = vpop.f32.mrb[0].mxu0
      %v5028 = vadd.f32 %v1723, %v5027
      %5029 = vmatprep.mubr.bf16.mxu0 0
      %5030 = vmatmul.mubr.bf16.gmra.mrb[0].mxu0 %v4882
      %v5031 = vpop.f32.mrb[0].mxu0
      %v5032 = vadd.f32 %v1724, %v5031
      %v5033 = vpop.f32.mrb[0].mxu0
      %v5034 = vadd.f32 %v1725, %v5033
      %v5035 = vpop.f32.mrb[0].mxu0
      %v5036 = vadd.f32 %v1726, %v5035
      %v5037 = vpop.f32.mrb[0].mxu0
      %v5038 = vadd.f32 %v1727, %v5037
      %5039 = vmatprep.mubr.bf16.mxu0 0
      %5040 = vmatmul.mubr.bf16.gmra.mrb[0].mxu0 %v4885
      %v5041 = vpop.f32.mrb[0].mxu0
      %v5042 = vadd.f32 %v1728, %v5041
      %v5043 = vpop.f32.mrb[0].mxu0
      %v5044 = vadd.f32 %v1729, %v5043
      %v5045 = vpop.f32.mrb[0].mxu0
      %v5046 = vadd.f32 %v1730, %v5045
      %v5047 = vpop.f32.mrb[0].mxu0
      %v5048 = vadd.f32 %v1731, %v5047
      %5049 = vdwg.mxu0
      %v5050 = vsel %vm1762, %v4954, -inf
      %v5051 = vmax.f32 %v4952, %v5050
      %5052 = vmax.xlane.f32.xlu0 %v5051
      %v5053 = vpop.xlane.xlu0 %5052
      %v5054 = vsel %vm1762, %v4958, -inf
      %v5055 = vmax.f32 %v4956, %v5054
      %5056 = vmax.xlane.f32.xlu0 %v5055
      %v5057 = vpop.xlane.xlu0 %5056
      %v5058 = vsel %vm1762, %v4964, -inf
      %v5059 = vmax.f32 %v4962, %v5058
      %5060 = vmax.xlane.f32.xlu0 %v5059
      %v5061 = vpop.xlane.xlu0 %5060
      %v5062 = vsel %vm1762, %v4968, -inf
      %v5063 = vmax.f32 %v4966, %v5062
      %5064 = vmax.xlane.f32.xlu0 %v5063
      %v5065 = vpop.xlane.xlu0 %5064
      %v5066 = vsel %vm1762, %v4974, -inf
      %v5067 = vmax.f32 %v4972, %v5066
      %5068 = vmax.xlane.f32.xlu0 %v5067
      %v5069 = vpop.xlane.xlu0 %5068
      %v5070 = vsel %vm1762, %v4978, -inf
      %v5071 = vmax.f32 %v4976, %v5070
      %5072 = vmax.xlane.f32.xlu0 %v5071
      %v5073 = vpop.xlane.xlu0 %5072
      %v5074 = vsel %vm1762, %v4984, -inf
      %v5075 = vmax.f32 %v4982, %v5074
      %5076 = vmax.xlane.f32.xlu0 %v5075
      %v5077 = vpop.xlane.xlu0 %5076
      %v5078 = vsel %vm1762, %v4988, -inf
      %v5079 = vmax.f32 %v4986, %v5078
      %5080 = vmax.xlane.f32.xlu0 %v5079
      %v5081 = vpop.xlane.xlu0 %5080
      %v5082 = vsel %vm1762, %v4994, -inf
      %v5083 = vmax.f32 %v4992, %v5082
      %5084 = vmax.xlane.f32.xlu0 %v5083
      %v5085 = vpop.xlane.xlu0 %5084
      %v5086 = vsel %vm1762, %v4998, -inf
      %v5087 = vmax.f32 %v4996, %v5086
      %5088 = vmax.xlane.f32.xlu0 %v5087
      %v5089 = vpop.xlane.xlu0 %5088
      %v5090 = vsel %vm1762, %v5004, -inf
      %v5091 = vmax.f32 %v5002, %v5090
      %5092 = vmax.xlane.f32.xlu0 %v5091
      %v5093 = vpop.xlane.xlu0 %5092
      %v5094 = vsel %vm1762, %v5008, -inf
      %v5095 = vmax.f32 %v5006, %v5094
      %5096 = vmax.xlane.f32.xlu0 %v5095
      %v5097 = vpop.xlane.xlu0 %5096
      %v5098 = vsel %vm1762, %v5014, -inf
      %v5099 = vmax.f32 %v5012, %v5098
      %5100 = vmax.xlane.f32.xlu0 %v5099
      %v5101 = vpop.xlane.xlu0 %5100
      %v5102 = vsel %vm1762, %v5018, -inf
      %v5103 = vmax.f32 %v5016, %v5102
      %5104 = vmax.xlane.f32.xlu0 %v5103
      %v5105 = vpop.xlane.xlu0 %5104
      %v5106 = vsel %vm1762, %v5024, -inf
      %v5107 = vmax.f32 %v5022, %v5106
      %5108 = vmax.xlane.f32.xlu0 %v5107
      %v5109 = vpop.xlane.xlu0 %5108
      %v5110 = vsel %vm1762, %v5028, -inf
      %v5111 = vmax.f32 %v5026, %v5110
      %5112 = vmax.xlane.f32.xlu0 %v5111
      %v5113 = vpop.xlane.xlu0 %5112
      %v5114 = vsel %vm1762, %v5034, -inf
      %v5115 = vmax.f32 %v5032, %v5114
      %5116 = vmax.xlane.f32.xlu0 %v5115
      %v5117 = vpop.xlane.xlu0 %5116
      %v5118 = vsel %vm1762, %v5038, -inf
      %v5119 = vmax.f32 %v5036, %v5118
      %5120 = vmax.xlane.f32.xlu0 %v5119
      %v5121 = vpop.xlane.xlu0 %5120
      %v5122 = vsel %vm1762, %v5044, -inf
      %v5123 = vmax.f32 %v5042, %v5122
      %5124 = vmax.xlane.f32.xlu0 %v5123
      %v5125 = vpop.xlane.xlu0 %5124
      %v5126 = vsel %vm1762, %v5048, -inf
      %v5127 = vmax.f32 %v5046, %v5126
      %5128 = vmax.xlane.f32.xlu0 %v5127
      %v5129 = vpop.xlane.xlu0 %5128
      %v5130 = vsub.f32 %v4952, %v5053
      %v5131 = vsub.f32 %v4954, %v5053
      %v5132 = vsub.f32 %v4956, %v5057
      %v5133 = vsub.f32 %v4958, %v5057
      %v5134 = vsub.f32 %v4962, %v5061
      %v5135 = vsub.f32 %v4964, %v5061
      %v5136 = vsub.f32 %v4966, %v5065
      %v5137 = vsub.f32 %v4968, %v5065
      %v5138 = vsub.f32 %v4972, %v5069
      %v5139 = vsub.f32 %v4974, %v5069
      %v5140 = vsub.f32 %v4976, %v5073
      %v5141 = vsub.f32 %v4978, %v5073
      %v5142 = vsub.f32 %v4982, %v5077
      %v5143 = vsub.f32 %v4984, %v5077
      %v5144 = vsub.f32 %v4986, %v5081
      %v5145 = vsub.f32 %v4988, %v5081
      %v5146 = vsub.f32 %v4992, %v5085
      %v5147 = vsub.f32 %v4994, %v5085
      %v5148 = vsub.f32 %v4996, %v5089
      %v5149 = vsub.f32 %v4998, %v5089
      %v5150 = vsub.f32 %v5002, %v5093
      %v5151 = vsub.f32 %v5004, %v5093
      %v5152 = vsub.f32 %v5006, %v5097
      %v5153 = vsub.f32 %v5008, %v5097
      %v5154 = vsub.f32 %v5012, %v5101
      %v5155 = vsub.f32 %v5014, %v5101
      %v5156 = vsub.f32 %v5016, %v5105
      %v5157 = vsub.f32 %v5018, %v5105
      %v5158 = vsub.f32 %v5022, %v5109
      %v5159 = vsub.f32 %v5024, %v5109
      %v5160 = vsub.f32 %v5026, %v5113
      %v5161 = vsub.f32 %v5028, %v5113
      %v5162 = vsub.f32 %v5032, %v5117
      %v5163 = vsub.f32 %v5034, %v5117
      %v5164 = vsub.f32 %v5036, %v5121
      %v5165 = vsub.f32 %v5038, %v5121
      %v5166 = vsub.f32 %v5042, %v5125
      %v5167 = vsub.f32 %v5044, %v5125
      %v5168 = vsub.f32 %v5046, %v5129
      %v5169 = vsub.f32 %v5048, %v5129
      %v5170 = vmul.f32 %v5130, 1.442695
      %v5171 = vpow.pop %v5170
      %v5172 = vmul.f32 %v5131, 1.442695
      %v5173 = vpow.pop %v5172
      %v5174 = vmul.f32 %v5132, 1.442695
      %v5175 = vpow.pop %v5174
      %v5176 = vmul.f32 %v5133, 1.442695
      %v5177 = vpow.pop %v5176
      %v5178 = vmul.f32 %v5134, 1.442695
      %v5179 = vpow.pop %v5178
      %v5180 = vmul.f32 %v5135, 1.442695
      %v5181 = vpow.pop %v5180
      %v5182 = vmul.f32 %v5136, 1.442695
      %v5183 = vpow.pop %v5182
      %v5184 = vmul.f32 %v5137, 1.442695
      %v5185 = vpow.pop %v5184
      %v5186 = vmul.f32 %v5138, 1.442695
      %v5187 = vpow.pop %v5186
      %v5188 = vmul.f32 %v5139, 1.442695
      %v5189 = vpow.pop %v5188
      %v5190 = vmul.f32 %v5140, 1.442695
      %v5191 = vpow.pop %v5190
      %v5192 = vmul.f32 %v5141, 1.442695
      %v5193 = vpow.pop %v5192
      %v5194 = vmul.f32 %v5142, 1.442695
      %v5195 = vpow.pop %v5194
      %v5196 = vmul.f32 %v5143, 1.442695
      %v5197 = vpow.pop %v5196
      %v5198 = vmul.f32 %v5144, 1.442695
      %v5199 = vpow.pop %v5198
      %v5200 = vmul.f32 %v5145, 1.442695
      %v5201 = vpow.pop %v5200
      %v5202 = vmul.f32 %v5146, 1.442695
      %v5203 = vpow.pop %v5202
      %v5204 = vmul.f32 %v5147, 1.442695
      %v5205 = vpow.pop %v5204
      %v5206 = vmul.f32 %v5148, 1.442695
      %v5207 = vpow.pop %v5206
      %v5208 = vmul.f32 %v5149, 1.442695
      %v5209 = vpow.pop %v5208
      %v5210 = vmul.f32 %v5150, 1.442695
      %v5211 = vpow.pop %v5210
      %v5212 = vmul.f32 %v5151, 1.442695
      %v5213 = vpow.pop %v5212
      %v5214 = vmul.f32 %v5152, 1.442695
      %v5215 = vpow.pop %v5214
      %v5216 = vmul.f32 %v5153, 1.442695
      %v5217 = vpow.pop %v5216
      %v5218 = vmul.f32 %v5154, 1.442695
      %v5219 = vpow.pop %v5218
      %v5220 = vmul.f32 %v5155, 1.442695
      %v5221 = vpow.pop %v5220
      %v5222 = vmul.f32 %v5156, 1.442695
      %v5223 = vpow.pop %v5222
      %v5224 = vmul.f32 %v5157, 1.442695
      %v5225 = vpow.pop %v5224
      %v5226 = vmul.f32 %v5158, 1.442695
      %v5227 = vpow.pop %v5226
      %v5228 = vmul.f32 %v5159, 1.442695
      %v5229 = vpow.pop %v5228
      %v5230 = vmul.f32 %v5160, 1.442695
      %v5231 = vpow.pop %v5230
      %v5232 = vmul.f32 %v5161, 1.442695
      %v5233 = vpow.pop %v5232
      %v5234 = vmul.f32 %v5162, 1.442695
      %v5235 = vpow.pop %v5234
      %v5236 = vmul.f32 %v5163, 1.442695
      %v5237 = vpow.pop %v5236
      %v5238 = vmul.f32 %v5164, 1.442695
      %v5239 = vpow.pop %v5238
      %v5240 = vmul.f32 %v5165, 1.442695
      %v5241 = vpow.pop %v5240
      %v5242 = vmul.f32 %v5166, 1.442695
      %v5243 = vpow.pop %v5242
      %v5244 = vmul.f32 %v5167, 1.442695
      %v5245 = vpow.pop %v5244
      %v5246 = vmul.f32 %v5168, 1.442695
      %v5247 = vpow.pop %v5246
      %v5248 = vmul.f32 %v5169, 1.442695
      %v5249 = vpow.pop %v5248
      %v5250 = vsel %vm1762, %v5173, 0.0
      %v5251 = vadd.f32 %v5171, %v5250
      %5252 = vadd.xlane.f32.xlu0 %v5251
      %v5253 = vpop.xlane.xlu0 %5252
      %v5254 = vsel %vm1762, %v5177, 0.0
      %v5255 = vadd.f32 %v5175, %v5254
      %5256 = vadd.xlane.f32.xlu0 %v5255
      %v5257 = vpop.xlane.xlu0 %5256
      %v5258 = vsel %vm1762, %v5181, 0.0
      %v5259 = vadd.f32 %v5179, %v5258
      %5260 = vadd.xlane.f32.xlu0 %v5259
      %v5261 = vpop.xlane.xlu0 %5260
      %v5262 = vsel %vm1762, %v5185, 0.0
      %v5263 = vadd.f32 %v5183, %v5262
      %5264 = vadd.xlane.f32.xlu0 %v5263
      %v5265 = vpop.xlane.xlu0 %5264
      %v5266 = vsel %vm1762, %v5189, 0.0
      %v5267 = vadd.f32 %v5187, %v5266
      %5268 = vadd.xlane.f32.xlu0 %v5267
      %v5269 = vpop.xlane.xlu0 %5268
      %v5270 = vsel %vm1762, %v5193, 0.0
      %v5271 = vadd.f32 %v5191, %v5270
      %5272 = vadd.xlane.f32.xlu0 %v5271
      %v5273 = vpop.xlane.xlu0 %5272
      %v5274 = vsel %vm1762, %v5197, 0.0
      %v5275 = vadd.f32 %v5195, %v5274
      %5276 = vadd.xlane.f32.xlu0 %v5275
      %v5277 = vpop.xlane.xlu0 %5276
      %v5278 = vsel %vm1762, %v5201, 0.0
      %v5279 = vadd.f32 %v5199, %v5278
      %5280 = vadd.xlane.f32.xlu0 %v5279
      %v5281 = vpop.xlane.xlu0 %5280
      %v5282 = vsel %vm1762, %v5205, 0.0
      %v5283 = vadd.f32 %v5203, %v5282
      %5284 = vadd.xlane.f32.xlu0 %v5283
      %v5285 = vpop.xlane.xlu0 %5284
      %v5286 = vsel %vm1762, %v5209, 0.0
      %v5287 = vadd.f32 %v5207, %v5286
      %5288 = vadd.xlane.f32.xlu0 %v5287
      %v5289 = vpop.xlane.xlu0 %5288
      %v5290 = vsel %vm1762, %v5213, 0.0
      %v5291 = vadd.f32 %v5211, %v5290
      %5292 = vadd.xlane.f32.xlu0 %v5291
      %v5293 = vpop.xlane.xlu0 %5292
      %v5294 = vsel %vm1762, %v5217, 0.0
      %v5295 = vadd.f32 %v5215, %v5294
      %5296 = vadd.xlane.f32.xlu0 %v5295
      %v5297 = vpop.xlane.xlu0 %5296
      %v5298 = vsel %vm1762, %v5221, 0.0
      %v5299 = vadd.f32 %v5219, %v5298
      %5300 = vadd.xlane.f32.xlu0 %v5299
      %v5301 = vpop.xlane.xlu0 %5300
      %v5302 = vsel %vm1762, %v5225, 0.0
      %v5303 = vadd.f32 %v5223, %v5302
      %5304 = vadd.xlane.f32.xlu0 %v5303
      %v5305 = vpop.xlane.xlu0 %5304
      %v5306 = vsel %vm1762, %v5229, 0.0
      %v5307 = vadd.f32 %v5227, %v5306
      %5308 = vadd.xlane.f32.xlu0 %v5307
      %v5309 = vpop.xlane.xlu0 %5308
      %v5310 = vsel %vm1762, %v5233, 0.0
      %v5311 = vadd.f32 %v5231, %v5310
      %5312 = vadd.xlane.f32.xlu0 %v5311
      %v5313 = vpop.xlane.xlu0 %5312
      %v5314 = vsel %vm1762, %v5237, 0.0
      %v5315 = vadd.f32 %v5235, %v5314
      %5316 = vadd.xlane.f32.xlu0 %v5315
      %v5317 = vpop.xlane.xlu0 %5316
      %v5318 = vsel %vm1762, %v5241, 0.0
      %v5319 = vadd.f32 %v5239, %v5318
      %5320 = vadd.xlane.f32.xlu0 %v5319
      %v5321 = vpop.xlane.xlu0 %5320
      %v5322 = vsel %vm1762, %v5245, 0.0
      %v5323 = vadd.f32 %v5243, %v5322
      %5324 = vadd.xlane.f32.xlu0 %v5323
      %v5325 = vpop.xlane.xlu0 %5324
      %v5326 = vsel %vm1762, %v5249, 0.0
      %v5327 = vadd.f32 %v5247, %v5326
      %5328 = vadd.xlane.f32.xlu0 %v5327
      %v5329 = vpop.xlane.xlu0 %5328
      %v5330 = vrcp.pop %v5253
      %v5331 = vrcp.pop %v5257
      %v5332 = vrcp.pop %v5261
      %v5333 = vrcp.pop %v5265
      %v5334 = vrcp.pop %v5269
      %v5335 = vrcp.pop %v5273
      %v5336 = vrcp.pop %v5277
      %v5337 = vrcp.pop %v5281
      %v5338 = vrcp.pop %v5285
      %v5339 = vrcp.pop %v5289
      %v5340 = vrcp.pop %v5293
      %v5341 = vrcp.pop %v5297
      %v5342 = vrcp.pop %v5301
      %v5343 = vrcp.pop %v5305
      %v5344 = vrcp.pop %v5309
      %v5345 = vrcp.pop %v5313
      %v5346 = vrcp.pop %v5317
      %v5347 = vrcp.pop %v5321
      %v5348 = vrcp.pop %v5325
      %v5349 = vrcp.pop %v5329
      %v5350 = vmul.f32 %v5171, %v5330
      %v5351 = vmul.f32 %v5173, %v5330
      %v5352 = vmul.f32 %v5175, %v5331
      %v5353 = vmul.f32 %v5177, %v5331
      %v5354 = vmul.f32 %v5179, %v5332
      %v5355 = vmul.f32 %v5181, %v5332
      %v5356 = vmul.f32 %v5183, %v5333
      %v5357 = vmul.f32 %v5185, %v5333
      %v5358 = vmul.f32 %v5187, %v5334
      %v5359 = vmul.f32 %v5189, %v5334
      %v5360 = vmul.f32 %v5191, %v5335
      %v5361 = vmul.f32 %v5193, %v5335
      %v5362 = vmul.f32 %v5195, %v5336
      %v5363 = vmul.f32 %v5197, %v5336
      %v5364 = vmul.f32 %v5199, %v5337
      %v5365 = vmul.f32 %v5201, %v5337
      %v5366 = vmul.f32 %v5203, %v5338
      %v5367 = vmul.f32 %v5205, %v5338
      %v5368 = vmul.f32 %v5207, %v5339
      %v5369 = vmul.f32 %v5209, %v5339
      %v5370 = vmul.f32 %v5211, %v5340
      %v5371 = vmul.f32 %v5213, %v5340
      %v5372 = vmul.f32 %v5215, %v5341
      %v5373 = vmul.f32 %v5217, %v5341
      %v5374 = vmul.f32 %v5219, %v5342
      %v5375 = vmul.f32 %v5221, %v5342
      %v5376 = vmul.f32 %v5223, %v5343
      %v5377 = vmul.f32 %v5225, %v5343
      %v5378 = vmul.f32 %v5227, %v5344
      %v5379 = vmul.f32 %v5229, %v5344
      %v5380 = vmul.f32 %v5231, %v5345
      %v5381 = vmul.f32 %v5233, %v5345
      %v5382 = vmul.f32 %v5235, %v5346
      %v5383 = vmul.f32 %v5237, %v5346
      %v5384 = vmul.f32 %v5239, %v5347
      %v5385 = vmul.f32 %v5241, %v5347
      %v5386 = vmul.f32 %v5243, %v5348
      %v5387 = vmul.f32 %v5245, %v5348
      %v5388 = vmul.f32 %v5247, %v5349
      %v5389 = vmul.f32 %v5249, %v5349
      %v5390 = vpack.c.bf16 %v5352, %v5350
      %v5391 = vpack.c.bf16 %v5353, %v5351
      %v5392 = vpack.c.bf16 %v5356, %v5354
      %v5393 = vpack.c.bf16 %v5357, %v5355
      %v5394 = vpack.c.bf16 %v5360, %v5358
      %v5395 = vpack.c.bf16 %v5361, %v5359
      %v5396 = vpack.c.bf16 %v5364, %v5362
      %v5397 = vpack.c.bf16 %v5365, %v5363
      %v5398 = vpack.c.bf16 %v5368, %v5366
      %v5399 = vpack.c.bf16 %v5369, %v5367
      %v5400 = vpack.c.bf16 %v5372, %v5370
      %v5401 = vpack.c.bf16 %v5373, %v5371
      %v5402 = vpack.c.bf16 %v5376, %v5374
      %v5403 = vpack.c.bf16 %v5377, %v5375
      %v5404 = vpack.c.bf16 %v5380, %v5378
      %v5405 = vpack.c.bf16 %v5381, %v5379
      %v5406 = vpack.c.bf16 %v5384, %v5382
      %v5407 = vpack.c.bf16 %v5385, %v5383
      %v5408 = vpack.c.bf16 %v5388, %v5386
      %v5409 = vpack.c.bf16 %v5389, %v5387
      %v5411 = vsel %vm1762, %v5391, 0
      %v5414 = vsel %vm1762, %v5393, 0
      %v5417 = vsel %vm1762, %v5395, 0
      %v5420 = vsel %vm1762, %v5397, 0
      %v5423 = vsel %vm1762, %v5399, 0
      %v5426 = vsel %vm1762, %v5401, 0
      %v5429 = vsel %vm1762, %v5403, 0
      %v5432 = vsel %vm1762, %v5405, 0
      %v5435 = vsel %vm1762, %v5407, 0
      %v5438 = vsel %vm1762, %v5409, 0
      %5440 = vmatprep.subr.bf16.mxu0 0
      %5441 = vmatpush1.bf16.msra.mxu0 %v4847
      %5442 = vmatprep.subr.bf16.mxu0 0
      %5443 = vmatpush1.bf16.msra.mxu0 %v4848
      %5444 = vmatprep.subr.bf16.mxu0 0
      %5445 = vmatpush1.bf16.msra.mxu0 %v4849
      %5446 = vmatprep.subr.bf16.mxu0 0
      %5447 = vmatpush1.bf16.msra.mxu0 %v4850
      %5448 = vmatprep.subr.bf16.mxu0 0
      %5449 = vmatpush1.bf16.msra.mxu0 %v4851
      %5450 = vmatprep.subr.bf16.mxu0 0
      %5451 = vmatpush1.bf16.msra.mxu0 %v4852
      %5452 = vmatprep.subr.bf16.mxu0 0
      %5453 = vmatpush1.bf16.msra.mxu0 %v4853
      %5454 = vmatprep.subr.bf16.mxu0 0
      %5455 = vmatpush1.bf16.msra.mxu0 %v4854
      %5456 = vmatprep.subr.bf16.mxu0 0
      %5457 = vmatpush1.bf16.msra.mxu0 %v4855
      %5458 = vmatprep.subr.bf16.mxu0 0
      %5459 = vmatpush1.bf16.msra.mxu0 %v4856
      %5460 = vmatprep.subr.bf16.mxu0 0
      %5461 = vmatpush1.bf16.msra.mxu0 0
      %5462 = vmatprep.subr.bf16.mxu0 0
      %5463 = vmatpush1.bf16.msra.mxu0 0
      %5464 = vmatprep.subr.bf16.mxu0 0
      %5465 = vmatpush1.bf16.msra.mxu0 0
      %5466 = vmatprep.subr.bf16.mxu0 0
      %5467 = vmatpush1.bf16.msra.mxu0 0
      %5468 = vmatprep.subr.bf16.mxu0 0
      %5469 = vmatpush1.bf16.msra.mxu0 0
      %5470 = vmatprep.subr.bf16.mxu0 0
      %5471 = vmatpush1.bf16.msra.mxu0 0
      %5472 = vmatprep.mubr.bf16.mxu0 %v5411
      %5473 = vmatmul.mubr.bf16.gmra.mrb[0].mxu0 %v5390
      %v5474 = vpop.f32.mrb[0].mxu0
      %v5475 = vadd.f32 0.0, %v5474
      %v5476 = vpop.f32.mrb[0].mxu0
      %v5477 = vpop.f32.mrb[0].mxu0
      %v5478 = vadd.f32 0.0, %v5477
      %v5479 = vpop.f32.mrb[0].mxu0
      %5480 = vmatprep.mubr.bf16.mxu0 %v5414
      %5481 = vmatmul.mubr.bf16.gmra.mrb[0].mxu0 %v5392
      %v5482 = vpop.f32.mrb[0].mxu0
      %v5483 = vadd.f32 0.0, %v5482
      %v5484 = vpop.f32.mrb[0].mxu0
      %v5485 = vpop.f32.mrb[0].mxu0
      %v5486 = vadd.f32 0.0, %v5485
      %v5487 = vpop.f32.mrb[0].mxu0
      %5488 = vmatprep.mubr.bf16.mxu0 %v5417
      %5489 = vmatmul.mubr.bf16.gmra.mrb[0].mxu0 %v5394
      %v5490 = vpop.f32.mrb[0].mxu0
      %v5491 = vadd.f32 0.0, %v5490
      %v5492 = vpop.f32.mrb[0].mxu0
      %v5493 = vpop.f32.mrb[0].mxu0
      %v5494 = vadd.f32 0.0, %v5493
      %v5495 = vpop.f32.mrb[0].mxu0
      %5496 = vmatprep.mubr.bf16.mxu0 %v5420
      %5497 = vmatmul.mubr.bf16.gmra.mrb[0].mxu0 %v5396
      %v5498 = vpop.f32.mrb[0].mxu0
      %v5499 = vadd.f32 0.0, %v5498
      %v5500 = vpop.f32.mrb[0].mxu0
      %v5501 = vpop.f32.mrb[0].mxu0
      %v5502 = vadd.f32 0.0, %v5501
      %v5503 = vpop.f32.mrb[0].mxu0
      %5504 = vmatprep.mubr.bf16.mxu0 %v5423
      %5505 = vmatmul.mubr.bf16.gmra.mrb[0].mxu0 %v5398
      %v5506 = vpop.f32.mrb[0].mxu0
      %v5507 = vadd.f32 0.0, %v5506
      %v5508 = vpop.f32.mrb[0].mxu0
      %v5509 = vpop.f32.mrb[0].mxu0
      %v5510 = vadd.f32 0.0, %v5509
      %v5511 = vpop.f32.mrb[0].mxu0
      %5512 = vmatprep.mubr.bf16.mxu0 %v5426
      %5513 = vmatmul.mubr.bf16.gmra.mrb[0].mxu0 %v5400
      %v5514 = vpop.f32.mrb[0].mxu0
      %v5515 = vadd.f32 0.0, %v5514
      %v5516 = vpop.f32.mrb[0].mxu0
      %v5517 = vpop.f32.mrb[0].mxu0
      %v5518 = vadd.f32 0.0, %v5517
      %v5519 = vpop.f32.mrb[0].mxu0
      %5520 = vmatprep.mubr.bf16.mxu0 %v5429
      %5521 = vmatmul.mubr.bf16.gmra.mrb[0].mxu0 %v5402
      %v5522 = vpop.f32.mrb[0].mxu0
      %v5523 = vadd.f32 0.0, %v5522
      %v5524 = vpop.f32.mrb[0].mxu0
      %v5525 = vpop.f32.mrb[0].mxu0
      %v5526 = vadd.f32 0.0, %v5525
      %v5527 = vpop.f32.mrb[0].mxu0
      %5528 = vmatprep.mubr.bf16.mxu0 %v5432
      %5529 = vmatmul.mubr.bf16.gmra.mrb[0].mxu0 %v5404
      %v5530 = vpop.f32.mrb[0].mxu0
      %v5531 = vadd.f32 0.0, %v5530
      %v5532 = vpop.f32.mrb[0].mxu0
      %v5533 = vpop.f32.mrb[0].mxu0
      %v5534 = vadd.f32 0.0, %v5533
      %v5535 = vpop.f32.mrb[0].mxu0
      %5536 = vmatprep.mubr.bf16.mxu0 %v5435
      %5537 = vmatmul.mubr.bf16.gmra.mrb[0].mxu0 %v5406
      %v5538 = vpop.f32.mrb[0].mxu0
      %v5539 = vadd.f32 0.0, %v5538
      %v5540 = vpop.f32.mrb[0].mxu0
      %v5541 = vpop.f32.mrb[0].mxu0
      %v5542 = vadd.f32 0.0, %v5541
      %v5543 = vpop.f32.mrb[0].mxu0
      %5544 = vmatprep.mubr.bf16.mxu0 %v5438
      %5545 = vmatmul.mubr.bf16.gmra.mrb[0].mxu0 %v5408
      %v5546 = vpop.f32.mrb[0].mxu0
      %v5547 = vadd.f32 0.0, %v5546
      %v5548 = vpop.f32.mrb[0].mxu0
      %v5549 = vpop.f32.mrb[0].mxu0
      %v5550 = vadd.f32 0.0, %v5549
      %v5551 = vpop.f32.mrb[0].mxu0
      %5552 = vdwg.mxu0
      %v5553 = vpack.c.bf16 %v5478, %v5475
      %v5554 = vpack.c.bf16 %v5486, %v5483
      %v5555 = vpack.c.bf16 %v5494, %v5491
      %v5556 = vpack.c.bf16 %v5502, %v5499
      %v5557 = vpack.c.bf16 %v5510, %v5507
      %v5558 = vpack.c.bf16 %v5518, %v5515
      %v5559 = vpack.c.bf16 %v5526, %v5523
      %v5560 = vpack.c.bf16 %v5534, %v5531
      %v5561 = vpack.c.bf16 %v5542, %v5539
      %v5562 = vpack.c.bf16 %v5550, %v5547
      %5573 = vrot.lane.b32.xlu0 %v4827, 96
      %v5574 = vpop.permute.xlu0 %5573
      %5575 = vrot.lane.b32.xlu0 %v4828, 96
      %v5576 = vpop.permute.xlu0 %5575
      %5577 = vrot.lane.b32.xlu0 %v4829, 96
      %v5578 = vpop.permute.xlu0 %5577
      %5579 = vrot.lane.b32.xlu0 %v4830, 96
      %v5580 = vpop.permute.xlu0 %5579
      %5581 = vrot.lane.b32.xlu0 %v4831, 96
      %v5582 = vpop.permute.xlu0 %5581
      %5583 = vrot.lane.b32.xlu0 %v4832, 96
      %v5584 = vpop.permute.xlu0 %5583
      %5585 = vrot.lane.b32.xlu0 %v4833, 96
      %v5586 = vpop.permute.xlu0 %5585
      %5587 = vrot.lane.b32.xlu0 %v4834, 96
      %v5588 = vpop.permute.xlu0 %5587
      %5589 = vrot.lane.b32.xlu0 %v4835, 96
      %v5590 = vpop.permute.xlu0 %5589
      %5591 = vrot.lane.b32.xlu0 %v4836, 96
      %v5592 = vpop.permute.xlu0 %5591
      %5603 = vrot.lane.b32.xlu0 %v4837, 96
      %v5604 = vpop.permute.xlu0 %5603
      %5605 = vrot.lane.b32.xlu0 %v4838, 96
      %v5606 = vpop.permute.xlu0 %5605
      %5607 = vrot.lane.b32.xlu0 %v4839, 96
      %v5608 = vpop.permute.xlu0 %5607
      %5609 = vrot.lane.b32.xlu0 %v4840, 96
      %v5610 = vpop.permute.xlu0 %5609
      %5611 = vrot.lane.b32.xlu0 %v4841, 96
      %v5612 = vpop.permute.xlu0 %5611
      %5613 = vrot.lane.b32.xlu0 %v4842, 96
      %v5614 = vpop.permute.xlu0 %5613
      %5615 = vrot.lane.b32.xlu0 %v4843, 96
      %v5616 = vpop.permute.xlu0 %5615
      %5617 = vrot.lane.b32.xlu0 %v4844, 96
      %v5618 = vpop.permute.xlu0 %5617
      %5619 = vrot.lane.b32.xlu0 %v4845, 96
      %v5620 = vpop.permute.xlu0 %5619
      %5621 = vrot.lane.b32.xlu0 %v4846, 96
      %v5622 = vpop.permute.xlu0 %5621
      %v5624 = vsel %vm1762, %v5574, 0
      %v5627 = vsel %vm1762, %v5576, 0
      %v5630 = vsel %vm1762, %v5578, 0
      %v5633 = vsel %vm1762, %v5580, 0
      %v5636 = vsel %vm1762, %v5582, 0
      %v5639 = vsel %vm1762, %v5584, 0
      %v5642 = vsel %vm1762, %v5586, 0
      %v5645 = vsel %vm1762, %v5588, 0
      %v5648 = vsel %vm1762, %v5590, 0
      %v5651 = vsel %vm1762, %v5592, 0
      %v5654 = vsel %vm1762, %v5604, 0
      %v5657 = vsel %vm1762, %v5606, 0
      %v5660 = vsel %vm1762, %v5608, 0
      %v5663 = vsel %vm1762, %v5610, 0
      %v5666 = vsel %vm1762, %v5612, 0
      %v5669 = vsel %vm1762, %v5614, 0
      %v5672 = vsel %vm1762, %v5616, 0
      %v5675 = vsel %vm1762, %v5618, 0
      %v5678 = vsel %vm1762, %v5620, 0
      %v5681 = vsel %vm1762, %v5622, 0
      %5683 = vmatprep.subr.bf16.mxu0 0
      %5684 = vmatpush1.bf16.xpose.msra.mxu0 %v5654
      %5685 = vmatprep.subr.bf16.mxu0 0
      %5686 = vmatpush1.bf16.xpose.msra.mxu0 %v5657
      %5687 = vmatprep.subr.bf16.mxu0 0
      %5688 = vmatpush1.bf16.xpose.msra.mxu0 %v5660
      %5689 = vmatprep.subr.bf16.mxu0 0
      %5690 = vmatpush1.bf16.xpose.msra.mxu0 %v5663
      %5691 = vmatprep.subr.bf16.mxu0 0
      %5692 = vmatpush1.bf16.xpose.msra.mxu0 %v5666
      %5693 = vmatprep.subr.bf16.mxu0 0
      %5694 = vmatpush1.bf16.xpose.msra.mxu0 %v5669
      %5695 = vmatprep.subr.bf16.mxu0 0
      %5696 = vmatpush1.bf16.xpose.msra.mxu0 %v5672
      %5697 = vmatprep.subr.bf16.mxu0 0
      %5698 = vmatpush1.bf16.xpose.msra.mxu0 %v5675
      %5699 = vmatprep.subr.bf16.mxu0 0
      %5700 = vmatpush1.bf16.xpose.msra.mxu0 %v5678
      %5701 = vmatprep.subr.bf16.mxu0 0
      %5702 = vmatpush1.bf16.xpose.msra.mxu0 %v5681
      %5703 = vmatprep.subr.bf16.mxu0 0
      %5704 = vmatpush1.bf16.xpose.msra.mxu0 0
      %5705 = vmatprep.subr.bf16.mxu0 0
      %5706 = vmatpush1.bf16.xpose.msra.mxu0 0
      %5707 = vmatprep.subr.bf16.mxu0 0
      %5708 = vmatpush1.bf16.xpose.msra.mxu0 0
      %5709 = vmatprep.subr.bf16.mxu0 0
      %5710 = vmatpush1.bf16.xpose.msra.mxu0 0
      %5711 = vmatprep.subr.bf16.mxu0 0
      %5712 = vmatpush1.bf16.xpose.msra.mxu0 0
      %5713 = vmatprep.subr.bf16.mxu0 0
      %5714 = vmatpush1.bf16.xpose.msra.mxu0 0
      %5715 = vmatprep.mubr.bf16.mxu0 0
      %5716 = vmatmul.mubr.bf16.gmra.mrb[0].mxu0 %v5624
      %v5717 = vpop.f32.mrb[0].mxu0
      %v5718 = vadd.f32 %v1692, %v5717
      %v5719 = vpop.f32.mrb[0].mxu0
      %v5720 = vadd.f32 %v1693, %v5719
      %v5721 = vpop.f32.mrb[0].mxu0
      %v5722 = vadd.f32 %v1694, %v5721
      %v5723 = vpop.f32.mrb[0].mxu0
      %v5724 = vadd.f32 %v1695, %v5723
      %5725 = vmatprep.mubr.bf16.mxu0 0
      %5726 = vmatmul.mubr.bf16.gmra.mrb[0].mxu0 %v5627
      %v5727 = vpop.f32.mrb[0].mxu0
      %v5728 = vadd.f32 %v1696, %v5727
      %v5729 = vpop.f32.mrb[0].mxu0
      %v5730 = vadd.f32 %v1697, %v5729
      %v5731 = vpop.f32.mrb[0].mxu0
      %v5732 = vadd.f32 %v1698, %v5731
      %v5733 = vpop.f32.mrb[0].mxu0
      %v5734 = vadd.f32 %v1699, %v5733
      %5735 = vmatprep.mubr.bf16.mxu0 0
      %5736 = vmatmul.mubr.bf16.gmra.mrb[0].mxu0 %v5630
      %v5737 = vpop.f32.mrb[0].mxu0
      %v5738 = vadd.f32 %v1700, %v5737
      %v5739 = vpop.f32.mrb[0].mxu0
      %v5740 = vadd.f32 %v1701, %v5739
      %v5741 = vpop.f32.mrb[0].mxu0
      %v5742 = vadd.f32 %v1702, %v5741
      %v5743 = vpop.f32.mrb[0].mxu0
      %v5744 = vadd.f32 %v1703, %v5743
      %5745 = vmatprep.mubr.bf16.mxu0 0
      %5746 = vmatmul.mubr.bf16.gmra.mrb[0].mxu0 %v5633
      %v5747 = vpop.f32.mrb[0].mxu0
      %v5748 = vadd.f32 %v1704, %v5747
      %v5749 = vpop.f32.mrb[0].mxu0
      %v5750 = vadd.f32 %v1705, %v5749
      %v5751 = vpop.f32.mrb[0].mxu0
      %v5752 = vadd.f32 %v1706, %v5751
      %v5753 = vpop.f32.mrb[0].mxu0
      %v5754 = vadd.f32 %v1707, %v5753
      %5755 = vmatprep.mubr.bf16.mxu0 0
      %5756 = vmatmul.mubr.bf16.gmra.mrb[0].mxu0 %v5636
      %v5757 = vpop.f32.mrb[0].mxu0
      %v5758 = vadd.f32 %v1708, %v5757
      %v5759 = vpop.f32.mrb[0].mxu0
      %v5760 = vadd.f32 %v1709, %v5759
      %v5761 = vpop.f32.mrb[0].mxu0
      %v5762 = vadd.f32 %v1710, %v5761
      %v5763 = vpop.f32.mrb[0].mxu0
      %v5764 = vadd.f32 %v1711, %v5763
      %5765 = vmatprep.mubr.bf16.mxu0 0
      %5766 = vmatmul.mubr.bf16.gmra.mrb[0].mxu0 %v5639
      %v5767 = vpop.f32.mrb[0].mxu0
      %v5768 = vadd.f32 %v1712, %v5767
      %v5769 = vpop.f32.mrb[0].mxu0
      %v5770 = vadd.f32 %v1713, %v5769
      %v5771 = vpop.f32.mrb[0].mxu0
      %v5772 = vadd.f32 %v1714, %v5771
      %v5773 = vpop.f32.mrb[0].mxu0
      %v5774 = vadd.f32 %v1715, %v5773
      %5775 = vmatprep.mubr.bf16.mxu0 0
      %5776 = vmatmul.mubr.bf16.gmra.mrb[0].mxu0 %v5642
      %v5777 = vpop.f32.mrb[0].mxu0
      %v5778 = vadd.f32 %v1716, %v5777
      %v5779 = vpop.f32.mrb[0].mxu0
      %v5780 = vadd.f32 %v1717, %v5779
      %v5781 = vpop.f32.mrb[0].mxu0
      %v5782 = vadd.f32 %v1718, %v5781
      %v5783 = vpop.f32.mrb[0].mxu0
      %v5784 = vadd.f32 %v1719, %v5783
      %5785 = vmatprep.mubr.bf16.mxu0 0
      %5786 = vmatmul.mubr.bf16.gmra.mrb[0].mxu0 %v5645
      %v5787 = vpop.f32.mrb[0].mxu0
      %v5788 = vadd.f32 %v1720, %v5787
      %v5789 = vpop.f32.mrb[0].mxu0
      %v5790 = vadd.f32 %v1721, %v5789
      %v5791 = vpop.f32.mrb[0].mxu0
      %v5792 = vadd.f32 %v1722, %v5791
      %v5793 = vpop.f32.mrb[0].mxu0
      %v5794 = vadd.f32 %v1723, %v5793
      %5795 = vmatprep.mubr.bf16.mxu0 0
      %5796 = vmatmul.mubr.bf16.gmra.mrb[0].mxu0 %v5648
      %v5797 = vpop.f32.mrb[0].mxu0
      %v5798 = vadd.f32 %v1724, %v5797
      %v5799 = vpop.f32.mrb[0].mxu0
      %v5800 = vadd.f32 %v1725, %v5799
      %v5801 = vpop.f32.mrb[0].mxu0
      %v5802 = vadd.f32 %v1726, %v5801
      %v5803 = vpop.f32.mrb[0].mxu0
      %v5804 = vadd.f32 %v1727, %v5803
      %5805 = vmatprep.mubr.bf16.mxu0 0
      %5806 = vmatmul.mubr.bf16.gmra.mrb[0].mxu0 %v5651
      %v5807 = vpop.f32.mrb[0].mxu0
      %v5808 = vadd.f32 %v1728, %v5807
      %v5809 = vpop.f32.mrb[0].mxu0
      %v5810 = vadd.f32 %v1729, %v5809
      %v5811 = vpop.f32.mrb[0].mxu0
      %v5812 = vadd.f32 %v1730, %v5811
      %v5813 = vpop.f32.mrb[0].mxu0
      %v5814 = vadd.f32 %v1731, %v5813
      %5815 = vdwg.mxu0
      %v5816 = vsel %vm1762, %v5720, -inf
      %v5817 = vmax.f32 %v5718, %v5816
      %5818 = vmax.xlane.f32.xlu0 %v5817
      %v5819 = vpop.xlane.xlu0 %5818
      %v5820 = vsel %vm1762, %v5724, -inf
      %v5821 = vmax.f32 %v5722, %v5820
      %5822 = vmax.xlane.f32.xlu0 %v5821
      %v5823 = vpop.xlane.xlu0 %5822
      %v5824 = vsel %vm1762, %v5730, -inf
      %v5825 = vmax.f32 %v5728, %v5824
      %5826 = vmax.xlane.f32.xlu0 %v5825
      %v5827 = vpop.xlane.xlu0 %5826
      %v5828 = vsel %vm1762, %v5734, -inf
      %v5829 = vmax.f32 %v5732, %v5828
      %5830 = vmax.xlane.f32.xlu0 %v5829
      %v5831 = vpop.xlane.xlu0 %5830
      %v5832 = vsel %vm1762, %v5740, -inf
      %v5833 = vmax.f32 %v5738, %v5832
      %5834 = vmax.xlane.f32.xlu0 %v5833
      %v5835 = vpop.xlane.xlu0 %5834
      %v5836 = vsel %vm1762, %v5744, -inf
      %v5837 = vmax.f32 %v5742, %v5836
      %5838 = vmax.xlane.f32.xlu0 %v5837
      %v5839 = vpop.xlane.xlu0 %5838
      %v5840 = vsel %vm1762, %v5750, -inf
      %v5841 = vmax.f32 %v5748, %v5840
      %5842 = vmax.xlane.f32.xlu0 %v5841
      %v5843 = vpop.xlane.xlu0 %5842
      %v5844 = vsel %vm1762, %v5754, -inf
      %v5845 = vmax.f32 %v5752, %v5844
      %5846 = vmax.xlane.f32.xlu0 %v5845
      %v5847 = vpop.xlane.xlu0 %5846
      %v5848 = vsel %vm1762, %v5760, -inf
      %v5849 = vmax.f32 %v5758, %v5848
      %5850 = vmax.xlane.f32.xlu0 %v5849
      %v5851 = vpop.xlane.xlu0 %5850
      %v5852 = vsel %vm1762, %v5764, -inf
      %v5853 = vmax.f32 %v5762, %v5852
      %5854 = vmax.xlane.f32.xlu0 %v5853
      %v5855 = vpop.xlane.xlu0 %5854
      %v5856 = vsel %vm1762, %v5770, -inf
      %v5857 = vmax.f32 %v5768, %v5856
      %5858 = vmax.xlane.f32.xlu0 %v5857
      %v5859 = vpop.xlane.xlu0 %5858
      %v5860 = vsel %vm1762, %v5774, -inf
      %v5861 = vmax.f32 %v5772, %v5860
      %5862 = vmax.xlane.f32.xlu0 %v5861
      %v5863 = vpop.xlane.xlu0 %5862
      %v5864 = vsel %vm1762, %v5780, -inf
      %v5865 = vmax.f32 %v5778, %v5864
      %5866 = vmax.xlane.f32.xlu0 %v5865
      %v5867 = vpop.xlane.xlu0 %5866
      %v5868 = vsel %vm1762, %v5784, -inf
      %v5869 = vmax.f32 %v5782, %v5868
      %5870 = vmax.xlane.f32.xlu0 %v5869
      %v5871 = vpop.xlane.xlu0 %5870
      %v5872 = vsel %vm1762, %v5790, -inf
      %v5873 = vmax.f32 %v5788, %v5872
      %5874 = vmax.xlane.f32.xlu0 %v5873
      %v5875 = vpop.xlane.xlu0 %5874
      %v5876 = vsel %vm1762, %v5794, -inf
      %v5877 = vmax.f32 %v5792, %v5876
      %5878 = vmax.xlane.f32.xlu0 %v5877
      %v5879 = vpop.xlane.xlu0 %5878
      %v5880 = vsel %vm1762, %v5800, -inf
      %v5881 = vmax.f32 %v5798, %v5880
      %5882 = vmax.xlane.f32.xlu0 %v5881
      %v5883 = vpop.xlane.xlu0 %5882
      %v5884 = vsel %vm1762, %v5804, -inf
      %v5885 = vmax.f32 %v5802, %v5884
      %5886 = vmax.xlane.f32.xlu0 %v5885
      %v5887 = vpop.xlane.xlu0 %5886
      %v5888 = vsel %vm1762, %v5810, -inf
      %v5889 = vmax.f32 %v5808, %v5888
      %5890 = vmax.xlane.f32.xlu0 %v5889
      %v5891 = vpop.xlane.xlu0 %5890
      %v5892 = vsel %vm1762, %v5814, -inf
      %v5893 = vmax.f32 %v5812, %v5892
      %5894 = vmax.xlane.f32.xlu0 %v5893
      %v5895 = vpop.xlane.xlu0 %5894
      %v5896 = vsub.f32 %v5718, %v5819
      %v5897 = vsub.f32 %v5720, %v5819
      %v5898 = vsub.f32 %v5722, %v5823
      %v5899 = vsub.f32 %v5724, %v5823
      %v5900 = vsub.f32 %v5728, %v5827
      %v5901 = vsub.f32 %v5730, %v5827
      %v5902 = vsub.f32 %v5732, %v5831
      %v5903 = vsub.f32 %v5734, %v5831
      %v5904 = vsub.f32 %v5738, %v5835
      %v5905 = vsub.f32 %v5740, %v5835
      %v5906 = vsub.f32 %v5742, %v5839
      %v5907 = vsub.f32 %v5744, %v5839
      %v5908 = vsub.f32 %v5748, %v5843
      %v5909 = vsub.f32 %v5750, %v5843
      %v5910 = vsub.f32 %v5752, %v5847
      %v5911 = vsub.f32 %v5754, %v5847
      %v5912 = vsub.f32 %v5758, %v5851
      %v5913 = vsub.f32 %v5760, %v5851
      %v5914 = vsub.f32 %v5762, %v5855
      %v5915 = vsub.f32 %v5764, %v5855
      %v5916 = vsub.f32 %v5768, %v5859
      %v5917 = vsub.f32 %v5770, %v5859
      %v5918 = vsub.f32 %v5772, %v5863
      %v5919 = vsub.f32 %v5774, %v5863
      %v5920 = vsub.f32 %v5778, %v5867
      %v5921 = vsub.f32 %v5780, %v5867
      %v5922 = vsub.f32 %v5782, %v5871
      %v5923 = vsub.f32 %v5784, %v5871
      %v5924 = vsub.f32 %v5788, %v5875
      %v5925 = vsub.f32 %v5790, %v5875
      %v5926 = vsub.f32 %v5792, %v5879
      %v5927 = vsub.f32 %v5794, %v5879
      %v5928 = vsub.f32 %v5798, %v5883
      %v5929 = vsub.f32 %v5800, %v5883
      %v5930 = vsub.f32 %v5802, %v5887
      %v5931 = vsub.f32 %v5804, %v5887
      %v5932 = vsub.f32 %v5808, %v5891
      %v5933 = vsub.f32 %v5810, %v5891
      %v5934 = vsub.f32 %v5812, %v5895
      %v5935 = vsub.f32 %v5814, %v5895
      %v5936 = vmul.f32 %v5896, 1.442695
      %v5937 = vpow.pop %v5936
      %v5938 = vmul.f32 %v5897, 1.442695
      %v5939 = vpow.pop %v5938
      %v5940 = vmul.f32 %v5898, 1.442695
      %v5941 = vpow.pop %v5940
      %v5942 = vmul.f32 %v5899, 1.442695
      %v5943 = vpow.pop %v5942
      %v5944 = vmul.f32 %v5900, 1.442695
      %v5945 = vpow.pop %v5944
      %v5946 = vmul.f32 %v5901, 1.442695
      %v5947 = vpow.pop %v5946
      %v5948 = vmul.f32 %v5902, 1.442695
      %v5949 = vpow.pop %v5948
      %v5950 = vmul.f32 %v5903, 1.442695
      %v5951 = vpow.pop %v5950
      %v5952 = vmul.f32 %v5904, 1.442695
      %v5953 = vpow.pop %v5952
      %v5954 = vmul.f32 %v5905, 1.442695
      %v5955 = vpow.pop %v5954
      %v5956 = vmul.f32 %v5906, 1.442695
      %v5957 = vpow.pop %v5956
      %v5958 = vmul.f32 %v5907, 1.442695
      %v5959 = vpow.pop %v5958
      %v5960 = vmul.f32 %v5908, 1.442695
      %v5961 = vpow.pop %v5960
      %v5962 = vmul.f32 %v5909, 1.442695
      %v5963 = vpow.pop %v5962
      %v5964 = vmul.f32 %v5910, 1.442695
      %v5965 = vpow.pop %v5964
      %v5966 = vmul.f32 %v5911, 1.442695
      %v5967 = vpow.pop %v5966
      %v5968 = vmul.f32 %v5912, 1.442695
      %v5969 = vpow.pop %v5968
      %v5970 = vmul.f32 %v5913, 1.442695
      %v5971 = vpow.pop %v5970
      %v5972 = vmul.f32 %v5914, 1.442695
      %v5973 = vpow.pop %v5972
      %v5974 = vmul.f32 %v5915, 1.442695
      %v5975 = vpow.pop %v5974
      %v5976 = vmul.f32 %v5916, 1.442695
      %v5977 = vpow.pop %v5976
      %v5978 = vmul.f32 %v5917, 1.442695
      %v5979 = vpow.pop %v5978
      %v5980 = vmul.f32 %v5918, 1.442695
      %v5981 = vpow.pop %v5980
      %v5982 = vmul.f32 %v5919, 1.442695
      %v5983 = vpow.pop %v5982
      %v5984 = vmul.f32 %v5920, 1.442695
      %v5985 = vpow.pop %v5984
      %v5986 = vmul.f32 %v5921, 1.442695
      %v5987 = vpow.pop %v5986
      %v5988 = vmul.f32 %v5922, 1.442695
      %v5989 = vpow.pop %v5988
      %v5990 = vmul.f32 %v5923, 1.442695
      %v5991 = vpow.pop %v5990
      %v5992 = vmul.f32 %v5924, 1.442695
      %v5993 = vpow.pop %v5992
      %v5994 = vmul.f32 %v5925, 1.442695
      %v5995 = vpow.pop %v5994
      %v5996 = vmul.f32 %v5926, 1.442695
      %v5997 = vpow.pop %v5996
      %v5998 = vmul.f32 %v5927, 1.442695
      %v5999 = vpow.pop %v5998
      %v6000 = vmul.f32 %v5928, 1.442695
      %v6001 = vpow.pop %v6000
      %v6002 = vmul.f32 %v5929, 1.442695
      %v6003 = vpow.pop %v6002
      %v6004 = vmul.f32 %v5930, 1.442695
      %v6005 = vpow.pop %v6004
      %v6006 = vmul.f32 %v5931, 1.442695
      %v6007 = vpow.pop %v6006
      %v6008 = vmul.f32 %v5932, 1.442695
      %v6009 = vpow.pop %v6008
      %v6010 = vmul.f32 %v5933, 1.442695
      %v6011 = vpow.pop %v6010
      %v6012 = vmul.f32 %v5934, 1.442695
      %v6013 = vpow.pop %v6012
      %v6014 = vmul.f32 %v5935, 1.442695
      %v6015 = vpow.pop %v6014
      %v6016 = vsel %vm1762, %v5939, 0.0
      %v6017 = vadd.f32 %v5937, %v6016
      %6018 = vadd.xlane.f32.xlu0 %v6017
      %v6019 = vpop.xlane.xlu0 %6018
      %v6020 = vsel %vm1762, %v5943, 0.0
      %v6021 = vadd.f32 %v5941, %v6020
      %6022 = vadd.xlane.f32.xlu0 %v6021
      %v6023 = vpop.xlane.xlu0 %6022
      %v6024 = vsel %vm1762, %v5947, 0.0
      %v6025 = vadd.f32 %v5945, %v6024
      %6026 = vadd.xlane.f32.xlu0 %v6025
      %v6027 = vpop.xlane.xlu0 %6026
      %v6028 = vsel %vm1762, %v5951, 0.0
      %v6029 = vadd.f32 %v5949, %v6028
      %6030 = vadd.xlane.f32.xlu0 %v6029
      %v6031 = vpop.xlane.xlu0 %6030
      %v6032 = vsel %vm1762, %v5955, 0.0
      %v6033 = vadd.f32 %v5953, %v6032
      %6034 = vadd.xlane.f32.xlu0 %v6033
      %v6035 = vpop.xlane.xlu0 %6034
      %v6036 = vsel %vm1762, %v5959, 0.0
      %v6037 = vadd.f32 %v5957, %v6036
      %6038 = vadd.xlane.f32.xlu0 %v6037
      %v6039 = vpop.xlane.xlu0 %6038
      %v6040 = vsel %vm1762, %v5963, 0.0
      %v6041 = vadd.f32 %v5961, %v6040
      %6042 = vadd.xlane.f32.xlu0 %v6041
      %v6043 = vpop.xlane.xlu0 %6042
      %v6044 = vsel %vm1762, %v5967, 0.0
      %v6045 = vadd.f32 %v5965, %v6044
      %6046 = vadd.xlane.f32.xlu0 %v6045
      %v6047 = vpop.xlane.xlu0 %6046
      %v6048 = vsel %vm1762, %v5971, 0.0
      %v6049 = vadd.f32 %v5969, %v6048
      %6050 = vadd.xlane.f32.xlu0 %v6049
      %v6051 = vpop.xlane.xlu0 %6050
      %v6052 = vsel %vm1762, %v5975, 0.0
      %v6053 = vadd.f32 %v5973, %v6052
      %6054 = vadd.xlane.f32.xlu0 %v6053
      %v6055 = vpop.xlane.xlu0 %6054
      %v6056 = vsel %vm1762, %v5979, 0.0
      %v6057 = vadd.f32 %v5977, %v6056
      %6058 = vadd.xlane.f32.xlu0 %v6057
      %v6059 = vpop.xlane.xlu0 %6058
      %v6060 = vsel %vm1762, %v5983, 0.0
      %v6061 = vadd.f32 %v5981, %v6060
      %6062 = vadd.xlane.f32.xlu0 %v6061
      %v6063 = vpop.xlane.xlu0 %6062
      %v6064 = vsel %vm1762, %v5987, 0.0
      %v6065 = vadd.f32 %v5985, %v6064
      %6066 = vadd.xlane.f32.xlu0 %v6065
      %v6067 = vpop.xlane.xlu0 %6066
      %v6068 = vsel %vm1762, %v5991, 0.0
      %v6069 = vadd.f32 %v5989, %v6068
      %6070 = vadd.xlane.f32.xlu0 %v6069
      %v6071 = vpop.xlane.xlu0 %6070
      %v6072 = vsel %vm1762, %v5995, 0.0
      %v6073 = vadd.f32 %v5993, %v6072
      %6074 = vadd.xlane.f32.xlu0 %v6073
      %v6075 = vpop.xlane.xlu0 %6074
      %v6076 = vsel %vm1762, %v5999, 0.0
      %v6077 = vadd.f32 %v5997, %v6076
      %6078 = vadd.xlane.f32.xlu0 %v6077
      %v6079 = vpop.xlane.xlu0 %6078
      %v6080 = vsel %vm1762, %v6003, 0.0
      %v6081 = vadd.f32 %v6001, %v6080
      %6082 = vadd.xlane.f32.xlu0 %v6081
      %v6083 = vpop.xlane.xlu0 %6082
      %v6084 = vsel %vm1762, %v6007, 0.0
      %v6085 = vadd.f32 %v6005, %v6084
      %6086 = vadd.xlane.f32.xlu0 %v6085
      %v6087 = vpop.xlane.xlu0 %6086
      %v6088 = vsel %vm1762, %v6011, 0.0
      %v6089 = vadd.f32 %v6009, %v6088
      %6090 = vadd.xlane.f32.xlu0 %v6089
      %v6091 = vpop.xlane.xlu0 %6090
      %v6092 = vsel %vm1762, %v6015, 0.0
      %v6093 = vadd.f32 %v6013, %v6092
      %6094 = vadd.xlane.f32.xlu0 %v6093
      %v6095 = vpop.xlane.xlu0 %6094
      %v6096 = vrcp.pop %v6019
      %v6097 = vrcp.pop %v6023
      %v6098 = vrcp.pop %v6027
      %v6099 = vrcp.pop %v6031
      %v6100 = vrcp.pop %v6035
      %v6101 = vrcp.pop %v6039
      %v6102 = vrcp.pop %v6043
      %v6103 = vrcp.pop %v6047
      %v6104 = vrcp.pop %v6051
      %v6105 = vrcp.pop %v6055
      %v6106 = vrcp.pop %v6059
      %v6107 = vrcp.pop %v6063
      %v6108 = vrcp.pop %v6067
      %v6109 = vrcp.pop %v6071
      %v6110 = vrcp.pop %v6075
      %v6111 = vrcp.pop %v6079
      %v6112 = vrcp.pop %v6083
      %v6113 = vrcp.pop %v6087
      %v6114 = vrcp.pop %v6091
      %v6115 = vrcp.pop %v6095
      %v6116 = vmul.f32 %v5937, %v6096
      %v6117 = vmul.f32 %v5939, %v6096
      %v6118 = vmul.f32 %v5941, %v6097
      %v6119 = vmul.f32 %v5943, %v6097
      %v6120 = vmul.f32 %v5945, %v6098
      %v6121 = vmul.f32 %v5947, %v6098
      %v6122 = vmul.f32 %v5949, %v6099
      %v6123 = vmul.f32 %v5951, %v6099
      %v6124 = vmul.f32 %v5953, %v6100
      %v6125 = vmul.f32 %v5955, %v6100
      %v6126 = vmul.f32 %v5957, %v6101
      %v6127 = vmul.f32 %v5959, %v6101
      %v6128 = vmul.f32 %v5961, %v6102
      %v6129 = vmul.f32 %v5963, %v6102
      %v6130 = vmul.f32 %v5965, %v6103
      %v6131 = vmul.f32 %v5967, %v6103
      %v6132 = vmul.f32 %v5969, %v6104
      %v6133 = vmul.f32 %v5971, %v6104
      %v6134 = vmul.f32 %v5973, %v6105
      %v6135 = vmul.f32 %v5975, %v6105
      %v6136 = vmul.f32 %v5977, %v6106
      %v6137 = vmul.f32 %v5979, %v6106
      %v6138 = vmul.f32 %v5981, %v6107
      %v6139 = vmul.f32 %v5983, %v6107
      %v6140 = vmul.f32 %v5985, %v6108
      %v6141 = vmul.f32 %v5987, %v6108
      %v6142 = vmul.f32 %v5989, %v6109
      %v6143 = vmul.f32 %v5991, %v6109
      %v6144 = vmul.f32 %v5993, %v6110
      %v6145 = vmul.f32 %v5995, %v6110
      %v6146 = vmul.f32 %v5997, %v6111
      %v6147 = vmul.f32 %v5999, %v6111
      %v6148 = vmul.f32 %v6001, %v6112
      %v6149 = vmul.f32 %v6003, %v6112
      %v6150 = vmul.f32 %v6005, %v6113
      %v6151 = vmul.f32 %v6007, %v6113
      %v6152 = vmul.f32 %v6009, %v6114
      %v6153 = vmul.f32 %v6011, %v6114
      %v6154 = vmul.f32 %v6013, %v6115
      %v6155 = vmul.f32 %v6015, %v6115
      %v6156 = vpack.c.bf16 %v6118, %v6116
      %v6157 = vpack.c.bf16 %v6119, %v6117
      %v6158 = vpack.c.bf16 %v6122, %v6120
      %v6159 = vpack.c.bf16 %v6123, %v6121
      %v6160 = vpack.c.bf16 %v6126, %v6124
      %v6161 = vpack.c.bf16 %v6127, %v6125
      %v6162 = vpack.c.bf16 %v6130, %v6128
      %v6163 = vpack.c.bf16 %v6131, %v6129
      %v6164 = vpack.c.bf16 %v6134, %v6132
      %v6165 = vpack.c.bf16 %v6135, %v6133
      %v6166 = vpack.c.bf16 %v6138, %v6136
      %v6167 = vpack.c.bf16 %v6139, %v6137
      %v6168 = vpack.c.bf16 %v6142, %v6140
      %v6169 = vpack.c.bf16 %v6143, %v6141
      %v6170 = vpack.c.bf16 %v6146, %v6144
      %v6171 = vpack.c.bf16 %v6147, %v6145
      %v6172 = vpack.c.bf16 %v6150, %v6148
      %v6173 = vpack.c.bf16 %v6151, %v6149
      %v6174 = vpack.c.bf16 %v6154, %v6152
      %v6175 = vpack.c.bf16 %v6155, %v6153
      %6186 = vrot.lane.b32.xlu0 %v4847, 96
      %v6187 = vpop.permute.xlu0 %6186
      %6188 = vrot.lane.b32.xlu0 %v4848, 96
      %v6189 = vpop.permute.xlu0 %6188
      %6190 = vrot.lane.b32.xlu0 %v4849, 96
      %v6191 = vpop.permute.xlu0 %6190
      %6192 = vrot.lane.b32.xlu0 %v4850, 96
      %v6193 = vpop.permute.xlu0 %6192
      %6194 = vrot.lane.b32.xlu0 %v4851, 96
      %v6195 = vpop.permute.xlu0 %6194
      %6196 = vrot.lane.b32.xlu0 %v4852, 96
      %v6197 = vpop.permute.xlu0 %6196
      %6198 = vrot.lane.b32.xlu0 %v4853, 96
      %v6199 = vpop.permute.xlu0 %6198
      %6200 = vrot.lane.b32.xlu0 %v4854, 96
      %v6201 = vpop.permute.xlu0 %6200
      %6202 = vrot.lane.b32.xlu0 %v4855, 96
      %v6203 = vpop.permute.xlu0 %6202
      %6204 = vrot.lane.b32.xlu0 %v4856, 96
      %v6205 = vpop.permute.xlu0 %6204
      %v6217 = vsel %vm1762, %v6157, 0
      %v6220 = vsel %vm1762, %v6159, 0
      %v6223 = vsel %vm1762, %v6161, 0
      %v6226 = vsel %vm1762, %v6163, 0
      %v6229 = vsel %vm1762, %v6165, 0
      %v6232 = vsel %vm1762, %v6167, 0
      %v6235 = vsel %vm1762, %v6169, 0
      %v6238 = vsel %vm1762, %v6171, 0
      %v6241 = vsel %vm1762, %v6173, 0
      %v6244 = vsel %vm1762, %v6175, 0
      %6246 = vmatprep.subr.bf16.mxu0 0
      %6247 = vmatpush1.bf16.msra.mxu0 %v6187
      %6248 = vmatprep.subr.bf16.mxu0 0
      %6249 = vmatpush1.bf16.msra.mxu0 %v6189
      %6250 = vmatprep.subr.bf16.mxu0 0
      %6251 = vmatpush1.bf16.msra.mxu0 %v6191
      %6252 = vmatprep.subr.bf16.mxu0 0
      %6253 = vmatpush1.bf16.msra.mxu0 %v6193
      %6254 = vmatprep.subr.bf16.mxu0 0
      %6255 = vmatpush1.bf16.msra.mxu0 %v6195
      %6256 = vmatprep.subr.bf16.mxu0 0
      %6257 = vmatpush1.bf16.msra.mxu0 %v6197
      %6258 = vmatprep.subr.bf16.mxu0 0
      %6259 = vmatpush1.bf16.msra.mxu0 %v6199
      %6260 = vmatprep.subr.bf16.mxu0 0
      %6261 = vmatpush1.bf16.msra.mxu0 %v6201
      %6262 = vmatprep.subr.bf16.mxu0 0
      %6263 = vmatpush1.bf16.msra.mxu0 %v6203
      %6264 = vmatprep.subr.bf16.mxu0 0
      %6265 = vmatpush1.bf16.msra.mxu0 %v6205
      %6266 = vmatprep.subr.bf16.mxu0 0
      %6267 = vmatpush1.bf16.msra.mxu0 0
      %6268 = vmatprep.subr.bf16.mxu0 0
      %6269 = vmatpush1.bf16.msra.mxu0 0
      %6270 = vmatprep.subr.bf16.mxu0 0
      %6271 = vmatpush1.bf16.msra.mxu0 0
      %6272 = vmatprep.subr.bf16.mxu0 0
      %6273 = vmatpush1.bf16.msra.mxu0 0
      %6274 = vmatprep.subr.bf16.mxu0 0
      %6275 = vmatpush1.bf16.msra.mxu0 0
      %6276 = vmatprep.subr.bf16.mxu0 0
      %6277 = vmatpush1.bf16.msra.mxu0 0
      %6278 = vmatprep.mubr.bf16.mxu0 %v6217
      %6279 = vmatmul.mubr.bf16.gmra.mrb[0].mxu0 %v6156
      %v6280 = vpop.f32.mrb[0].mxu0
      %v6281 = vadd.f32 0.0, %v6280
      %v6282 = vpop.f32.mrb[0].mxu0
      %v6283 = vpop.f32.mrb[0].mxu0
      %v6284 = vadd.f32 0.0, %v6283
      %v6285 = vpop.f32.mrb[0].mxu0
      %6286 = vmatprep.mubr.bf16.mxu0 %v6220
      %6287 = vmatmul.mubr.bf16.gmra.mrb[0].mxu0 %v6158
      %v6288 = vpop.f32.mrb[0].mxu0
      %v6289 = vadd.f32 0.0, %v6288
      %v6290 = vpop.f32.mrb[0].mxu0
      %v6291 = vpop.f32.mrb[0].mxu0
      %v6292 = vadd.f32 0.0, %v6291
      %v6293 = vpop.f32.mrb[0].mxu0
      %6294 = vmatprep.mubr.bf16.mxu0 %v6223
      %6295 = vmatmul.mubr.bf16.gmra.mrb[0].mxu0 %v6160
      %v6296 = vpop.f32.mrb[0].mxu0
      %v6297 = vadd.f32 0.0, %v6296
      %v6298 = vpop.f32.mrb[0].mxu0
      %v6299 = vpop.f32.mrb[0].mxu0
      %v6300 = vadd.f32 0.0, %v6299
      %v6301 = vpop.f32.mrb[0].mxu0
      %6302 = vmatprep.mubr.bf16.mxu0 %v6226
      %6303 = vmatmul.mubr.bf16.gmra.mrb[0].mxu0 %v6162
      %v6304 = vpop.f32.mrb[0].mxu0
      %v6305 = vadd.f32 0.0, %v6304
      %v6306 = vpop.f32.mrb[0].mxu0
      %v6307 = vpop.f32.mrb[0].mxu0
      %v6308 = vadd.f32 0.0, %v6307
      %v6309 = vpop.f32.mrb[0].mxu0
      %6310 = vmatprep.mubr.bf16.mxu0 %v6229
      %6311 = vmatmul.mubr.bf16.gmra.mrb[0].mxu0 %v6164
      %v6312 = vpop.f32.mrb[0].mxu0
      %v6313 = vadd.f32 0.0, %v6312
      %v6314 = vpop.f32.mrb[0].mxu0
      %v6315 = vpop.f32.mrb[0].mxu0
      %v6316 = vadd.f32 0.0, %v6315
      %v6317 = vpop.f32.mrb[0].mxu0
      %6318 = vmatprep.mubr.bf16.mxu0 %v6232
      %6319 = vmatmul.mubr.bf16.gmra.mrb[0].mxu0 %v6166
      %v6320 = vpop.f32.mrb[0].mxu0
      %v6321 = vadd.f32 0.0, %v6320
      %v6322 = vpop.f32.mrb[0].mxu0
      %v6323 = vpop.f32.mrb[0].mxu0
      %v6324 = vadd.f32 0.0, %v6323
      %v6325 = vpop.f32.mrb[0].mxu0
      %6326 = vmatprep.mubr.bf16.mxu0 %v6235
      %6327 = vmatmul.mubr.bf16.gmra.mrb[0].mxu0 %v6168
      %v6328 = vpop.f32.mrb[0].mxu0
      %v6329 = vadd.f32 0.0, %v6328
      %v6330 = vpop.f32.mrb[0].mxu0
      %v6331 = vpop.f32.mrb[0].mxu0
      %v6332 = vadd.f32 0.0, %v6331
      %v6333 = vpop.f32.mrb[0].mxu0
      %6334 = vmatprep.mubr.bf16.mxu0 %v6238
      %6335 = vmatmul.mubr.bf16.gmra.mrb[0].mxu0 %v6170
      %v6336 = vpop.f32.mrb[0].mxu0
      %v6337 = vadd.f32 0.0, %v6336
      %v6338 = vpop.f32.mrb[0].mxu0
      %v6339 = vpop.f32.mrb[0].mxu0
      %v6340 = vadd.f32 0.0, %v6339
      %v6341 = vpop.f32.mrb[0].mxu0
      %6342 = vmatprep.mubr.bf16.mxu0 %v6241
      %6343 = vmatmul.mubr.bf16.gmra.mrb[0].mxu0 %v6172
      %v6344 = vpop.f32.mrb[0].mxu0
      %v6345 = vadd.f32 0.0, %v6344
      %v6346 = vpop.f32.mrb[0].mxu0
      %v6347 = vpop.f32.mrb[0].mxu0
      %v6348 = vadd.f32 0.0, %v6347
      %v6349 = vpop.f32.mrb[0].mxu0
      %6350 = vmatprep.mubr.bf16.mxu0 %v6244
      %6351 = vmatmul.mubr.bf16.gmra.mrb[0].mxu0 %v6174
      %v6352 = vpop.f32.mrb[0].mxu0
      %v6353 = vadd.f32 0.0, %v6352
      %v6354 = vpop.f32.mrb[0].mxu0
      %v6355 = vpop.f32.mrb[0].mxu0
      %v6356 = vadd.f32 0.0, %v6355
      %v6357 = vpop.f32.mrb[0].mxu0
      %6358 = vdwg.mxu0
      %v6359 = vpack.c.bf16 %v6284, %v6281
      %v6360 = vpack.c.bf16 %v6292, %v6289
      %v6361 = vpack.c.bf16 %v6300, %v6297
      %v6362 = vpack.c.bf16 %v6308, %v6305
      %v6363 = vpack.c.bf16 %v6316, %v6313
      %v6364 = vpack.c.bf16 %v6324, %v6321
      %v6365 = vpack.c.bf16 %v6332, %v6329
      %v6366 = vpack.c.bf16 %v6340, %v6337
      %v6367 = vpack.c.bf16 %v6348, %v6345
      %v6368 = vpack.c.bf16 %v6356, %v6353
      %6369 = vrot.lane.b32.xlu0 %v4827, 64
      %v6370 = vpop.permute.xlu0 %6369
      %6371 = vrot.lane.b32.xlu0 %v4828, 64
      %v6372 = vpop.permute.xlu0 %6371
      %6373 = vrot.lane.b32.xlu0 %v4829, 64
      %v6374 = vpop.permute.xlu0 %6373
      %6375 = vrot.lane.b32.xlu0 %v4830, 64
      %v6376 = vpop.permute.xlu0 %6375
      %6377 = vrot.lane.b32.xlu0 %v4831, 64
      %v6378 = vpop.permute.xlu0 %6377
      %6379 = vrot.lane.b32.xlu0 %v4832, 64
      %v6380 = vpop.permute.xlu0 %6379
      %6381 = vrot.lane.b32.xlu0 %v4833, 64
      %v6382 = vpop.permute.xlu0 %6381
      %6383 = vrot.lane.b32.xlu0 %v4834, 64
      %v6384 = vpop.permute.xlu0 %6383
      %6385 = vrot.lane.b32.xlu0 %v4835, 64
      %v6386 = vpop.permute.xlu0 %6385
      %6387 = vrot.lane.b32.xlu0 %v4836, 64
      %v6388 = vpop.permute.xlu0 %6387
      %6389 = vrot.lane.b32.xlu0 %v4837, 64
      %v6390 = vpop.permute.xlu0 %6389
      %6391 = vrot.lane.b32.xlu0 %v4838, 64
      %v6392 = vpop.permute.xlu0 %6391
      %6393 = vrot.lane.b32.xlu0 %v4839, 64
      %v6394 = vpop.permute.xlu0 %6393
      %6395 = vrot.lane.b32.xlu0 %v4840, 64
      %v6396 = vpop.permute.xlu0 %6395
      %6397 = vrot.lane.b32.xlu0 %v4841, 64
      %v6398 = vpop.permute.xlu0 %6397
      %6399 = vrot.lane.b32.xlu0 %v4842, 64
      %v6400 = vpop.permute.xlu0 %6399
      %6401 = vrot.lane.b32.xlu0 %v4843, 64
      %v6402 = vpop.permute.xlu0 %6401
      %6403 = vrot.lane.b32.xlu0 %v4844, 64
      %v6404 = vpop.permute.xlu0 %6403
      %6405 = vrot.lane.b32.xlu0 %v4845, 64
      %v6406 = vpop.permute.xlu0 %6405
      %6407 = vrot.lane.b32.xlu0 %v4846, 64
      %v6408 = vpop.permute.xlu0 %6407
      %v6410 = vsel %vm1762, %v6370, 0
      %v6413 = vsel %vm1762, %v6372, 0
      %v6416 = vsel %vm1762, %v6374, 0
      %v6419 = vsel %vm1762, %v6376, 0
      %v6422 = vsel %vm1762, %v6378, 0
      %v6425 = vsel %vm1762, %v6380, 0
      %v6428 = vsel %vm1762, %v6382, 0
      %v6431 = vsel %vm1762, %v6384, 0
      %v6434 = vsel %vm1762, %v6386, 0
      %v6437 = vsel %vm1762, %v6388, 0
      %v6440 = vsel %vm1762, %v6390, 0
      %v6443 = vsel %vm1762, %v6392, 0
      %v6446 = vsel %vm1762, %v6394, 0
      %v6449 = vsel %vm1762, %v6396, 0
      %v6452 = vsel %vm1762, %v6398, 0
      %v6455 = vsel %vm1762, %v6400, 0
      %v6458 = vsel %vm1762, %v6402, 0
      %v6461 = vsel %vm1762, %v6404, 0
      %v6464 = vsel %vm1762, %v6406, 0
      %v6467 = vsel %vm1762, %v6408, 0
      %6469 = vmatprep.subr.bf16.mxu0 0
      %6470 = vmatpush1.bf16.xpose.msra.mxu0 %v6440
      %6471 = vmatprep.subr.bf16.mxu0 0
      %6472 = vmatpush1.bf16.xpose.msra.mxu0 %v6443
      %6473 = vmatprep.subr.bf16.mxu0 0
      %6474 = vmatpush1.bf16.xpose.msra.mxu0 %v6446
      %6475 = vmatprep.subr.bf16.mxu0 0
      %6476 = vmatpush1.bf16.xpose.msra.mxu0 %v6449
      %6477 = vmatprep.subr.bf16.mxu0 0
      %6478 = vmatpush1.bf16.xpose.msra.mxu0 %v6452
      %6479 = vmatprep.subr.bf16.mxu0 0
      %6480 = vmatpush1.bf16.xpose.msra.mxu0 %v6455
      %6481 = vmatprep.subr.bf16.mxu0 0
      %6482 = vmatpush1.bf16.xpose.msra.mxu0 %v6458
      %6483 = vmatprep.subr.bf16.mxu0 0
      %6484 = vmatpush1.bf16.xpose.msra.mxu0 %v6461
      %6485 = vmatprep.subr.bf16.mxu0 0
      %6486 = vmatpush1.bf16.xpose.msra.mxu0 %v6464
      %6487 = vmatprep.subr.bf16.mxu0 0
      %6488 = vmatpush1.bf16.xpose.msra.mxu0 %v6467
      %6489 = vmatprep.subr.bf16.mxu0 0
      %6490 = vmatpush1.bf16.xpose.msra.mxu0 0
      %6491 = vmatprep.subr.bf16.mxu0 0
      %6492 = vmatpush1.bf16.xpose.msra.mxu0 0
      %6493 = vmatprep.subr.bf16.mxu0 0
      %6494 = vmatpush1.bf16.xpose.msra.mxu0 0
      %6495 = vmatprep.subr.bf16.mxu0 0
      %6496 = vmatpush1.bf16.xpose.msra.mxu0 0
      %6497 = vmatprep.subr.bf16.mxu0 0
      %6498 = vmatpush1.bf16.xpose.msra.mxu0 0
      %6499 = vmatprep.subr.bf16.mxu0 0
      %6500 = vmatpush1.bf16.xpose.msra.mxu0 0
      %6501 = vmatprep.mubr.bf16.mxu0 0
      %6502 = vmatmul.mubr.bf16.gmra.mrb[0].mxu0 %v6410
      %v6503 = vpop.f32.mrb[0].mxu0
      %v6504 = vadd.f32 %v1692, %v6503
      %v6505 = vpop.f32.mrb[0].mxu0
      %v6506 = vadd.f32 %v1693, %v6505
      %v6507 = vpop.f32.mrb[0].mxu0
      %v6508 = vadd.f32 %v1694, %v6507
      %v6509 = vpop.f32.mrb[0].mxu0
      %v6510 = vadd.f32 %v1695, %v6509
      %6511 = vmatprep.mubr.bf16.mxu0 0
      %6512 = vmatmul.mubr.bf16.gmra.mrb[0].mxu0 %v6413
      %v6513 = vpop.f32.mrb[0].mxu0
      %v6514 = vadd.f32 %v1696, %v6513
      %v6515 = vpop.f32.mrb[0].mxu0
      %v6516 = vadd.f32 %v1697, %v6515
      %v6517 = vpop.f32.mrb[0].mxu0
      %v6518 = vadd.f32 %v1698, %v6517
      %v6519 = vpop.f32.mrb[0].mxu0
      %v6520 = vadd.f32 %v1699, %v6519
      %6521 = vmatprep.mubr.bf16.mxu0 0
      %6522 = vmatmul.mubr.bf16.gmra.mrb[0].mxu0 %v6416
      %v6523 = vpop.f32.mrb[0].mxu0
      %v6524 = vadd.f32 %v1700, %v6523
      %v6525 = vpop.f32.mrb[0].mxu0
      %v6526 = vadd.f32 %v1701, %v6525
      %v6527 = vpop.f32.mrb[0].mxu0
      %v6528 = vadd.f32 %v1702, %v6527
      %v6529 = vpop.f32.mrb[0].mxu0
      %v6530 = vadd.f32 %v1703, %v6529
      %6531 = vmatprep.mubr.bf16.mxu0 0
      %6532 = vmatmul.mubr.bf16.gmra.mrb[0].mxu0 %v6419
      %v6533 = vpop.f32.mrb[0].mxu0
      %v6534 = vadd.f32 %v1704, %v6533
      %v6535 = vpop.f32.mrb[0].mxu0
      %v6536 = vadd.f32 %v1705, %v6535
      %v6537 = vpop.f32.mrb[0].mxu0
      %v6538 = vadd.f32 %v1706, %v6537
      %v6539 = vpop.f32.mrb[0].mxu0
      %v6540 = vadd.f32 %v1707, %v6539
      %6541 = vmatprep.mubr.bf16.mxu0 0
      %6542 = vmatmul.mubr.bf16.gmra.mrb[0].mxu0 %v6422
      %v6543 = vpop.f32.mrb[0].mxu0
      %v6544 = vadd.f32 %v1708, %v6543
      %v6545 = vpop.f32.mrb[0].mxu0
      %v6546 = vadd.f32 %v1709, %v6545
      %v6547 = vpop.f32.mrb[0].mxu0
      %v6548 = vadd.f32 %v1710, %v6547
      %v6549 = vpop.f32.mrb[0].mxu0
      %v6550 = vadd.f32 %v1711, %v6549
      %6551 = vmatprep.mubr.bf16.mxu0 0
      %6552 = vmatmul.mubr.bf16.gmra.mrb[0].mxu0 %v6425
      %v6553 = vpop.f32.mrb[0].mxu0
      %v6554 = vadd.f32 %v1712, %v6553
      %v6555 = vpop.f32.mrb[0].mxu0
      %v6556 = vadd.f32 %v1713, %v6555
      %v6557 = vpop.f32.mrb[0].mxu0
      %v6558 = vadd.f32 %v1714, %v6557
      %v6559 = vpop.f32.mrb[0].mxu0
      %v6560 = vadd.f32 %v1715, %v6559
      %6561 = vmatprep.mubr.bf16.mxu0 0
      %6562 = vmatmul.mubr.bf16.gmra.mrb[0].mxu0 %v6428
      %v6563 = vpop.f32.mrb[0].mxu0
      %v6564 = vadd.f32 %v1716, %v6563
      %v6565 = vpop.f32.mrb[0].mxu0
      %v6566 = vadd.f32 %v1717, %v6565
      %v6567 = vpop.f32.mrb[0].mxu0
      %v6568 = vadd.f32 %v1718, %v6567
      %v6569 = vpop.f32.mrb[0].mxu0
      %v6570 = vadd.f32 %v1719, %v6569
      %6571 = vmatprep.mubr.bf16.mxu0 0
      %6572 = vmatmul.mubr.bf16.gmra.mrb[0].mxu0 %v6431
      %v6573 = vpop.f32.mrb[0].mxu0
      %v6574 = vadd.f32 %v1720, %v6573
      %v6575 = vpop.f32.mrb[0].mxu0
      %v6576 = vadd.f32 %v1721, %v6575
      %v6577 = vpop.f32.mrb[0].mxu0
      %v6578 = vadd.f32 %v1722, %v6577
      %v6579 = vpop.f32.mrb[0].mxu0
      %v6580 = vadd.f32 %v1723, %v6579
      %6581 = vmatprep.mubr.bf16.mxu0 0
      %6582 = vmatmul.mubr.bf16.gmra.mrb[0].mxu0 %v6434
      %v6583 = vpop.f32.mrb[0].mxu0
      %v6584 = vadd.f32 %v1724, %v6583
      %v6585 = vpop.f32.mrb[0].mxu0
      %v6586 = vadd.f32 %v1725, %v6585
      %v6587 = vpop.f32.mrb[0].mxu0
      %v6588 = vadd.f32 %v1726, %v6587
      %v6589 = vpop.f32.mrb[0].mxu0
      %v6590 = vadd.f32 %v1727, %v6589
      %6591 = vmatprep.mubr.bf16.mxu0 0
      %6592 = vmatmul.mubr.bf16.gmra.mrb[0].mxu0 %v6437
      %v6593 = vpop.f32.mrb[0].mxu0
      %v6594 = vadd.f32 %v1728, %v6593
      %v6595 = vpop.f32.mrb[0].mxu0
      %v6596 = vadd.f32 %v1729, %v6595
      %v6597 = vpop.f32.mrb[0].mxu0
      %v6598 = vadd.f32 %v1730, %v6597
      %v6599 = vpop.f32.mrb[0].mxu0
      %v6600 = vadd.f32 %v1731, %v6599
      %6601 = vdwg.mxu0
      %v6602 = vsel %vm1762, %v6506, -inf
      %v6603 = vmax.f32 %v6504, %v6602
      %6604 = vmax.xlane.f32.xlu0 %v6603
      %v6605 = vpop.xlane.xlu0 %6604
      %v6606 = vsel %vm1762, %v6510, -inf
      %v6607 = vmax.f32 %v6508, %v6606
      %6608 = vmax.xlane.f32.xlu0 %v6607
      %v6609 = vpop.xlane.xlu0 %6608
      %v6610 = vsel %vm1762, %v6516, -inf
      %v6611 = vmax.f32 %v6514, %v6610
      %6612 = vmax.xlane.f32.xlu0 %v6611
      %v6613 = vpop.xlane.xlu0 %6612
      %v6614 = vsel %vm1762, %v6520, -inf
      %v6615 = vmax.f32 %v6518, %v6614
      %6616 = vmax.xlane.f32.xlu0 %v6615
      %v6617 = vpop.xlane.xlu0 %6616
      %v6618 = vsel %vm1762, %v6526, -inf
      %v6619 = vmax.f32 %v6524, %v6618
      %6620 = vmax.xlane.f32.xlu0 %v6619
      %v6621 = vpop.xlane.xlu0 %6620
      %v6622 = vsel %vm1762, %v6530, -inf
      %v6623 = vmax.f32 %v6528, %v6622
      %6624 = vmax.xlane.f32.xlu0 %v6623
      %v6625 = vpop.xlane.xlu0 %6624
      %v6626 = vsel %vm1762, %v6536, -inf
      %v6627 = vmax.f32 %v6534, %v6626
      %6628 = vmax.xlane.f32.xlu0 %v6627
      %v6629 = vpop.xlane.xlu0 %6628
      %v6630 = vsel %vm1762, %v6540, -inf
      %v6631 = vmax.f32 %v6538, %v6630
      %6632 = vmax.xlane.f32.xlu0 %v6631
      %v6633 = vpop.xlane.xlu0 %6632
      %v6634 = vsel %vm1762, %v6546, -inf
      %v6635 = vmax.f32 %v6544, %v6634
      %6636 = vmax.xlane.f32.xlu0 %v6635
      %v6637 = vpop.xlane.xlu0 %6636
      %v6638 = vsel %vm1762, %v6550, -inf
      %v6639 = vmax.f32 %v6548, %v6638
      %6640 = vmax.xlane.f32.xlu0 %v6639
      %v6641 = vpop.xlane.xlu0 %6640
      %v6642 = vsel %vm1762, %v6556, -inf
      %v6643 = vmax.f32 %v6554, %v6642
      %6644 = vmax.xlane.f32.xlu0 %v6643
      %v6645 = vpop.xlane.xlu0 %6644
      %v6646 = vsel %vm1762, %v6560, -inf
      %v6647 = vmax.f32 %v6558, %v6646
      %6648 = vmax.xlane.f32.xlu0 %v6647
      %v6649 = vpop.xlane.xlu0 %6648
      %v6650 = vsel %vm1762, %v6566, -inf
      %v6651 = vmax.f32 %v6564, %v6650
      %6652 = vmax.xlane.f32.xlu0 %v6651
      %v6653 = vpop.xlane.xlu0 %6652
      %v6654 = vsel %vm1762, %v6570, -inf
      %v6655 = vmax.f32 %v6568, %v6654
      %6656 = vmax.xlane.f32.xlu0 %v6655
      %v6657 = vpop.xlane.xlu0 %6656
      %v6658 = vsel %vm1762, %v6576, -inf
      %v6659 = vmax.f32 %v6574, %v6658
      %6660 = vmax.xlane.f32.xlu0 %v6659
      %v6661 = vpop.xlane.xlu0 %6660
      %v6662 = vsel %vm1762, %v6580, -inf
      %v6663 = vmax.f32 %v6578, %v6662
      %6664 = vmax.xlane.f32.xlu0 %v6663
      %v6665 = vpop.xlane.xlu0 %6664
      %v6666 = vsel %vm1762, %v6586, -inf
      %v6667 = vmax.f32 %v6584, %v6666
      %6668 = vmax.xlane.f32.xlu0 %v6667
      %v6669 = vpop.xlane.xlu0 %6668
      %v6670 = vsel %vm1762, %v6590, -inf
      %v6671 = vmax.f32 %v6588, %v6670
      %6672 = vmax.xlane.f32.xlu0 %v6671
      %v6673 = vpop.xlane.xlu0 %6672
      %v6674 = vsel %vm1762, %v6596, -inf
      %v6675 = vmax.f32 %v6594, %v6674
      %6676 = vmax.xlane.f32.xlu0 %v6675
      %v6677 = vpop.xlane.xlu0 %6676
      %v6678 = vsel %vm1762, %v6600, -inf
      %v6679 = vmax.f32 %v6598, %v6678
      %6680 = vmax.xlane.f32.xlu0 %v6679
      %v6681 = vpop.xlane.xlu0 %6680
      %v6682 = vsub.f32 %v6504, %v6605
      %v6683 = vsub.f32 %v6506, %v6605
      %v6684 = vsub.f32 %v6508, %v6609
      %v6685 = vsub.f32 %v6510, %v6609
      %v6686 = vsub.f32 %v6514, %v6613
      %v6687 = vsub.f32 %v6516, %v6613
      %v6688 = vsub.f32 %v6518, %v6617
      %v6689 = vsub.f32 %v6520, %v6617
      %v6690 = vsub.f32 %v6524, %v6621
      %v6691 = vsub.f32 %v6526, %v6621
      %v6692 = vsub.f32 %v6528, %v6625
      %v6693 = vsub.f32 %v6530, %v6625
      %v6694 = vsub.f32 %v6534, %v6629
      %v6695 = vsub.f32 %v6536, %v6629
      %v6696 = vsub.f32 %v6538, %v6633
      %v6697 = vsub.f32 %v6540, %v6633
      %v6698 = vsub.f32 %v6544, %v6637
      %v6699 = vsub.f32 %v6546, %v6637
      %v6700 = vsub.f32 %v6548, %v6641
      %v6701 = vsub.f32 %v6550, %v6641
      %v6702 = vsub.f32 %v6554, %v6645
      %v6703 = vsub.f32 %v6556, %v6645
      %v6704 = vsub.f32 %v6558, %v6649
      %v6705 = vsub.f32 %v6560, %v6649
      %v6706 = vsub.f32 %v6564, %v6653
      %v6707 = vsub.f32 %v6566, %v6653
      %v6708 = vsub.f32 %v6568, %v6657
      %v6709 = vsub.f32 %v6570, %v6657
      %v6710 = vsub.f32 %v6574, %v6661
      %v6711 = vsub.f32 %v6576, %v6661
      %v6712 = vsub.f32 %v6578, %v6665
      %v6713 = vsub.f32 %v6580, %v6665
      %v6714 = vsub.f32 %v6584, %v6669
      %v6715 = vsub.f32 %v6586, %v6669
      %v6716 = vsub.f32 %v6588, %v6673
      %v6717 = vsub.f32 %v6590, %v6673
      %v6718 = vsub.f32 %v6594, %v6677
      %v6719 = vsub.f32 %v6596, %v6677
      %v6720 = vsub.f32 %v6598, %v6681
      %v6721 = vsub.f32 %v6600, %v6681
      %v6722 = vmul.f32 %v6682, 1.442695
      %v6723 = vpow.pop %v6722
      %v6724 = vmul.f32 %v6683, 1.442695
      %v6725 = vpow.pop %v6724
      %v6726 = vmul.f32 %v6684, 1.442695
      %v6727 = vpow.pop %v6726
      %v6728 = vmul.f32 %v6685, 1.442695
      %v6729 = vpow.pop %v6728
      %v6730 = vmul.f32 %v6686, 1.442695
      %v6731 = vpow.pop %v6730
      %v6732 = vmul.f32 %v6687, 1.442695
      %v6733 = vpow.pop %v6732
      %v6734 = vmul.f32 %v6688, 1.442695
      %v6735 = vpow.pop %v6734
      %v6736 = vmul.f32 %v6689, 1.442695
      %v6737 = vpow.pop %v6736
      %v6738 = vmul.f32 %v6690, 1.442695
      %v6739 = vpow.pop %v6738
      %v6740 = vmul.f32 %v6691, 1.442695
      %v6741 = vpow.pop %v6740
      %v6742 = vmul.f32 %v6692, 1.442695
      %v6743 = vpow.pop %v6742
      %v6744 = vmul.f32 %v6693, 1.442695
      %v6745 = vpow.pop %v6744
      %v6746 = vmul.f32 %v6694, 1.442695
      %v6747 = vpow.pop %v6746
      %v6748 = vmul.f32 %v6695, 1.442695
      %v6749 = vpow.pop %v6748
      %v6750 = vmul.f32 %v6696, 1.442695
      %v6751 = vpow.pop %v6750
      %v6752 = vmul.f32 %v6697, 1.442695
      %v6753 = vpow.pop %v6752
      %v6754 = vmul.f32 %v6698, 1.442695
      %v6755 = vpow.pop %v6754
      %v6756 = vmul.f32 %v6699, 1.442695
      %v6757 = vpow.pop %v6756
      %v6758 = vmul.f32 %v6700, 1.442695
      %v6759 = vpow.pop %v6758
      %v6760 = vmul.f32 %v6701, 1.442695
      %v6761 = vpow.pop %v6760
      %v6762 = vmul.f32 %v6702, 1.442695
      %v6763 = vpow.pop %v6762
      %v6764 = vmul.f32 %v6703, 1.442695
      %v6765 = vpow.pop %v6764
      %v6766 = vmul.f32 %v6704, 1.442695
      %v6767 = vpow.pop %v6766
      %v6768 = vmul.f32 %v6705, 1.442695
      %v6769 = vpow.pop %v6768
      %v6770 = vmul.f32 %v6706, 1.442695
      %v6771 = vpow.pop %v6770
      %v6772 = vmul.f32 %v6707, 1.442695
      %v6773 = vpow.pop %v6772
      %v6774 = vmul.f32 %v6708, 1.442695
      %v6775 = vpow.pop %v6774
      %v6776 = vmul.f32 %v6709, 1.442695
      %v6777 = vpow.pop %v6776
      %v6778 = vmul.f32 %v6710, 1.442695
      %v6779 = vpow.pop %v6778
      %v6780 = vmul.f32 %v6711, 1.442695
      %v6781 = vpow.pop %v6780
      %v6782 = vmul.f32 %v6712, 1.442695
      %v6783 = vpow.pop %v6782
      %v6784 = vmul.f32 %v6713, 1.442695
      %v6785 = vpow.pop %v6784
      %v6786 = vmul.f32 %v6714, 1.442695
      %v6787 = vpow.pop %v6786
      %v6788 = vmul.f32 %v6715, 1.442695
      %v6789 = vpow.pop %v6788
      %v6790 = vmul.f32 %v6716, 1.442695
      %v6791 = vpow.pop %v6790
      %v6792 = vmul.f32 %v6717, 1.442695
      %v6793 = vpow.pop %v6792
      %v6794 = vmul.f32 %v6718, 1.442695
      %v6795 = vpow.pop %v6794
      %v6796 = vmul.f32 %v6719, 1.442695
      %v6797 = vpow.pop %v6796
      %v6798 = vmul.f32 %v6720, 1.442695
      %v6799 = vpow.pop %v6798
      %v6800 = vmul.f32 %v6721, 1.442695
      %v6801 = vpow.pop %v6800
      %v6802 = vsel %vm1762, %v6725, 0.0
      %v6803 = vadd.f32 %v6723, %v6802
      %6804 = vadd.xlane.f32.xlu0 %v6803
      %v6805 = vpop.xlane.xlu0 %6804
      %v6806 = vsel %vm1762, %v6729, 0.0
      %v6807 = vadd.f32 %v6727, %v6806
      %6808 = vadd.xlane.f32.xlu0 %v6807
      %v6809 = vpop.xlane.xlu0 %6808
      %v6810 = vsel %vm1762, %v6733, 0.0
      %v6811 = vadd.f32 %v6731, %v6810
      %6812 = vadd.xlane.f32.xlu0 %v6811
      %v6813 = vpop.xlane.xlu0 %6812
      %v6814 = vsel %vm1762, %v6737, 0.0
      %v6815 = vadd.f32 %v6735, %v6814
      %6816 = vadd.xlane.f32.xlu0 %v6815
      %v6817 = vpop.xlane.xlu0 %6816
      %v6818 = vsel %vm1762, %v6741, 0.0
      %v6819 = vadd.f32 %v6739, %v6818
      %6820 = vadd.xlane.f32.xlu0 %v6819
      %v6821 = vpop.xlane.xlu0 %6820
      %v6822 = vsel %vm1762, %v6745, 0.0
      %v6823 = vadd.f32 %v6743, %v6822
      %6824 = vadd.xlane.f32.xlu0 %v6823
      %v6825 = vpop.xlane.xlu0 %6824
      %v6826 = vsel %vm1762, %v6749, 0.0
      %v6827 = vadd.f32 %v6747, %v6826
      %6828 = vadd.xlane.f32.xlu0 %v6827
      %v6829 = vpop.xlane.xlu0 %6828
      %v6830 = vsel %vm1762, %v6753, 0.0
      %v6831 = vadd.f32 %v6751, %v6830
      %6832 = vadd.xlane.f32.xlu0 %v6831
      %v6833 = vpop.xlane.xlu0 %6832
      %v6834 = vsel %vm1762, %v6757, 0.0
      %v6835 = vadd.f32 %v6755, %v6834
      %6836 = vadd.xlane.f32.xlu0 %v6835
      %v6837 = vpop.xlane.xlu0 %6836
      %v6838 = vsel %vm1762, %v6761, 0.0
      %v6839 = vadd.f32 %v6759, %v6838
      %6840 = vadd.xlane.f32.xlu0 %v6839
      %v6841 = vpop.xlane.xlu0 %6840
      %v6842 = vsel %vm1762, %v6765, 0.0
      %v6843 = vadd.f32 %v6763, %v6842
      %6844 = vadd.xlane.f32.xlu0 %v6843
      %v6845 = vpop.xlane.xlu0 %6844
      %v6846 = vsel %vm1762, %v6769, 0.0
      %v6847 = vadd.f32 %v6767, %v6846
      %6848 = vadd.xlane.f32.xlu0 %v6847
      %v6849 = vpop.xlane.xlu0 %6848
      %v6850 = vsel %vm1762, %v6773, 0.0
      %v6851 = vadd.f32 %v6771, %v6850
      %6852 = vadd.xlane.f32.xlu0 %v6851
      %v6853 = vpop.xlane.xlu0 %6852
      %v6854 = vsel %vm1762, %v6777, 0.0
      %v6855 = vadd.f32 %v6775, %v6854
      %6856 = vadd.xlane.f32.xlu0 %v6855
      %v6857 = vpop.xlane.xlu0 %6856
      %v6858 = vsel %vm1762, %v6781, 0.0
      %v6859 = vadd.f32 %v6779, %v6858
      %6860 = vadd.xlane.f32.xlu0 %v6859
      %v6861 = vpop.xlane.xlu0 %6860
      %v6862 = vsel %vm1762, %v6785, 0.0
      %v6863 = vadd.f32 %v6783, %v6862
      %6864 = vadd.xlane.f32.xlu0 %v6863
      %v6865 = vpop.xlane.xlu0 %6864
      %v6866 = vsel %vm1762, %v6789, 0.0
      %v6867 = vadd.f32 %v6787, %v6866
      %6868 = vadd.xlane.f32.xlu0 %v6867
      %v6869 = vpop.xlane.xlu0 %6868
      %v6870 = vsel %vm1762, %v6793, 0.0
      %v6871 = vadd.f32 %v6791, %v6870
      %6872 = vadd.xlane.f32.xlu0 %v6871
      %v6873 = vpop.xlane.xlu0 %6872
      %v6874 = vsel %vm1762, %v6797, 0.0
      %v6875 = vadd.f32 %v6795, %v6874
      %6876 = vadd.xlane.f32.xlu0 %v6875
      %v6877 = vpop.xlane.xlu0 %6876
      %v6878 = vsel %vm1762, %v6801, 0.0
      %v6879 = vadd.f32 %v6799, %v6878
      %6880 = vadd.xlane.f32.xlu0 %v6879
      %v6881 = vpop.xlane.xlu0 %6880
      %v6882 = vrcp.pop %v6805
      %v6883 = vrcp.pop %v6809
      %v6884 = vrcp.pop %v6813
      %v6885 = vrcp.pop %v6817
      %v6886 = vrcp.pop %v6821
      %v6887 = vrcp.pop %v6825
      %v6888 = vrcp.pop %v6829
      %v6889 = vrcp.pop %v6833
      %v6890 = vrcp.pop %v6837
      %v6891 = vrcp.pop %v6841
      %v6892 = vrcp.pop %v6845
      %v6893 = vrcp.pop %v6849
      %v6894 = vrcp.pop %v6853
      %v6895 = vrcp.pop %v6857
      %v6896 = vrcp.pop %v6861
      %v6897 = vrcp.pop %v6865
      %v6898 = vrcp.pop %v6869
      %v6899 = vrcp.pop %v6873
      %v6900 = vrcp.pop %v6877
      %v6901 = vrcp.pop %v6881
      %v6902 = vmul.f32 %v6723, %v6882
      %v6903 = vmul.f32 %v6725, %v6882
      %v6904 = vmul.f32 %v6727, %v6883
      %v6905 = vmul.f32 %v6729, %v6883
      %v6906 = vmul.f32 %v6731, %v6884
      %v6907 = vmul.f32 %v6733, %v6884
      %v6908 = vmul.f32 %v6735, %v6885
      %v6909 = vmul.f32 %v6737, %v6885
      %v6910 = vmul.f32 %v6739, %v6886
      %v6911 = vmul.f32 %v6741, %v6886
      %v6912 = vmul.f32 %v6743, %v6887
      %v6913 = vmul.f32 %v6745, %v6887
      %v6914 = vmul.f32 %v6747, %v6888
      %v6915 = vmul.f32 %v6749, %v6888
      %v6916 = vmul.f32 %v6751, %v6889
      %v6917 = vmul.f32 %v6753, %v6889
      %v6918 = vmul.f32 %v6755, %v6890
      %v6919 = vmul.f32 %v6757, %v6890
      %v6920 = vmul.f32 %v6759, %v6891
      %v6921 = vmul.f32 %v6761, %v6891
      %v6922 = vmul.f32 %v6763, %v6892
      %v6923 = vmul.f32 %v6765, %v6892
      %v6924 = vmul.f32 %v6767, %v6893
      %v6925 = vmul.f32 %v6769, %v6893
      %v6926 = vmul.f32 %v6771, %v6894
      %v6927 = vmul.f32 %v6773, %v6894
      %v6928 = vmul.f32 %v6775, %v6895
      %v6929 = vmul.f32 %v6777, %v6895
      %v6930 = vmul.f32 %v6779, %v6896
      %v6931 = vmul.f32 %v6781, %v6896
      %v6932 = vmul.f32 %v6783, %v6897
      %v6933 = vmul.f32 %v6785, %v6897
      %v6934 = vmul.f32 %v6787, %v6898
      %v6935 = vmul.f32 %v6789, %v6898
      %v6936 = vmul.f32 %v6791, %v6899
      %v6937 = vmul.f32 %v6793, %v6899
      %v6938 = vmul.f32 %v6795, %v6900
      %v6939 = vmul.f32 %v6797, %v6900
      %v6940 = vmul.f32 %v6799, %v6901
      %v6941 = vmul.f32 %v6801, %v6901
      %v6942 = vpack.c.bf16 %v6904, %v6902
      %v6943 = vpack.c.bf16 %v6905, %v6903
      %v6944 = vpack.c.bf16 %v6908, %v6906
      %v6945 = vpack.c.bf16 %v6909, %v6907
      %v6946 = vpack.c.bf16 %v6912, %v6910
      %v6947 = vpack.c.bf16 %v6913, %v6911
      %v6948 = vpack.c.bf16 %v6916, %v6914
      %v6949 = vpack.c.bf16 %v6917, %v6915
      %v6950 = vpack.c.bf16 %v6920, %v6918
      %v6951 = vpack.c.bf16 %v6921, %v6919
      %v6952 = vpack.c.bf16 %v6924, %v6922
      %v6953 = vpack.c.bf16 %v6925, %v6923
      %v6954 = vpack.c.bf16 %v6928, %v6926
      %v6955 = vpack.c.bf16 %v6929, %v6927
      %v6956 = vpack.c.bf16 %v6932, %v6930
      %v6957 = vpack.c.bf16 %v6933, %v6931
      %v6958 = vpack.c.bf16 %v6936, %v6934
      %v6959 = vpack.c.bf16 %v6937, %v6935
      %v6960 = vpack.c.bf16 %v6940, %v6938
      %v6961 = vpack.c.bf16 %v6941, %v6939
      %6962 = vrot.lane.b32.xlu0 %v4847, 64
      %v6963 = vpop.permute.xlu0 %6962
      %6964 = vrot.lane.b32.xlu0 %v4848, 64
      %v6965 = vpop.permute.xlu0 %6964
      %6966 = vrot.lane.b32.xlu0 %v4849, 64
      %v6967 = vpop.permute.xlu0 %6966
      %6968 = vrot.lane.b32.xlu0 %v4850, 64
      %v6969 = vpop.permute.xlu0 %6968
      %6970 = vrot.lane.b32.xlu0 %v4851, 64
      %v6971 = vpop.permute.xlu0 %6970
      %6972 = vrot.lane.b32.xlu0 %v4852, 64
      %v6973 = vpop.permute.xlu0 %6972
      %6974 = vrot.lane.b32.xlu0 %v4853, 64
      %v6975 = vpop.permute.xlu0 %6974
      %6976 = vrot.lane.b32.xlu0 %v4854, 64
      %v6977 = vpop.permute.xlu0 %6976
      %6978 = vrot.lane.b32.xlu0 %v4855, 64
      %v6979 = vpop.permute.xlu0 %6978
      %6980 = vrot.lane.b32.xlu0 %v4856, 64
      %v6981 = vpop.permute.xlu0 %6980
      %v6993 = vsel %vm1762, %v6943, 0
      %v6996 = vsel %vm1762, %v6945, 0
      %v6999 = vsel %vm1762, %v6947, 0
      %v7002 = vsel %vm1762, %v6949, 0
      %v7005 = vsel %vm1762, %v6951, 0
      %v7008 = vsel %vm1762, %v6953, 0
      %v7011 = vsel %vm1762, %v6955, 0
      %v7014 = vsel %vm1762, %v6957, 0
      %v7017 = vsel %vm1762, %v6959, 0
      %v7020 = vsel %vm1762, %v6961, 0
      %7022 = vmatprep.subr.bf16.mxu0 0
      %7023 = vmatpush1.bf16.msra.mxu0 %v6963
      %7024 = vmatprep.subr.bf16.mxu0 0
      %7025 = vmatpush1.bf16.msra.mxu0 %v6965
      %7026 = vmatprep.subr.bf16.mxu0 0
      %7027 = vmatpush1.bf16.msra.mxu0 %v6967
      %7028 = vmatprep.subr.bf16.mxu0 0
      %7029 = vmatpush1.bf16.msra.mxu0 %v6969
      %7030 = vmatprep.subr.bf16.mxu0 0
      %7031 = vmatpush1.bf16.msra.mxu0 %v6971
      %7032 = vmatprep.subr.bf16.mxu0 0
      %7033 = vmatpush1.bf16.msra.mxu0 %v6973
      %7034 = vmatprep.subr.bf16.mxu0 0
      %7035 = vmatpush1.bf16.msra.mxu0 %v6975
      %7036 = vmatprep.subr.bf16.mxu0 0
      %7037 = vmatpush1.bf16.msra.mxu0 %v6977
      %7038 = vmatprep.subr.bf16.mxu0 0
      %7039 = vmatpush1.bf16.msra.mxu0 %v6979
      %7040 = vmatprep.subr.bf16.mxu0 0
      %7041 = vmatpush1.bf16.msra.mxu0 %v6981
      %7042 = vmatprep.subr.bf16.mxu0 0
      %7043 = vmatpush1.bf16.msra.mxu0 0
      %7044 = vmatprep.subr.bf16.mxu0 0
      %7045 = vmatpush1.bf16.msra.mxu0 0
      %7046 = vmatprep.subr.bf16.mxu0 0
      %7047 = vmatpush1.bf16.msra.mxu0 0
      %7048 = vmatprep.subr.bf16.mxu0 0
      %7049 = vmatpush1.bf16.msra.mxu0 0
      %7050 = vmatprep.subr.bf16.mxu0 0
      %7051 = vmatpush1.bf16.msra.mxu0 0
      %7052 = vmatprep.subr.bf16.mxu0 0
      %7053 = vmatpush1.bf16.msra.mxu0 0
      %7054 = vmatprep.mubr.bf16.mxu0 %v6993
      %7055 = vmatmul.mubr.bf16.gmra.mrb[0].mxu0 %v6942
      %v7056 = vpop.f32.mrb[0].mxu0
      %v7057 = vadd.f32 0.0, %v7056
      %v7058 = vpop.f32.mrb[0].mxu0
      %v7059 = vpop.f32.mrb[0].mxu0
      %v7060 = vadd.f32 0.0, %v7059
      %v7061 = vpop.f32.mrb[0].mxu0
      %7062 = vmatprep.mubr.bf16.mxu0 %v6996
      %7063 = vmatmul.mubr.bf16.gmra.mrb[0].mxu0 %v6944
      %v7064 = vpop.f32.mrb[0].mxu0
      %v7065 = vadd.f32 0.0, %v7064
      %v7066 = vpop.f32.mrb[0].mxu0
      %v7067 = vpop.f32.mrb[0].mxu0
      %v7068 = vadd.f32 0.0, %v7067
      %v7069 = vpop.f32.mrb[0].mxu0
      %7070 = vmatprep.mubr.bf16.mxu0 %v6999
      %7071 = vmatmul.mubr.bf16.gmra.mrb[0].mxu0 %v6946
      %v7072 = vpop.f32.mrb[0].mxu0
      %v7073 = vadd.f32 0.0, %v7072
      %v7074 = vpop.f32.mrb[0].mxu0
      %v7075 = vpop.f32.mrb[0].mxu0
      %v7076 = vadd.f32 0.0, %v7075
      %v7077 = vpop.f32.mrb[0].mxu0
      %7078 = vmatprep.mubr.bf16.mxu0 %v7002
      %7079 = vmatmul.mubr.bf16.gmra.mrb[0].mxu0 %v6948
      %v7080 = vpop.f32.mrb[0].mxu0
      %v7081 = vadd.f32 0.0, %v7080
      %v7082 = vpop.f32.mrb[0].mxu0
      %v7083 = vpop.f32.mrb[0].mxu0
      %v7084 = vadd.f32 0.0, %v7083
      %v7085 = vpop.f32.mrb[0].mxu0
      %7086 = vmatprep.mubr.bf16.mxu0 %v7005
      %7087 = vmatmul.mubr.bf16.gmra.mrb[0].mxu0 %v6950
      %v7088 = vpop.f32.mrb[0].mxu0
      %v7089 = vadd.f32 0.0, %v7088
      %v7090 = vpop.f32.mrb[0].mxu0
      %v7091 = vpop.f32.mrb[0].mxu0
      %v7092 = vadd.f32 0.0, %v7091
      %v7093 = vpop.f32.mrb[0].mxu0
      %7094 = vmatprep.mubr.bf16.mxu0 %v7008
      %7095 = vmatmul.mubr.bf16.gmra.mrb[0].mxu0 %v6952
      %v7096 = vpop.f32.mrb[0].mxu0
      %v7097 = vadd.f32 0.0, %v7096
      %v7098 = vpop.f32.mrb[0].mxu0
      %v7099 = vpop.f32.mrb[0].mxu0
      %v7100 = vadd.f32 0.0, %v7099
      %v7101 = vpop.f32.mrb[0].mxu0
      %7102 = vmatprep.mubr.bf16.mxu0 %v7011
      %7103 = vmatmul.mubr.bf16.gmra.mrb[0].mxu0 %v6954
      %v7104 = vpop.f32.mrb[0].mxu0
      %v7105 = vadd.f32 0.0, %v7104
      %v7106 = vpop.f32.mrb[0].mxu0
      %v7107 = vpop.f32.mrb[0].mxu0
      %v7108 = vadd.f32 0.0, %v7107
      %v7109 = vpop.f32.mrb[0].mxu0
      %7110 = vmatprep.mubr.bf16.mxu0 %v7014
      %7111 = vmatmul.mubr.bf16.gmra.mrb[0].mxu0 %v6956
      %v7112 = vpop.f32.mrb[0].mxu0
      %v7113 = vadd.f32 0.0, %v7112
      %v7114 = vpop.f32.mrb[0].mxu0
      %v7115 = vpop.f32.mrb[0].mxu0
      %v7116 = vadd.f32 0.0, %v7115
      %v7117 = vpop.f32.mrb[0].mxu0
      %7118 = vmatprep.mubr.bf16.mxu0 %v7017
      %7119 = vmatmul.mubr.bf16.gmra.mrb[0].mxu0 %v6958
      %v7120 = vpop.f32.mrb[0].mxu0
      %v7121 = vadd.f32 0.0, %v7120
      %v7122 = vpop.f32.mrb[0].mxu0
      %v7123 = vpop.f32.mrb[0].mxu0
      %v7124 = vadd.f32 0.0, %v7123
      %v7125 = vpop.f32.mrb[0].mxu0
      %7126 = vmatprep.mubr.bf16.mxu0 %v7020
      %7127 = vmatmul.mubr.bf16.gmra.mrb[0].mxu0 %v6960
      %v7128 = vpop.f32.mrb[0].mxu0
      %v7129 = vadd.f32 0.0, %v7128
      %v7130 = vpop.f32.mrb[0].mxu0
      %v7131 = vpop.f32.mrb[0].mxu0
      %v7132 = vadd.f32 0.0, %v7131
      %v7133 = vpop.f32.mrb[0].mxu0
      %7134 = vdwg.mxu0
      %v7135 = vpack.c.bf16 %v7060, %v7057
      %v7136 = vpack.c.bf16 %v7068, %v7065
      %v7137 = vpack.c.bf16 %v7076, %v7073
      %v7138 = vpack.c.bf16 %v7084, %v7081
      %v7139 = vpack.c.bf16 %v7092, %v7089
      %v7140 = vpack.c.bf16 %v7100, %v7097
      %v7141 = vpack.c.bf16 %v7108, %v7105
      %v7142 = vpack.c.bf16 %v7116, %v7113
      %v7143 = vpack.c.bf16 %v7124, %v7121
      %v7144 = vpack.c.bf16 %v7132, %v7129
      %7145 = vrot.lane.b32.xlu0 %v4827, 32
      %v7146 = vpop.permute.xlu0 %7145
      %7147 = vrot.lane.b32.xlu0 %v4828, 32
      %v7148 = vpop.permute.xlu0 %7147
      %7149 = vrot.lane.b32.xlu0 %v4829, 32
      %v7150 = vpop.permute.xlu0 %7149
      %7151 = vrot.lane.b32.xlu0 %v4830, 32
      %v7152 = vpop.permute.xlu0 %7151
      %7153 = vrot.lane.b32.xlu0 %v4831, 32
      %v7154 = vpop.permute.xlu0 %7153
      %7155 = vrot.lane.b32.xlu0 %v4832, 32
      %v7156 = vpop.permute.xlu0 %7155
      %7157 = vrot.lane.b32.xlu0 %v4833, 32
      %v7158 = vpop.permute.xlu0 %7157
      %7159 = vrot.lane.b32.xlu0 %v4834, 32
      %v7160 = vpop.permute.xlu0 %7159
      %7161 = vrot.lane.b32.xlu0 %v4835, 32
      %v7162 = vpop.permute.xlu0 %7161
      %7163 = vrot.lane.b32.xlu0 %v4836, 32
      %v7164 = vpop.permute.xlu0 %7163
      %7165 = vrot.lane.b32.xlu0 %v4837, 32
      %v7166 = vpop.permute.xlu0 %7165
      %7167 = vrot.lane.b32.xlu0 %v4838, 32
      %v7168 = vpop.permute.xlu0 %7167
      %7169 = vrot.lane.b32.xlu0 %v4839, 32
      %v7170 = vpop.permute.xlu0 %7169
      %7171 = vrot.lane.b32.xlu0 %v4840, 32
      %v7172 = vpop.permute.xlu0 %7171
      %7173 = vrot.lane.b32.xlu0 %v4841, 32
      %v7174 = vpop.permute.xlu0 %7173
      %7175 = vrot.lane.b32.xlu0 %v4842, 32
      %v7176 = vpop.permute.xlu0 %7175
      %7177 = vrot.lane.b32.xlu0 %v4843, 32
      %v7178 = vpop.permute.xlu0 %7177
      %7179 = vrot.lane.b32.xlu0 %v4844, 32
      %v7180 = vpop.permute.xlu0 %7179
      %7181 = vrot.lane.b32.xlu0 %v4845, 32
      %v7182 = vpop.permute.xlu0 %7181
      %7183 = vrot.lane.b32.xlu0 %v4846, 32
      %v7184 = vpop.permute.xlu0 %7183
      %v7186 = vsel %vm1762, %v7146, 0
      %v7189 = vsel %vm1762, %v7148, 0
      %v7192 = vsel %vm1762, %v7150, 0
      %v7195 = vsel %vm1762, %v7152, 0
      %v7198 = vsel %vm1762, %v7154, 0
      %v7201 = vsel %vm1762, %v7156, 0
      %v7204 = vsel %vm1762, %v7158, 0
      %v7207 = vsel %vm1762, %v7160, 0
      %v7210 = vsel %vm1762, %v7162, 0
      %v7213 = vsel %vm1762, %v7164, 0
      %v7216 = vsel %vm1762, %v7166, 0
      %v7219 = vsel %vm1762, %v7168, 0
      %v7222 = vsel %vm1762, %v7170, 0
      %v7225 = vsel %vm1762, %v7172, 0
      %v7228 = vsel %vm1762, %v7174, 0
      %v7231 = vsel %vm1762, %v7176, 0
      %v7234 = vsel %vm1762, %v7178, 0
      %v7237 = vsel %vm1762, %v7180, 0
      %v7240 = vsel %vm1762, %v7182, 0
      %v7243 = vsel %vm1762, %v7184, 0
      %7245 = vmatprep.subr.bf16.mxu0 0
      %7246 = vmatpush1.bf16.xpose.msra.mxu0 %v7216
      %7247 = vmatprep.subr.bf16.mxu0 0
      %7248 = vmatpush1.bf16.xpose.msra.mxu0 %v7219
      %7249 = vmatprep.subr.bf16.mxu0 0
      %7250 = vmatpush1.bf16.xpose.msra.mxu0 %v7222
      %7251 = vmatprep.subr.bf16.mxu0 0
      %7252 = vmatpush1.bf16.xpose.msra.mxu0 %v7225
      %7253 = vmatprep.subr.bf16.mxu0 0
      %7254 = vmatpush1.bf16.xpose.msra.mxu0 %v7228
      %7255 = vmatprep.subr.bf16.mxu0 0
      %7256 = vmatpush1.bf16.xpose.msra.mxu0 %v7231
      %7257 = vmatprep.subr.bf16.mxu0 0
      %7258 = vmatpush1.bf16.xpose.msra.mxu0 %v7234
      %7259 = vmatprep.subr.bf16.mxu0 0
      %7260 = vmatpush1.bf16.xpose.msra.mxu0 %v7237
      %7261 = vmatprep.subr.bf16.mxu0 0
      %7262 = vmatpush1.bf16.xpose.msra.mxu0 %v7240
      %7263 = vmatprep.subr.bf16.mxu0 0
      %7264 = vmatpush1.bf16.xpose.msra.mxu0 %v7243
      %7265 = vmatprep.subr.bf16.mxu0 0
      %7266 = vmatpush1.bf16.xpose.msra.mxu0 0
      %7267 = vmatprep.subr.bf16.mxu0 0
      %7268 = vmatpush1.bf16.xpose.msra.mxu0 0
      %7269 = vmatprep.subr.bf16.mxu0 0
      %7270 = vmatpush1.bf16.xpose.msra.mxu0 0
      %7271 = vmatprep.subr.bf16.mxu0 0
      %7272 = vmatpush1.bf16.xpose.msra.mxu0 0
      %7273 = vmatprep.subr.bf16.mxu0 0
      %7274 = vmatpush1.bf16.xpose.msra.mxu0 0
      %7275 = vmatprep.subr.bf16.mxu0 0
      %7276 = vmatpush1.bf16.xpose.msra.mxu0 0
      %7277 = vmatprep.mubr.bf16.mxu0 0
      %7278 = vmatmul.mubr.bf16.gmra.mrb[0].mxu0 %v7186
      %v7279 = vpop.f32.mrb[0].mxu0
      %v7280 = vadd.f32 %v1692, %v7279
      %v7281 = vpop.f32.mrb[0].mxu0
      %v7282 = vadd.f32 %v1693, %v7281
      %v7283 = vpop.f32.mrb[0].mxu0
      %v7284 = vadd.f32 %v1694, %v7283
      %v7285 = vpop.f32.mrb[0].mxu0
      %v7286 = vadd.f32 %v1695, %v7285
      %7287 = vmatprep.mubr.bf16.mxu0 0
      %7288 = vmatmul.mubr.bf16.gmra.mrb[0].mxu0 %v7189
      %v7289 = vpop.f32.mrb[0].mxu0
      %v7290 = vadd.f32 %v1696, %v7289
      %v7291 = vpop.f32.mrb[0].mxu0
      %v7292 = vadd.f32 %v1697, %v7291
      %v7293 = vpop.f32.mrb[0].mxu0
      %v7294 = vadd.f32 %v1698, %v7293
      %v7295 = vpop.f32.mrb[0].mxu0
      %v7296 = vadd.f32 %v1699, %v7295
      %7297 = vmatprep.mubr.bf16.mxu0 0
      %7298 = vmatmul.mubr.bf16.gmra.mrb[0].mxu0 %v7192
      %v7299 = vpop.f32.mrb[0].mxu0
      %v7300 = vadd.f32 %v1700, %v7299
      %v7301 = vpop.f32.mrb[0].mxu0
      %v7302 = vadd.f32 %v1701, %v7301
      %v7303 = vpop.f32.mrb[0].mxu0
      %v7304 = vadd.f32 %v1702, %v7303
      %v7305 = vpop.f32.mrb[0].mxu0
      %v7306 = vadd.f32 %v1703, %v7305
      %7307 = vmatprep.mubr.bf16.mxu0 0
      %7308 = vmatmul.mubr.bf16.gmra.mrb[0].mxu0 %v7195
      %v7309 = vpop.f32.mrb[0].mxu0
      %v7310 = vadd.f32 %v1704, %v7309
      %v7311 = vpop.f32.mrb[0].mxu0
      %v7312 = vadd.f32 %v1705, %v7311
      %v7313 = vpop.f32.mrb[0].mxu0
      %v7314 = vadd.f32 %v1706, %v7313
      %v7315 = vpop.f32.mrb[0].mxu0
      %v7316 = vadd.f32 %v1707, %v7315
      %7317 = vmatprep.mubr.bf16.mxu0 0
      %7318 = vmatmul.mubr.bf16.gmra.mrb[0].mxu0 %v7198
      %v7319 = vpop.f32.mrb[0].mxu0
      %v7320 = vadd.f32 %v1708, %v7319
      %v7321 = vpop.f32.mrb[0].mxu0
      %v7322 = vadd.f32 %v1709, %v7321
      %v7323 = vpop.f32.mrb[0].mxu0
      %v7324 = vadd.f32 %v1710, %v7323
      %v7325 = vpop.f32.mrb[0].mxu0
      %v7326 = vadd.f32 %v1711, %v7325
      %7327 = vmatprep.mubr.bf16.mxu0 0
      %7328 = vmatmul.mubr.bf16.gmra.mrb[0].mxu0 %v7201
      %v7329 = vpop.f32.mrb[0].mxu0
      %v7330 = vadd.f32 %v1712, %v7329
      %v7331 = vpop.f32.mrb[0].mxu0
      %v7332 = vadd.f32 %v1713, %v7331
      %v7333 = vpop.f32.mrb[0].mxu0
      %v7334 = vadd.f32 %v1714, %v7333
      %v7335 = vpop.f32.mrb[0].mxu0
      %v7336 = vadd.f32 %v1715, %v7335
      %7337 = vmatprep.mubr.bf16.mxu0 0
      %7338 = vmatmul.mubr.bf16.gmra.mrb[0].mxu0 %v7204
      %v7339 = vpop.f32.mrb[0].mxu0
      %v7340 = vadd.f32 %v1716, %v7339
      %v7341 = vpop.f32.mrb[0].mxu0
      %v7342 = vadd.f32 %v1717, %v7341
      %v7343 = vpop.f32.mrb[0].mxu0
      %v7344 = vadd.f32 %v1718, %v7343
      %v7345 = vpop.f32.mrb[0].mxu0
      %v7346 = vadd.f32 %v1719, %v7345
      %7347 = vmatprep.mubr.bf16.mxu0 0
      %7348 = vmatmul.mubr.bf16.gmra.mrb[0].mxu0 %v7207
      %v7349 = vpop.f32.mrb[0].mxu0
      %v7350 = vadd.f32 %v1720, %v7349
      %v7351 = vpop.f32.mrb[0].mxu0
      %v7352 = vadd.f32 %v1721, %v7351
      %v7353 = vpop.f32.mrb[0].mxu0
      %v7354 = vadd.f32 %v1722, %v7353
      %v7355 = vpop.f32.mrb[0].mxu0
      %v7356 = vadd.f32 %v1723, %v7355
      %7357 = vmatprep.mubr.bf16.mxu0 0
      %7358 = vmatmul.mubr.bf16.gmra.mrb[0].mxu0 %v7210
      %v7359 = vpop.f32.mrb[0].mxu0
      %v7360 = vadd.f32 %v1724, %v7359
      %v7361 = vpop.f32.mrb[0].mxu0
      %v7362 = vadd.f32 %v1725, %v7361
      %v7363 = vpop.f32.mrb[0].mxu0
      %v7364 = vadd.f32 %v1726, %v7363
      %v7365 = vpop.f32.mrb[0].mxu0
      %v7366 = vadd.f32 %v1727, %v7365
      %7367 = vmatprep.mubr.bf16.mxu0 0
      %7368 = vmatmul.mubr.bf16.gmra.mrb[0].mxu0 %v7213
      %v7369 = vpop.f32.mrb[0].mxu0
      %v7370 = vadd.f32 %v1728, %v7369
      %v7371 = vpop.f32.mrb[0].mxu0
      %v7372 = vadd.f32 %v1729, %v7371
      %v7373 = vpop.f32.mrb[0].mxu0
      %v7374 = vadd.f32 %v1730, %v7373
      %v7375 = vpop.f32.mrb[0].mxu0
      %v7376 = vadd.f32 %v1731, %v7375
      %7377 = vdwg.mxu0
      %v7378 = vsel %vm1762, %v7282, -inf
      %v7379 = vmax.f32 %v7280, %v7378
      %7380 = vmax.xlane.f32.xlu0 %v7379
      %v7381 = vpop.xlane.xlu0 %7380
      %v7382 = vsel %vm1762, %v7286, -inf
      %v7383 = vmax.f32 %v7284, %v7382
      %7384 = vmax.xlane.f32.xlu0 %v7383
      %v7385 = vpop.xlane.xlu0 %7384
      %v7386 = vsel %vm1762, %v7292, -inf
      %v7387 = vmax.f32 %v7290, %v7386
      %7388 = vmax.xlane.f32.xlu0 %v7387
      %v7389 = vpop.xlane.xlu0 %7388
      %v7390 = vsel %vm1762, %v7296, -inf
      %v7391 = vmax.f32 %v7294, %v7390
      %7392 = vmax.xlane.f32.xlu0 %v7391
      %v7393 = vpop.xlane.xlu0 %7392
      %v7394 = vsel %vm1762, %v7302, -inf
      %v7395 = vmax.f32 %v7300, %v7394
      %7396 = vmax.xlane.f32.xlu0 %v7395
      %v7397 = vpop.xlane.xlu0 %7396
      %v7398 = vsel %vm1762, %v7306, -inf
      %v7399 = vmax.f32 %v7304, %v7398
      %7400 = vmax.xlane.f32.xlu0 %v7399
      %v7401 = vpop.xlane.xlu0 %7400
      %v7402 = vsel %vm1762, %v7312, -inf
      %v7403 = vmax.f32 %v7310, %v7402
      %7404 = vmax.xlane.f32.xlu0 %v7403
      %v7405 = vpop.xlane.xlu0 %7404
      %v7406 = vsel %vm1762, %v7316, -inf
      %v7407 = vmax.f32 %v7314, %v7406
      %7408 = vmax.xlane.f32.xlu0 %v7407
      %v7409 = vpop.xlane.xlu0 %7408
      %v7410 = vsel %vm1762, %v7322, -inf
      %v7411 = vmax.f32 %v7320, %v7410
      %7412 = vmax.xlane.f32.xlu0 %v7411
      %v7413 = vpop.xlane.xlu0 %7412
      %v7414 = vsel %vm1762, %v7326, -inf
      %v7415 = vmax.f32 %v7324, %v7414
      %7416 = vmax.xlane.f32.xlu0 %v7415
      %v7417 = vpop.xlane.xlu0 %7416
      %v7418 = vsel %vm1762, %v7332, -inf
      %v7419 = vmax.f32 %v7330, %v7418
      %7420 = vmax.xlane.f32.xlu0 %v7419
      %v7421 = vpop.xlane.xlu0 %7420
      %v7422 = vsel %vm1762, %v7336, -inf
      %v7423 = vmax.f32 %v7334, %v7422
      %7424 = vmax.xlane.f32.xlu0 %v7423
      %v7425 = vpop.xlane.xlu0 %7424
      %v7426 = vsel %vm1762, %v7342, -inf
      %v7427 = vmax.f32 %v7340, %v7426
      %7428 = vmax.xlane.f32.xlu0 %v7427
      %v7429 = vpop.xlane.xlu0 %7428
      %v7430 = vsel %vm1762, %v7346, -inf
      %v7431 = vmax.f32 %v7344, %v7430
      %7432 = vmax.xlane.f32.xlu0 %v7431
      %v7433 = vpop.xlane.xlu0 %7432
      %v7434 = vsel %vm1762, %v7352, -inf
      %v7435 = vmax.f32 %v7350, %v7434
      %7436 = vmax.xlane.f32.xlu0 %v7435
      %v7437 = vpop.xlane.xlu0 %7436
      %v7438 = vsel %vm1762, %v7356, -inf
      %v7439 = vmax.f32 %v7354, %v7438
      %7440 = vmax.xlane.f32.xlu0 %v7439
      %v7441 = vpop.xlane.xlu0 %7440
      %v7442 = vsel %vm1762, %v7362, -inf
      %v7443 = vmax.f32 %v7360, %v7442
      %7444 = vmax.xlane.f32.xlu0 %v7443
      %v7445 = vpop.xlane.xlu0 %7444
      %v7446 = vsel %vm1762, %v7366, -inf
      %v7447 = vmax.f32 %v7364, %v7446
      %7448 = vmax.xlane.f32.xlu0 %v7447
      %v7449 = vpop.xlane.xlu0 %7448
      %v7450 = vsel %vm1762, %v7372, -inf
      %v7451 = vmax.f32 %v7370, %v7450
      %7452 = vmax.xlane.f32.xlu0 %v7451
      %v7453 = vpop.xlane.xlu0 %7452
      %v7454 = vsel %vm1762, %v7376, -inf
      %v7455 = vmax.f32 %v7374, %v7454
      %7456 = vmax.xlane.f32.xlu0 %v7455
      %v7457 = vpop.xlane.xlu0 %7456
      %v7458 = vsub.f32 %v7280, %v7381
      %v7459 = vsub.f32 %v7282, %v7381
      %v7460 = vsub.f32 %v7284, %v7385
      %v7461 = vsub.f32 %v7286, %v7385
      %v7462 = vsub.f32 %v7290, %v7389
      %v7463 = vsub.f32 %v7292, %v7389
      %v7464 = vsub.f32 %v7294, %v7393
      %v7465 = vsub.f32 %v7296, %v7393
      %v7466 = vsub.f32 %v7300, %v7397
      %v7467 = vsub.f32 %v7302, %v7397
      %v7468 = vsub.f32 %v7304, %v7401
      %v7469 = vsub.f32 %v7306, %v7401
      %v7470 = vsub.f32 %v7310, %v7405
      %v7471 = vsub.f32 %v7312, %v7405
      %v7472 = vsub.f32 %v7314, %v7409
      %v7473 = vsub.f32 %v7316, %v7409
      %v7474 = vsub.f32 %v7320, %v7413
      %v7475 = vsub.f32 %v7322, %v7413
      %v7476 = vsub.f32 %v7324, %v7417
      %v7477 = vsub.f32 %v7326, %v7417
      %v7478 = vsub.f32 %v7330, %v7421
      %v7479 = vsub.f32 %v7332, %v7421
      %v7480 = vsub.f32 %v7334, %v7425
      %v7481 = vsub.f32 %v7336, %v7425
      %v7482 = vsub.f32 %v7340, %v7429
      %v7483 = vsub.f32 %v7342, %v7429
      %v7484 = vsub.f32 %v7344, %v7433
      %v7485 = vsub.f32 %v7346, %v7433
      %v7486 = vsub.f32 %v7350, %v7437
      %v7487 = vsub.f32 %v7352, %v7437
      %v7488 = vsub.f32 %v7354, %v7441
      %v7489 = vsub.f32 %v7356, %v7441
      %v7490 = vsub.f32 %v7360, %v7445
      %v7491 = vsub.f32 %v7362, %v7445
      %v7492 = vsub.f32 %v7364, %v7449
      %v7493 = vsub.f32 %v7366, %v7449
      %v7494 = vsub.f32 %v7370, %v7453
      %v7495 = vsub.f32 %v7372, %v7453
      %v7496 = vsub.f32 %v7374, %v7457
      %v7497 = vsub.f32 %v7376, %v7457
      %v7498 = vmul.f32 %v7458, 1.442695
      %v7499 = vpow.pop %v7498
      %v7500 = vmul.f32 %v7459, 1.442695
      %v7501 = vpow.pop %v7500
      %v7502 = vmul.f32 %v7460, 1.442695
      %v7503 = vpow.pop %v7502
      %v7504 = vmul.f32 %v7461, 1.442695
      %v7505 = vpow.pop %v7504
      %v7506 = vmul.f32 %v7462, 1.442695
      %v7507 = vpow.pop %v7506
      %v7508 = vmul.f32 %v7463, 1.442695
      %v7509 = vpow.pop %v7508
      %v7510 = vmul.f32 %v7464, 1.442695
      %v7511 = vpow.pop %v7510
      %v7512 = vmul.f32 %v7465, 1.442695
      %v7513 = vpow.pop %v7512
      %v7514 = vmul.f32 %v7466, 1.442695
      %v7515 = vpow.pop %v7514
      %v7516 = vmul.f32 %v7467, 1.442695
      %v7517 = vpow.pop %v7516
      %v7518 = vmul.f32 %v7468, 1.442695
      %v7519 = vpow.pop %v7518
      %v7520 = vmul.f32 %v7469, 1.442695
      %v7521 = vpow.pop %v7520
      %v7522 = vmul.f32 %v7470, 1.442695
      %v7523 = vpow.pop %v7522
      %v7524 = vmul.f32 %v7471, 1.442695
      %v7525 = vpow.pop %v7524
      %v7526 = vmul.f32 %v7472, 1.442695
      %v7527 = vpow.pop %v7526
      %v7528 = vmul.f32 %v7473, 1.442695
      %v7529 = vpow.pop %v7528
      %v7530 = vmul.f32 %v7474, 1.442695
      %v7531 = vpow.pop %v7530
      %v7532 = vmul.f32 %v7475, 1.442695
      %v7533 = vpow.pop %v7532
      %v7534 = vmul.f32 %v7476, 1.442695
      %v7535 = vpow.pop %v7534
      %v7536 = vmul.f32 %v7477, 1.442695
      %v7537 = vpow.pop %v7536
      %v7538 = vmul.f32 %v7478, 1.442695
      %v7539 = vpow.pop %v7538
      %v7540 = vmul.f32 %v7479, 1.442695
      %v7541 = vpow.pop %v7540
      %v7542 = vmul.f32 %v7480, 1.442695
      %v7543 = vpow.pop %v7542
      %v7544 = vmul.f32 %v7481, 1.442695
      %v7545 = vpow.pop %v7544
      %v7546 = vmul.f32 %v7482, 1.442695
      %v7547 = vpow.pop %v7546
      %v7548 = vmul.f32 %v7483, 1.442695
      %v7549 = vpow.pop %v7548
      %v7550 = vmul.f32 %v7484, 1.442695
      %v7551 = vpow.pop %v7550
      %v7552 = vmul.f32 %v7485, 1.442695
      %v7553 = vpow.pop %v7552
      %v7554 = vmul.f32 %v7486, 1.442695
      %v7555 = vpow.pop %v7554
      %v7556 = vmul.f32 %v7487, 1.442695
      %v7557 = vpow.pop %v7556
      %v7558 = vmul.f32 %v7488, 1.442695
      %v7559 = vpow.pop %v7558
      %v7560 = vmul.f32 %v7489, 1.442695
      %v7561 = vpow.pop %v7560
      %v7562 = vmul.f32 %v7490, 1.442695
      %v7563 = vpow.pop %v7562
      %v7564 = vmul.f32 %v7491, 1.442695
      %v7565 = vpow.pop %v7564
      %v7566 = vmul.f32 %v7492, 1.442695
      %v7567 = vpow.pop %v7566
      %v7568 = vmul.f32 %v7493, 1.442695
      %v7569 = vpow.pop %v7568
      %v7570 = vmul.f32 %v7494, 1.442695
      %v7571 = vpow.pop %v7570
      %v7572 = vmul.f32 %v7495, 1.442695
      %v7573 = vpow.pop %v7572
      %v7574 = vmul.f32 %v7496, 1.442695
      %v7575 = vpow.pop %v7574
      %v7576 = vmul.f32 %v7497, 1.442695
      %v7577 = vpow.pop %v7576
      %v7578 = vsel %vm1762, %v7501, 0.0
      %v7579 = vadd.f32 %v7499, %v7578
      %7580 = vadd.xlane.f32.xlu0 %v7579
      %v7581 = vpop.xlane.xlu0 %7580
      %v7582 = vsel %vm1762, %v7505, 0.0
      %v7583 = vadd.f32 %v7503, %v7582
      %7584 = vadd.xlane.f32.xlu0 %v7583
      %v7585 = vpop.xlane.xlu0 %7584
      %v7586 = vsel %vm1762, %v7509, 0.0
      %v7587 = vadd.f32 %v7507, %v7586
      %7588 = vadd.xlane.f32.xlu0 %v7587
      %v7589 = vpop.xlane.xlu0 %7588
      %v7590 = vsel %vm1762, %v7513, 0.0
      %v7591 = vadd.f32 %v7511, %v7590
      %7592 = vadd.xlane.f32.xlu0 %v7591
      %v7593 = vpop.xlane.xlu0 %7592
      %v7594 = vsel %vm1762, %v7517, 0.0
      %v7595 = vadd.f32 %v7515, %v7594
      %7596 = vadd.xlane.f32.xlu0 %v7595
      %v7597 = vpop.xlane.xlu0 %7596
      %v7598 = vsel %vm1762, %v7521, 0.0
      %v7599 = vadd.f32 %v7519, %v7598
      %7600 = vadd.xlane.f32.xlu0 %v7599
      %v7601 = vpop.xlane.xlu0 %7600
      %v7602 = vsel %vm1762, %v7525, 0.0
      %v7603 = vadd.f32 %v7523, %v7602
      %7604 = vadd.xlane.f32.xlu0 %v7603
      %v7605 = vpop.xlane.xlu0 %7604
      %v7606 = vsel %vm1762, %v7529, 0.0
      %v7607 = vadd.f32 %v7527, %v7606
      %7608 = vadd.xlane.f32.xlu0 %v7607
      %v7609 = vpop.xlane.xlu0 %7608
      %v7610 = vsel %vm1762, %v7533, 0.0
      %v7611 = vadd.f32 %v7531, %v7610
      %7612 = vadd.xlane.f32.xlu0 %v7611
      %v7613 = vpop.xlane.xlu0 %7612
      %v7614 = vsel %vm1762, %v7537, 0.0
      %v7615 = vadd.f32 %v7535, %v7614
      %7616 = vadd.xlane.f32.xlu0 %v7615
      %v7617 = vpop.xlane.xlu0 %7616
      %v7618 = vsel %vm1762, %v7541, 0.0
      %v7619 = vadd.f32 %v7539, %v7618
      %7620 = vadd.xlane.f32.xlu0 %v7619
      %v7621 = vpop.xlane.xlu0 %7620
      %v7622 = vsel %vm1762, %v7545, 0.0
      %v7623 = vadd.f32 %v7543, %v7622
      %7624 = vadd.xlane.f32.xlu0 %v7623
      %v7625 = vpop.xlane.xlu0 %7624
      %v7626 = vsel %vm1762, %v7549, 0.0
      %v7627 = vadd.f32 %v7547, %v7626
      %7628 = vadd.xlane.f32.xlu0 %v7627
      %v7629 = vpop.xlane.xlu0 %7628
      %v7630 = vsel %vm1762, %v7553, 0.0
      %v7631 = vadd.f32 %v7551, %v7630
      %7632 = vadd.xlane.f32.xlu0 %v7631
      %v7633 = vpop.xlane.xlu0 %7632
      %v7634 = vsel %vm1762, %v7557, 0.0
      %v7635 = vadd.f32 %v7555, %v7634
      %7636 = vadd.xlane.f32.xlu0 %v7635
      %v7637 = vpop.xlane.xlu0 %7636
      %v7638 = vsel %vm1762, %v7561, 0.0
      %v7639 = vadd.f32 %v7559, %v7638
      %7640 = vadd.xlane.f32.xlu0 %v7639
      %v7641 = vpop.xlane.xlu0 %7640
      %v7642 = vsel %vm1762, %v7565, 0.0
      %v7643 = vadd.f32 %v7563, %v7642
      %7644 = vadd.xlane.f32.xlu0 %v7643
      %v7645 = vpop.xlane.xlu0 %7644
      %v7646 = vsel %vm1762, %v7569, 0.0
      %v7647 = vadd.f32 %v7567, %v7646
      %7648 = vadd.xlane.f32.xlu0 %v7647
      %v7649 = vpop.xlane.xlu0 %7648
      %v7650 = vsel %vm1762, %v7573, 0.0
      %v7651 = vadd.f32 %v7571, %v7650
      %7652 = vadd.xlane.f32.xlu0 %v7651
      %v7653 = vpop.xlane.xlu0 %7652
      %v7654 = vsel %vm1762, %v7577, 0.0
      %v7655 = vadd.f32 %v7575, %v7654
      %7656 = vadd.xlane.f32.xlu0 %v7655
      %v7657 = vpop.xlane.xlu0 %7656
      %v7658 = vrcp.pop %v7581
      %v7659 = vrcp.pop %v7585
      %v7660 = vrcp.pop %v7589
      %v7661 = vrcp.pop %v7593
      %v7662 = vrcp.pop %v7597
      %v7663 = vrcp.pop %v7601
      %v7664 = vrcp.pop %v7605
      %v7665 = vrcp.pop %v7609
      %v7666 = vrcp.pop %v7613
      %v7667 = vrcp.pop %v7617
      %v7668 = vrcp.pop %v7621
      %v7669 = vrcp.pop %v7625
      %v7670 = vrcp.pop %v7629
      %v7671 = vrcp.pop %v7633
      %v7672 = vrcp.pop %v7637
      %v7673 = vrcp.pop %v7641
      %v7674 = vrcp.pop %v7645
      %v7675 = vrcp.pop %v7649
      %v7676 = vrcp.pop %v7653
      %v7677 = vrcp.pop %v7657
      %v7678 = vmul.f32 %v7499, %v7658
      %v7679 = vmul.f32 %v7501, %v7658
      %v7680 = vmul.f32 %v7503, %v7659
      %v7681 = vmul.f32 %v7505, %v7659
      %v7682 = vmul.f32 %v7507, %v7660
      %v7683 = vmul.f32 %v7509, %v7660
      %v7684 = vmul.f32 %v7511, %v7661
      %v7685 = vmul.f32 %v7513, %v7661
      %v7686 = vmul.f32 %v7515, %v7662
      %v7687 = vmul.f32 %v7517, %v7662
      %v7688 = vmul.f32 %v7519, %v7663
      %v7689 = vmul.f32 %v7521, %v7663
      %v7690 = vmul.f32 %v7523, %v7664
      %v7691 = vmul.f32 %v7525, %v7664
      %v7692 = vmul.f32 %v7527, %v7665
      %v7693 = vmul.f32 %v7529, %v7665
      %v7694 = vmul.f32 %v7531, %v7666
      %v7695 = vmul.f32 %v7533, %v7666
      %v7696 = vmul.f32 %v7535, %v7667
      %v7697 = vmul.f32 %v7537, %v7667
      %v7698 = vmul.f32 %v7539, %v7668
      %v7699 = vmul.f32 %v7541, %v7668
      %v7700 = vmul.f32 %v7543, %v7669
      %v7701 = vmul.f32 %v7545, %v7669
      %v7702 = vmul.f32 %v7547, %v7670
      %v7703 = vmul.f32 %v7549, %v7670
      %v7704 = vmul.f32 %v7551, %v7671
      %v7705 = vmul.f32 %v7553, %v7671
      %v7706 = vmul.f32 %v7555, %v7672
      %v7707 = vmul.f32 %v7557, %v7672
      %v7708 = vmul.f32 %v7559, %v7673
      %v7709 = vmul.f32 %v7561, %v7673
      %v7710 = vmul.f32 %v7563, %v7674
      %v7711 = vmul.f32 %v7565, %v7674
      %v7712 = vmul.f32 %v7567, %v7675
      %v7713 = vmul.f32 %v7569, %v7675
      %v7714 = vmul.f32 %v7571, %v7676
      %v7715 = vmul.f32 %v7573, %v7676
      %v7716 = vmul.f32 %v7575, %v7677
      %v7717 = vmul.f32 %v7577, %v7677
      %v7718 = vpack.c.bf16 %v7680, %v7678
      %v7719 = vpack.c.bf16 %v7681, %v7679
      %v7720 = vpack.c.bf16 %v7684, %v7682
      %v7721 = vpack.c.bf16 %v7685, %v7683
      %v7722 = vpack.c.bf16 %v7688, %v7686
      %v7723 = vpack.c.bf16 %v7689, %v7687
      %v7724 = vpack.c.bf16 %v7692, %v7690
      %v7725 = vpack.c.bf16 %v7693, %v7691
      %v7726 = vpack.c.bf16 %v7696, %v7694
      %v7727 = vpack.c.bf16 %v7697, %v7695
      %v7728 = vpack.c.bf16 %v7700, %v7698
      %v7729 = vpack.c.bf16 %v7701, %v7699
      %v7730 = vpack.c.bf16 %v7704, %v7702
      %v7731 = vpack.c.bf16 %v7705, %v7703
      %v7732 = vpack.c.bf16 %v7708, %v7706
      %v7733 = vpack.c.bf16 %v7709, %v7707
      %v7734 = vpack.c.bf16 %v7712, %v7710
      %v7735 = vpack.c.bf16 %v7713, %v7711
      %v7736 = vpack.c.bf16 %v7716, %v7714
      %v7737 = vpack.c.bf16 %v7717, %v7715
      %7738 = vrot.lane.b32.xlu0 %v4847, 32
      %v7739 = vpop.permute.xlu0 %7738
      %7740 = vrot.lane.b32.xlu0 %v4848, 32
      %v7741 = vpop.permute.xlu0 %7740
      %7742 = vrot.lane.b32.xlu0 %v4849, 32
      %v7743 = vpop.permute.xlu0 %7742
      %7744 = vrot.lane.b32.xlu0 %v4850, 32
      %v7745 = vpop.permute.xlu0 %7744
      %7746 = vrot.lane.b32.xlu0 %v4851, 32
      %v7747 = vpop.permute.xlu0 %7746
      %7748 = vrot.lane.b32.xlu0 %v4852, 32
      %v7749 = vpop.permute.xlu0 %7748
      %7750 = vrot.lane.b32.xlu0 %v4853, 32
      %v7751 = vpop.permute.xlu0 %7750
      %7752 = vrot.lane.b32.xlu0 %v4854, 32
      %v7753 = vpop.permute.xlu0 %7752
      %7754 = vrot.lane.b32.xlu0 %v4855, 32
      %v7755 = vpop.permute.xlu0 %7754
      %7756 = vrot.lane.b32.xlu0 %v4856, 32
      %v7757 = vpop.permute.xlu0 %7756
      %v7769 = vsel %vm1762, %v7719, 0
      %v7772 = vsel %vm1762, %v7721, 0
      %v7775 = vsel %vm1762, %v7723, 0
      %v7778 = vsel %vm1762, %v7725, 0
      %v7781 = vsel %vm1762, %v7727, 0
      %v7784 = vsel %vm1762, %v7729, 0
      %v7787 = vsel %vm1762, %v7731, 0
      %v7790 = vsel %vm1762, %v7733, 0
      %v7793 = vsel %vm1762, %v7735, 0
      %v7796 = vsel %vm1762, %v7737, 0
      %7798 = vmatprep.subr.bf16.mxu0 0
      %7799 = vmatpush1.bf16.msra.mxu0 %v7739
      %7800 = vmatprep.subr.bf16.mxu0 0
      %7801 = vmatpush1.bf16.msra.mxu0 %v7741
      %7802 = vmatprep.subr.bf16.mxu0 0
      %7803 = vmatpush1.bf16.msra.mxu0 %v7743
      %7804 = vmatprep.subr.bf16.mxu0 0
      %7805 = vmatpush1.bf16.msra.mxu0 %v7745
      %7806 = vmatprep.subr.bf16.mxu0 0
      %7807 = vmatpush1.bf16.msra.mxu0 %v7747
      %7808 = vmatprep.subr.bf16.mxu0 0
      %7809 = vmatpush1.bf16.msra.mxu0 %v7749
      %7810 = vmatprep.subr.bf16.mxu0 0
      %7811 = vmatpush1.bf16.msra.mxu0 %v7751
      %7812 = vmatprep.subr.bf16.mxu0 0
      %7813 = vmatpush1.bf16.msra.mxu0 %v7753
      %7814 = vmatprep.subr.bf16.mxu0 0
      %7815 = vmatpush1.bf16.msra.mxu0 %v7755
      %7816 = vmatprep.subr.bf16.mxu0 0
      %7817 = vmatpush1.bf16.msra.mxu0 %v7757
      %7818 = vmatprep.subr.bf16.mxu0 0
      %7819 = vmatpush1.bf16.msra.mxu0 0
      %7820 = vmatprep.subr.bf16.mxu0 0
      %7821 = vmatpush1.bf16.msra.mxu0 0
      %7822 = vmatprep.subr.bf16.mxu0 0
      %7823 = vmatpush1.bf16.msra.mxu0 0
      %7824 = vmatprep.subr.bf16.mxu0 0
      %7825 = vmatpush1.bf16.msra.mxu0 0
      %7826 = vmatprep.subr.bf16.mxu0 0
      %7827 = vmatpush1.bf16.msra.mxu0 0
      %7828 = vmatprep.subr.bf16.mxu0 0
      %7829 = vmatpush1.bf16.msra.mxu0 0
      %7830 = vmatprep.mubr.bf16.mxu0 %v7769
      %7831 = vmatmul.mubr.bf16.gmra.mrb[0].mxu0 %v7718
      %v7832 = vpop.f32.mrb[0].mxu0
      %v7833 = vadd.f32 0.0, %v7832
      %v7834 = vpop.f32.mrb[0].mxu0
      %v7835 = vpop.f32.mrb[0].mxu0
      %v7836 = vadd.f32 0.0, %v7835
      %v7837 = vpop.f32.mrb[0].mxu0
      %7838 = vmatprep.mubr.bf16.mxu0 %v7772
      %7839 = vmatmul.mubr.bf16.gmra.mrb[0].mxu0 %v7720
      %v7840 = vpop.f32.mrb[0].mxu0
      %v7841 = vadd.f32 0.0, %v7840
      %v7842 = vpop.f32.mrb[0].mxu0
      %v7843 = vpop.f32.mrb[0].mxu0
      %v7844 = vadd.f32 0.0, %v7843
      %v7845 = vpop.f32.mrb[0].mxu0
      %7846 = vmatprep.mubr.bf16.mxu0 %v7775
      %7847 = vmatmul.mubr.bf16.gmra.mrb[0].mxu0 %v7722
      %v7848 = vpop.f32.mrb[0].mxu0
      %v7849 = vadd.f32 0.0, %v7848
      %v7850 = vpop.f32.mrb[0].mxu0
      %v7851 = vpop.f32.mrb[0].mxu0
      %v7852 = vadd.f32 0.0, %v7851
      %v7853 = vpop.f32.mrb[0].mxu0
      %7854 = vmatprep.mubr.bf16.mxu0 %v7778
      %7855 = vmatmul.mubr.bf16.gmra.mrb[0].mxu0 %v7724
      %v7856 = vpop.f32.mrb[0].mxu0
      %v7857 = vadd.f32 0.0, %v7856
      %v7858 = vpop.f32.mrb[0].mxu0
      %v7859 = vpop.f32.mrb[0].mxu0
      %v7860 = vadd.f32 0.0, %v7859
      %v7861 = vpop.f32.mrb[0].mxu0
      %7862 = vmatprep.mubr.bf16.mxu0 %v7781
      %7863 = vmatmul.mubr.bf16.gmra.mrb[0].mxu0 %v7726
      %v7864 = vpop.f32.mrb[0].mxu0
      %v7865 = vadd.f32 0.0, %v7864
      %v7866 = vpop.f32.mrb[0].mxu0
      %v7867 = vpop.f32.mrb[0].mxu0
      %v7868 = vadd.f32 0.0, %v7867
      %v7869 = vpop.f32.mrb[0].mxu0
      %7870 = vmatprep.mubr.bf16.mxu0 %v7784
      %7871 = vmatmul.mubr.bf16.gmra.mrb[0].mxu0 %v7728
      %v7872 = vpop.f32.mrb[0].mxu0
      %v7873 = vadd.f32 0.0, %v7872
      %v7874 = vpop.f32.mrb[0].mxu0
      %v7875 = vpop.f32.mrb[0].mxu0
      %v7876 = vadd.f32 0.0, %v7875
      %v7877 = vpop.f32.mrb[0].mxu0
      %7878 = vmatprep.mubr.bf16.mxu0 %v7787
      %7879 = vmatmul.mubr.bf16.gmra.mrb[0].mxu0 %v7730
      %v7880 = vpop.f32.mrb[0].mxu0
      %v7881 = vadd.f32 0.0, %v7880
      %v7882 = vpop.f32.mrb[0].mxu0
      %v7883 = vpop.f32.mrb[0].mxu0
      %v7884 = vadd.f32 0.0, %v7883
      %v7885 = vpop.f32.mrb[0].mxu0
      %7886 = vmatprep.mubr.bf16.mxu0 %v7790
      %7887 = vmatmul.mubr.bf16.gmra.mrb[0].mxu0 %v7732
      %v7888 = vpop.f32.mrb[0].mxu0
      %v7889 = vadd.f32 0.0, %v7888
      %v7890 = vpop.f32.mrb[0].mxu0
      %v7891 = vpop.f32.mrb[0].mxu0
      %v7892 = vadd.f32 0.0, %v7891
      %v7893 = vpop.f32.mrb[0].mxu0
      %7894 = vmatprep.mubr.bf16.mxu0 %v7793
      %7895 = vmatmul.mubr.bf16.gmra.mrb[0].mxu0 %v7734
      %v7896 = vpop.f32.mrb[0].mxu0
      %v7897 = vadd.f32 0.0, %v7896
      %v7898 = vpop.f32.mrb[0].mxu0
      %v7899 = vpop.f32.mrb[0].mxu0
      %v7900 = vadd.f32 0.0, %v7899
      %v7901 = vpop.f32.mrb[0].mxu0
      %7902 = vmatprep.mubr.bf16.mxu0 %v7796
      %7903 = vmatmul.mubr.bf16.gmra.mrb[0].mxu0 %v7736
      %v7904 = vpop.f32.mrb[0].mxu0
      %v7905 = vadd.f32 0.0, %v7904
      %v7906 = vpop.f32.mrb[0].mxu0
      %v7907 = vpop.f32.mrb[0].mxu0
      %v7908 = vadd.f32 0.0, %v7907
      %v7909 = vpop.f32.mrb[0].mxu0
      %7910 = vdwg.mxu0
      %v7911 = vpack.c.bf16 %v7836, %v7833
      %v7912 = vpack.c.bf16 %v7844, %v7841
      %v7913 = vpack.c.bf16 %v7852, %v7849
      %v7914 = vpack.c.bf16 %v7860, %v7857
      %v7915 = vpack.c.bf16 %v7868, %v7865
      %v7916 = vpack.c.bf16 %v7876, %v7873
      %v7917 = vpack.c.bf16 %v7884, %v7881
      %v7918 = vpack.c.bf16 %v7892, %v7889
      %v7919 = vpack.c.bf16 %v7900, %v7897
      %v7920 = vpack.c.bf16 %v7908, %v7905
      %7931 = vrot.lane.b32.xlu0 %v3265, 32
      %v7932 = vpop.permute.xlu0 %7931
      %7933 = vrot.lane.b32.xlu0 %v3266, 32
      %v7934 = vpop.permute.xlu0 %7933
      %7935 = vrot.lane.b32.xlu0 %v3267, 32
      %v7936 = vpop.permute.xlu0 %7935
      %7937 = vrot.lane.b32.xlu0 %v3268, 32
      %v7938 = vpop.permute.xlu0 %7937
      %7939 = vrot.lane.b32.xlu0 %v3269, 32
      %v7940 = vpop.permute.xlu0 %7939
      %7941 = vrot.lane.b32.xlu0 %v3270, 32
      %v7942 = vpop.permute.xlu0 %7941
      %7943 = vrot.lane.b32.xlu0 %v3271, 32
      %v7944 = vpop.permute.xlu0 %7943
      %7945 = vrot.lane.b32.xlu0 %v3272, 32
      %v7946 = vpop.permute.xlu0 %7945
      %7947 = vrot.lane.b32.xlu0 %v3273, 32
      %v7948 = vpop.permute.xlu0 %7947
      %7949 = vrot.lane.b32.xlu0 %v3274, 32
      %v7950 = vpop.permute.xlu0 %7949
      %7961 = vrot.lane.b32.xlu0 %v4041, 64
      %v7962 = vpop.permute.xlu0 %7961
      %7963 = vrot.lane.b32.xlu0 %v4042, 64
      %v7964 = vpop.permute.xlu0 %7963
      %7965 = vrot.lane.b32.xlu0 %v4043, 64
      %v7966 = vpop.permute.xlu0 %7965
      %7967 = vrot.lane.b32.xlu0 %v4044, 64
      %v7968 = vpop.permute.xlu0 %7967
      %7969 = vrot.lane.b32.xlu0 %v4045, 64
      %v7970 = vpop.permute.xlu0 %7969
      %7971 = vrot.lane.b32.xlu0 %v4046, 64
      %v7972 = vpop.permute.xlu0 %7971
      %7973 = vrot.lane.b32.xlu0 %v4047, 64
      %v7974 = vpop.permute.xlu0 %7973
      %7975 = vrot.lane.b32.xlu0 %v4048, 64
      %v7976 = vpop.permute.xlu0 %7975
      %7977 = vrot.lane.b32.xlu0 %v4049, 64
      %v7978 = vpop.permute.xlu0 %7977
      %7979 = vrot.lane.b32.xlu0 %v4050, 64
      %v7980 = vpop.permute.xlu0 %7979
      %7991 = vrot.lane.b32.xlu0 %v4817, 96
      %v7992 = vpop.permute.xlu0 %7991
      %7993 = vrot.lane.b32.xlu0 %v4818, 96
      %v7994 = vpop.permute.xlu0 %7993
      %7995 = vrot.lane.b32.xlu0 %v4819, 96
      %v7996 = vpop.permute.xlu0 %7995
      %7997 = vrot.lane.b32.xlu0 %v4820, 96
      %v7998 = vpop.permute.xlu0 %7997
      %7999 = vrot.lane.b32.xlu0 %v4821, 96
      %v8000 = vpop.permute.xlu0 %7999
      %8001 = vrot.lane.b32.xlu0 %v4822, 96
      %v8002 = vpop.permute.xlu0 %8001
      %8003 = vrot.lane.b32.xlu0 %v4823, 96
      %v8004 = vpop.permute.xlu0 %8003
      %8005 = vrot.lane.b32.xlu0 %v4824, 96
      %v8006 = vpop.permute.xlu0 %8005
      %8007 = vrot.lane.b32.xlu0 %v4825, 96
      %v8008 = vpop.permute.xlu0 %8007
      %8009 = vrot.lane.b32.xlu0 %v4826, 96
      %v8010 = vpop.permute.xlu0 %8009
      %8021 = vrot.lane.b32.xlu0 %v6359, 32
      %v8022 = vpop.permute.xlu0 %8021
      %8023 = vrot.lane.b32.xlu0 %v6360, 32
      %v8024 = vpop.permute.xlu0 %8023
      %8025 = vrot.lane.b32.xlu0 %v6361, 32
      %v8026 = vpop.permute.xlu0 %8025
      %8027 = vrot.lane.b32.xlu0 %v6362, 32
      %v8028 = vpop.permute.xlu0 %8027
      %8029 = vrot.lane.b32.xlu0 %v6363, 32
      %v8030 = vpop.permute.xlu0 %8029
      %8031 = vrot.lane.b32.xlu0 %v6364, 32
      %v8032 = vpop.permute.xlu0 %8031
      %8033 = vrot.lane.b32.xlu0 %v6365, 32
      %v8034 = vpop.permute.xlu0 %8033
      %8035 = vrot.lane.b32.xlu0 %v6366, 32
      %v8036 = vpop.permute.xlu0 %8035
      %8037 = vrot.lane.b32.xlu0 %v6367, 32
      %v8038 = vpop.permute.xlu0 %8037
      %8039 = vrot.lane.b32.xlu0 %v6368, 32
      %v8040 = vpop.permute.xlu0 %8039
      %8051 = vrot.lane.b32.xlu0 %v7135, 64
      %v8052 = vpop.permute.xlu0 %8051
      %8053 = vrot.lane.b32.xlu0 %v7136, 64
      %v8054 = vpop.permute.xlu0 %8053
      %8055 = vrot.lane.b32.xlu0 %v7137, 64
      %v8056 = vpop.permute.xlu0 %8055
      %8057 = vrot.lane.b32.xlu0 %v7138, 64
      %v8058 = vpop.permute.xlu0 %8057
      %8059 = vrot.lane.b32.xlu0 %v7139, 64
      %v8060 = vpop.permute.xlu0 %8059
      %8061 = vrot.lane.b32.xlu0 %v7140, 64
      %v8062 = vpop.permute.xlu0 %8061
      %8063 = vrot.lane.b32.xlu0 %v7141, 64
      %v8064 = vpop.permute.xlu0 %8063
      %8065 = vrot.lane.b32.xlu0 %v7142, 64
      %v8066 = vpop.permute.xlu0 %8065
      %8067 = vrot.lane.b32.xlu0 %v7143, 64
      %v8068 = vpop.permute.xlu0 %8067
      %8069 = vrot.lane.b32.xlu0 %v7144, 64
      %v8070 = vpop.permute.xlu0 %8069
      %8081 = vrot.lane.b32.xlu0 %v7911, 96
      %v8082 = vpop.permute.xlu0 %8081
      %8083 = vrot.lane.b32.xlu0 %v7912, 96
      %v8084 = vpop.permute.xlu0 %8083
      %8085 = vrot.lane.b32.xlu0 %v7913, 96
      %v8086 = vpop.permute.xlu0 %8085
      %8087 = vrot.lane.b32.xlu0 %v7914, 96
      %v8088 = vpop.permute.xlu0 %8087
      %8089 = vrot.lane.b32.xlu0 %v7915, 96
      %v8090 = vpop.permute.xlu0 %8089
      %8091 = vrot.lane.b32.xlu0 %v7916, 96
      %v8092 = vpop.permute.xlu0 %8091
      %8093 = vrot.lane.b32.xlu0 %v7917, 96
      %v8094 = vpop.permute.xlu0 %8093
      %8095 = vrot.lane.b32.xlu0 %v7918, 96
      %v8096 = vpop.permute.xlu0 %8095
      %8097 = vrot.lane.b32.xlu0 %v7919, 96
      %v8098 = vpop.permute.xlu0 %8097
      %8099 = vrot.lane.b32.xlu0 %v7920, 96
      %v8100 = vpop.permute.xlu0 %8099
      %v8103 = vsel %vm1762, %v2459, %v7932
      %v8106 = vsel %vm1762, %v2460, %v7934
      %v8109 = vsel %vm1762, %v2461, %v7936
      %v8112 = vsel %vm1762, %v2462, %v7938
      %v8115 = vsel %vm1762, %v2463, %v7940
      %v8118 = vsel %vm1762, %v2464, %v7942
      %v8121 = vsel %vm1762, %v2465, %v7944
      %v8124 = vsel %vm1762, %v2466, %v7946
      %v8127 = vsel %vm1762, %v2467, %v7948
      %v8130 = vsel %vm1762, %v2468, %v7950
      %v8132 = vsel %vm370, %v8103, %v7962
      %v8134 = vsel %vm370, %v8106, %v7964
      %v8136 = vsel %vm370, %v8109, %v7966
      %v8138 = vsel %vm370, %v8112, %v7968
      %v8140 = vsel %vm370, %v8115, %v7970
      %v8142 = vsel %vm370, %v8118, %v7972
      %v8144 = vsel %vm370, %v8121, %v7974
      %v8146 = vsel %vm370, %v8124, %v7976
      %v8148 = vsel %vm370, %v8127, %v7978
      %v8150 = vsel %vm370, %v8130, %v7980
      %vm8151 = vcmask 785408
      %v8153 = vsel %vm8151, %v8132, %v7992
      %v8156 = vsel %vm8151, %v8134, %v7994
      %v8159 = vsel %vm8151, %v8136, %v7996
      %v8162 = vsel %vm8151, %v8138, %v7998
      %v8165 = vsel %vm8151, %v8140, %v8000
      %v8168 = vsel %vm8151, %v8142, %v8002
      %v8171 = vsel %vm8151, %v8144, %v8004
      %v8174 = vsel %vm8151, %v8146, %v8006
      %v8177 = vsel %vm8151, %v8148, %v8008
      %v8180 = vsel %vm8151, %v8150, %v8010
      %v8184 = vsel %vm1762, %v5553, %v8022
      %v8187 = vsel %vm1762, %v5554, %v8024
      %v8190 = vsel %vm1762, %v5555, %v8026
      %v8193 = vsel %vm1762, %v5556, %v8028
      %v8196 = vsel %vm1762, %v5557, %v8030
      %v8199 = vsel %vm1762, %v5558, %v8032
      %v8202 = vsel %vm1762, %v5559, %v8034
      %v8205 = vsel %vm1762, %v5560, %v8036
      %v8208 = vsel %vm1762, %v5561, %v8038
      %v8211 = vsel %vm1762, %v5562, %v8040
      %v8213 = vsel %vm370, %v8184, %v8052
      %v8215 = vsel %vm370, %v8187, %v8054
      %v8217 = vsel %vm370, %v8190, %v8056
      %v8219 = vsel %vm370, %v8193, %v8058
      %v8221 = vsel %vm370, %v8196, %v8060
      %v8223 = vsel %vm370, %v8199, %v8062
      %v8225 = vsel %vm370, %v8202, %v8064
      %v8227 = vsel %vm370, %v8205, %v8066
      %v8229 = vsel %vm370, %v8208, %v8068
      %v8231 = vsel %vm370, %v8211, %v8070
      %v8233 = vsel %vm8151, %v8213, %v8082
      %v8236 = vsel %vm8151, %v8215, %v8084
      %v8239 = vsel %vm8151, %v8217, %v8086
      %v8242 = vsel %vm8151, %v8219, %v8088
      %v8245 = vsel %vm8151, %v8221, %v8090
      %v8248 = vsel %vm8151, %v8223, %v8092
      %v8251 = vsel %vm8151, %v8225, %v8094
      %v8254 = vsel %vm8151, %v8227, %v8096
      %v8257 = vsel %vm8151, %v8229, %v8098
      %v8260 = vsel %vm8151, %v8231, %v8100
      %s8262 = smul.u32 %s615, 64
      %s8263 = smul.addr %s8262, 4
      %s8264 = scalar_lea.vmem %s7, %s8263
      %v8265 = vld [vmem:[%s8264] sm:$0xff]
      %v8266 = vld [vmem:[%s8264 + $0x8] sm:$0xff]
      %v8267 = vld [vmem:[%s8264 + $0x10] sm:$0xff]
      %v8268 = vld [vmem:[%s8264 + $0x18] sm:$0xff]
      %v8269 = vld [vmem:[%s8264 + $0x20] sm:$0xff]
      %v8270 = vld [vmem:[%s8264 + $0x28] sm:$0xff]
      %v8271 = vld [vmem:[%s8264 + $0x30] sm:$0xff]
      %v8272 = vld [vmem:[%s8264 + $0x38] sm:$0xff]
      %v8273 = vld [vmem:[%s8264 + $0x40] sm:$0xff]
      %v8274 = vld [vmem:[%s8264 + $0x48] sm:$0xff]
      %v8275 = vld [vmem:[%s8264 + $0x50] sm:$0xff]
      %v8276 = vld [vmem:[%s8264 + $0x58] sm:$0xff]
      %v8277 = vld [vmem:[%s8264 + $0x60] sm:$0xff]
      %v8278 = vld [vmem:[%s8264 + $0x68] sm:$0xff]
      %v8279 = vld [vmem:[%s8264 + $0x70] sm:$0xff]
      %v8280 = vld [vmem:[%s8264 + $0x78] sm:$0xff]
      %v8281 = vld [vmem:[%s8264 + $0x80] sm:$0xff]
      %v8282 = vld [vmem:[%s8264 + $0x88] sm:$0xff]
      %v8283 = vld [vmem:[%s8264 + $0x90] sm:$0xff]
      %v8284 = vld [vmem:[%s8264 + $0x98] sm:$0xff]
      %v8285 = vld [vmem:[%s8264 + $0xa0] sm:$0xff]
      %v8286 = vld [vmem:[%s8264 + $0xa8] sm:$0xff]
      %v8287 = vld [vmem:[%s8264 + $0xb0] sm:$0xff]
      %v8288 = vld [vmem:[%s8264 + $0xb8] sm:$0xff]
      %v8289 = vld [vmem:[%s8264 + $0xc0] sm:$0xff]
      %v8290 = vld [vmem:[%s8264 + $0xc8] sm:$0xff]
      %v8291 = vld [vmem:[%s8264 + $0xd0] sm:$0xff]
      %v8292 = vld [vmem:[%s8264 + $0xd8] sm:$0xff]
      %v8293 = vld [vmem:[%s8264 + $0xe0] sm:$0xff]
      %v8294 = vld [vmem:[%s8264 + $0xe8] sm:$0xff]
      %v8295 = vld [vmem:[%s8264 + $0xf0] sm:$0xff]
      %v8296 = vld [vmem:[%s8264 + $0xf8] sm:$0xff]
      %s8297 = smul.u32 %s615, 2
      %s8298 = scalar_lea.vmem [#allocation10], %s8297
      %v8299 = vld [vmem:[%s8298] sm:$0x3]
      %v8301 = vlaneseq
      %v8302 = vshrl.u32 %v8301, 7
      %v8303 = vsub.s32 0, %v8302
      %v8304 = vrot.slane %v8299, %v8303
      %v8305 = vlaneseq
      %v8306 = vshrl.u32 %v8305, 7
      %v8307 = vsub.s32 1, %v8306
      %v8308 = vrot.slane %v8299, %v8307
      %v8343 = vunpack.c.l.b16 %v8265
      %v8344 = vunpack.c.h.b16 %v8265
      %v8345 = vunpack.c.l.b16 %v8266
      %v8346 = vunpack.c.h.b16 %v8266
      %v8347 = vunpack.c.l.b16 %v8267
      %v8348 = vunpack.c.h.b16 %v8267
      %v8349 = vunpack.c.l.b16 %v8268
      %v8350 = vunpack.c.h.b16 %v8268
      %v8351 = vunpack.c.l.b16 %v8269
      %v8352 = vunpack.c.h.b16 %v8269
      %v8353 = vunpack.c.l.b16 %v8270
      %v8354 = vunpack.c.h.b16 %v8270
      %v8355 = vunpack.c.l.b16 %v8271
      %v8356 = vunpack.c.h.b16 %v8271
      %v8357 = vunpack.c.l.b16 %v8272
      %v8358 = vunpack.c.h.b16 %v8272
      %v8359 = vunpack.c.l.b16 %v8273
      %v8360 = vunpack.c.h.b16 %v8273
      %v8361 = vunpack.c.l.b16 %v8274
      %v8362 = vunpack.c.h.b16 %v8274
      %v8363 = vunpack.c.l.b16 %v8275
      %v8364 = vunpack.c.h.b16 %v8275
      %v8365 = vunpack.c.l.b16 %v8276
      %v8366 = vunpack.c.h.b16 %v8276
      %v8367 = vunpack.c.l.b16 %v8277
      %v8368 = vunpack.c.h.b16 %v8277
      %v8369 = vunpack.c.l.b16 %v8278
      %v8370 = vunpack.c.h.b16 %v8278
      %v8371 = vunpack.c.l.b16 %v8279
      %v8372 = vunpack.c.h.b16 %v8279
      %v8373 = vunpack.c.l.b16 %v8280
      %v8374 = vunpack.c.h.b16 %v8280
      %v8375 = vunpack.c.l.b16 %v8281
      %v8376 = vunpack.c.h.b16 %v8281
      %v8377 = vunpack.c.l.b16 %v8282
      %v8378 = vunpack.c.h.b16 %v8282
      %v8379 = vunpack.c.l.b16 %v8283
      %v8380 = vunpack.c.h.b16 %v8283
      %v8381 = vunpack.c.l.b16 %v8284
      %v8382 = vunpack.c.h.b16 %v8284
      %v8383 = vunpack.c.l.b16 %v8285
      %v8384 = vunpack.c.h.b16 %v8285
      %v8385 = vunpack.c.l.b16 %v8286
      %v8386 = vunpack.c.h.b16 %v8286
      %v8387 = vunpack.c.l.b16 %v8287
      %v8388 = vunpack.c.h.b16 %v8287
      %v8389 = vunpack.c.l.b16 %v8288
      %v8390 = vunpack.c.h.b16 %v8288
      %v8391 = vunpack.c.l.b16 %v8289
      %v8392 = vunpack.c.h.b16 %v8289
      %v8393 = vunpack.c.l.b16 %v8290
      %v8394 = vunpack.c.h.b16 %v8290
      %v8395 = vunpack.c.l.b16 %v8291
      %v8396 = vunpack.c.h.b16 %v8291
      %v8397 = vunpack.c.l.b16 %v8292
      %v8398 = vunpack.c.h.b16 %v8292
      %v8399 = vunpack.c.l.b16 %v8293
      %v8400 = vunpack.c.h.b16 %v8293
      %v8401 = vunpack.c.l.b16 %v8294
      %v8402 = vunpack.c.h.b16 %v8294
      %v8403 = vunpack.c.l.b16 %v8295
      %v8404 = vunpack.c.h.b16 %v8295
      %v8405 = vunpack.c.l.b16 %v8296
      %v8406 = vunpack.c.h.b16 %v8296
      %v8407 = vpack.c.b16 %v8345, %v8343
      %v8408 = vpack.c.b16 %v8346, %v8344
      %v8409 = vpack.c.b16 %v8349, %v8347
      %v8410 = vpack.c.b16 %v8350, %v8348
      %v8411 = vpack.c.b16 %v8353, %v8351
      %v8412 = vpack.c.b16 %v8354, %v8352
      %v8413 = vpack.c.b16 %v8357, %v8355
      %v8414 = vpack.c.b16 %v8358, %v8356
      %v8415 = vpack.c.b16 %v8361, %v8359
      %v8416 = vpack.c.b16 %v8362, %v8360
      %v8417 = vpack.c.b16 %v8365, %v8363
      %v8418 = vpack.c.b16 %v8366, %v8364
      %v8419 = vpack.c.b16 %v8369, %v8367
      %v8420 = vpack.c.b16 %v8370, %v8368
      %v8421 = vpack.c.b16 %v8373, %v8371
      %v8422 = vpack.c.b16 %v8374, %v8372
      %v8423 = vpack.c.b16 %v8377, %v8375
      %v8424 = vpack.c.b16 %v8378, %v8376
      %v8425 = vpack.c.b16 %v8381, %v8379
      %v8426 = vpack.c.b16 %v8382, %v8380
      %v8427 = vpack.c.b16 %v8385, %v8383
      %v8428 = vpack.c.b16 %v8386, %v8384
      %v8429 = vpack.c.b16 %v8389, %v8387
      %v8430 = vpack.c.b16 %v8390, %v8388
      %v8431 = vpack.c.b16 %v8393, %v8391
      %v8432 = vpack.c.b16 %v8394, %v8392
      %v8433 = vpack.c.b16 %v8397, %v8395
      %v8434 = vpack.c.b16 %v8398, %v8396
      %v8435 = vpack.c.b16 %v8401, %v8399
      %v8436 = vpack.c.b16 %v8402, %v8400
      %v8437 = vpack.c.b16 %v8405, %v8403
      %v8438 = vpack.c.b16 %v8406, %v8404
      %8471 = vmatprep.subr.bf16.mxu0 %v8408
      %8472 = vmatpush1.bf16.msra.mxu0 %v8407
      %8473 = vmatprep.subr.bf16.mxu0 %v8410
      %8474 = vmatpush1.bf16.msra.mxu0 %v8409
      %8475 = vmatprep.subr.bf16.mxu0 %v8412
      %8476 = vmatpush1.bf16.msra.mxu0 %v8411
      %8477 = vmatprep.subr.bf16.mxu0 %v8414
      %8478 = vmatpush1.bf16.msra.mxu0 %v8413
      %8479 = vmatprep.subr.bf16.mxu0 %v8416
      %8480 = vmatpush1.bf16.msra.mxu0 %v8415
      %8481 = vmatprep.subr.bf16.mxu0 %v8418
      %8482 = vmatpush1.bf16.msra.mxu0 %v8417
      %8483 = vmatprep.subr.bf16.mxu0 %v8420
      %8484 = vmatpush1.bf16.msra.mxu0 %v8419
      %8485 = vmatprep.subr.bf16.mxu0 %v8422
      %8486 = vmatpush1.bf16.msra.mxu0 %v8421
      %8487 = vmatprep.subr.bf16.mxu0 %v8424
      %8488 = vmatpush1.bf16.msra.mxu0 %v8423
      %8489 = vmatprep.subr.bf16.mxu0 %v8426
      %8490 = vmatpush1.bf16.msra.mxu0 %v8425
      %8491 = vmatprep.subr.bf16.mxu0 %v8428
      %8492 = vmatpush1.bf16.msra.mxu0 %v8427
      %8493 = vmatprep.subr.bf16.mxu0 %v8430
      %8494 = vmatpush1.bf16.msra.mxu0 %v8429
      %8495 = vmatprep.subr.bf16.mxu0 %v8432
      %8496 = vmatpush1.bf16.msra.mxu0 %v8431
      %8497 = vmatprep.subr.bf16.mxu0 %v8434
      %8498 = vmatpush1.bf16.msra.mxu0 %v8433
      %8499 = vmatprep.subr.bf16.mxu0 %v8436
      %8500 = vmatpush1.bf16.msra.mxu0 %v8435
      %8501 = vmatprep.subr.bf16.mxu0 %v8438
      %8502 = vmatpush1.bf16.msra.mxu0 %v8437
      %8503 = vmatprep.mubr.bf16.mxu0 %v8233
      %8504 = vmatmul.mubr.bf16.gmra.mrb[0].mxu0 %v8153
      %v8505 = vpop.f32.mrb[0].mxu0
      %v8506 = vadd.f32 %v8304, %v8505
      %v8507 = vpop.f32.mrb[0].mxu0
      %v8508 = vadd.f32 %v8308, %v8507
      %v8509 = vpop.f32.mrb[0].mxu0
      %v8510 = vadd.f32 %v8304, %v8509
      %v8511 = vpop.f32.mrb[0].mxu0
      %v8512 = vadd.f32 %v8308, %v8511
      %8513 = vmatprep.mubr.bf16.mxu0 %v8236
      %8514 = vmatmul.mubr.bf16.gmra.mrb[0].mxu0 %v8156
      %v8515 = vpop.f32.mrb[0].mxu0
      %v8516 = vadd.f32 %v8304, %v8515
      %v8517 = vpop.f32.mrb[0].mxu0
      %v8518 = vadd.f32 %v8308, %v8517
      %v8519 = vpop.f32.mrb[0].mxu0
      %v8520 = vadd.f32 %v8304, %v8519
      %v8521 = vpop.f32.mrb[0].mxu0
      %v8522 = vadd.f32 %v8308, %v8521
      %8523 = vmatprep.mubr.bf16.mxu0 %v8239
      %8524 = vmatmul.mubr.bf16.gmra.mrb[0].mxu0 %v8159
      %v8525 = vpop.f32.mrb[0].mxu0
      %v8526 = vadd.f32 %v8304, %v8525
      %v8527 = vpop.f32.mrb[0].mxu0
      %v8528 = vadd.f32 %v8308, %v8527
      %v8529 = vpop.f32.mrb[0].mxu0
      %v8530 = vadd.f32 %v8304, %v8529
      %v8531 = vpop.f32.mrb[0].mxu0
      %v8532 = vadd.f32 %v8308, %v8531
      %8533 = vmatprep.mubr.bf16.mxu0 %v8242
      %8534 = vmatmul.mubr.bf16.gmra.mrb[0].mxu0 %v8162
      %v8535 = vpop.f32.mrb[0].mxu0
      %v8536 = vadd.f32 %v8304, %v8535
      %v8537 = vpop.f32.mrb[0].mxu0
      %v8538 = vadd.f32 %v8308, %v8537
      %v8539 = vpop.f32.mrb[0].mxu0
      %v8540 = vadd.f32 %v8304, %v8539
      %v8541 = vpop.f32.mrb[0].mxu0
      %v8542 = vadd.f32 %v8308, %v8541
      %8543 = vmatprep.mubr.bf16.mxu0 %v8245
      %8544 = vmatmul.mubr.bf16.gmra.mrb[0].mxu0 %v8165
      %v8545 = vpop.f32.mrb[0].mxu0
      %v8546 = vadd.f32 %v8304, %v8545
      %v8547 = vpop.f32.mrb[0].mxu0
      %v8548 = vadd.f32 %v8308, %v8547
      %v8549 = vpop.f32.mrb[0].mxu0
      %v8550 = vadd.f32 %v8304, %v8549
      %v8551 = vpop.f32.mrb[0].mxu0
      %v8552 = vadd.f32 %v8308, %v8551
      %8553 = vmatprep.mubr.bf16.mxu0 %v8248
      %8554 = vmatmul.mubr.bf16.gmra.mrb[0].mxu0 %v8168
      %v8555 = vpop.f32.mrb[0].mxu0
      %v8556 = vadd.f32 %v8304, %v8555
      %v8557 = vpop.f32.mrb[0].mxu0
      %v8558 = vadd.f32 %v8308, %v8557
      %v8559 = vpop.f32.mrb[0].mxu0
      %v8560 = vadd.f32 %v8304, %v8559
      %v8561 = vpop.f32.mrb[0].mxu0
      %v8562 = vadd.f32 %v8308, %v8561
      %8563 = vmatprep.mubr.bf16.mxu0 %v8251
      %8564 = vmatmul.mubr.bf16.gmra.mrb[0].mxu0 %v8171
      %v8565 = vpop.f32.mrb[0].mxu0
      %v8566 = vadd.f32 %v8304, %v8565
      %v8567 = vpop.f32.mrb[0].mxu0
      %v8568 = vadd.f32 %v8308, %v8567
      %v8569 = vpop.f32.mrb[0].mxu0
      %v8570 = vadd.f32 %v8304, %v8569
      %v8571 = vpop.f32.mrb[0].mxu0
      %v8572 = vadd.f32 %v8308, %v8571
      %8573 = vmatprep.mubr.bf16.mxu0 %v8254
      %8574 = vmatmul.mubr.bf16.gmra.mrb[0].mxu0 %v8174
      %v8575 = vpop.f32.mrb[0].mxu0
      %v8576 = vadd.f32 %v8304, %v8575
      %v8577 = vpop.f32.mrb[0].mxu0
      %v8578 = vadd.f32 %v8308, %v8577
      %v8579 = vpop.f32.mrb[0].mxu0
      %v8580 = vadd.f32 %v8304, %v8579
      %v8581 = vpop.f32.mrb[0].mxu0
      %v8582 = vadd.f32 %v8308, %v8581
      %8583 = vmatprep.mubr.bf16.mxu0 %v8257
      %8584 = vmatmul.mubr.bf16.gmra.mrb[0].mxu0 %v8177
      %v8585 = vpop.f32.mrb[0].mxu0
      %v8586 = vadd.f32 %v8304, %v8585
      %v8587 = vpop.f32.mrb[0].mxu0
      %v8588 = vadd.f32 %v8308, %v8587
      %v8589 = vpop.f32.mrb[0].mxu0
      %v8590 = vadd.f32 %v8304, %v8589
      %v8591 = vpop.f32.mrb[0].mxu0
      %v8592 = vadd.f32 %v8308, %v8591
      %8593 = vmatprep.mubr.bf16.mxu0 %v8260
      %8594 = vmatmul.mubr.bf16.gmra.mrb[0].mxu0 %v8180
      %v8595 = vpop.f32.mrb[0].mxu0
      %v8596 = vadd.f32 %v8304, %v8595
      %v8597 = vpop.f32.mrb[0].mxu0
      %v8598 = vadd.f32 %v8308, %v8597
      %v8599 = vpop.f32.mrb[0].mxu0
      %v8600 = vadd.f32 %v8304, %v8599
      %v8601 = vpop.f32.mrb[0].mxu0
      %v8602 = vadd.f32 %v8308, %v8601
      %8603 = vdwg.mxu0
      %v8604 = vadd.f32 %v620, %v8506
      %v8605 = vadd.f32 %v621, %v8508
      %v8606 = vadd.f32 %v622, %v8510
      %v8607 = vadd.f32 %v623, %v8512
      %v8608 = vadd.f32 %v624, %v8516
      %v8609 = vadd.f32 %v625, %v8518
      %v8610 = vadd.f32 %v626, %v8520
      %v8611 = vadd.f32 %v627, %v8522
      %v8612 = vadd.f32 %v628, %v8526
      %v8613 = vadd.f32 %v629, %v8528
      %v8614 = vadd.f32 %v630, %v8530
      %v8615 = vadd.f32 %v631, %v8532
      %v8616 = vadd.f32 %v632, %v8536
      %v8617 = vadd.f32 %v633, %v8538
      %v8618 = vadd.f32 %v634, %v8540
      %v8619 = vadd.f32 %v635, %v8542
      %v8620 = vadd.f32 %v636, %v8546
      %v8621 = vadd.f32 %v637, %v8548
      %v8622 = vadd.f32 %v638, %v8550
      %v8623 = vadd.f32 %v639, %v8552
      %v8624 = vadd.f32 %v640, %v8556
      %v8625 = vadd.f32 %v641, %v8558
      %v8626 = vadd.f32 %v642, %v8560
      %v8627 = vadd.f32 %v643, %v8562
      %v8628 = vadd.f32 %v644, %v8566
      %v8629 = vadd.f32 %v645, %v8568
      %v8630 = vadd.f32 %v646, %v8570
      %v8631 = vadd.f32 %v647, %v8572
      %v8632 = vadd.f32 %v648, %v8576
      %v8633 = vadd.f32 %v649, %v8578
      %v8634 = vadd.f32 %v650, %v8580
      %v8635 = vadd.f32 %v651, %v8582
      %v8636 = vadd.f32 %v652, %v8586
      %v8637 = vadd.f32 %v653, %v8588
      %v8638 = vadd.f32 %v654, %v8590
      %v8639 = vadd.f32 %v655, %v8592
      %v8640 = vadd.f32 %v656, %v8596
      %v8641 = vadd.f32 %v657, %v8598
      %v8642 = vadd.f32 %v658, %v8600
      %v8643 = vadd.f32 %v659, %v8602
      %s8644 = scalar_lea.vmem [#allocation11], %s8297
      %v8645 = vld [vmem:[%s8644] sm:$0x3]
      %s8646 = scalar_lea.vmem [#allocation13], %s8297
      %v8647 = vld [vmem:[%s8646] sm:$0x3]
      %v8648 = vadd.f32 %v8604, %v8605
      %8649 = vadd.xlane.f32.xlu0 %v8648
      %v8650 = vpop.xlane.xlu0 %8649
      %v8651 = vadd.f32 %v8606, %v8607
      %8652 = vadd.xlane.f32.xlu0 %v8651
      %v8653 = vpop.xlane.xlu0 %8652
      %v8654 = vadd.f32 %v8608, %v8609
      %8655 = vadd.xlane.f32.xlu0 %v8654
      %v8656 = vpop.xlane.xlu0 %8655
      %v8657 = vadd.f32 %v8610, %v8611
      %8658 = vadd.xlane.f32.xlu0 %v8657
      %v8659 = vpop.xlane.xlu0 %8658
      %v8660 = vadd.f32 %v8612, %v8613
      %8661 = vadd.xlane.f32.xlu0 %v8660
      %v8662 = vpop.xlane.xlu0 %8661
      %v8663 = vadd.f32 %v8614, %v8615
      %8664 = vadd.xlane.f32.xlu0 %v8663
      %v8665 = vpop.xlane.xlu0 %8664
      %v8666 = vadd.f32 %v8616, %v8617
      %8667 = vadd.xlane.f32.xlu0 %v8666
      %v8668 = vpop.xlane.xlu0 %8667
      %v8669 = vadd.f32 %v8618, %v8619
      %8670 = vadd.xlane.f32.xlu0 %v8669
      %v8671 = vpop.xlane.xlu0 %8670
      %v8672 = vadd.f32 %v8620, %v8621
      %8673 = vadd.xlane.f32.xlu0 %v8672
      %v8674 = vpop.xlane.xlu0 %8673
      %v8675 = vadd.f32 %v8622, %v8623
      %8676 = vadd.xlane.f32.xlu0 %v8675
      %v8677 = vpop.xlane.xlu0 %8676
      %v8678 = vadd.f32 %v8624, %v8625
      %8679 = vadd.xlane.f32.xlu0 %v8678
      %v8680 = vpop.xlane.xlu0 %8679
      %v8681 = vadd.f32 %v8626, %v8627
      %8682 = vadd.xlane.f32.xlu0 %v8681
      %v8683 = vpop.xlane.xlu0 %8682
      %v8684 = vadd.f32 %v8628, %v8629
      %8685 = vadd.xlane.f32.xlu0 %v8684
      %v8686 = vpop.xlane.xlu0 %8685
      %v8687 = vadd.f32 %v8630, %v8631
      %8688 = vadd.xlane.f32.xlu0 %v8687
      %v8689 = vpop.xlane.xlu0 %8688
      %v8690 = vadd.f32 %v8632, %v8633
      %8691 = vadd.xlane.f32.xlu0 %v8690
      %v8692 = vpop.xlane.xlu0 %8691
      %v8693 = vadd.f32 %v8634, %v8635
      %8694 = vadd.xlane.f32.xlu0 %v8693
      %v8695 = vpop.xlane.xlu0 %8694
      %v8696 = vadd.f32 %v8636, %v8637
      %8697 = vadd.xlane.f32.xlu0 %v8696
      %v8698 = vpop.xlane.xlu0 %8697
      %v8699 = vadd.f32 %v8638, %v8639
      %8700 = vadd.xlane.f32.xlu0 %v8699
      %v8701 = vpop.xlane.xlu0 %8700
      %v8702 = vadd.f32 %v8640, %v8641
      %8703 = vadd.xlane.f32.xlu0 %v8702
      %v8704 = vpop.xlane.xlu0 %8703
      %v8705 = vadd.f32 %v8642, %v8643
      %8706 = vadd.xlane.f32.xlu0 %v8705
      %v8707 = vpop.xlane.xlu0 %8706
      %v8708 = vrcp.pop 256.0
      %v8709 = vmul.f32 %v8650, %v8708
      %v8710 = vmul.f32 %v8653, %v8708
      %v8711 = vmul.f32 %v8656, %v8708
      %v8712 = vmul.f32 %v8659, %v8708
      %v8713 = vmul.f32 %v8662, %v8708
      %v8714 = vmul.f32 %v8665, %v8708
      %v8715 = vmul.f32 %v8668, %v8708
      %v8716 = vmul.f32 %v8671, %v8708
      %v8717 = vmul.f32 %v8674, %v8708
      %v8718 = vmul.f32 %v8677, %v8708
      %v8719 = vmul.f32 %v8680, %v8708
      %v8720 = vmul.f32 %v8683, %v8708
      %v8721 = vmul.f32 %v8686, %v8708
      %v8722 = vmul.f32 %v8689, %v8708
      %v8723 = vmul.f32 %v8692, %v8708
      %v8724 = vmul.f32 %v8695, %v8708
      %v8725 = vmul.f32 %v8698, %v8708
      %v8726 = vmul.f32 %v8701, %v8708
      %v8727 = vmul.f32 %v8704, %v8708
      %v8728 = vmul.f32 %v8707, %v8708
      %v8729 = vsub.f32 %v8604, %v8709
      %v8730 = vsub.f32 %v8605, %v8709
      %v8731 = vsub.f32 %v8606, %v8710
      %v8732 = vsub.f32 %v8607, %v8710
      %v8733 = vsub.f32 %v8608, %v8711
      %v8734 = vsub.f32 %v8609, %v8711
      %v8735 = vsub.f32 %v8610, %v8712
      %v8736 = vsub.f32 %v8611, %v8712
      %v8737 = vsub.f32 %v8612, %v8713
      %v8738 = vsub.f32 %v8613, %v8713
      %v8739 = vsub.f32 %v8614, %v8714
      %v8740 = vsub.f32 %v8615, %v8714
      %v8741 = vsub.f32 %v8616, %v8715
      %v8742 = vsub.f32 %v8617, %v8715
      %v8743 = vsub.f32 %v8618, %v8716
      %v8744 = vsub.f32 %v8619, %v8716
      %v8745 = vsub.f32 %v8620, %v8717
      %v8746 = vsub.f32 %v8621, %v8717
      %v8747 = vsub.f32 %v8622, %v8718
      %v8748 = vsub.f32 %v8623, %v8718
      %v8749 = vsub.f32 %v8624, %v8719
      %v8750 = vsub.f32 %v8625, %v8719
      %v8751 = vsub.f32 %v8626, %v8720
      %v8752 = vsub.f32 %v8627, %v8720
      %v8753 = vsub.f32 %v8628, %v8721
      %v8754 = vsub.f32 %v8629, %v8721
      %v8755 = vsub.f32 %v8630, %v8722
      %v8756 = vsub.f32 %v8631, %v8722
      %v8757 = vsub.f32 %v8632, %v8723
      %v8758 = vsub.f32 %v8633, %v8723
      %v8759 = vsub.f32 %v8634, %v8724
      %v8760 = vsub.f32 %v8635, %v8724
      %v8761 = vsub.f32 %v8636, %v8725
      %v8762 = vsub.f32 %v8637, %v8725
      %v8763 = vsub.f32 %v8638, %v8726
      %v8764 = vsub.f32 %v8639, %v8726
      %v8765 = vsub.f32 %v8640, %v8727
      %v8766 = vsub.f32 %v8641, %v8727
      %v8767 = vsub.f32 %v8642, %v8728
      %v8768 = vsub.f32 %v8643, %v8728
      %v8769 = vmul.f32 %v8729, %v8729
      %v8770 = vmul.f32 %v8730, %v8730
      %v8771 = vmul.f32 %v8731, %v8731
      %v8772 = vmul.f32 %v8732, %v8732
      %v8773 = vmul.f32 %v8733, %v8733
      %v8774 = vmul.f32 %v8734, %v8734
      %v8775 = vmul.f32 %v8735, %v8735
      %v8776 = vmul.f32 %v8736, %v8736
      %v8777 = vmul.f32 %v8737, %v8737
      %v8778 = vmul.f32 %v8738, %v8738
      %v8779 = vmul.f32 %v8739, %v8739
      %v8780 = vmul.f32 %v8740, %v8740
      %v8781 = vmul.f32 %v8741, %v8741
      %v8782 = vmul.f32 %v8742, %v8742
      %v8783 = vmul.f32 %v8743, %v8743
      %v8784 = vmul.f32 %v8744, %v8744
      %v8785 = vmul.f32 %v8745, %v8745
      %v8786 = vmul.f32 %v8746, %v8746
      %v8787 = vmul.f32 %v8747, %v8747
      %v8788 = vmul.f32 %v8748, %v8748
      %v8789 = vmul.f32 %v8749, %v8749
      %v8790 = vmul.f32 %v8750, %v8750
      %v8791 = vmul.f32 %v8751, %v8751
      %v8792 = vmul.f32 %v8752, %v8752
      %v8793 = vmul.f32 %v8753, %v8753
      %v8794 = vmul.f32 %v8754, %v8754
      %v8795 = vmul.f32 %v8755, %v8755
      %v8796 = vmul.f32 %v8756, %v8756
      %v8797 = vmul.f32 %v8757, %v8757
      %v8798 = vmul.f32 %v8758, %v8758
      %v8799 = vmul.f32 %v8759, %v8759
      %v8800 = vmul.f32 %v8760, %v8760
      %v8801 = vmul.f32 %v8761, %v8761
      %v8802 = vmul.f32 %v8762, %v8762
      %v8803 = vmul.f32 %v8763, %v8763
      %v8804 = vmul.f32 %v8764, %v8764
      %v8805 = vmul.f32 %v8765, %v8765
      %v8806 = vmul.f32 %v8766, %v8766
      %v8807 = vmul.f32 %v8767, %v8767
      %v8808 = vmul.f32 %v8768, %v8768
      %v8809 = vadd.f32 %v8769, %v8770
      %8810 = vadd.xlane.f32.xlu0 %v8809
      %v8811 = vpop.xlane.xlu0 %8810
      %v8812 = vadd.f32 %v8771, %v8772
      %8813 = vadd.xlane.f32.xlu0 %v8812
      %v8814 = vpop.xlane.xlu0 %8813
      %v8815 = vadd.f32 %v8773, %v8774
      %8816 = vadd.xlane.f32.xlu0 %v8815
      %v8817 = vpop.xlane.xlu0 %8816
      %v8818 = vadd.f32 %v8775, %v8776
      %8819 = vadd.xlane.f32.xlu0 %v8818
      %v8820 = vpop.xlane.xlu0 %8819
      %v8821 = vadd.f32 %v8777, %v8778
      %8822 = vadd.xlane.f32.xlu0 %v8821
      %v8823 = vpop.xlane.xlu0 %8822
      %v8824 = vadd.f32 %v8779, %v8780
      %8825 = vadd.xlane.f32.xlu0 %v8824
      %v8826 = vpop.xlane.xlu0 %8825
      %v8827 = vadd.f32 %v8781, %v8782
      %8828 = vadd.xlane.f32.xlu0 %v8827
      %v8829 = vpop.xlane.xlu0 %8828
      %v8830 = vadd.f32 %v8783, %v8784
      %8831 = vadd.xlane.f32.xlu0 %v8830
      %v8832 = vpop.xlane.xlu0 %8831
      %v8833 = vadd.f32 %v8785, %v8786
      %8834 = vadd.xlane.f32.xlu0 %v8833
      %v8835 = vpop.xlane.xlu0 %8834
      %v8836 = vadd.f32 %v8787, %v8788
      %8837 = vadd.xlane.f32.xlu0 %v8836
      %v8838 = vpop.xlane.xlu0 %8837
      %v8839 = vadd.f32 %v8789, %v8790
      %8840 = vadd.xlane.f32.xlu0 %v8839
      %v8841 = vpop.xlane.xlu0 %8840
      %v8842 = vadd.f32 %v8791, %v8792
      %8843 = vadd.xlane.f32.xlu0 %v8842
      %v8844 = vpop.xlane.xlu0 %8843
      %v8845 = vadd.f32 %v8793, %v8794
      %8846 = vadd.xlane.f32.xlu0 %v8845
      %v8847 = vpop.xlane.xlu0 %8846
      %v8848 = vadd.f32 %v8795, %v8796
      %8849 = vadd.xlane.f32.xlu0 %v8848
      %v8850 = vpop.xlane.xlu0 %8849
      %v8851 = vadd.f32 %v8797, %v8798
      %8852 = vadd.xlane.f32.xlu0 %v8851
      %v8853 = vpop.xlane.xlu0 %8852
      %v8854 = vadd.f32 %v8799, %v8800
      %8855 = vadd.xlane.f32.xlu0 %v8854
      %v8856 = vpop.xlane.xlu0 %8855
      %v8857 = vadd.f32 %v8801, %v8802
      %8858 = vadd.xlane.f32.xlu0 %v8857
      %v8859 = vpop.xlane.xlu0 %8858
      %v8860 = vadd.f32 %v8803, %v8804
      %8861 = vadd.xlane.f32.xlu0 %v8860
      %v8862 = vpop.xlane.xlu0 %8861
      %v8863 = vadd.f32 %v8805, %v8806
      %8864 = vadd.xlane.f32.xlu0 %v8863
      %v8865 = vpop.xlane.xlu0 %8864
      %v8866 = vadd.f32 %v8807, %v8808
      %8867 = vadd.xlane.f32.xlu0 %v8866
      %v8868 = vpop.xlane.xlu0 %8867
      %v8869 = vmul.f32 %v8811, %v8708
      %v8870 = vmul.f32 %v8814, %v8708
      %v8871 = vmul.f32 %v8817, %v8708
      %v8872 = vmul.f32 %v8820, %v8708
      %v8873 = vmul.f32 %v8823, %v8708
      %v8874 = vmul.f32 %v8826, %v8708
      %v8875 = vmul.f32 %v8829, %v8708
      %v8876 = vmul.f32 %v8832, %v8708
      %v8877 = vmul.f32 %v8835, %v8708
      %v8878 = vmul.f32 %v8838, %v8708
      %v8879 = vmul.f32 %v8841, %v8708
      %v8880 = vmul.f32 %v8844, %v8708
      %v8881 = vmul.f32 %v8847, %v8708
      %v8882 = vmul.f32 %v8850, %v8708
      %v8883 = vmul.f32 %v8853, %v8708
      %v8884 = vmul.f32 %v8856, %v8708
      %v8885 = vmul.f32 %v8859, %v8708
      %v8886 = vmul.f32 %v8862, %v8708
      %v8887 = vmul.f32 %v8865, %v8708
      %v8888 = vmul.f32 %v8868, %v8708
      %v8889 = vadd.f32 %v8869, 1e-05
      %v8890 = vadd.f32 %v8870, 1e-05
      %v8891 = vadd.f32 %v8871, 1e-05
      %v8892 = vadd.f32 %v8872, 1e-05
      %v8893 = vadd.f32 %v8873, 1e-05
      %v8894 = vadd.f32 %v8874, 1e-05
      %v8895 = vadd.f32 %v8875, 1e-05
      %v8896 = vadd.f32 %v8876, 1e-05
      %v8897 = vadd.f32 %v8877, 1e-05
      %v8898 = vadd.f32 %v8878, 1e-05
      %v8899 = vadd.f32 %v8879, 1e-05
      %v8900 = vadd.f32 %v8880, 1e-05
      %v8901 = vadd.f32 %v8881, 1e-05
      %v8902 = vadd.f32 %v8882, 1e-05
      %v8903 = vadd.f32 %v8883, 1e-05
      %v8904 = vadd.f32 %v8884, 1e-05
      %v8905 = vadd.f32 %v8885, 1e-05
      %v8906 = vadd.f32 %v8886, 1e-05
      %v8907 = vadd.f32 %v8887, 1e-05
      %v8908 = vadd.f32 %v8888, 1e-05
      %v8909 = vrsqrt.pop %v8889
      %v8910 = vrsqrt.pop %v8890
      %v8911 = vrsqrt.pop %v8891
      %v8912 = vrsqrt.pop %v8892
      %v8913 = vrsqrt.pop %v8893
      %v8914 = vrsqrt.pop %v8894
      %v8915 = vrsqrt.pop %v8895
      %v8916 = vrsqrt.pop %v8896
      %v8917 = vrsqrt.pop %v8897
      %v8918 = vrsqrt.pop %v8898
      %v8919 = vrsqrt.pop %v8899
      %v8920 = vrsqrt.pop %v8900
      %v8921 = vrsqrt.pop %v8901
      %v8922 = vrsqrt.pop %v8902
      %v8923 = vrsqrt.pop %v8903
      %v8924 = vrsqrt.pop %v8904
      %v8925 = vrsqrt.pop %v8905
      %v8926 = vrsqrt.pop %v8906
      %v8927 = vrsqrt.pop %v8907
      %v8928 = vrsqrt.pop %v8908
      %v8929 = vmul.f32 %v8729, %v8909
      %v8930 = vmul.f32 %v8730, %v8909
      %v8931 = vmul.f32 %v8731, %v8910
      %v8932 = vmul.f32 %v8732, %v8910
      %v8933 = vmul.f32 %v8733, %v8911
      %v8934 = vmul.f32 %v8734, %v8911
      %v8935 = vmul.f32 %v8735, %v8912
      %v8936 = vmul.f32 %v8736, %v8912
      %v8937 = vmul.f32 %v8737, %v8913
      %v8938 = vmul.f32 %v8738, %v8913
      %v8939 = vmul.f32 %v8739, %v8914
      %v8940 = vmul.f32 %v8740, %v8914
      %v8941 = vmul.f32 %v8741, %v8915
      %v8942 = vmul.f32 %v8742, %v8915
      %v8943 = vmul.f32 %v8743, %v8916
      %v8944 = vmul.f32 %v8744, %v8916
      %v8945 = vmul.f32 %v8745, %v8917
      %v8946 = vmul.f32 %v8746, %v8917
      %v8947 = vmul.f32 %v8747, %v8918
      %v8948 = vmul.f32 %v8748, %v8918
      %v8949 = vmul.f32 %v8749, %v8919
      %v8950 = vmul.f32 %v8750, %v8919
      %v8951 = vmul.f32 %v8751, %v8920
      %v8952 = vmul.f32 %v8752, %v8920
      %v8953 = vmul.f32 %v8753, %v8921
      %v8954 = vmul.f32 %v8754, %v8921
      %v8955 = vmul.f32 %v8755, %v8922
      %v8956 = vmul.f32 %v8756, %v8922
      %v8957 = vmul.f32 %v8757, %v8923
      %v8958 = vmul.f32 %v8758, %v8923
      %v8959 = vmul.f32 %v8759, %v8924
      %v8960 = vmul.f32 %v8760, %v8924
      %v8961 = vmul.f32 %v8761, %v8925
      %v8962 = vmul.f32 %v8762, %v8925
      %v8963 = vmul.f32 %v8763, %v8926
      %v8964 = vmul.f32 %v8764, %v8926
      %v8965 = vmul.f32 %v8765, %v8927
      %v8966 = vmul.f32 %v8766, %v8927
      %v8967 = vmul.f32 %v8767, %v8928
      %v8968 = vmul.f32 %v8768, %v8928
      %v8970 = vlaneseq
      %v8971 = vshrl.u32 %v8970, 7
      %v8972 = vsub.s32 0, %v8971
      %v8973 = vrot.slane %v8645, %v8972
      %v8974 = vlaneseq
      %v8975 = vshrl.u32 %v8974, 7
      %v8976 = vsub.s32 1, %v8975
      %v8977 = vrot.slane %v8645, %v8976
      %v8980 = vmul.f32 %v8929, %v8973
      %v8981 = vmul.f32 %v8930, %v8977
      %v8982 = vmul.f32 %v8931, %v8973
      %v8983 = vmul.f32 %v8932, %v8977
      %v8984 = vmul.f32 %v8933, %v8973
      %v8985 = vmul.f32 %v8934, %v8977
      %v8986 = vmul.f32 %v8935, %v8973
      %v8987 = vmul.f32 %v8936, %v8977
      %v8988 = vmul.f32 %v8937, %v8973
      %v8989 = vmul.f32 %v8938, %v8977
      %v8990 = vmul.f32 %v8939, %v8973
      %v8991 = vmul.f32 %v8940, %v8977
      %v8992 = vmul.f32 %v8941, %v8973
      %v8993 = vmul.f32 %v8942, %v8977
      %v8994 = vmul.f32 %v8943, %v8973
      %v8995 = vmul.f32 %v8944, %v8977
      %v8996 = vmul.f32 %v8945, %v8973
      %v8997 = vmul.f32 %v8946, %v8977
      %v8998 = vmul.f32 %v8947, %v8973
      %v8999 = vmul.f32 %v8948, %v8977
      %v9000 = vmul.f32 %v8949, %v8973
      %v9001 = vmul.f32 %v8950, %v8977
      %v9002 = vmul.f32 %v8951, %v8973
      %v9003 = vmul.f32 %v8952, %v8977
      %v9004 = vmul.f32 %v8953, %v8973
      %v9005 = vmul.f32 %v8954, %v8977
      %v9006 = vmul.f32 %v8955, %v8973
      %v9007 = vmul.f32 %v8956, %v8977
      %v9008 = vmul.f32 %v8957, %v8973
      %v9009 = vmul.f32 %v8958, %v8977
      %v9010 = vmul.f32 %v8959, %v8973
      %v9011 = vmul.f32 %v8960, %v8977
      %v9012 = vmul.f32 %v8961, %v8973
      %v9013 = vmul.f32 %v8962, %v8977
      %v9014 = vmul.f32 %v8963, %v8973
      %v9015 = vmul.f32 %v8964, %v8977
      %v9016 = vmul.f32 %v8965, %v8973
      %v9017 = vmul.f32 %v8966, %v8977
      %v9018 = vmul.f32 %v8967, %v8973
      %v9019 = vmul.f32 %v8968, %v8977
      %v9021 = vlaneseq
      %v9022 = vshrl.u32 %v9021, 7
      %v9023 = vsub.s32 0, %v9022
      %v9024 = vrot.slane %v8647, %v9023
      %v9025 = vlaneseq
      %v9026 = vshrl.u32 %v9025, 7
      %v9027 = vsub.s32 1, %v9026
      %v9028 = vrot.slane %v8647, %v9027
      %v9031 = vadd.f32 %v8980, %v9024
      %v9032 = vadd.f32 %v8981, %v9028
      %v9033 = vadd.f32 %v8982, %v9024
      %v9034 = vadd.f32 %v8983, %v9028
      %v9035 = vadd.f32 %v8984, %v9024
      %v9036 = vadd.f32 %v8985, %v9028
      %v9037 = vadd.f32 %v8986, %v9024
      %v9038 = vadd.f32 %v8987, %v9028
      %v9039 = vadd.f32 %v8988, %v9024
      %v9040 = vadd.f32 %v8989, %v9028
      %v9041 = vadd.f32 %v8990, %v9024
      %v9042 = vadd.f32 %v8991, %v9028
      %v9043 = vadd.f32 %v8992, %v9024
      %v9044 = vadd.f32 %v8993, %v9028
      %v9045 = vadd.f32 %v8994, %v9024
      %v9046 = vadd.f32 %v8995, %v9028
      %v9047 = vadd.f32 %v8996, %v9024
      %v9048 = vadd.f32 %v8997, %v9028
      %v9049 = vadd.f32 %v8998, %v9024
      %v9050 = vadd.f32 %v8999, %v9028
      %v9051 = vadd.f32 %v9000, %v9024
      %v9052 = vadd.f32 %v9001, %v9028
      %v9053 = vadd.f32 %v9002, %v9024
      %v9054 = vadd.f32 %v9003, %v9028
      %v9055 = vadd.f32 %v9004, %v9024
      %v9056 = vadd.f32 %v9005, %v9028
      %v9057 = vadd.f32 %v9006, %v9024
      %v9058 = vadd.f32 %v9007, %v9028
      %v9059 = vadd.f32 %v9008, %v9024
      %v9060 = vadd.f32 %v9009, %v9028
      %v9061 = vadd.f32 %v9010, %v9024
      %v9062 = vadd.f32 %v9011, %v9028
      %v9063 = vadd.f32 %v9012, %v9024
      %v9064 = vadd.f32 %v9013, %v9028
      %v9065 = vadd.f32 %v9014, %v9024
      %v9066 = vadd.f32 %v9015, %v9028
      %v9067 = vadd.f32 %v9016, %v9024
      %v9068 = vadd.f32 %v9017, %v9028
      %v9069 = vadd.f32 %v9018, %v9024
      %v9070 = vadd.f32 %v9019, %v9028
      %v9071 = vpack.c.bf16 %v9033, %v9031
      %v9072 = vpack.c.bf16 %v9034, %v9032
      %v9073 = vpack.c.bf16 %v9037, %v9035
      %v9074 = vpack.c.bf16 %v9038, %v9036
      %v9075 = vpack.c.bf16 %v9041, %v9039
      %v9076 = vpack.c.bf16 %v9042, %v9040
      %v9077 = vpack.c.bf16 %v9045, %v9043
      %v9078 = vpack.c.bf16 %v9046, %v9044
      %v9079 = vpack.c.bf16 %v9049, %v9047
      %v9080 = vpack.c.bf16 %v9050, %v9048
      %v9081 = vpack.c.bf16 %v9053, %v9051
      %v9082 = vpack.c.bf16 %v9054, %v9052
      %v9083 = vpack.c.bf16 %v9057, %v9055
      %v9084 = vpack.c.bf16 %v9058, %v9056
      %v9085 = vpack.c.bf16 %v9061, %v9059
      %v9086 = vpack.c.bf16 %v9062, %v9060
      %v9087 = vpack.c.bf16 %v9065, %v9063
      %v9088 = vpack.c.bf16 %v9066, %v9064
      %v9089 = vpack.c.bf16 %v9069, %v9067
      %v9090 = vpack.c.bf16 %v9070, %v9068
      %s9091 = smul.u32 %s615, 128
      %s9092 = smul.addr %s9091, 4
      %s9093 = scalar_lea.vmem [#allocation14], %s9092
      %v9094 = vld [vmem:[%s9093] sm:$0xff]
      %v9095 = vld [vmem:[%s9093 + $0x8] sm:$0xff]
      %v9096 = vld [vmem:[%s9093 + $0x10] sm:$0xff]
      %v9097 = vld [vmem:[%s9093 + $0x18] sm:$0xff]
      %v9098 = vld [vmem:[%s9093 + $0x20] sm:$0xff]
      %v9099 = vld [vmem:[%s9093 + $0x28] sm:$0xff]
      %v9100 = vld [vmem:[%s9093 + $0x30] sm:$0xff]
      %v9101 = vld [vmem:[%s9093 + $0x38] sm:$0xff]
      %v9102 = vld [vmem:[%s9093 + $0x40] sm:$0xff]
      %v9103 = vld [vmem:[%s9093 + $0x48] sm:$0xff]
      %v9104 = vld [vmem:[%s9093 + $0x50] sm:$0xff]
      %v9105 = vld [vmem:[%s9093 + $0x58] sm:$0xff]
      %v9106 = vld [vmem:[%s9093 + $0x60] sm:$0xff]
      %v9107 = vld [vmem:[%s9093 + $0x68] sm:$0xff]
      %v9108 = vld [vmem:[%s9093 + $0x70] sm:$0xff]
      %v9109 = vld [vmem:[%s9093 + $0x78] sm:$0xff]
      %v9110 = vld [vmem:[%s9093 + $0x80] sm:$0xff]
      %v9111 = vld [vmem:[%s9093 + $0x88] sm:$0xff]
      %v9112 = vld [vmem:[%s9093 + $0x90] sm:$0xff]
      %v9113 = vld [vmem:[%s9093 + $0x98] sm:$0xff]
      %v9114 = vld [vmem:[%s9093 + $0xa0] sm:$0xff]
      %v9115 = vld [vmem:[%s9093 + $0xa8] sm:$0xff]
      %v9116 = vld [vmem:[%s9093 + $0xb0] sm:$0xff]
      %v9117 = vld [vmem:[%s9093 + $0xb8] sm:$0xff]
      %v9118 = vld [vmem:[%s9093 + $0xc0] sm:$0xff]
      %v9119 = vld [vmem:[%s9093 + $0xc8] sm:$0xff]
      %v9120 = vld [vmem:[%s9093 + $0xd0] sm:$0xff]
      %v9121 = vld [vmem:[%s9093 + $0xd8] sm:$0xff]
      %v9122 = vld [vmem:[%s9093 + $0xe0] sm:$0xff]
      %v9123 = vld [vmem:[%s9093 + $0xe8] sm:$0xff]
      %v9124 = vld [vmem:[%s9093 + $0xf0] sm:$0xff]
      %v9125 = vld [vmem:[%s9093 + $0xf8] sm:$0xff]
      %v9126 = vld [vmem:[%s9093 + $0x100] sm:$0xff]
      %v9127 = vld [vmem:[%s9093 + $0x108] sm:$0xff]
      %v9128 = vld [vmem:[%s9093 + $0x110] sm:$0xff]
      %v9129 = vld [vmem:[%s9093 + $0x118] sm:$0xff]
      %v9130 = vld [vmem:[%s9093 + $0x120] sm:$0xff]
      %v9131 = vld [vmem:[%s9093 + $0x128] sm:$0xff]
      %v9132 = vld [vmem:[%s9093 + $0x130] sm:$0xff]
      %v9133 = vld [vmem:[%s9093 + $0x138] sm:$0xff]
      %v9134 = vld [vmem:[%s9093 + $0x140] sm:$0xff]
      %v9135 = vld [vmem:[%s9093 + $0x148] sm:$0xff]
      %v9136 = vld [vmem:[%s9093 + $0x150] sm:$0xff]
      %v9137 = vld [vmem:[%s9093 + $0x158] sm:$0xff]
      %v9138 = vld [vmem:[%s9093 + $0x160] sm:$0xff]
      %v9139 = vld [vmem:[%s9093 + $0x168] sm:$0xff]
      %v9140 = vld [vmem:[%s9093 + $0x170] sm:$0xff]
      %v9141 = vld [vmem:[%s9093 + $0x178] sm:$0xff]
      %v9142 = vld [vmem:[%s9093 + $0x180] sm:$0xff]
      %v9143 = vld [vmem:[%s9093 + $0x188] sm:$0xff]
      %v9144 = vld [vmem:[%s9093 + $0x190] sm:$0xff]
      %v9145 = vld [vmem:[%s9093 + $0x198] sm:$0xff]
      %v9146 = vld [vmem:[%s9093 + $0x1a0] sm:$0xff]
      %v9147 = vld [vmem:[%s9093 + $0x1a8] sm:$0xff]
      %v9148 = vld [vmem:[%s9093 + $0x1b0] sm:$0xff]
      %v9149 = vld [vmem:[%s9093 + $0x1b8] sm:$0xff]
      %v9150 = vld [vmem:[%s9093 + $0x1c0] sm:$0xff]
      %v9151 = vld [vmem:[%s9093 + $0x1c8] sm:$0xff]
      %v9152 = vld [vmem:[%s9093 + $0x1d0] sm:$0xff]
      %v9153 = vld [vmem:[%s9093 + $0x1d8] sm:$0xff]
      %v9154 = vld [vmem:[%s9093 + $0x1e0] sm:$0xff]
      %v9155 = vld [vmem:[%s9093 + $0x1e8] sm:$0xff]
      %v9156 = vld [vmem:[%s9093 + $0x1f0] sm:$0xff]
      %v9157 = vld [vmem:[%s9093 + $0x1f8] sm:$0xff]
      %s9158 = smul.u32 %s615, 4
      %s9159 = scalar_lea.vmem [#allocation16], %s9158
      %v9160 = vld [vmem:[%s9159] sm:$0xf]
      %v9162 = vlaneseq
      %v9163 = vshrl.u32 %v9162, 7
      %v9164 = vsub.s32 0, %v9163
      %v9165 = vrot.slane %v9160, %v9164
      %v9166 = vlaneseq
      %v9167 = vshrl.u32 %v9166, 7
      %v9168 = vsub.s32 1, %v9167
      %v9169 = vrot.slane %v9160, %v9168
      %v9170 = vlaneseq
      %v9171 = vshrl.u32 %v9170, 7
      %v9172 = vsub.s32 2, %v9171
      %v9173 = vrot.slane %v9160, %v9172
      %v9174 = vlaneseq
      %v9175 = vshrl.u32 %v9174, 7
      %v9176 = vsub.s32 3, %v9175
      %v9177 = vrot.slane %v9160, %v9176
      %v9246 = vunpack.c.l.b16 %v9094
      %v9247 = vunpack.c.h.b16 %v9094
      %v9248 = vunpack.c.l.b16 %v9095
      %v9249 = vunpack.c.h.b16 %v9095
      %v9250 = vunpack.c.l.b16 %v9096
      %v9251 = vunpack.c.h.b16 %v9096
      %v9252 = vunpack.c.l.b16 %v9097
      %v9253 = vunpack.c.h.b16 %v9097
      %v9254 = vunpack.c.l.b16 %v9098
      %v9255 = vunpack.c.h.b16 %v9098
      %v9256 = vunpack.c.l.b16 %v9099
      %v9257 = vunpack.c.h.b16 %v9099
      %v9258 = vunpack.c.l.b16 %v9100
      %v9259 = vunpack.c.h.b16 %v9100
      %v9260 = vunpack.c.l.b16 %v9101
      %v9261 = vunpack.c.h.b16 %v9101
      %v9262 = vunpack.c.l.b16 %v9102
      %v9263 = vunpack.c.h.b16 %v9102
      %v9264 = vunpack.c.l.b16 %v9103
      %v9265 = vunpack.c.h.b16 %v9103
      %v9266 = vunpack.c.l.b16 %v9104
      %v9267 = vunpack.c.h.b16 %v9104
      %v9268 = vunpack.c.l.b16 %v9105
      %v9269 = vunpack.c.h.b16 %v9105
      %v9270 = vunpack.c.l.b16 %v9106
      %v9271 = vunpack.c.h.b16 %v9106
      %v9272 = vunpack.c.l.b16 %v9107
      %v9273 = vunpack.c.h.b16 %v9107
      %v9274 = vunpack.c.l.b16 %v9108
      %v9275 = vunpack.c.h.b16 %v9108
      %v9276 = vunpack.c.l.b16 %v9109
      %v9277 = vunpack.c.h.b16 %v9109
      %v9278 = vunpack.c.l.b16 %v9110
      %v9279 = vunpack.c.h.b16 %v9110
      %v9280 = vunpack.c.l.b16 %v9111
      %v9281 = vunpack.c.h.b16 %v9111
      %v9282 = vunpack.c.l.b16 %v9112
      %v9283 = vunpack.c.h.b16 %v9112
      %v9284 = vunpack.c.l.b16 %v9113
      %v9285 = vunpack.c.h.b16 %v9113
      %v9286 = vunpack.c.l.b16 %v9114
      %v9287 = vunpack.c.h.b16 %v9114
      %v9288 = vunpack.c.l.b16 %v9115
      %v9289 = vunpack.c.h.b16 %v9115
      %v9290 = vunpack.c.l.b16 %v9116
      %v9291 = vunpack.c.h.b16 %v9116
      %v9292 = vunpack.c.l.b16 %v9117
      %v9293 = vunpack.c.h.b16 %v9117
      %v9294 = vunpack.c.l.b16 %v9118
      %v9295 = vunpack.c.h.b16 %v9118
      %v9296 = vunpack.c.l.b16 %v9119
      %v9297 = vunpack.c.h.b16 %v9119
      %v9298 = vunpack.c.l.b16 %v9120
      %v9299 = vunpack.c.h.b16 %v9120
      %v9300 = vunpack.c.l.b16 %v9121
      %v9301 = vunpack.c.h.b16 %v9121
      %v9302 = vunpack.c.l.b16 %v9122
      %v9303 = vunpack.c.h.b16 %v9122
      %v9304 = vunpack.c.l.b16 %v9123
      %v9305 = vunpack.c.h.b16 %v9123
      %v9306 = vunpack.c.l.b16 %v9124
      %v9307 = vunpack.c.h.b16 %v9124
      %v9308 = vunpack.c.l.b16 %v9125
      %v9309 = vunpack.c.h.b16 %v9125
      %v9310 = vunpack.c.l.b16 %v9126
      %v9311 = vunpack.c.h.b16 %v9126
      %v9312 = vunpack.c.l.b16 %v9127
      %v9313 = vunpack.c.h.b16 %v9127
      %v9314 = vunpack.c.l.b16 %v9128
      %v9315 = vunpack.c.h.b16 %v9128
      %v9316 = vunpack.c.l.b16 %v9129
      %v9317 = vunpack.c.h.b16 %v9129
      %v9318 = vunpack.c.l.b16 %v9130
      %v9319 = vunpack.c.h.b16 %v9130
      %v9320 = vunpack.c.l.b16 %v9131
      %v9321 = vunpack.c.h.b16 %v9131
      %v9322 = vunpack.c.l.b16 %v9132
      %v9323 = vunpack.c.h.b16 %v9132
      %v9324 = vunpack.c.l.b16 %v9133
      %v9325 = vunpack.c.h.b16 %v9133
      %v9326 = vunpack.c.l.b16 %v9134
      %v9327 = vunpack.c.h.b16 %v9134
      %v9328 = vunpack.c.l.b16 %v9135
      %v9329 = vunpack.c.h.b16 %v9135
      %v9330 = vunpack.c.l.b16 %v9136
      %v9331 = vunpack.c.h.b16 %v9136
      %v9332 = vunpack.c.l.b16 %v9137
      %v9333 = vunpack.c.h.b16 %v9137
      %v9334 = vunpack.c.l.b16 %v9138
      %v9335 = vunpack.c.h.b16 %v9138
      %v9336 = vunpack.c.l.b16 %v9139
      %v9337 = vunpack.c.h.b16 %v9139
      %v9338 = vunpack.c.l.b16 %v9140
      %v9339 = vunpack.c.h.b16 %v9140
      %v9340 = vunpack.c.l.b16 %v9141
      %v9341 = vunpack.c.h.b16 %v9141
      %v9342 = vunpack.c.l.b16 %v9142
      %v9343 = vunpack.c.h.b16 %v9142
      %v9344 = vunpack.c.l.b16 %v9143
      %v9345 = vunpack.c.h.b16 %v9143
      %v9346 = vunpack.c.l.b16 %v9144
      %v9347 = vunpack.c.h.b16 %v9144
      %v9348 = vunpack.c.l.b16 %v9145
      %v9349 = vunpack.c.h.b16 %v9145
      %v9350 = vunpack.c.l.b16 %v9146
      %v9351 = vunpack.c.h.b16 %v9146
      %v9352 = vunpack.c.l.b16 %v9147
      %v9353 = vunpack.c.h.b16 %v9147
      %v9354 = vunpack.c.l.b16 %v9148
      %v9355 = vunpack.c.h.b16 %v9148
      %v9356 = vunpack.c.l.b16 %v9149
      %v9357 = vunpack.c.h.b16 %v9149
      %v9358 = vunpack.c.l.b16 %v9150
      %v9359 = vunpack.c.h.b16 %v9150
      %v9360 = vunpack.c.l.b16 %v9151
      %v9361 = vunpack.c.h.b16 %v9151
      %v9362 = vunpack.c.l.b16 %v9152
      %v9363 = vunpack.c.h.b16 %v9152
      %v9364 = vunpack.c.l.b16 %v9153
      %v9365 = vunpack.c.h.b16 %v9153
      %v9366 = vunpack.c.l.b16 %v9154
      %v9367 = vunpack.c.h.b16 %v9154
      %v9368 = vunpack.c.l.b16 %v9155
      %v9369 = vunpack.c.h.b16 %v9155
      %v9370 = vunpack.c.l.b16 %v9156
      %v9371 = vunpack.c.h.b16 %v9156
      %v9372 = vunpack.c.l.b16 %v9157
      %v9373 = vunpack.c.h.b16 %v9157
      %v9374 = vpack.c.b16 %v9250, %v9246
      %v9375 = vpack.c.b16 %v9251, %v9247
      %v9376 = vpack.c.b16 %v9252, %v9248
      %v9377 = vpack.c.b16 %v9253, %v9249
      %v9378 = vpack.c.b16 %v9258, %v9254
      %v9379 = vpack.c.b16 %v9259, %v9255
      %v9380 = vpack.c.b16 %v9260, %v9256
      %v9381 = vpack.c.b16 %v9261, %v9257
      %v9382 = vpack.c.b16 %v9266, %v9262
      %v9383 = vpack.c.b16 %v9267, %v9263
      %v9384 = vpack.c.b16 %v9268, %v9264
      %v9385 = vpack.c.b16 %v9269, %v9265
      %v9386 = vpack.c.b16 %v9274, %v9270
      %v9387 = vpack.c.b16 %v9275, %v9271
      %v9388 = vpack.c.b16 %v9276, %v9272
      %v9389 = vpack.c.b16 %v9277, %v9273
      %v9390 = vpack.c.b16 %v9282, %v9278
      %v9391 = vpack.c.b16 %v9283, %v9279
      %v9392 = vpack.c.b16 %v9284, %v9280
      %v9393 = vpack.c.b16 %v9285, %v9281
      %v9394 = vpack.c.b16 %v9290, %v9286
      %v9395 = vpack.c.b16 %v9291, %v9287
      %v9396 = vpack.c.b16 %v9292, %v9288
      %v9397 = vpack.c.b16 %v9293, %v9289
      %v9398 = vpack.c.b16 %v9298, %v9294
      %v9399 = vpack.c.b16 %v9299, %v9295
      %v9400 = vpack.c.b16 %v9300, %v9296
      %v9401 = vpack.c.b16 %v9301, %v9297
      %v9402 = vpack.c.b16 %v9306, %v9302
      %v9403 = vpack.c.b16 %v9307, %v9303
      %v9404 = vpack.c.b16 %v9308, %v9304
      %v9405 = vpack.c.b16 %v9309, %v9305
      %v9406 = vpack.c.b16 %v9314, %v9310
      %v9407 = vpack.c.b16 %v9315, %v9311
      %v9408 = vpack.c.b16 %v9316, %v9312
      %v9409 = vpack.c.b16 %v9317, %v9313
      %v9410 = vpack.c.b16 %v9322, %v9318
      %v9411 = vpack.c.b16 %v9323, %v9319
      %v9412 = vpack.c.b16 %v9324, %v9320
      %v9413 = vpack.c.b16 %v9325, %v9321
      %v9414 = vpack.c.b16 %v9330, %v9326
      %v9415 = vpack.c.b16 %v9331, %v9327
      %v9416 = vpack.c.b16 %v9332, %v9328
      %v9417 = vpack.c.b16 %v9333, %v9329
      %v9418 = vpack.c.b16 %v9338, %v9334
      %v9419 = vpack.c.b16 %v9339, %v9335
      %v9420 = vpack.c.b16 %v9340, %v9336
      %v9421 = vpack.c.b16 %v9341, %v9337
      %v9422 = vpack.c.b16 %v9346, %v9342
      %v9423 = vpack.c.b16 %v9347, %v9343
      %v9424 = vpack.c.b16 %v9348, %v9344
      %v9425 = vpack.c.b16 %v9349, %v9345
      %v9426 = vpack.c.b16 %v9354, %v9350
      %v9427 = vpack.c.b16 %v9355, %v9351
      %v9428 = vpack.c.b16 %v9356, %v9352
      %v9429 = vpack.c.b16 %v9357, %v9353
      %v9430 = vpack.c.b16 %v9362, %v9358
      %v9431 = vpack.c.b16 %v9363, %v9359
      %v9432 = vpack.c.b16 %v9364, %v9360
      %v9433 = vpack.c.b16 %v9365, %v9361
      %v9434 = vpack.c.b16 %v9370, %v9366
      %v9435 = vpack.c.b16 %v9371, %v9367
      %v9436 = vpack.c.b16 %v9372, %v9368
      %v9437 = vpack.c.b16 %v9373, %v9369
      %9502 = vmatprep.subr.bf16.mxu0 %v9375
      %9503 = vmatpush1.bf16.msra.mxu0 %v9374
      %9504 = vmatprep.subr.bf16.mxu0 %v9379
      %9505 = vmatpush1.bf16.msra.mxu0 %v9378
      %9506 = vmatprep.subr.bf16.mxu0 %v9383
      %9507 = vmatpush1.bf16.msra.mxu0 %v9382
      %9508 = vmatprep.subr.bf16.mxu0 %v9387
      %9509 = vmatpush1.bf16.msra.mxu0 %v9386
      %9510 = vmatprep.subr.bf16.mxu0 %v9391
      %9511 = vmatpush1.bf16.msra.mxu0 %v9390
      %9512 = vmatprep.subr.bf16.mxu0 %v9395
      %9513 = vmatpush1.bf16.msra.mxu0 %v9394
      %9514 = vmatprep.subr.bf16.mxu0 %v9399
      %9515 = vmatpush1.bf16.msra.mxu0 %v9398
      %9516 = vmatprep.subr.bf16.mxu0 %v9403
      %9517 = vmatpush1.bf16.msra.mxu0 %v9402
      %9518 = vmatprep.subr.bf16.mxu0 %v9407
      %9519 = vmatpush1.bf16.msra.mxu0 %v9406
      %9520 = vmatprep.subr.bf16.mxu0 %v9411
      %9521 = vmatpush1.bf16.msra.mxu0 %v9410
      %9522 = vmatprep.subr.bf16.mxu0 %v9415
      %9523 = vmatpush1.bf16.msra.mxu0 %v9414
      %9524 = vmatprep.subr.bf16.mxu0 %v9419
      %9525 = vmatpush1.bf16.msra.mxu0 %v9418
      %9526 = vmatprep.subr.bf16.mxu0 %v9423
      %9527 = vmatpush1.bf16.msra.mxu0 %v9422
      %9528 = vmatprep.subr.bf16.mxu0 %v9427
      %9529 = vmatpush1.bf16.msra.mxu0 %v9426
      %9530 = vmatprep.subr.bf16.mxu0 %v9431
      %9531 = vmatpush1.bf16.msra.mxu0 %v9430
      %9532 = vmatprep.subr.bf16.mxu0 %v9435
      %9533 = vmatpush1.bf16.msra.mxu0 %v9434
      %9534 = vmatprep.mubr.bf16.mxu0 %v9072
      %9535 = vmatmul.mubr.bf16.gmra.mrb[0].mxu0 %v9071
      %v9536 = vpop.f32.mrb[0].mxu0
      %v9537 = vadd.f32 %v9165, %v9536
      %v9538 = vpop.f32.mrb[0].mxu0
      %v9539 = vadd.f32 %v9169, %v9538
      %v9540 = vpop.f32.mrb[0].mxu0
      %v9541 = vadd.f32 %v9165, %v9540
      %v9542 = vpop.f32.mrb[0].mxu0
      %v9543 = vadd.f32 %v9169, %v9542
      %9544 = vmatprep.mubr.bf16.mxu0 %v9074
      %9545 = vmatmul.mubr.bf16.gmra.mrb[0].mxu0 %v9073
      %v9546 = vpop.f32.mrb[0].mxu0
      %v9547 = vadd.f32 %v9165, %v9546
      %v9548 = vpop.f32.mrb[0].mxu0
      %v9549 = vadd.f32 %v9169, %v9548
      %v9550 = vpop.f32.mrb[0].mxu0
      %v9551 = vadd.f32 %v9165, %v9550
      %v9552 = vpop.f32.mrb[0].mxu0
      %v9553 = vadd.f32 %v9169, %v9552
      %9554 = vmatprep.mubr.bf16.mxu0 %v9076
      %9555 = vmatmul.mubr.bf16.gmra.mrb[0].mxu0 %v9075
      %v9556 = vpop.f32.mrb[0].mxu0
      %v9557 = vadd.f32 %v9165, %v9556
      %v9558 = vpop.f32.mrb[0].mxu0
      %v9559 = vadd.f32 %v9169, %v9558
      %v9560 = vpop.f32.mrb[0].mxu0
      %v9561 = vadd.f32 %v9165, %v9560
      %v9562 = vpop.f32.mrb[0].mxu0
      %v9563 = vadd.f32 %v9169, %v9562
      %9564 = vmatprep.mubr.bf16.mxu0 %v9078
      %9565 = vmatmul.mubr.bf16.gmra.mrb[0].mxu0 %v9077
      %v9566 = vpop.f32.mrb[0].mxu0
      %v9567 = vadd.f32 %v9165, %v9566
      %v9568 = vpop.f32.mrb[0].mxu0
      %v9569 = vadd.f32 %v9169, %v9568
      %v9570 = vpop.f32.mrb[0].mxu0
      %v9571 = vadd.f32 %v9165, %v9570
      %v9572 = vpop.f32.mrb[0].mxu0
      %v9573 = vadd.f32 %v9169, %v9572
      %9574 = vmatprep.mubr.bf16.mxu0 %v9080
      %9575 = vmatmul.mubr.bf16.gmra.mrb[0].mxu0 %v9079
      %v9576 = vpop.f32.mrb[0].mxu0
      %v9577 = vadd.f32 %v9165, %v9576
      %v9578 = vpop.f32.mrb[0].mxu0
      %v9579 = vadd.f32 %v9169, %v9578
      %v9580 = vpop.f32.mrb[0].mxu0
      %v9581 = vadd.f32 %v9165, %v9580
      %v9582 = vpop.f32.mrb[0].mxu0
      %v9583 = vadd.f32 %v9169, %v9582
      %9584 = vmatprep.mubr.bf16.mxu0 %v9082
      %9585 = vmatmul.mubr.bf16.gmra.mrb[0].mxu0 %v9081
      %v9586 = vpop.f32.mrb[0].mxu0
      %v9587 = vadd.f32 %v9165, %v9586
      %v9588 = vpop.f32.mrb[0].mxu0
      %v9589 = vadd.f32 %v9169, %v9588
      %v9590 = vpop.f32.mrb[0].mxu0
      %v9591 = vadd.f32 %v9165, %v9590
      %v9592 = vpop.f32.mrb[0].mxu0
      %v9593 = vadd.f32 %v9169, %v9592
      %9594 = vmatprep.mubr.bf16.mxu0 %v9084
      %9595 = vmatmul.mubr.bf16.gmra.mrb[0].mxu0 %v9083
      %v9596 = vpop.f32.mrb[0].mxu0
      %v9597 = vadd.f32 %v9165, %v9596
      %v9598 = vpop.f32.mrb[0].mxu0
      %v9599 = vadd.f32 %v9169, %v9598
      %v9600 = vpop.f32.mrb[0].mxu0
      %v9601 = vadd.f32 %v9165, %v9600
      %v9602 = vpop.f32.mrb[0].mxu0
      %v9603 = vadd.f32 %v9169, %v9602
      %9604 = vmatprep.mubr.bf16.mxu0 %v9086
      %9605 = vmatmul.mubr.bf16.gmra.mrb[0].mxu0 %v9085
      %v9606 = vpop.f32.mrb[0].mxu0
      %v9607 = vadd.f32 %v9165, %v9606
      %v9608 = vpop.f32.mrb[0].mxu0
      %v9609 = vadd.f32 %v9169, %v9608
      %v9610 = vpop.f32.mrb[0].mxu0
      %v9611 = vadd.f32 %v9165, %v9610
      %v9612 = vpop.f32.mrb[0].mxu0
      %v9613 = vadd.f32 %v9169, %v9612
      %9614 = vmatprep.mubr.bf16.mxu0 %v9088
      %9615 = vmatmul.mubr.bf16.gmra.mrb[0].mxu0 %v9087
      %v9616 = vpop.f32.mrb[0].mxu0
      %v9617 = vadd.f32 %v9165, %v9616
      %v9618 = vpop.f32.mrb[0].mxu0
      %v9619 = vadd.f32 %v9169, %v9618
      %v9620 = vpop.f32.mrb[0].mxu0
      %v9621 = vadd.f32 %v9165, %v9620
      %v9622 = vpop.f32.mrb[0].mxu0
      %v9623 = vadd.f32 %v9169, %v9622
      %9624 = vmatprep.mubr.bf16.mxu0 %v9090
      %9625 = vmatmul.mubr.bf16.gmra.mrb[0].mxu0 %v9089
      %v9626 = vpop.f32.mrb[0].mxu0
      %v9627 = vadd.f32 %v9165, %v9626
      %v9628 = vpop.f32.mrb[0].mxu0
      %v9629 = vadd.f32 %v9169, %v9628
      %v9630 = vpop.f32.mrb[0].mxu0
      %v9631 = vadd.f32 %v9165, %v9630
      %v9632 = vpop.f32.mrb[0].mxu0
      %v9633 = vadd.f32 %v9169, %v9632
      %9634 = vdwg.mxu0
      %9635 = vmatprep.subr.bf16.mxu0 %v9377
      %9636 = vmatpush1.bf16.msra.mxu0 %v9376
      %9637 = vmatprep.subr.bf16.mxu0 %v9381
      %9638 = vmatpush1.bf16.msra.mxu0 %v9380
      %9639 = vmatprep.subr.bf16.mxu0 %v9385
      %9640 = vmatpush1.bf16.msra.mxu0 %v9384
      %9641 = vmatprep.subr.bf16.mxu0 %v9389
      %9642 = vmatpush1.bf16.msra.mxu0 %v9388
      %9643 = vmatprep.subr.bf16.mxu0 %v9393
      %9644 = vmatpush1.bf16.msra.mxu0 %v9392
      %9645 = vmatprep.subr.bf16.mxu0 %v9397
      %9646 = vmatpush1.bf16.msra.mxu0 %v9396
      %9647 = vmatprep.subr.bf16.mxu0 %v9401
      %9648 = vmatpush1.bf16.msra.mxu0 %v9400
      %9649 = vmatprep.subr.bf16.mxu0 %v9405
      %9650 = vmatpush1.bf16.msra.mxu0 %v9404
      %9651 = vmatprep.subr.bf16.mxu0 %v9409
      %9652 = vmatpush1.bf16.msra.mxu0 %v9408
      %9653 = vmatprep.subr.bf16.mxu0 %v9413
      %9654 = vmatpush1.bf16.msra.mxu0 %v9412
      %9655 = vmatprep.subr.bf16.mxu0 %v9417
      %9656 = vmatpush1.bf16.msra.mxu0 %v9416
      %9657 = vmatprep.subr.bf16.mxu0 %v9421
      %9658 = vmatpush1.bf16.msra.mxu0 %v9420
      %9659 = vmatprep.subr.bf16.mxu0 %v9425
      %9660 = vmatpush1.bf16.msra.mxu0 %v9424
      %9661 = vmatprep.subr.bf16.mxu0 %v9429
      %9662 = vmatpush1.bf16.msra.mxu0 %v9428
      %9663 = vmatprep.subr.bf16.mxu0 %v9433
      %9664 = vmatpush1.bf16.msra.mxu0 %v9432
      %9665 = vmatprep.subr.bf16.mxu0 %v9437
      %9666 = vmatpush1.bf16.msra.mxu0 %v9436
      %9667 = vmatprep.mubr.bf16.mxu0 %v9072
      %9668 = vmatmul.mubr.bf16.gmra.mrb[0].mxu0 %v9071
      %v9669 = vpop.f32.mrb[0].mxu0
      %v9670 = vadd.f32 %v9173, %v9669
      %v9671 = vpop.f32.mrb[0].mxu0
      %v9672 = vadd.f32 %v9177, %v9671
      %v9673 = vpop.f32.mrb[0].mxu0
      %v9674 = vadd.f32 %v9173, %v9673
      %v9675 = vpop.f32.mrb[0].mxu0
      %v9676 = vadd.f32 %v9177, %v9675
      %9677 = vmatprep.mubr.bf16.mxu0 %v9074
      %9678 = vmatmul.mubr.bf16.gmra.mrb[0].mxu0 %v9073
      %v9679 = vpop.f32.mrb[0].mxu0
      %v9680 = vadd.f32 %v9173, %v9679
      %v9681 = vpop.f32.mrb[0].mxu0
      %v9682 = vadd.f32 %v9177, %v9681
      %v9683 = vpop.f32.mrb[0].mxu0
      %v9684 = vadd.f32 %v9173, %v9683
      %v9685 = vpop.f32.mrb[0].mxu0
      %v9686 = vadd.f32 %v9177, %v9685
      %9687 = vmatprep.mubr.bf16.mxu0 %v9076
      %9688 = vmatmul.mubr.bf16.gmra.mrb[0].mxu0 %v9075
      %v9689 = vpop.f32.mrb[0].mxu0
      %v9690 = vadd.f32 %v9173, %v9689
      %v9691 = vpop.f32.mrb[0].mxu0
      %v9692 = vadd.f32 %v9177, %v9691
      %v9693 = vpop.f32.mrb[0].mxu0
      %v9694 = vadd.f32 %v9173, %v9693
      %v9695 = vpop.f32.mrb[0].mxu0
      %v9696 = vadd.f32 %v9177, %v9695
      %9697 = vmatprep.mubr.bf16.mxu0 %v9078
      %9698 = vmatmul.mubr.bf16.gmra.mrb[0].mxu0 %v9077
      %v9699 = vpop.f32.mrb[0].mxu0
      %v9700 = vadd.f32 %v9173, %v9699
      %v9701 = vpop.f32.mrb[0].mxu0
      %v9702 = vadd.f32 %v9177, %v9701
      %v9703 = vpop.f32.mrb[0].mxu0
      %v9704 = vadd.f32 %v9173, %v9703
      %v9705 = vpop.f32.mrb[0].mxu0
      %v9706 = vadd.f32 %v9177, %v9705
      %9707 = vmatprep.mubr.bf16.mxu0 %v9080
      %9708 = vmatmul.mubr.bf16.gmra.mrb[0].mxu0 %v9079
      %v9709 = vpop.f32.mrb[0].mxu0
      %v9710 = vadd.f32 %v9173, %v9709
      %v9711 = vpop.f32.mrb[0].mxu0
      %v9712 = vadd.f32 %v9177, %v9711
      %v9713 = vpop.f32.mrb[0].mxu0
      %v9714 = vadd.f32 %v9173, %v9713
      %v9715 = vpop.f32.mrb[0].mxu0
      %v9716 = vadd.f32 %v9177, %v9715
      %9717 = vmatprep.mubr.bf16.mxu0 %v9082
      %9718 = vmatmul.mubr.bf16.gmra.mrb[0].mxu0 %v9081
      %v9719 = vpop.f32.mrb[0].mxu0
      %v9720 = vadd.f32 %v9173, %v9719
      %v9721 = vpop.f32.mrb[0].mxu0
      %v9722 = vadd.f32 %v9177, %v9721
      %v9723 = vpop.f32.mrb[0].mxu0
      %v9724 = vadd.f32 %v9173, %v9723
      %v9725 = vpop.f32.mrb[0].mxu0
      %v9726 = vadd.f32 %v9177, %v9725
      %9727 = vmatprep.mubr.bf16.mxu0 %v9084
      %9728 = vmatmul.mubr.bf16.gmra.mrb[0].mxu0 %v9083
      %v9729 = vpop.f32.mrb[0].mxu0
      %v9730 = vadd.f32 %v9173, %v9729
      %v9731 = vpop.f32.mrb[0].mxu0
      %v9732 = vadd.f32 %v9177, %v9731
      %v9733 = vpop.f32.mrb[0].mxu0
      %v9734 = vadd.f32 %v9173, %v9733
      %v9735 = vpop.f32.mrb[0].mxu0
      %v9736 = vadd.f32 %v9177, %v9735
      %9737 = vmatprep.mubr.bf16.mxu0 %v9086
      %9738 = vmatmul.mubr.bf16.gmra.mrb[0].mxu0 %v9085
      %v9739 = vpop.f32.mrb[0].mxu0
      %v9740 = vadd.f32 %v9173, %v9739
      %v9741 = vpop.f32.mrb[0].mxu0
      %v9742 = vadd.f32 %v9177, %v9741
      %v9743 = vpop.f32.mrb[0].mxu0
      %v9744 = vadd.f32 %v9173, %v9743
      %v9745 = vpop.f32.mrb[0].mxu0
      %v9746 = vadd.f32 %v9177, %v9745
      %9747 = vmatprep.mubr.bf16.mxu0 %v9088
      %9748 = vmatmul.mubr.bf16.gmra.mrb[0].mxu0 %v9087
      %v9749 = vpop.f32.mrb[0].mxu0
      %v9750 = vadd.f32 %v9173, %v9749
      %v9751 = vpop.f32.mrb[0].mxu0
      %v9752 = vadd.f32 %v9177, %v9751
      %v9753 = vpop.f32.mrb[0].mxu0
      %v9754 = vadd.f32 %v9173, %v9753
      %v9755 = vpop.f32.mrb[0].mxu0
      %v9756 = vadd.f32 %v9177, %v9755
      %9757 = vmatprep.mubr.bf16.mxu0 %v9090
      %9758 = vmatmul.mubr.bf16.gmra.mrb[0].mxu0 %v9089
      %v9759 = vpop.f32.mrb[0].mxu0
      %v9760 = vadd.f32 %v9173, %v9759
      %v9761 = vpop.f32.mrb[0].mxu0
      %v9762 = vadd.f32 %v9177, %v9761
      %v9763 = vpop.f32.mrb[0].mxu0
      %v9764 = vadd.f32 %v9173, %v9763
      %v9765 = vpop.f32.mrb[0].mxu0
      %v9766 = vadd.f32 %v9177, %v9765
      %9767 = vdwg.mxu0
      %v9768 = vmax.f32 %v9537, 0.0
      %v9769 = vmax.f32 %v9539, 0.0
      %v9770 = vmax.f32 %v9670, 0.0
      %v9771 = vmax.f32 %v9672, 0.0
      %v9772 = vmax.f32 %v9541, 0.0
      %v9773 = vmax.f32 %v9543, 0.0
      %v9774 = vmax.f32 %v9674, 0.0
      %v9775 = vmax.f32 %v9676, 0.0
      %v9776 = vmax.f32 %v9547, 0.0
      %v9777 = vmax.f32 %v9549, 0.0
      %v9778 = vmax.f32 %v9680, 0.0
      %v9779 = vmax.f32 %v9682, 0.0
      %v9780 = vmax.f32 %v9551, 0.0
      %v9781 = vmax.f32 %v9553, 0.0
      %v9782 = vmax.f32 %v9684, 0.0
      %v9783 = vmax.f32 %v9686, 0.0
      %v9784 = vmax.f32 %v9557, 0.0
      %v9785 = vmax.f32 %v9559, 0.0
      %v9786 = vmax.f32 %v9690, 0.0
      %v9787 = vmax.f32 %v9692, 0.0
      %v9788 = vmax.f32 %v9561, 0.0
      %v9789 = vmax.f32 %v9563, 0.0
      %v9790 = vmax.f32 %v9694, 0.0
      %v9791 = vmax.f32 %v9696, 0.0
      %v9792 = vmax.f32 %v9567, 0.0
      %v9793 = vmax.f32 %v9569, 0.0
      %v9794 = vmax.f32 %v9700, 0.0
      %v9795 = vmax.f32 %v9702, 0.0
      %v9796 = vmax.f32 %v9571, 0.0
      %v9797 = vmax.f32 %v9573, 0.0
      %v9798 = vmax.f32 %v9704, 0.0
      %v9799 = vmax.f32 %v9706, 0.0
      %v9800 = vmax.f32 %v9577, 0.0
      %v9801 = vmax.f32 %v9579, 0.0
      %v9802 = vmax.f32 %v9710, 0.0
      %v9803 = vmax.f32 %v9712, 0.0
      %v9804 = vmax.f32 %v9581, 0.0
      %v9805 = vmax.f32 %v9583, 0.0
      %v9806 = vmax.f32 %v9714, 0.0
      %v9807 = vmax.f32 %v9716, 0.0
      %v9808 = vmax.f32 %v9587, 0.0
      %v9809 = vmax.f32 %v9589, 0.0
      %v9810 = vmax.f32 %v9720, 0.0
      %v9811 = vmax.f32 %v9722, 0.0
      %v9812 = vmax.f32 %v9591, 0.0
      %v9813 = vmax.f32 %v9593, 0.0
      %v9814 = vmax.f32 %v9724, 0.0
      %v9815 = vmax.f32 %v9726, 0.0
      %v9816 = vmax.f32 %v9597, 0.0
      %v9817 = vmax.f32 %v9599, 0.0
      %v9818 = vmax.f32 %v9730, 0.0
      %v9819 = vmax.f32 %v9732, 0.0
      %v9820 = vmax.f32 %v9601, 0.0
      %v9821 = vmax.f32 %v9603, 0.0
      %v9822 = vmax.f32 %v9734, 0.0
      %v9823 = vmax.f32 %v9736, 0.0
      %v9824 = vmax.f32 %v9607, 0.0
      %v9825 = vmax.f32 %v9609, 0.0
      %v9826 = vmax.f32 %v9740, 0.0
      %v9827 = vmax.f32 %v9742, 0.0
      %v9828 = vmax.f32 %v9611, 0.0
      %v9829 = vmax.f32 %v9613, 0.0
      %v9830 = vmax.f32 %v9744, 0.0
      %v9831 = vmax.f32 %v9746, 0.0
      %v9832 = vmax.f32 %v9617, 0.0
      %v9833 = vmax.f32 %v9619, 0.0
      %v9834 = vmax.f32 %v9750, 0.0
      %v9835 = vmax.f32 %v9752, 0.0
      %v9836 = vmax.f32 %v9621, 0.0
      %v9837 = vmax.f32 %v9623, 0.0
      %v9838 = vmax.f32 %v9754, 0.0
      %v9839 = vmax.f32 %v9756, 0.0
      %v9840 = vmax.f32 %v9627, 0.0
      %v9841 = vmax.f32 %v9629, 0.0
      %v9842 = vmax.f32 %v9760, 0.0
      %v9843 = vmax.f32 %v9762, 0.0
      %v9844 = vmax.f32 %v9631, 0.0
      %v9845 = vmax.f32 %v9633, 0.0
      %v9846 = vmax.f32 %v9764, 0.0
      %v9847 = vmax.f32 %v9766, 0.0
      %v9848 = vpack.c.bf16 %v9772, %v9768
      %v9849 = vpack.c.bf16 %v9773, %v9769
      %v9850 = vpack.c.bf16 %v9774, %v9770
      %v9851 = vpack.c.bf16 %v9775, %v9771
      %v9852 = vpack.c.bf16 %v9780, %v9776
      %v9853 = vpack.c.bf16 %v9781, %v9777
      %v9854 = vpack.c.bf16 %v9782, %v9778
      %v9855 = vpack.c.bf16 %v9783, %v9779
      %v9856 = vpack.c.bf16 %v9788, %v9784
      %v9857 = vpack.c.bf16 %v9789, %v9785
      %v9858 = vpack.c.bf16 %v9790, %v9786
      %v9859 = vpack.c.bf16 %v9791, %v9787
      %v9860 = vpack.c.bf16 %v9796, %v9792
      %v9861 = vpack.c.bf16 %v9797, %v9793
      %v9862 = vpack.c.bf16 %v9798, %v9794
      %v9863 = vpack.c.bf16 %v9799, %v9795
      %v9864 = vpack.c.bf16 %v9804, %v9800
      %v9865 = vpack.c.bf16 %v9805, %v9801
      %v9866 = vpack.c.bf16 %v9806, %v9802
      %v9867 = vpack.c.bf16 %v9807, %v9803
      %v9868 = vpack.c.bf16 %v9812, %v9808
      %v9869 = vpack.c.bf16 %v9813, %v9809
      %v9870 = vpack.c.bf16 %v9814, %v9810
      %v9871 = vpack.c.bf16 %v9815, %v9811
      %v9872 = vpack.c.bf16 %v9820, %v9816
      %v9873 = vpack.c.bf16 %v9821, %v9817
      %v9874 = vpack.c.bf16 %v9822, %v9818
      %v9875 = vpack.c.bf16 %v9823, %v9819
      %v9876 = vpack.c.bf16 %v9828, %v9824
      %v9877 = vpack.c.bf16 %v9829, %v9825
      %v9878 = vpack.c.bf16 %v9830, %v9826
      %v9879 = vpack.c.bf16 %v9831, %v9827
      %v9880 = vpack.c.bf16 %v9836, %v9832
      %v9881 = vpack.c.bf16 %v9837, %v9833
      %v9882 = vpack.c.bf16 %v9838, %v9834
      %v9883 = vpack.c.bf16 %v9839, %v9835
      %v9884 = vpack.c.bf16 %v9844, %v9840
      %v9885 = vpack.c.bf16 %v9845, %v9841
      %v9886 = vpack.c.bf16 %v9846, %v9842
      %v9887 = vpack.c.bf16 %v9847, %v9843
      %s9888 = smul.addr %s9091, 4
      %s9889 = scalar_lea.vmem [#allocation17], %s9888
      %v9890 = vld [vmem:[%s9889] sm:$0xff]
      %v9891 = vld [vmem:[%s9889 + $0x8] sm:$0xff]
      %v9892 = vld [vmem:[%s9889 + $0x10] sm:$0xff]
      %v9893 = vld [vmem:[%s9889 + $0x18] sm:$0xff]
      %v9894 = vld [vmem:[%s9889 + $0x20] sm:$0xff]
      %v9895 = vld [vmem:[%s9889 + $0x28] sm:$0xff]
      %v9896 = vld [vmem:[%s9889 + $0x30] sm:$0xff]
      %v9897 = vld [vmem:[%s9889 + $0x38] sm:$0xff]
      %v9898 = vld [vmem:[%s9889 + $0x40] sm:$0xff]
      %v9899 = vld [vmem:[%s9889 + $0x48] sm:$0xff]
      %v9900 = vld [vmem:[%s9889 + $0x50] sm:$0xff]
      %v9901 = vld [vmem:[%s9889 + $0x58] sm:$0xff]
      %v9902 = vld [vmem:[%s9889 + $0x60] sm:$0xff]
      %v9903 = vld [vmem:[%s9889 + $0x68] sm:$0xff]
      %v9904 = vld [vmem:[%s9889 + $0x70] sm:$0xff]
      %v9905 = vld [vmem:[%s9889 + $0x78] sm:$0xff]
      %v9906 = vld [vmem:[%s9889 + $0x80] sm:$0xff]
      %v9907 = vld [vmem:[%s9889 + $0x88] sm:$0xff]
      %v9908 = vld [vmem:[%s9889 + $0x90] sm:$0xff]
      %v9909 = vld [vmem:[%s9889 + $0x98] sm:$0xff]
      %v9910 = vld [vmem:[%s9889 + $0xa0] sm:$0xff]
      %v9911 = vld [vmem:[%s9889 + $0xa8] sm:$0xff]
      %v9912 = vld [vmem:[%s9889 + $0xb0] sm:$0xff]
      %v9913 = vld [vmem:[%s9889 + $0xb8] sm:$0xff]
      %v9914 = vld [vmem:[%s9889 + $0xc0] sm:$0xff]
      %v9915 = vld [vmem:[%s9889 + $0xc8] sm:$0xff]
      %v9916 = vld [vmem:[%s9889 + $0xd0] sm:$0xff]
      %v9917 = vld [vmem:[%s9889 + $0xd8] sm:$0xff]
      %v9918 = vld [vmem:[%s9889 + $0xe0] sm:$0xff]
      %v9919 = vld [vmem:[%s9889 + $0xe8] sm:$0xff]
      %v9920 = vld [vmem:[%s9889 + $0xf0] sm:$0xff]
      %v9921 = vld [vmem:[%s9889 + $0xf8] sm:$0xff]
      %v9922 = vld [vmem:[%s9889 + $0x100] sm:$0xff]
      %v9923 = vld [vmem:[%s9889 + $0x108] sm:$0xff]
      %v9924 = vld [vmem:[%s9889 + $0x110] sm:$0xff]
      %v9925 = vld [vmem:[%s9889 + $0x118] sm:$0xff]
      %v9926 = vld [vmem:[%s9889 + $0x120] sm:$0xff]
      %v9927 = vld [vmem:[%s9889 + $0x128] sm:$0xff]
      %v9928 = vld [vmem:[%s9889 + $0x130] sm:$0xff]
      %v9929 = vld [vmem:[%s9889 + $0x138] sm:$0xff]
      %v9930 = vld [vmem:[%s9889 + $0x140] sm:$0xff]
      %v9931 = vld [vmem:[%s9889 + $0x148] sm:$0xff]
      %v9932 = vld [vmem:[%s9889 + $0x150] sm:$0xff]
      %v9933 = vld [vmem:[%s9889 + $0x158] sm:$0xff]
      %v9934 = vld [vmem:[%s9889 + $0x160] sm:$0xff]
      %v9935 = vld [vmem:[%s9889 + $0x168] sm:$0xff]
      %v9936 = vld [vmem:[%s9889 + $0x170] sm:$0xff]
      %v9937 = vld [vmem:[%s9889 + $0x178] sm:$0xff]
      %v9938 = vld [vmem:[%s9889 + $0x180] sm:$0xff]
      %v9939 = vld [vmem:[%s9889 + $0x188] sm:$0xff]
      %v9940 = vld [vmem:[%s9889 + $0x190] sm:$0xff]
      %v9941 = vld [vmem:[%s9889 + $0x198] sm:$0xff]
      %v9942 = vld [vmem:[%s9889 + $0x1a0] sm:$0xff]
      %v9943 = vld [vmem:[%s9889 + $0x1a8] sm:$0xff]
      %v9944 = vld [vmem:[%s9889 + $0x1b0] sm:$0xff]
      %v9945 = vld [vmem:[%s9889 + $0x1b8] sm:$0xff]
      %v9946 = vld [vmem:[%s9889 + $0x1c0] sm:$0xff]
      %v9947 = vld [vmem:[%s9889 + $0x1c8] sm:$0xff]
      %v9948 = vld [vmem:[%s9889 + $0x1d0] sm:$0xff]
      %v9949 = vld [vmem:[%s9889 + $0x1d8] sm:$0xff]
      %v9950 = vld [vmem:[%s9889 + $0x1e0] sm:$0xff]
      %v9951 = vld [vmem:[%s9889 + $0x1e8] sm:$0xff]
      %v9952 = vld [vmem:[%s9889 + $0x1f0] sm:$0xff]
      %v9953 = vld [vmem:[%s9889 + $0x1f8] sm:$0xff]
      %s9954 = scalar_lea.vmem [#allocation19], %s8297
      %v9955 = vld [vmem:[%s9954] sm:$0x3]
      %v9957 = vlaneseq
      %v9958 = vshrl.u32 %v9957, 7
      %v9959 = vsub.s32 0, %v9958
      %v9960 = vrot.slane %v9955, %v9959
      %v9961 = vlaneseq
      %v9962 = vshrl.u32 %v9961, 7
      %v9963 = vsub.s32 1, %v9962
      %v9964 = vrot.slane %v9955, %v9963
      %v10031 = vunpack.c.l.b16 %v9890
      %v10032 = vunpack.c.h.b16 %v9890
      %v10033 = vunpack.c.l.b16 %v9891
      %v10034 = vunpack.c.h.b16 %v9891
      %v10035 = vunpack.c.l.b16 %v9892
      %v10036 = vunpack.c.h.b16 %v9892
      %v10037 = vunpack.c.l.b16 %v9893
      %v10038 = vunpack.c.h.b16 %v9893
      %v10039 = vunpack.c.l.b16 %v9894
      %v10040 = vunpack.c.h.b16 %v9894
      %v10041 = vunpack.c.l.b16 %v9895
      %v10042 = vunpack.c.h.b16 %v9895
      %v10043 = vunpack.c.l.b16 %v9896
      %v10044 = vunpack.c.h.b16 %v9896
      %v10045 = vunpack.c.l.b16 %v9897
      %v10046 = vunpack.c.h.b16 %v9897
      %v10047 = vunpack.c.l.b16 %v9898
      %v10048 = vunpack.c.h.b16 %v9898
      %v10049 = vunpack.c.l.b16 %v9899
      %v10050 = vunpack.c.h.b16 %v9899
      %v10051 = vunpack.c.l.b16 %v9900
      %v10052 = vunpack.c.h.b16 %v9900
      %v10053 = vunpack.c.l.b16 %v9901
      %v10054 = vunpack.c.h.b16 %v9901
      %v10055 = vunpack.c.l.b16 %v9902
      %v10056 = vunpack.c.h.b16 %v9902
      %v10057 = vunpack.c.l.b16 %v9903
      %v10058 = vunpack.c.h.b16 %v9903
      %v10059 = vunpack.c.l.b16 %v9904
      %v10060 = vunpack.c.h.b16 %v9904
      %v10061 = vunpack.c.l.b16 %v9905
      %v10062 = vunpack.c.h.b16 %v9905
      %v10063 = vunpack.c.l.b16 %v9906
      %v10064 = vunpack.c.h.b16 %v9906
      %v10065 = vunpack.c.l.b16 %v9907
      %v10066 = vunpack.c.h.b16 %v9907
      %v10067 = vunpack.c.l.b16 %v9908
      %v10068 = vunpack.c.h.b16 %v9908
      %v10069 = vunpack.c.l.b16 %v9909
      %v10070 = vunpack.c.h.b16 %v9909
      %v10071 = vunpack.c.l.b16 %v9910
      %v10072 = vunpack.c.h.b16 %v9910
      %v10073 = vunpack.c.l.b16 %v9911
      %v10074 = vunpack.c.h.b16 %v9911
      %v10075 = vunpack.c.l.b16 %v9912
      %v10076 = vunpack.c.h.b16 %v9912
      %v10077 = vunpack.c.l.b16 %v9913
      %v10078 = vunpack.c.h.b16 %v9913
      %v10079 = vunpack.c.l.b16 %v9914
      %v10080 = vunpack.c.h.b16 %v9914
      %v10081 = vunpack.c.l.b16 %v9915
      %v10082 = vunpack.c.h.b16 %v9915
      %v10083 = vunpack.c.l.b16 %v9916
      %v10084 = vunpack.c.h.b16 %v9916
      %v10085 = vunpack.c.l.b16 %v9917
      %v10086 = vunpack.c.h.b16 %v9917
      %v10087 = vunpack.c.l.b16 %v9918
      %v10088 = vunpack.c.h.b16 %v9918
      %v10089 = vunpack.c.l.b16 %v9919
      %v10090 = vunpack.c.h.b16 %v9919
      %v10091 = vunpack.c.l.b16 %v9920
      %v10092 = vunpack.c.h.b16 %v9920
      %v10093 = vunpack.c.l.b16 %v9921
      %v10094 = vunpack.c.h.b16 %v9921
      %v10095 = vunpack.c.l.b16 %v9922
      %v10096 = vunpack.c.h.b16 %v9922
      %v10097 = vunpack.c.l.b16 %v9923
      %v10098 = vunpack.c.h.b16 %v9923
      %v10099 = vunpack.c.l.b16 %v9924
      %v10100 = vunpack.c.h.b16 %v9924
      %v10101 = vunpack.c.l.b16 %v9925
      %v10102 = vunpack.c.h.b16 %v9925
      %v10103 = vunpack.c.l.b16 %v9926
      %v10104 = vunpack.c.h.b16 %v9926
      %v10105 = vunpack.c.l.b16 %v9927
      %v10106 = vunpack.c.h.b16 %v9927
      %v10107 = vunpack.c.l.b16 %v9928
      %v10108 = vunpack.c.h.b16 %v9928
      %v10109 = vunpack.c.l.b16 %v9929
      %v10110 = vunpack.c.h.b16 %v9929
      %v10111 = vunpack.c.l.b16 %v9930
      %v10112 = vunpack.c.h.b16 %v9930
      %v10113 = vunpack.c.l.b16 %v9931
      %v10114 = vunpack.c.h.b16 %v9931
      %v10115 = vunpack.c.l.b16 %v9932
      %v10116 = vunpack.c.h.b16 %v9932
      %v10117 = vunpack.c.l.b16 %v9933
      %v10118 = vunpack.c.h.b16 %v9933
      %v10119 = vunpack.c.l.b16 %v9934
      %v10120 = vunpack.c.h.b16 %v9934
      %v10121 = vunpack.c.l.b16 %v9935
      %v10122 = vunpack.c.h.b16 %v9935
      %v10123 = vunpack.c.l.b16 %v9936
      %v10124 = vunpack.c.h.b16 %v9936
      %v10125 = vunpack.c.l.b16 %v9937
      %v10126 = vunpack.c.h.b16 %v9937
      %v10127 = vunpack.c.l.b16 %v9938
      %v10128 = vunpack.c.h.b16 %v9938
      %v10129 = vunpack.c.l.b16 %v9939
      %v10130 = vunpack.c.h.b16 %v9939
      %v10131 = vunpack.c.l.b16 %v9940
      %v10132 = vunpack.c.h.b16 %v9940
      %v10133 = vunpack.c.l.b16 %v9941
      %v10134 = vunpack.c.h.b16 %v9941
      %v10135 = vunpack.c.l.b16 %v9942
      %v10136 = vunpack.c.h.b16 %v9942
      %v10137 = vunpack.c.l.b16 %v9943
      %v10138 = vunpack.c.h.b16 %v9943
      %v10139 = vunpack.c.l.b16 %v9944
      %v10140 = vunpack.c.h.b16 %v9944
      %v10141 = vunpack.c.l.b16 %v9945
      %v10142 = vunpack.c.h.b16 %v9945
      %v10143 = vunpack.c.l.b16 %v9946
      %v10144 = vunpack.c.h.b16 %v9946
      %v10145 = vunpack.c.l.b16 %v9947
      %v10146 = vunpack.c.h.b16 %v9947
      %v10147 = vunpack.c.l.b16 %v9948
      %v10148 = vunpack.c.h.b16 %v9948
      %v10149 = vunpack.c.l.b16 %v9949
      %v10150 = vunpack.c.h.b16 %v9949
      %v10151 = vunpack.c.l.b16 %v9950
      %v10152 = vunpack.c.h.b16 %v9950
      %v10153 = vunpack.c.l.b16 %v9951
      %v10154 = vunpack.c.h.b16 %v9951
      %v10155 = vunpack.c.l.b16 %v9952
      %v10156 = vunpack.c.h.b16 %v9952
      %v10157 = vunpack.c.l.b16 %v9953
      %v10158 = vunpack.c.h.b16 %v9953
      %v10159 = vpack.c.b16 %v10033, %v10031
      %v10160 = vpack.c.b16 %v10034, %v10032
      %v10161 = vpack.c.b16 %v10037, %v10035
      %v10162 = vpack.c.b16 %v10038, %v10036
      %v10163 = vpack.c.b16 %v10041, %v10039
      %v10164 = vpack.c.b16 %v10042, %v10040
      %v10165 = vpack.c.b16 %v10045, %v10043
      %v10166 = vpack.c.b16 %v10046, %v10044
      %v10167 = vpack.c.b16 %v10049, %v10047
      %v10168 = vpack.c.b16 %v10050, %v10048
      %v10169 = vpack.c.b16 %v10053, %v10051
      %v10170 = vpack.c.b16 %v10054, %v10052
      %v10171 = vpack.c.b16 %v10057, %v10055
      %v10172 = vpack.c.b16 %v10058, %v10056
      %v10173 = vpack.c.b16 %v10061, %v10059
      %v10174 = vpack.c.b16 %v10062, %v10060
      %v10175 = vpack.c.b16 %v10065, %v10063
      %v10176 = vpack.c.b16 %v10066, %v10064
      %v10177 = vpack.c.b16 %v10069, %v10067
      %v10178 = vpack.c.b16 %v10070, %v10068
      %v10179 = vpack.c.b16 %v10073, %v10071
      %v10180 = vpack.c.b16 %v10074, %v10072
      %v10181 = vpack.c.b16 %v10077, %v10075
      %v10182 = vpack.c.b16 %v10078, %v10076
      %v10183 = vpack.c.b16 %v10081, %v10079
      %v10184 = vpack.c.b16 %v10082, %v10080
      %v10185 = vpack.c.b16 %v10085, %v10083
      %v10186 = vpack.c.b16 %v10086, %v10084
      %v10187 = vpack.c.b16 %v10089, %v10087
      %v10188 = vpack.c.b16 %v10090, %v10088
      %v10189 = vpack.c.b16 %v10093, %v10091
      %v10190 = vpack.c.b16 %v10094, %v10092
      %v10191 = vpack.c.b16 %v10097, %v10095
      %v10192 = vpack.c.b16 %v10098, %v10096
      %v10193 = vpack.c.b16 %v10101, %v10099
      %v10194 = vpack.c.b16 %v10102, %v10100
      %v10195 = vpack.c.b16 %v10105, %v10103
      %v10196 = vpack.c.b16 %v10106, %v10104
      %v10197 = vpack.c.b16 %v10109, %v10107
      %v10198 = vpack.c.b16 %v10110, %v10108
      %v10199 = vpack.c.b16 %v10113, %v10111
      %v10200 = vpack.c.b16 %v10114, %v10112
      %v10201 = vpack.c.b16 %v10117, %v10115
      %v10202 = vpack.c.b16 %v10118, %v10116
      %v10203 = vpack.c.b16 %v10121, %v10119
      %v10204 = vpack.c.b16 %v10122, %v10120
      %v10205 = vpack.c.b16 %v10125, %v10123
      %v10206 = vpack.c.b16 %v10126, %v10124
      %v10207 = vpack.c.b16 %v10129, %v10127
      %v10208 = vpack.c.b16 %v10130, %v10128
      %v10209 = vpack.c.b16 %v10133, %v10131
      %v10210 = vpack.c.b16 %v10134, %v10132
      %v10211 = vpack.c.b16 %v10137, %v10135
      %v10212 = vpack.c.b16 %v10138, %v10136
      %v10213 = vpack.c.b16 %v10141, %v10139
      %v10214 = vpack.c.b16 %v10142, %v10140
      %v10215 = vpack.c.b16 %v10145, %v10143
      %v10216 = vpack.c.b16 %v10146, %v10144
      %v10217 = vpack.c.b16 %v10149, %v10147
      %v10218 = vpack.c.b16 %v10150, %v10148
      %v10219 = vpack.c.b16 %v10153, %v10151
      %v10220 = vpack.c.b16 %v10154, %v10152
      %v10221 = vpack.c.b16 %v10157, %v10155
      %v10222 = vpack.c.b16 %v10158, %v10156
      %10287 = vmatprep.subr.bf16.mxu0 %v10160
      %10288 = vmatpush1.bf16.msra.mxu0 %v10159
      %10289 = vmatprep.subr.bf16.mxu0 %v10162
      %10290 = vmatpush1.bf16.msra.mxu0 %v10161
      %10291 = vmatprep.subr.bf16.mxu0 %v10164
      %10292 = vmatpush1.bf16.msra.mxu0 %v10163
      %10293 = vmatprep.subr.bf16.mxu0 %v10166
      %10294 = vmatpush1.bf16.msra.mxu0 %v10165
      %10295 = vmatprep.subr.bf16.mxu0 %v10168
      %10296 = vmatpush1.bf16.msra.mxu0 %v10167
      %10297 = vmatprep.subr.bf16.mxu0 %v10170
      %10298 = vmatpush1.bf16.msra.mxu0 %v10169
      %10299 = vmatprep.subr.bf16.mxu0 %v10172
      %10300 = vmatpush1.bf16.msra.mxu0 %v10171
      %10301 = vmatprep.subr.bf16.mxu0 %v10174
      %10302 = vmatpush1.bf16.msra.mxu0 %v10173
      %10303 = vmatprep.subr.bf16.mxu0 %v10176
      %10304 = vmatpush1.bf16.msra.mxu0 %v10175
      %10305 = vmatprep.subr.bf16.mxu0 %v10178
      %10306 = vmatpush1.bf16.msra.mxu0 %v10177
      %10307 = vmatprep.subr.bf16.mxu0 %v10180
      %10308 = vmatpush1.bf16.msra.mxu0 %v10179
      %10309 = vmatprep.subr.bf16.mxu0 %v10182
      %10310 = vmatpush1.bf16.msra.mxu0 %v10181
      %10311 = vmatprep.subr.bf16.mxu0 %v10184
      %10312 = vmatpush1.bf16.msra.mxu0 %v10183
      %10313 = vmatprep.subr.bf16.mxu0 %v10186
      %10314 = vmatpush1.bf16.msra.mxu0 %v10185
      %10315 = vmatprep.subr.bf16.mxu0 %v10188
      %10316 = vmatpush1.bf16.msra.mxu0 %v10187
      %10317 = vmatprep.subr.bf16.mxu0 %v10190
      %10318 = vmatpush1.bf16.msra.mxu0 %v10189
      %10319 = vmatprep.mubr.bf16.mxu0 %v9849
      %10320 = vmatmul.mubr.bf16.gmra.mrb[0].mxu0 %v9848
      %v10321 = vpop.f32.mrb[0].mxu0
      %v10322 = vadd.f32 %v9960, %v10321
      %v10323 = vpop.f32.mrb[0].mxu0
      %v10324 = vadd.f32 %v9964, %v10323
      %v10325 = vpop.f32.mrb[0].mxu0
      %v10326 = vadd.f32 %v9960, %v10325
      %v10327 = vpop.f32.mrb[0].mxu0
      %v10328 = vadd.f32 %v9964, %v10327
      %10329 = vmatprep.mubr.bf16.mxu0 %v9853
      %10330 = vmatmul.mubr.bf16.gmra.mrb[0].mxu0 %v9852
      %v10331 = vpop.f32.mrb[0].mxu0
      %v10332 = vadd.f32 %v9960, %v10331
      %v10333 = vpop.f32.mrb[0].mxu0
      %v10334 = vadd.f32 %v9964, %v10333
      %v10335 = vpop.f32.mrb[0].mxu0
      %v10336 = vadd.f32 %v9960, %v10335
      %v10337 = vpop.f32.mrb[0].mxu0
      %v10338 = vadd.f32 %v9964, %v10337
      %10339 = vmatprep.mubr.bf16.mxu0 %v9857
      %10340 = vmatmul.mubr.bf16.gmra.mrb[0].mxu0 %v9856
      %v10341 = vpop.f32.mrb[0].mxu0
      %v10342 = vadd.f32 %v9960, %v10341
      %v10343 = vpop.f32.mrb[0].mxu0
      %v10344 = vadd.f32 %v9964, %v10343
      %v10345 = vpop.f32.mrb[0].mxu0
      %v10346 = vadd.f32 %v9960, %v10345
      %v10347 = vpop.f32.mrb[0].mxu0
      %v10348 = vadd.f32 %v9964, %v10347
      %10349 = vmatprep.mubr.bf16.mxu0 %v9861
      %10350 = vmatmul.mubr.bf16.gmra.mrb[0].mxu0 %v9860
      %v10351 = vpop.f32.mrb[0].mxu0
      %v10352 = vadd.f32 %v9960, %v10351
      %v10353 = vpop.f32.mrb[0].mxu0
      %v10354 = vadd.f32 %v9964, %v10353
      %v10355 = vpop.f32.mrb[0].mxu0
      %v10356 = vadd.f32 %v9960, %v10355
      %v10357 = vpop.f32.mrb[0].mxu0
      %v10358 = vadd.f32 %v9964, %v10357
      %10359 = vmatprep.mubr.bf16.mxu0 %v9865
      %10360 = vmatmul.mubr.bf16.gmra.mrb[0].mxu0 %v9864
      %v10361 = vpop.f32.mrb[0].mxu0
      %v10362 = vadd.f32 %v9960, %v10361
      %v10363 = vpop.f32.mrb[0].mxu0
      %v10364 = vadd.f32 %v9964, %v10363
      %v10365 = vpop.f32.mrb[0].mxu0
      %v10366 = vadd.f32 %v9960, %v10365
      %v10367 = vpop.f32.mrb[0].mxu0
      %v10368 = vadd.f32 %v9964, %v10367
      %10369 = vmatprep.mubr.bf16.mxu0 %v9869
      %10370 = vmatmul.mubr.bf16.gmra.mrb[0].mxu0 %v9868
      %v10371 = vpop.f32.mrb[0].mxu0
      %v10372 = vadd.f32 %v9960, %v10371
      %v10373 = vpop.f32.mrb[0].mxu0
      %v10374 = vadd.f32 %v9964, %v10373
      %v10375 = vpop.f32.mrb[0].mxu0
      %v10376 = vadd.f32 %v9960, %v10375
      %v10377 = vpop.f32.mrb[0].mxu0
      %v10378 = vadd.f32 %v9964, %v10377
      %10379 = vmatprep.mubr.bf16.mxu0 %v9873
      %10380 = vmatmul.mubr.bf16.gmra.mrb[0].mxu0 %v9872
      %v10381 = vpop.f32.mrb[0].mxu0
      %v10382 = vadd.f32 %v9960, %v10381
      %v10383 = vpop.f32.mrb[0].mxu0
      %v10384 = vadd.f32 %v9964, %v10383
      %v10385 = vpop.f32.mrb[0].mxu0
      %v10386 = vadd.f32 %v9960, %v10385
      %v10387 = vpop.f32.mrb[0].mxu0
      %v10388 = vadd.f32 %v9964, %v10387
      %10389 = vmatprep.mubr.bf16.mxu0 %v9877
      %10390 = vmatmul.mubr.bf16.gmra.mrb[0].mxu0 %v9876
      %v10391 = vpop.f32.mrb[0].mxu0
      %v10392 = vadd.f32 %v9960, %v10391
      %v10393 = vpop.f32.mrb[0].mxu0
      %v10394 = vadd.f32 %v9964, %v10393
      %v10395 = vpop.f32.mrb[0].mxu0
      %v10396 = vadd.f32 %v9960, %v10395
      %v10397 = vpop.f32.mrb[0].mxu0
      %v10398 = vadd.f32 %v9964, %v10397
      %10399 = vmatprep.mubr.bf16.mxu0 %v9881
      %10400 = vmatmul.mubr.bf16.gmra.mrb[0].mxu0 %v9880
      %v10401 = vpop.f32.mrb[0].mxu0
      %v10402 = vadd.f32 %v9960, %v10401
      %v10403 = vpop.f32.mrb[0].mxu0
      %v10404 = vadd.f32 %v9964, %v10403
      %v10405 = vpop.f32.mrb[0].mxu0
      %v10406 = vadd.f32 %v9960, %v10405
      %v10407 = vpop.f32.mrb[0].mxu0
      %v10408 = vadd.f32 %v9964, %v10407
      %10409 = vmatprep.mubr.bf16.mxu0 %v9885
      %10410 = vmatmul.mubr.bf16.gmra.mrb[0].mxu0 %v9884
      %v10411 = vpop.f32.mrb[0].mxu0
      %v10412 = vadd.f32 %v9960, %v10411
      %v10413 = vpop.f32.mrb[0].mxu0
      %v10414 = vadd.f32 %v9964, %v10413
      %v10415 = vpop.f32.mrb[0].mxu0
      %v10416 = vadd.f32 %v9960, %v10415
      %v10417 = vpop.f32.mrb[0].mxu0
      %v10418 = vadd.f32 %v9964, %v10417
      %10419 = vdwg.mxu0
      %10420 = vmatprep.subr.bf16.mxu0 %v10192
      %10421 = vmatpush1.bf16.msra.mxu0 %v10191
      %10422 = vmatprep.subr.bf16.mxu0 %v10194
      %10423 = vmatpush1.bf16.msra.mxu0 %v10193
      %10424 = vmatprep.subr.bf16.mxu0 %v10196
      %10425 = vmatpush1.bf16.msra.mxu0 %v10195
      %10426 = vmatprep.subr.bf16.mxu0 %v10198
      %10427 = vmatpush1.bf16.msra.mxu0 %v10197
      %10428 = vmatprep.subr.bf16.mxu0 %v10200
      %10429 = vmatpush1.bf16.msra.mxu0 %v10199
      %10430 = vmatprep.subr.bf16.mxu0 %v10202
      %10431 = vmatpush1.bf16.msra.mxu0 %v10201
      %10432 = vmatprep.subr.bf16.mxu0 %v10204
      %10433 = vmatpush1.bf16.msra.mxu0 %v10203
      %10434 = vmatprep.subr.bf16.mxu0 %v10206
      %10435 = vmatpush1.bf16.msra.mxu0 %v10205
      %10436 = vmatprep.subr.bf16.mxu0 %v10208
      %10437 = vmatpush1.bf16.msra.mxu0 %v10207
      %10438 = vmatprep.subr.bf16.mxu0 %v10210
      %10439 = vmatpush1.bf16.msra.mxu0 %v10209
      %10440 = vmatprep.subr.bf16.mxu0 %v10212
      %10441 = vmatpush1.bf16.msra.mxu0 %v10211
      %10442 = vmatprep.subr.bf16.mxu0 %v10214
      %10443 = vmatpush1.bf16.msra.mxu0 %v10213
      %10444 = vmatprep.subr.bf16.mxu0 %v10216
      %10445 = vmatpush1.bf16.msra.mxu0 %v10215
      %10446 = vmatprep.subr.bf16.mxu0 %v10218
      %10447 = vmatpush1.bf16.msra.mxu0 %v10217
      %10448 = vmatprep.subr.bf16.mxu0 %v10220
      %10449 = vmatpush1.bf16.msra.mxu0 %v10219
      %10450 = vmatprep.subr.bf16.mxu0 %v10222
      %10451 = vmatpush1.bf16.msra.mxu0 %v10221
      %10452 = vmatprep.mubr.bf16.mxu0 %v9851
      %10453 = vmatmul.mubr.bf16.gmra.mrb[0].mxu0 %v9850
      %v10454 = vpop.f32.mrb[0].mxu0
      %v10455 = vadd.f32 %v10322, %v10454
      %v10456 = vpop.f32.mrb[0].mxu0
      %v10457 = vadd.f32 %v10324, %v10456
      %v10458 = vpop.f32.mrb[0].mxu0
      %v10459 = vadd.f32 %v10326, %v10458
      %v10460 = vpop.f32.mrb[0].mxu0
      %v10461 = vadd.f32 %v10328, %v10460
      %10462 = vmatprep.mubr.bf16.mxu0 %v9855
      %10463 = vmatmul.mubr.bf16.gmra.mrb[0].mxu0 %v9854
      %v10464 = vpop.f32.mrb[0].mxu0
      %v10465 = vadd.f32 %v10332, %v10464
      %v10466 = vpop.f32.mrb[0].mxu0
      %v10467 = vadd.f32 %v10334, %v10466
      %v10468 = vpop.f32.mrb[0].mxu0
      %v10469 = vadd.f32 %v10336, %v10468
      %v10470 = vpop.f32.mrb[0].mxu0
      %v10471 = vadd.f32 %v10338, %v10470
      %10472 = vmatprep.mubr.bf16.mxu0 %v9859
      %10473 = vmatmul.mubr.bf16.gmra.mrb[0].mxu0 %v9858
      %v10474 = vpop.f32.mrb[0].mxu0
      %v10475 = vadd.f32 %v10342, %v10474
      %v10476 = vpop.f32.mrb[0].mxu0
      %v10477 = vadd.f32 %v10344, %v10476
      %v10478 = vpop.f32.mrb[0].mxu0
      %v10479 = vadd.f32 %v10346, %v10478
      %v10480 = vpop.f32.mrb[0].mxu0
      %v10481 = vadd.f32 %v10348, %v10480
      %10482 = vmatprep.mubr.bf16.mxu0 %v9863
      %10483 = vmatmul.mubr.bf16.gmra.mrb[0].mxu0 %v9862
      %v10484 = vpop.f32.mrb[0].mxu0
      %v10485 = vadd.f32 %v10352, %v10484
      %v10486 = vpop.f32.mrb[0].mxu0
      %v10487 = vadd.f32 %v10354, %v10486
      %v10488 = vpop.f32.mrb[0].mxu0
      %v10489 = vadd.f32 %v10356, %v10488
      %v10490 = vpop.f32.mrb[0].mxu0
      %v10491 = vadd.f32 %v10358, %v10490
      %10492 = vmatprep.mubr.bf16.mxu0 %v9867
      %10493 = vmatmul.mubr.bf16.gmra.mrb[0].mxu0 %v9866
      %v10494 = vpop.f32.mrb[0].mxu0
      %v10495 = vadd.f32 %v10362, %v10494
      %v10496 = vpop.f32.mrb[0].mxu0
      %v10497 = vadd.f32 %v10364, %v10496
      %v10498 = vpop.f32.mrb[0].mxu0
      %v10499 = vadd.f32 %v10366, %v10498
      %v10500 = vpop.f32.mrb[0].mxu0
      %v10501 = vadd.f32 %v10368, %v10500
      %10502 = vmatprep.mubr.bf16.mxu0 %v9871
      %10503 = vmatmul.mubr.bf16.gmra.mrb[0].mxu0 %v9870
      %v10504 = vpop.f32.mrb[0].mxu0
      %v10505 = vadd.f32 %v10372, %v10504
      %v10506 = vpop.f32.mrb[0].mxu0
      %v10507 = vadd.f32 %v10374, %v10506
      %v10508 = vpop.f32.mrb[0].mxu0
      %v10509 = vadd.f32 %v10376, %v10508
      %v10510 = vpop.f32.mrb[0].mxu0
      %v10511 = vadd.f32 %v10378, %v10510
      %10512 = vmatprep.mubr.bf16.mxu0 %v9875
      %10513 = vmatmul.mubr.bf16.gmra.mrb[0].mxu0 %v9874
      %v10514 = vpop.f32.mrb[0].mxu0
      %v10515 = vadd.f32 %v10382, %v10514
      %v10516 = vpop.f32.mrb[0].mxu0
      %v10517 = vadd.f32 %v10384, %v10516
      %v10518 = vpop.f32.mrb[0].mxu0
      %v10519 = vadd.f32 %v10386, %v10518
      %v10520 = vpop.f32.mrb[0].mxu0
      %v10521 = vadd.f32 %v10388, %v10520
      %10522 = vmatprep.mubr.bf16.mxu0 %v9879
      %10523 = vmatmul.mubr.bf16.gmra.mrb[0].mxu0 %v9878
      %v10524 = vpop.f32.mrb[0].mxu0
      %v10525 = vadd.f32 %v10392, %v10524
      %v10526 = vpop.f32.mrb[0].mxu0
      %v10527 = vadd.f32 %v10394, %v10526
      %v10528 = vpop.f32.mrb[0].mxu0
      %v10529 = vadd.f32 %v10396, %v10528
      %v10530 = vpop.f32.mrb[0].mxu0
      %v10531 = vadd.f32 %v10398, %v10530
      %10532 = vmatprep.mubr.bf16.mxu0 %v9883
      %10533 = vmatmul.mubr.bf16.gmra.mrb[0].mxu0 %v9882
      %v10534 = vpop.f32.mrb[0].mxu0
      %v10535 = vadd.f32 %v10402, %v10534
      %v10536 = vpop.f32.mrb[0].mxu0
      %v10537 = vadd.f32 %v10404, %v10536
      %v10538 = vpop.f32.mrb[0].mxu0
      %v10539 = vadd.f32 %v10406, %v10538
      %v10540 = vpop.f32.mrb[0].mxu0
      %v10541 = vadd.f32 %v10408, %v10540
      %10542 = vmatprep.mubr.bf16.mxu0 %v9887
      %10543 = vmatmul.mubr.bf16.gmra.mrb[0].mxu0 %v9886
      %v10544 = vpop.f32.mrb[0].mxu0
      %v10545 = vadd.f32 %v10412, %v10544
      %v10546 = vpop.f32.mrb[0].mxu0
      %v10547 = vadd.f32 %v10414, %v10546
      %v10548 = vpop.f32.mrb[0].mxu0
      %v10549 = vadd.f32 %v10416, %v10548
      %v10550 = vpop.f32.mrb[0].mxu0
      %v10551 = vadd.f32 %v10418, %v10550
      %10552 = vdwg.mxu0
      %v10553 = vadd.f32 %v9031, %v10455
      %v10554 = vadd.f32 %v9032, %v10457
      %v10555 = vadd.f32 %v9033, %v10459
      %v10556 = vadd.f32 %v9034, %v10461
      %v10557 = vadd.f32 %v9035, %v10465
      %v10558 = vadd.f32 %v9036, %v10467
      %v10559 = vadd.f32 %v9037, %v10469
      %v10560 = vadd.f32 %v9038, %v10471
      %v10561 = vadd.f32 %v9039, %v10475
      %v10562 = vadd.f32 %v9040, %v10477
      %v10563 = vadd.f32 %v9041, %v10479
      %v10564 = vadd.f32 %v9042, %v10481
      %v10565 = vadd.f32 %v9043, %v10485
      %v10566 = vadd.f32 %v9044, %v10487
      %v10567 = vadd.f32 %v9045, %v10489
      %v10568 = vadd.f32 %v9046, %v10491
      %v10569 = vadd.f32 %v9047, %v10495
      %v10570 = vadd.f32 %v9048, %v10497
      %v10571 = vadd.f32 %v9049, %v10499
      %v10572 = vadd.f32 %v9050, %v10501
      %v10573 = vadd.f32 %v9051, %v10505
      %v10574 = vadd.f32 %v9052, %v10507
      %v10575 = vadd.f32 %v9053, %v10509
      %v10576 = vadd.f32 %v9054, %v10511
      %v10577 = vadd.f32 %v9055, %v10515
      %v10578 = vadd.f32 %v9056, %v10517
      %v10579 = vadd.f32 %v9057, %v10519
      %v10580 = vadd.f32 %v9058, %v10521
      %v10581 = vadd.f32 %v9059, %v10525
      %v10582 = vadd.f32 %v9060, %v10527
      %v10583 = vadd.f32 %v9061, %v10529
      %v10584 = vadd.f32 %v9062, %v10531
      %v10585 = vadd.f32 %v9063, %v10535
      %v10586 = vadd.f32 %v9064, %v10537
      %v10587 = vadd.f32 %v9065, %v10539
      %v10588 = vadd.f32 %v9066, %v10541
      %v10589 = vadd.f32 %v9067, %v10545
      %v10590 = vadd.f32 %v9068, %v10547
      %v10591 = vadd.f32 %v9069, %v10549
      %v10592 = vadd.f32 %v9070, %v10551
      %s10593 = scalar_lea.vmem [#allocation20], %s8297
      %v10594 = vld [vmem:[%s10593] sm:$0x3]
      %s10595 = scalar_lea.vmem [#allocation22], %s8297
      %v10596 = vld [vmem:[%s10595] sm:$0x3]
      %v10597 = vadd.f32 %v10553, %v10554
      %10598 = vadd.xlane.f32.xlu0 %v10597
      %v10599 = vpop.xlane.xlu0 %10598
      %v10600 = vadd.f32 %v10555, %v10556
      %10601 = vadd.xlane.f32.xlu0 %v10600
      %v10602 = vpop.xlane.xlu0 %10601
      %v10603 = vadd.f32 %v10557, %v10558
      %10604 = vadd.xlane.f32.xlu0 %v10603
      %v10605 = vpop.xlane.xlu0 %10604
      %v10606 = vadd.f32 %v10559, %v10560
      %10607 = vadd.xlane.f32.xlu0 %v10606
      %v10608 = vpop.xlane.xlu0 %10607
      %v10609 = vadd.f32 %v10561, %v10562
      %10610 = vadd.xlane.f32.xlu0 %v10609
      %v10611 = vpop.xlane.xlu0 %10610
      %v10612 = vadd.f32 %v10563, %v10564
      %10613 = vadd.xlane.f32.xlu0 %v10612
      %v10614 = vpop.xlane.xlu0 %10613
      %v10615 = vadd.f32 %v10565, %v10566
      %10616 = vadd.xlane.f32.xlu0 %v10615
      %v10617 = vpop.xlane.xlu0 %10616
      %v10618 = vadd.f32 %v10567, %v10568
      %10619 = vadd.xlane.f32.xlu0 %v10618
      %v10620 = vpop.xlane.xlu0 %10619
      %v10621 = vadd.f32 %v10569, %v10570
      %10622 = vadd.xlane.f32.xlu0 %v10621
      %v10623 = vpop.xlane.xlu0 %10622
      %v10624 = vadd.f32 %v10571, %v10572
      %10625 = vadd.xlane.f32.xlu0 %v10624
      %v10626 = vpop.xlane.xlu0 %10625
      %v10627 = vadd.f32 %v10573, %v10574
      %10628 = vadd.xlane.f32.xlu0 %v10627
      %v10629 = vpop.xlane.xlu0 %10628
      %v10630 = vadd.f32 %v10575, %v10576
      %10631 = vadd.xlane.f32.xlu0 %v10630
      %v10632 = vpop.xlane.xlu0 %10631
      %v10633 = vadd.f32 %v10577, %v10578
      %10634 = vadd.xlane.f32.xlu0 %v10633
      %v10635 = vpop.xlane.xlu0 %10634
      %v10636 = vadd.f32 %v10579, %v10580
      %10637 = vadd.xlane.f32.xlu0 %v10636
      %v10638 = vpop.xlane.xlu0 %10637
      %v10639 = vadd.f32 %v10581, %v10582
      %10640 = vadd.xlane.f32.xlu0 %v10639
      %v10641 = vpop.xlane.xlu0 %10640
      %v10642 = vadd.f32 %v10583, %v10584
      %10643 = vadd.xlane.f32.xlu0 %v10642
      %v10644 = vpop.xlane.xlu0 %10643
      %v10645 = vadd.f32 %v10585, %v10586
      %10646 = vadd.xlane.f32.xlu0 %v10645
      %v10647 = vpop.xlane.xlu0 %10646
      %v10648 = vadd.f32 %v10587, %v10588
      %10649 = vadd.xlane.f32.xlu0 %v10648
      %v10650 = vpop.xlane.xlu0 %10649
      %v10651 = vadd.f32 %v10589, %v10590
      %10652 = vadd.xlane.f32.xlu0 %v10651
      %v10653 = vpop.xlane.xlu0 %10652
      %v10654 = vadd.f32 %v10591, %v10592
      %10655 = vadd.xlane.f32.xlu0 %v10654
      %v10656 = vpop.xlane.xlu0 %10655
      %v10657 = vmul.f32 %v10599, %v8708
      %v10658 = vmul.f32 %v10602, %v8708
      %v10659 = vmul.f32 %v10605, %v8708
      %v10660 = vmul.f32 %v10608, %v8708
      %v10661 = vmul.f32 %v10611, %v8708
      %v10662 = vmul.f32 %v10614, %v8708
      %v10663 = vmul.f32 %v10617, %v8708
      %v10664 = vmul.f32 %v10620, %v8708
      %v10665 = vmul.f32 %v10623, %v8708
      %v10666 = vmul.f32 %v10626, %v8708
      %v10667 = vmul.f32 %v10629, %v8708
      %v10668 = vmul.f32 %v10632, %v8708
      %v10669 = vmul.f32 %v10635, %v8708
      %v10670 = vmul.f32 %v10638, %v8708
      %v10671 = vmul.f32 %v10641, %v8708
      %v10672 = vmul.f32 %v10644, %v8708
      %v10673 = vmul.f32 %v10647, %v8708
      %v10674 = vmul.f32 %v10650, %v8708
      %v10675 = vmul.f32 %v10653, %v8708
      %v10676 = vmul.f32 %v10656, %v8708
      %v10677 = vsub.f32 %v10553, %v10657
      %v10678 = vsub.f32 %v10554, %v10657
      %v10679 = vsub.f32 %v10555, %v10658
      %v10680 = vsub.f32 %v10556, %v10658
      %v10681 = vsub.f32 %v10557, %v10659
      %v10682 = vsub.f32 %v10558, %v10659
      %v10683 = vsub.f32 %v10559, %v10660
      %v10684 = vsub.f32 %v10560, %v10660
      %v10685 = vsub.f32 %v10561, %v10661
      %v10686 = vsub.f32 %v10562, %v10661
      %v10687 = vsub.f32 %v10563, %v10662
      %v10688 = vsub.f32 %v10564, %v10662
      %v10689 = vsub.f32 %v10565, %v10663
      %v10690 = vsub.f32 %v10566, %v10663
      %v10691 = vsub.f32 %v10567, %v10664
      %v10692 = vsub.f32 %v10568, %v10664
      %v10693 = vsub.f32 %v10569, %v10665
      %v10694 = vsub.f32 %v10570, %v10665
      %v10695 = vsub.f32 %v10571, %v10666
      %v10696 = vsub.f32 %v10572, %v10666
      %v10697 = vsub.f32 %v10573, %v10667
      %v10698 = vsub.f32 %v10574, %v10667
      %v10699 = vsub.f32 %v10575, %v10668
      %v10700 = vsub.f32 %v10576, %v10668
      %v10701 = vsub.f32 %v10577, %v10669
      %v10702 = vsub.f32 %v10578, %v10669
      %v10703 = vsub.f32 %v10579, %v10670
      %v10704 = vsub.f32 %v10580, %v10670
      %v10705 = vsub.f32 %v10581, %v10671
      %v10706 = vsub.f32 %v10582, %v10671
      %v10707 = vsub.f32 %v10583, %v10672
      %v10708 = vsub.f32 %v10584, %v10672
      %v10709 = vsub.f32 %v10585, %v10673
      %v10710 = vsub.f32 %v10586, %v10673
      %v10711 = vsub.f32 %v10587, %v10674
      %v10712 = vsub.f32 %v10588, %v10674
      %v10713 = vsub.f32 %v10589, %v10675
      %v10714 = vsub.f32 %v10590, %v10675
      %v10715 = vsub.f32 %v10591, %v10676
      %v10716 = vsub.f32 %v10592, %v10676
      %v10717 = vmul.f32 %v10677, %v10677
      %v10718 = vmul.f32 %v10678, %v10678
      %v10719 = vmul.f32 %v10679, %v10679
      %v10720 = vmul.f32 %v10680, %v10680
      %v10721 = vmul.f32 %v10681, %v10681
      %v10722 = vmul.f32 %v10682, %v10682
      %v10723 = vmul.f32 %v10683, %v10683
      %v10724 = vmul.f32 %v10684, %v10684
      %v10725 = vmul.f32 %v10685, %v10685
      %v10726 = vmul.f32 %v10686, %v10686
      %v10727 = vmul.f32 %v10687, %v10687
      %v10728 = vmul.f32 %v10688, %v10688
      %v10729 = vmul.f32 %v10689, %v10689
      %v10730 = vmul.f32 %v10690, %v10690
      %v10731 = vmul.f32 %v10691, %v10691
      %v10732 = vmul.f32 %v10692, %v10692
      %v10733 = vmul.f32 %v10693, %v10693
      %v10734 = vmul.f32 %v10694, %v10694
      %v10735 = vmul.f32 %v10695, %v10695
      %v10736 = vmul.f32 %v10696, %v10696
      %v10737 = vmul.f32 %v10697, %v10697
      %v10738 = vmul.f32 %v10698, %v10698
      %v10739 = vmul.f32 %v10699, %v10699
      %v10740 = vmul.f32 %v10700, %v10700
      %v10741 = vmul.f32 %v10701, %v10701
      %v10742 = vmul.f32 %v10702, %v10702
      %v10743 = vmul.f32 %v10703, %v10703
      %v10744 = vmul.f32 %v10704, %v10704
      %v10745 = vmul.f32 %v10705, %v10705
      %v10746 = vmul.f32 %v10706, %v10706
      %v10747 = vmul.f32 %v10707, %v10707
      %v10748 = vmul.f32 %v10708, %v10708
      %v10749 = vmul.f32 %v10709, %v10709
      %v10750 = vmul.f32 %v10710, %v10710
      %v10751 = vmul.f32 %v10711, %v10711
      %v10752 = vmul.f32 %v10712, %v10712
      %v10753 = vmul.f32 %v10713, %v10713
      %v10754 = vmul.f32 %v10714, %v10714
      %v10755 = vmul.f32 %v10715, %v10715
      %v10756 = vmul.f32 %v10716, %v10716
      %v10757 = vadd.f32 %v10717, %v10718
      %10758 = vadd.xlane.f32.xlu0 %v10757
      %v10759 = vpop.xlane.xlu0 %10758
      %v10760 = vadd.f32 %v10719, %v10720
      %10761 = vadd.xlane.f32.xlu0 %v10760
      %v10762 = vpop.xlane.xlu0 %10761
      %v10763 = vadd.f32 %v10721, %v10722
      %10764 = vadd.xlane.f32.xlu0 %v10763
      %v10765 = vpop.xlane.xlu0 %10764
      %v10766 = vadd.f32 %v10723, %v10724
      %10767 = vadd.xlane.f32.xlu0 %v10766
      %v10768 = vpop.xlane.xlu0 %10767
      %v10769 = vadd.f32 %v10725, %v10726
      %10770 = vadd.xlane.f32.xlu0 %v10769
      %v10771 = vpop.xlane.xlu0 %10770
      %v10772 = vadd.f32 %v10727, %v10728
      %10773 = vadd.xlane.f32.xlu0 %v10772
      %v10774 = vpop.xlane.xlu0 %10773
      %v10775 = vadd.f32 %v10729, %v10730
      %10776 = vadd.xlane.f32.xlu0 %v10775
      %v10777 = vpop.xlane.xlu0 %10776
      %v10778 = vadd.f32 %v10731, %v10732
      %10779 = vadd.xlane.f32.xlu0 %v10778
      %v10780 = vpop.xlane.xlu0 %10779
      %v10781 = vadd.f32 %v10733, %v10734
      %10782 = vadd.xlane.f32.xlu0 %v10781
      %v10783 = vpop.xlane.xlu0 %10782
      %v10784 = vadd.f32 %v10735, %v10736
      %10785 = vadd.xlane.f32.xlu0 %v10784
      %v10786 = vpop.xlane.xlu0 %10785
      %v10787 = vadd.f32 %v10737, %v10738
      %10788 = vadd.xlane.f32.xlu0 %v10787
      %v10789 = vpop.xlane.xlu0 %10788
      %v10790 = vadd.f32 %v10739, %v10740
      %10791 = vadd.xlane.f32.xlu0 %v10790
      %v10792 = vpop.xlane.xlu0 %10791
      %v10793 = vadd.f32 %v10741, %v10742
      %10794 = vadd.xlane.f32.xlu0 %v10793
      %v10795 = vpop.xlane.xlu0 %10794
      %v10796 = vadd.f32 %v10743, %v10744
      %10797 = vadd.xlane.f32.xlu0 %v10796
      %v10798 = vpop.xlane.xlu0 %10797
      %v10799 = vadd.f32 %v10745, %v10746
      %10800 = vadd.xlane.f32.xlu0 %v10799
      %v10801 = vpop.xlane.xlu0 %10800
      %v10802 = vadd.f32 %v10747, %v10748
      %10803 = vadd.xlane.f32.xlu0 %v10802
      %v10804 = vpop.xlane.xlu0 %10803
      %v10805 = vadd.f32 %v10749, %v10750
      %10806 = vadd.xlane.f32.xlu0 %v10805
      %v10807 = vpop.xlane.xlu0 %10806
      %v10808 = vadd.f32 %v10751, %v10752
      %10809 = vadd.xlane.f32.xlu0 %v10808
      %v10810 = vpop.xlane.xlu0 %10809
      %v10811 = vadd.f32 %v10753, %v10754
      %10812 = vadd.xlane.f32.xlu0 %v10811
      %v10813 = vpop.xlane.xlu0 %10812
      %v10814 = vadd.f32 %v10755, %v10756
      %10815 = vadd.xlane.f32.xlu0 %v10814
      %v10816 = vpop.xlane.xlu0 %10815
      %v10817 = vmul.f32 %v10759, %v8708
      %v10818 = vmul.f32 %v10762, %v8708
      %v10819 = vmul.f32 %v10765, %v8708
      %v10820 = vmul.f32 %v10768, %v8708
      %v10821 = vmul.f32 %v10771, %v8708
      %v10822 = vmul.f32 %v10774, %v8708
      %v10823 = vmul.f32 %v10777, %v8708
      %v10824 = vmul.f32 %v10780, %v8708
      %v10825 = vmul.f32 %v10783, %v8708
      %v10826 = vmul.f32 %v10786, %v8708
      %v10827 = vmul.f32 %v10789, %v8708
      %v10828 = vmul.f32 %v10792, %v8708
      %v10829 = vmul.f32 %v10795, %v8708
      %v10830 = vmul.f32 %v10798, %v8708
      %v10831 = vmul.f32 %v10801, %v8708
      %v10832 = vmul.f32 %v10804, %v8708
      %v10833 = vmul.f32 %v10807, %v8708
      %v10834 = vmul.f32 %v10810, %v8708
      %v10835 = vmul.f32 %v10813, %v8708
      %v10836 = vmul.f32 %v10816, %v8708
      %v10837 = vadd.f32 %v10817, 1e-05
      %v10838 = vadd.f32 %v10818, 1e-05
      %v10839 = vadd.f32 %v10819, 1e-05
      %v10840 = vadd.f32 %v10820, 1e-05
      %v10841 = vadd.f32 %v10821, 1e-05
      %v10842 = vadd.f32 %v10822, 1e-05
      %v10843 = vadd.f32 %v10823, 1e-05
      %v10844 = vadd.f32 %v10824, 1e-05
      %v10845 = vadd.f32 %v10825, 1e-05
      %v10846 = vadd.f32 %v10826, 1e-05
      %v10847 = vadd.f32 %v10827, 1e-05
      %v10848 = vadd.f32 %v10828, 1e-05
      %v10849 = vadd.f32 %v10829, 1e-05
      %v10850 = vadd.f32 %v10830, 1e-05
      %v10851 = vadd.f32 %v10831, 1e-05
      %v10852 = vadd.f32 %v10832, 1e-05
      %v10853 = vadd.f32 %v10833, 1e-05
      %v10854 = vadd.f32 %v10834, 1e-05
      %v10855 = vadd.f32 %v10835, 1e-05
      %v10856 = vadd.f32 %v10836, 1e-05
      %v10857 = vrsqrt.pop %v10837
      %v10858 = vrsqrt.pop %v10838
      %v10859 = vrsqrt.pop %v10839
      %v10860 = vrsqrt.pop %v10840
      %v10861 = vrsqrt.pop %v10841
      %v10862 = vrsqrt.pop %v10842
      %v10863 = vrsqrt.pop %v10843
      %v10864 = vrsqrt.pop %v10844
      %v10865 = vrsqrt.pop %v10845
      %v10866 = vrsqrt.pop %v10846
      %v10867 = vrsqrt.pop %v10847
      %v10868 = vrsqrt.pop %v10848
      %v10869 = vrsqrt.pop %v10849
      %v10870 = vrsqrt.pop %v10850
      %v10871 = vrsqrt.pop %v10851
      %v10872 = vrsqrt.pop %v10852
      %v10873 = vrsqrt.pop %v10853
      %v10874 = vrsqrt.pop %v10854
      %v10875 = vrsqrt.pop %v10855
      %v10876 = vrsqrt.pop %v10856
      %v10877 = vmul.f32 %v10677, %v10857
      %v10878 = vmul.f32 %v10678, %v10857
      %v10879 = vmul.f32 %v10679, %v10858
      %v10880 = vmul.f32 %v10680, %v10858
      %v10881 = vmul.f32 %v10681, %v10859
      %v10882 = vmul.f32 %v10682, %v10859
      %v10883 = vmul.f32 %v10683, %v10860
      %v10884 = vmul.f32 %v10684, %v10860
      %v10885 = vmul.f32 %v10685, %v10861
      %v10886 = vmul.f32 %v10686, %v10861
      %v10887 = vmul.f32 %v10687, %v10862
      %v10888 = vmul.f32 %v10688, %v10862
      %v10889 = vmul.f32 %v10689, %v10863
      %v10890 = vmul.f32 %v10690, %v10863
      %v10891 = vmul.f32 %v10691, %v10864
      %v10892 = vmul.f32 %v10692, %v10864
      %v10893 = vmul.f32 %v10693, %v10865
      %v10894 = vmul.f32 %v10694, %v10865
      %v10895 = vmul.f32 %v10695, %v10866
      %v10896 = vmul.f32 %v10696, %v10866
      %v10897 = vmul.f32 %v10697, %v10867
      %v10898 = vmul.f32 %v10698, %v10867
      %v10899 = vmul.f32 %v10699, %v10868
      %v10900 = vmul.f32 %v10700, %v10868
      %v10901 = vmul.f32 %v10701, %v10869
      %v10902 = vmul.f32 %v10702, %v10869
      %v10903 = vmul.f32 %v10703, %v10870
      %v10904 = vmul.f32 %v10704, %v10870
      %v10905 = vmul.f32 %v10705, %v10871
      %v10906 = vmul.f32 %v10706, %v10871
      %v10907 = vmul.f32 %v10707, %v10872
      %v10908 = vmul.f32 %v10708, %v10872
      %v10909 = vmul.f32 %v10709, %v10873
      %v10910 = vmul.f32 %v10710, %v10873
      %v10911 = vmul.f32 %v10711, %v10874
      %v10912 = vmul.f32 %v10712, %v10874
      %v10913 = vmul.f32 %v10713, %v10875
      %v10914 = vmul.f32 %v10714, %v10875
      %v10915 = vmul.f32 %v10715, %v10876
      %v10916 = vmul.f32 %v10716, %v10876
      %v10918 = vlaneseq
      %v10919 = vshrl.u32 %v10918, 7
      %v10920 = vsub.s32 0, %v10919
      %v10921 = vrot.slane %v10594, %v10920
      %v10922 = vlaneseq
      %v10923 = vshrl.u32 %v10922, 7
      %v10924 = vsub.s32 1, %v10923
      %v10925 = vrot.slane %v10594, %v10924
      %v10928 = vmul.f32 %v10877, %v10921
      %v10929 = vmul.f32 %v10878, %v10925
      %v10930 = vmul.f32 %v10879, %v10921
      %v10931 = vmul.f32 %v10880, %v10925
      %v10932 = vmul.f32 %v10881, %v10921
      %v10933 = vmul.f32 %v10882, %v10925
      %v10934 = vmul.f32 %v10883, %v10921
      %v10935 = vmul.f32 %v10884, %v10925
      %v10936 = vmul.f32 %v10885, %v10921
      %v10937 = vmul.f32 %v10886, %v10925
      %v10938 = vmul.f32 %v10887, %v10921
      %v10939 = vmul.f32 %v10888, %v10925
      %v10940 = vmul.f32 %v10889, %v10921
      %v10941 = vmul.f32 %v10890, %v10925
      %v10942 = vmul.f32 %v10891, %v10921
      %v10943 = vmul.f32 %v10892, %v10925
      %v10944 = vmul.f32 %v10893, %v10921
      %v10945 = vmul.f32 %v10894, %v10925
      %v10946 = vmul.f32 %v10895, %v10921
      %v10947 = vmul.f32 %v10896, %v10925
      %v10948 = vmul.f32 %v10897, %v10921
      %v10949 = vmul.f32 %v10898, %v10925
      %v10950 = vmul.f32 %v10899, %v10921
      %v10951 = vmul.f32 %v10900, %v10925
      %v10952 = vmul.f32 %v10901, %v10921
      %v10953 = vmul.f32 %v10902, %v10925
      %v10954 = vmul.f32 %v10903, %v10921
      %v10955 = vmul.f32 %v10904, %v10925
      %v10956 = vmul.f32 %v10905, %v10921
      %v10957 = vmul.f32 %v10906, %v10925
      %v10958 = vmul.f32 %v10907, %v10921
      %v10959 = vmul.f32 %v10908, %v10925
      %v10960 = vmul.f32 %v10909, %v10921
      %v10961 = vmul.f32 %v10910, %v10925
      %v10962 = vmul.f32 %v10911, %v10921
      %v10963 = vmul.f32 %v10912, %v10925
      %v10964 = vmul.f32 %v10913, %v10921
      %v10965 = vmul.f32 %v10914, %v10925
      %v10966 = vmul.f32 %v10915, %v10921
      %v10967 = vmul.f32 %v10916, %v10925
      %v10969 = vlaneseq
      %v10970 = vshrl.u32 %v10969, 7
      %v10971 = vsub.s32 0, %v10970
      %v10972 = vrot.slane %v10596, %v10971
      %v10973 = vlaneseq
      %v10974 = vshrl.u32 %v10973, 7
      %v10975 = vsub.s32 1, %v10974
      %v10976 = vrot.slane %v10596, %v10975
      %v10979 = vadd.f32 %v10928, %v10972
      %v10980 = vadd.f32 %v10929, %v10976
      %v10981 = vadd.f32 %v10930, %v10972
      %v10982 = vadd.f32 %v10931, %v10976
      %v10983 = vadd.f32 %v10932, %v10972
      %v10984 = vadd.f32 %v10933, %v10976
      %v10985 = vadd.f32 %v10934, %v10972
      %v10986 = vadd.f32 %v10935, %v10976
      %v10987 = vadd.f32 %v10936, %v10972
      %v10988 = vadd.f32 %v10937, %v10976
      %v10989 = vadd.f32 %v10938, %v10972
      %v10990 = vadd.f32 %v10939, %v10976
      %v10991 = vadd.f32 %v10940, %v10972
      %v10992 = vadd.f32 %v10941, %v10976
      %v10993 = vadd.f32 %v10942, %v10972
      %v10994 = vadd.f32 %v10943, %v10976
      %v10995 = vadd.f32 %v10944, %v10972
      %v10996 = vadd.f32 %v10945, %v10976
      %v10997 = vadd.f32 %v10946, %v10972
      %v10998 = vadd.f32 %v10947, %v10976
      %v10999 = vadd.f32 %v10948, %v10972
      %v11000 = vadd.f32 %v10949, %v10976
      %v11001 = vadd.f32 %v10950, %v10972
      %v11002 = vadd.f32 %v10951, %v10976
      %v11003 = vadd.f32 %v10952, %v10972
      %v11004 = vadd.f32 %v10953, %v10976
      %v11005 = vadd.f32 %v10954, %v10972
      %v11006 = vadd.f32 %v10955, %v10976
      %v11007 = vadd.f32 %v10956, %v10972
      %v11008 = vadd.f32 %v10957, %v10976
      %v11009 = vadd.f32 %v10958, %v10972
      %v11010 = vadd.f32 %v10959, %v10976
      %v11011 = vadd.f32 %v10960, %v10972
      %v11012 = vadd.f32 %v10961, %v10976
      %v11013 = vadd.f32 %v10962, %v10972
      %v11014 = vadd.f32 %v10963, %v10976
      %v11015 = vadd.f32 %v10964, %v10972
      %v11016 = vadd.f32 %v10965, %v10976
      %v11017 = vadd.f32 %v10966, %v10972
      %v11018 = vadd.f32 %v10967, %v10976
    $region154: #{forward.1} parent=1 // loop_footer
      %s619 = sadd.s32 1, %s615
    $region155: #{forward.1} parent=1 // loop_footer_branch
      %614 = sbr.rel target = $region151
    $region156: #{forward.1} parent=1 // loop_exit
      _
    %v11019 = vlaneseq
    %v11020 = vand.u32 %v11019, 127
    %v11021 = vadd.s32 %v11020, 128
    %v11022 = vlaneseq
    %v11023 = vshrl.u32 %v11022, 7
    %v11024 = vadd.s32 %v11023, 8
    %v11025 = vmul.u32 %v11023, 10
    %v11026 = vmul.u32 %v11024, 10
    %v11027 = vadd.s32 %v11025, 9
    %v11028 = vadd.s32 %v11026, 9
    %vm11029 = vcmp.eq.s32.totalorder %v11020, %v11027
    %vm11030 = vcmp.eq.s32.totalorder %v11021, %v11027
    %vm11031 = vcmp.eq.s32.totalorder %v11020, %v11028
    %vm11032 = vcmp.eq.s32.totalorder %v11021, %v11028
    %v11033 = vsel %vm11029, 1.0, 0.0
    %v11034 = vsel %vm11030, 1.0, 0.0
    %v11035 = vsel %vm11031, 1.0, 0.0
    %v11036 = vsel %vm11032, 1.0, 0.0
    %vm11037 = vcmask 261120
    %v11039 = vsel %vm11037, %v11034, 0
    %v11042 = vsel %vm11037, %v11036, 0
    %11044 = vmatprep.subr.mxu0 %v621
    %11045 = vmatpush1.msra.mxu0 %v620
    %11046 = vmatprep.subr.mxu0 %v623
    %11047 = vmatpush1.msra.mxu0 %v622
    %11048 = vmatprep.subr.mxu0 %v625
    %11049 = vmatpush1.msra.mxu0 %v624
    %11050 = vmatprep.subr.mxu0 %v627
    %11051 = vmatpush1.msra.mxu0 %v626
    %11052 = vmatprep.subr.mxu0 %v629
    %11053 = vmatpush1.msra.mxu0 %v628
    %11054 = vmatprep.subr.mxu0 %v631
    %11055 = vmatpush1.msra.mxu0 %v630
    %11056 = vmatprep.subr.mxu0 %v633
    %11057 = vmatpush1.msra.mxu0 %v632
    %11058 = vmatprep.subr.mxu0 %v635
    %11059 = vmatpush1.msra.mxu0 %v634
    %11060 = vmatprep.subr.mxu0 %v637
    %11061 = vmatpush1.msra.mxu0 %v636
    %11062 = vmatprep.subr.mxu0 %v639
    %11063 = vmatpush1.msra.mxu0 %v638
    %11064 = vmatprep.subr.mxu0 %v641
    %11065 = vmatpush1.msra.mxu0 %v640
    %11066 = vmatprep.subr.mxu0 %v643
    %11067 = vmatpush1.msra.mxu0 %v642
    %11068 = vmatprep.subr.mxu0 %v645
    %11069 = vmatpush1.msra.mxu0 %v644
    %11070 = vmatprep.subr.mxu0 %v647
    %11071 = vmatpush1.msra.mxu0 %v646
    %11072 = vmatprep.subr.mxu0 %v649
    %11073 = vmatpush1.msra.mxu0 %v648
    %11074 = vmatprep.subr.mxu0 %v651
    %11075 = vmatpush1.msra.mxu0 %v650
    %11076 = vmatprep.subr.mxu0 %v653
    %11077 = vmatpush1.msra.mxu0 %v652
    %11078 = vmatprep.subr.mxu0 %v655
    %11079 = vmatpush1.msra.mxu0 %v654
    %11080 = vmatprep.subr.mxu0 %v657
    %11081 = vmatpush1.msra.mxu0 %v656
    %11082 = vmatprep.subr.mxu0 %v659
    %11083 = vmatpush1.msra.mxu0 %v658
    %11084 = vmatprep.subr.mxu0 0.0
    %11085 = vmatpush1.msra.mxu0 0.0
    %11086 = vmatprep.subr.mxu0 0.0
    %11087 = vmatpush1.msra.mxu0 0.0
    %11088 = vmatprep.subr.mxu0 0.0
    %11089 = vmatpush1.msra.mxu0 0.0
    %11090 = vmatprep.subr.mxu0 0.0
    %11091 = vmatpush1.msra.mxu0 0.0
    %11092 = vmatprep.subr.mxu0 0.0
    %11093 = vmatpush1.msra.mxu0 0.0
    %11094 = vmatprep.subr.mxu0 0.0
    %11095 = vmatpush1.msra.mxu0 0.0
    %11096 = vmatprep.subr.mxu0 0.0
    %11097 = vmatpush1.msra.mxu0 0.0
    %11098 = vmatprep.subr.mxu0 0.0
    %11099 = vmatpush1.msra.mxu0 0.0
    %11100 = vmatprep.subr.mxu0 0.0
    %11101 = vmatpush1.msra.mxu0 0.0
    %11102 = vmatprep.subr.mxu0 0.0
    %11103 = vmatpush1.msra.mxu0 0.0
    %11104 = vmatprep.subr.mxu0 0.0
    %11105 = vmatpush1.msra.mxu0 0.0
    %11106 = vmatprep.subr.mxu0 0.0
    %11107 = vmatpush1.msra.mxu0 0.0
    %11108 = vmatprep.mubr.f32.mxu0 %v11039
    %11109 = vmatmul.mubr.f32.gmra.mrb[0].mxu0 %v11033
    %v11110 = vpop.f32.mrb[0].mxu0
    %v11111 = vadd.f32 0.0, %v11110
    %v11112 = vpop.f32.mrb[0].mxu0
    %v11113 = vadd.f32 0.0, %v11112
    %11114 = vmatprep.mubr.f32.mxu0 %v11042
    %11115 = vmatmul.mubr.f32.gmra.mrb[0].mxu0 %v11035
    %v11116 = vpop.f32.mrb[0].mxu0
    %v11117 = vadd.f32 0.0, %v11116
    %v11118 = vpop.f32.mrb[0].mxu0
    %v11119 = vadd.f32 0.0, %v11118
    %11120 = vdwg.mxu0
    %v11121 = vld [vmem:[#allocation23] sm:$0x3]
    %v11122 = vld [vmem:[#allocation25] sm:$0x3]
    %v11123 = vadd.f32 %v11111, %v11113
    %11124 = vadd.xlane.f32.xlu0 %v11123
    %v11125 = vpop.xlane.xlu0 %11124
    %v11126 = vadd.f32 %v11117, %v11119
    %11127 = vadd.xlane.f32.xlu0 %v11126
    %v11128 = vpop.xlane.xlu0 %11127
    %v11129 = vrcp.pop 256.0
    %v11130 = vmul.f32 %v11125, %v11129
    %v11131 = vmul.f32 %v11128, %v11129
    %v11132 = vsub.f32 %v11111, %v11130
    %v11133 = vsub.f32 %v11113, %v11130
    %v11134 = vsub.f32 %v11117, %v11131
    %v11135 = vsub.f32 %v11119, %v11131
    %v11136 = vmul.f32 %v11132, %v11132
    %v11137 = vmul.f32 %v11133, %v11133
    %v11138 = vmul.f32 %v11134, %v11134
    %v11139 = vmul.f32 %v11135, %v11135
    %v11140 = vadd.f32 %v11136, %v11137
    %11141 = vadd.xlane.f32.xlu0 %v11140
    %v11142 = vpop.xlane.xlu0 %11141
    %v11143 = vadd.f32 %v11138, %v11139
    %11144 = vadd.xlane.f32.xlu0 %v11143
    %v11145 = vpop.xlane.xlu0 %11144
    %v11146 = vmul.f32 %v11142, %v11129
    %v11147 = vmul.f32 %v11145, %v11129
    %v11148 = vadd.f32 %v11146, 1e-05
    %v11149 = vadd.f32 %v11147, 1e-05
    %v11150 = vrsqrt.pop %v11148
    %v11151 = vrsqrt.pop %v11149
    %v11152 = vmul.f32 %v11132, %v11150
    %v11153 = vmul.f32 %v11133, %v11150
    %v11154 = vmul.f32 %v11134, %v11151
    %v11155 = vmul.f32 %v11135, %v11151
    %v11157 = vlaneseq
    %v11158 = vshrl.u32 %v11157, 7
    %v11159 = vsub.s32 0, %v11158
    %v11160 = vrot.slane %v11121, %v11159
    %v11161 = vlaneseq
    %v11162 = vshrl.u32 %v11161, 7
    %v11163 = vsub.s32 1, %v11162
    %v11164 = vrot.slane %v11121, %v11163
    %v11167 = vmul.f32 %v11152, %v11160
    %v11168 = vmul.f32 %v11153, %v11164
    %v11169 = vmul.f32 %v11154, %v11160
    %v11170 = vmul.f32 %v11155, %v11164
    %v11172 = vlaneseq
    %v11173 = vshrl.u32 %v11172, 7
    %v11174 = vsub.s32 0, %v11173
    %v11175 = vrot.slane %v11122, %v11174
    %v11176 = vlaneseq
    %v11177 = vshrl.u32 %v11176, 7
    %v11178 = vsub.s32 1, %v11177
    %v11179 = vrot.slane %v11122, %v11178
    %v11182 = vadd.f32 %v11167, %v11175
    %v11183 = vadd.f32 %v11168, %v11179
    %v11184 = vadd.f32 %v11169, %v11175
    %v11185 = vadd.f32 %v11170, %v11179
    %v11186 = vld [vmem:[#allocation26] sm:$0x3]
    %v11188 = vlaneseq
    %v11189 = vshrl.u32 %v11188, 7
    %v11190 = vsub.s32 0, %v11189
    %v11191 = vrot.slane %v11186, %v11190
    %v11192 = vlaneseq
    %v11193 = vshrl.u32 %v11192, 7
    %v11194 = vsub.s32 1, %v11193
    %v11195 = vrot.slane %v11186, %v11194
    %v11198 = vmul.f32 %v11182, %v11191
    %v11199 = vmul.f32 %v11183, %v11195
    %v11200 = vmul.f32 %v11184, %v11191
    %v11201 = vmul.f32 %v11185, %v11195
    %v11202 = vadd.f32 %v11198, %v11199
    %11203 = vadd.xlane.f32.xlu0 %v11202
    %v11204 = vpop.xlane.xlu0 %11203
    %v11205 = vadd.f32 %v11200, %v11201
    %11206 = vadd.xlane.f32.xlu0 %v11205
    %v11207 = vpop.xlane.xlu0 %11206
    %v11208 = vld [vmem:[#allocation2] sm:$0x1]
    %v11210 = vlaneseq
    %v11211 = vshrl.u32 %v11210, 7
    %v11212 = vsub.s32 0, %v11211
    %v11213 = vrot.slane %v11208, %v11212
    %v11215 = vadd.f32 %v11204, %v11213
    %v11216 = vadd.f32 %v11207, %v11213
    %vm11217 = vcmask 7168
    %11218 = vst.msk [vmem:[%s21] sm:$0xff] %vm11217, %v11215
    %11219 = vst.msk [vmem:[%s21 + $0x8] sm:$0xff] %vm11217, %v11216
    // Predicated region
    $region157: #{forward.1} parent=1 // pred_check
      _
    $region158: #{forward.1} parent=1 // pred_check_branch
      %11221 = sbr.rel (0) target = $region160
    $region159: #{forward.1} parent=1 // pred_region
      _
    $region160: #{forward.1} parent=1 // pred_fallthru
      _
    // Predicated region
    $region161: #{forward.1} parent=1 // pred_check
      _
    $region162: #{forward.1} parent=1 // pred_check_branch
      %11223 = sbr.rel (0) target = $region164
    $region163: #{forward.1} parent=1 // pred_region
      _
    $region164: #{forward.1} parent=1 // pred_fallthru
      _
    %11224 = vsyncpa [#allocation4], 1
    %11225 = vsyncpa [#allocation6], 1
    %11226 = vsyncpa [#allocation9], 1
    %11227 = vsyncpa [#allocation12], 1
    %11228 = vsyncpa [#allocation15], 1
    %11229 = vsyncpa [#allocation18], 1
    %11230 = vsyncpa [#allocation21], 1
    %11231 = vsyncpa [#allocation24], 1
    %11232 = vsyncpa [#allocation27], 1

</llo_original>
